<compile_context>
chip_gen: v5e
topology: v5e:2x2
jax: 0.10.0
libtpu: 0.0.40
codegen_flags: <defaults>
</compile_context>

<pallas_src>
import functools

import jax
import jax.numpy as jnp
from jax.experimental import pallas as pl
from jax.experimental.pallas import tpu as pltpu


def _sigmoid(z):
    # Exact sigmoid (EUP exp + VPU divide).  pl.reciprocal(approx=True) is
    # reserved for the softmax denominator so the offsets feeding floor()/
    # corner selection are not perturbed.
    return 1.0 / (1.0 + jnp.exp(-z))


@functools.lru_cache(maxsize=None)
def _probe_roll_convention():
    """Detect pltpu.roll's shift convention on this backend.

    Returns (use_roll, roll_like_jnp).  Falls back to jnp.roll-based shifts
    inside the kernel if pltpu.roll is unavailable or behaves unexpectedly.
    """
    def _kern(o_ref):
        lane = jax.lax.broadcasted_iota(jnp.int32, (8, 128), 1).astype(jnp.float32)
        o_ref[...] = pltpu.roll(lane, 1, 1)

    try:
        res = pl.pallas_call(
            _kern, out_shape=jax.ShapeDtypeStruct((8, 128), jnp.float32))()
        first = float(jax.device_get(res)[0, 0])
        if first == 127.0:      # out[p] = in[p - shift]  (jnp.roll convention)
            return True, True
        if first == 1.0:        # out[p] = in[p + shift]
            return True, False
        return False, True
    except Exception:           # lowering unavailable -> jnp.roll fallback
        return False, True


def rrfu_kernel(r_ref, consts_ref, x_ref, w1_ref, b1_ref, w2_ref, b2_ref,
                out_ref, *, h, w, c, groups, s_f, sample_k,
                mxu_dtype, use_roll, roll_like_jnp):
    H, W = s_f * h, s_f * w
    P, Q = H * W, h * w
    cg = c // groups
    s_c = s_f * s_f
    goff = groups * s_c * 2
    sc = sample_k * sample_k
    r = sample_k // 2

    x = x_ref[0].astype(jnp.float32)                           # (c, Q)

    # ---- fused 1x1 convs: offset & offset_mask in one MXU call (f32) ----
    cat1 = jnp.dot(w1_ref[...], x, preferred_element_type=jnp.float32) + b1_ref[...]
    x_offset = cat1[:goff, :] * _sigmoid(cat1[goff:, :])       # (goff, Q)

    # ---- nearest-neighbour upsample of the offset field: one MXU matmul
    #      against the precomputed one-hot R (resident across the batch) ----
    off_up = jnp.dot(x_offset.astype(mxu_dtype), r_ref[...],
                     preferred_element_type=jnp.float32)       # (goff, P)

    # precomputed per-output-pixel constants (resident across the batch)
    sel = [consts_ref[k:k + 1, :] for k in range(s_c)]         # s_f^2 x (1, P)
    base_x = consts_ref[s_c:s_c + 1, :]                        # (Wo+.5)/s_f-.5
    base_y = consts_ref[s_c + 1:s_c + 2, :]
    tap_valid = consts_ref[s_c + 2:s_c + 2 + sc, :]            # (sc, P)

    inv_sf = 1.0 / s_f
    iota_h = jax.lax.broadcasted_iota(jnp.int32, (h, P), 0).astype(jnp.float32)
    iota_w = jax.lax.broadcasted_iota(jnp.int32, (w, P), 0).astype(jnp.float32)

    # ---- offset_sample: grid_sample(bilinear, border, align_corners=False) ----
    xdef_rows = []
    for g in range(groups):
        off_x = jnp.zeros((1, P), jnp.float32)
        off_y = jnp.zeros((1, P), jnp.float32)
        for i_ in range(s_f):
            for j_ in range(s_f):
                # channel layout matches reshape(b*g, s_f, s_f, 2, h, w):
                # x offset at ch, y offset at ch + 1
                ch = ((g * s_f + i_) * s_f + j_) * 2
                s_ = sel[i_ * s_f + j_]
                off_x = off_x + s_ * off_up[ch:ch + 1, :]
                off_y = off_y + s_ * off_up[ch + 1:ch + 2, :]

        # un-normalized source coords, border clamp (align_corners=False)
        px = jnp.clip(base_x + off_x * inv_sf, 0.0, w - 1.0)
        py = jnp.clip(base_y + off_y * inv_sf, 0.0, h - 1.0)
        x0 = jnp.floor(px)
        y0 = jnp.floor(py)
        fx = px - x0
        fy = py - y0
        x1 = jnp.minimum(x0 + 1.0, w - 1.0)
        y1 = jnp.minimum(y0 + 1.0, h - 1.0)

        # separable weighted one-hots: (h+w)*P compares, not 4*Q*P
        ryw = (jnp.where(iota_h == y0, 1.0 - fy, 0.0)
               + jnp.where(iota_h == y1, fy, 0.0))             # (h, P)
        cxw = (jnp.where(iota_w == x0, 1.0 - fx, 0.0)
               + jnp.where(iota_w == x1, fx, 0.0))             # (w, P)

        # M[y*w+x, p] = ryw[y,p] * cxw[x,p]; assembled from 2-D row blocks
        # (sublane-aligned concat) to keep the Mosaic lowering simple.
        m_rows = [ryw[y:y + 1, :] * cxw for y in range(h)]
        m = jnp.concatenate(m_rows, axis=0).astype(mxu_dtype)  # (Q, P)

        xg = x[g * cg:(g + 1) * cg, :].astype(mxu_dtype)       # (cg, Q)
        xdef_rows.append(jnp.dot(xg, m, preferred_element_type=jnp.float32))

    # single aligned concat instead of per-group scratch stores
    x_def = jnp.concatenate(xdef_rows, axis=0)                 # (c, P) f32

    # ---- dynamic_sample: fused sample_kernel/kernel_mask convs + softmax ----
    cat2 = jnp.dot(w2_ref[...], x_def, preferred_element_type=jnp.float32) + b2_ref[...]
    logits = cat2[:sc, :] * _sigmoid(cat2[sc:, :])             # (sc, P)
    logits = logits - jnp.max(logits, axis=0, keepdims=True)
    e = jnp.exp(logits)
    wgt = e * pl.reciprocal(jnp.sum(e, axis=0, keepdims=True), approx=True)
    # fold the F.unfold zero-padding masks into the weights once (no per-tap
    # masking, no renormalization -- matches unfold semantics)
    wgt = wgt * tap_valid                                      # (sc, P)

    # ---- 3x3 dynamic re-sample: 9 lane-rolls (XLU) of dense x_def + VPU FMAs ----
    out = jnp.zeros((c, P), jnp.float32)
    k_idx = 0
    for di in range(-r, r + 1):
        for dj in range(-r, r + 1):
            s = di * W + dj                                    # tap[p] = x_def[p + s]
            if s % P == 0:
                tap = x_def
            elif use_roll:
                amt = (-s) % P if roll_like_jnp else s % P
                tap = pltpu.roll(x_def, amt, 1)
            else:
                tap = jnp.roll(x_def, -s, axis=1)
            out = out + wgt[k_idx:k_idx + 1, :] * tap
            k_idx += 1

    out_ref[0] = out.astype(out_ref.dtype)


def rrfu_forward(x, w_off, b_off, w_offm, b_offm, w_sk, b_sk, w_km, b_km,
                 *, groups=4, scale_factor=2, sample_k=3,
                 mxu_dtype=jnp.bfloat16):
    b, c, h, w = x.shape                                       # NCHW, like PyTorch
    s_f = scale_factor
    H, W = s_f * h, s_f * w
    P, Q = H * W, h * w
    s_c = s_f * s_f
    goff = groups * s_c * 2
    sc = sample_k * sample_k
    r = sample_k // 2
    assert c % groups == 0

    # ---- data-independent constants, hoisted out of the kernel ----
    p_idx = jnp.arange(P, dtype=jnp.int32)
    Ho = p_idx // W
    Wo = p_idx % W
    q_src = (Ho // s_f) * w + (Wo // s_f)
    R = (jnp.arange(Q, dtype=jnp.int32)[:, None] == q_src[None, :]).astype(mxu_dtype)

    rows = []
    for i in range(s_f):                                       # sub-pixel selectors
        for j in range(s_f):
            rows.append(((Ho % s_f == i) & (Wo % s_f == j)).astype(jnp.float32))
    rows.append((Wo.astype(jnp.float32) + 0.5) / s_f - 0.5)    # base_x
    rows.append((Ho.astype(jnp.float32) + 0.5) / s_f - 0.5)    # base_y
    for di in range(-r, r + 1):                                # unfold zero-pad masks
        for dj in range(-r, r + 1):
            ok = ((Ho + di >= 0) & (Ho + di < H) & (Wo + dj >= 0) & (Wo + dj < W))
            rows.append(ok.astype(jnp.float32))
    consts = jnp.stack(rows, axis=0)                           # (s_c + 2 + sc, P)
    n_const = consts.shape[0]

    x2 = x.reshape(b, c, Q)
    w1 = jnp.concatenate([w_off, w_offm], axis=0)              # (2*goff, c)
    b1 = jnp.concatenate([b_off, b_offm], axis=0).reshape(2 * goff, 1)
    w2 = jnp.concatenate([w_sk, w_km], axis=0)                 # (2*sc, c)
    b2 = jnp.concatenate([b_sk, b_km], axis=0).reshape(2 * sc, 1)

    use_roll, roll_like_jnp = _probe_roll_convention()

    kernel = functools.partial(
        rrfu_kernel, h=h, w=w, c=c, groups=groups, s_f=s_f, sample_k=sample_k,
        mxu_dtype=mxu_dtype, use_roll=use_roll, roll_like_jnp=roll_like_jnp)

    # explicit scoped-VMEM limit from the per-step working set (+ headroom)
    mxu_bytes = jnp.dtype(mxu_dtype).itemsize
    est = (2 * Q * P * mxu_bytes                      # resident R
           + 2 * n_const * P * 4                      # resident constants
           + 2 * c * Q * 4 + 2 * c * P * 4            # x / out double buffers
           + Q * P * (4 + mxu_bytes)                  # M construction + cast
           + (goff + 4 * c + 8 * sc + 4 * (h + w)) * P * 4
           + (2 * goff + 2 * sc) * (c + 1) * 4
           + (1 << 20))
    vmem_limit = int(min(max(2 * est, 32 * 1024 * 1024), 64 * 1024 * 1024))

    out = pl.pallas_call(
        kernel,
        out_shape=jax.ShapeDtypeStruct((b, c, P), x.dtype),
        grid=(b,),
        in_specs=[
            pl.BlockSpec((Q, P), lambda i: (0, 0)),            # R (resident)
            pl.BlockSpec((n_const, P), lambda i: (0, 0)),      # constants
            pl.BlockSpec((1, c, Q), lambda i: (i, 0, 0)),      # x
            pl.BlockSpec((2 * goff, c), lambda i: (0, 0)),
            pl.BlockSpec((2 * goff, 1), lambda i: (0, 0)),
            pl.BlockSpec((2 * sc, c), lambda i: (0, 0)),
            pl.BlockSpec((2 * sc, 1), lambda i: (0, 0)),
        ],
        out_specs=pl.BlockSpec((1, c, P), lambda i: (i, 0, 0)),
        compiler_params=pltpu.CompilerParams(
            dimension_semantics=("parallel",),
            vmem_limit_bytes=vmem_limit),
    )(R, consts, x2, w1, b1, w2, b2)

    return out.reshape(b, c, H, W)


if __name__ == "__main__":
    b, c, h, w = 2, 8, 16, 16
    groups, s_f, sample_k = 4, 2, 3
    goff = groups * s_f * s_f * 2
    sc = sample_k * sample_k

    key = jax.random.PRNGKey(0)
    k0, k1, k2, k3, k4 = jax.random.split(key, 5)

    # NCHW input, same layout as the PyTorch module.
    x = jax.random.normal(k0, (b, c, h, w), jnp.float32)

    # 1x1 conv parameters as (out_c, in_c) matrices (Conv2d weight squeezed),
    # biases as (out_c,).  Module init: offset~N(0,1e-3), sample_kernel~N(0,5e-3),
    # masks zero-init; masks get small random weights here so the sigmoid
    # gating paths are exercised non-trivially.
    w_off = 0.001 * jax.random.normal(k1, (goff, c), jnp.float32)
    b_off = jnp.zeros((goff,), jnp.float32)
    w_offm = 0.1 * jax.random.normal(k2, (goff, c), jnp.float32)
    b_offm = jnp.zeros((goff,), jnp.float32)
    w_sk = 0.005 * jax.random.normal(k3, (sc, c), jnp.float32)
    b_sk = jnp.zeros((sc,), jnp.float32)
    w_km = 0.1 * jax.random.normal(k4, (sc, c), jnp.float32)
    b_km = jnp.zeros((sc,), jnp.float32)

    out = rrfu_forward(x, w_off, b_off, w_offm, b_offm, w_sk, b_sk, w_km, b_km,
                       groups=groups, scale_factor=s_f, sample_k=sample_k)
    out = jax.block_until_ready(out)

    assert out.shape == (b, c, s_f * h, s_f * w), out.shape
    assert bool(jnp.all(jnp.isfinite(out)))
    print("KERNEL_OK")
</pallas_src>

<mosaic_0001>
module attributes {stable_mosaic.version = 11 : i64} {
  func.func @rrfu_kernel(%arg0: i32, %arg1: memref<256x1024xbf16, #tpu.memory_space<vmem>>, %arg2: memref<15x1024xf32, #tpu.memory_space<vmem>>, %arg3: memref<1x8x256xf32, #tpu.memory_space<vmem>>, %arg4: memref<64x8xf32, #tpu.memory_space<vmem>>, %arg5: memref<64x1xf32, #tpu.memory_space<vmem>>, %arg6: memref<18x8xf32, #tpu.memory_space<vmem>>, %arg7: memref<18x1xf32, #tpu.memory_space<vmem>>, %arg8: memref<1x8x1024xf32, #tpu.memory_space<vmem>>) attributes {dimension_semantics = [#tpu.dimension_semantics<parallel>], iteration_bounds = array<i64: 2>, scalar_prefetch = 0 : i64, scratch_operands = 0 : i64, tpu.core_type = #tpu.core_type<tc>, window_params = [{pipeline_mode = #tpu.pipeline_mode<synchronous>, transform_indices = @transform_0, window_bounds = array<i64: 256, 1024>}, {pipeline_mode = #tpu.pipeline_mode<synchronous>, transform_indices = @transform_1, window_bounds = array<i64: 15, 1024>}, {transform_indices = @transform_2, window_bounds = array<i64: 1, 8, 256>}, {pipeline_mode = #tpu.pipeline_mode<synchronous>, transform_indices = @transform_3, window_bounds = array<i64: 64, 8>}, {pipeline_mode = #tpu.pipeline_mode<synchronous>, transform_indices = @transform_4, window_bounds = array<i64: 64, 1>}, {pipeline_mode = #tpu.pipeline_mode<synchronous>, transform_indices = @transform_5, window_bounds = array<i64: 18, 8>}, {pipeline_mode = #tpu.pipeline_mode<synchronous>, transform_indices = @transform_6, window_bounds = array<i64: 18, 1>}, {transform_indices = @transform_7, window_bounds = array<i64: 1, 8, 1024>}]} {
    %c0 = arith.constant 0 : index
    %c0_0 = arith.constant 0 : index
    %c0_1 = arith.constant 0 : index
    %0 = vector.load %arg3[%c0, %c0_0, %c0_1] : memref<1x8x256xf32, #tpu.memory_space<vmem>>, vector<1x8x256xf32>
    %1 = vector.shape_cast %0 : vector<1x8x256xf32> to vector<8x256xf32>
    %c0_2 = arith.constant 0 : index
    %c0_3 = arith.constant 0 : index
    %2 = vector.load %arg4[%c0_2, %c0_3] : memref<64x8xf32, #tpu.memory_space<vmem>>, vector<64x8xf32>
    %cst = arith.constant dense<0.000000e+00> : vector<64x256xf32>
    %3 = tpu.matmul %2, %1, %cst {dimension_numbers = #tpu.dot_dimension_numbers<[1], [0], [0], [1], [0, 0, 1, 1], [], []>} : vector<64x8xf32>, vector<8x256xf32>, vector<64x256xf32> -> vector<64x256xf32>
    %c0_4 = arith.constant 0 : index
    %c0_5 = arith.constant 0 : index
    %4 = vector.load %arg5[%c0_4, %c0_5] : memref<64x1xf32, #tpu.memory_space<vmem>>, vector<64x1xf32>
    %5 = vector.broadcast %4 : vector<64x1xf32> to vector<64x256xf32>
    %6 = arith.addf %3, %5 : vector<64x256xf32>
    %7 = vector.extract_strided_slice %6 {offsets = [0, 0], sizes = [32, 256], strides = [1, 1]} : vector<64x256xf32> to vector<32x256xf32>
    %8 = vector.extract_strided_slice %6 {offsets = [32, 0], sizes = [32, 256], strides = [1, 1]} : vector<64x256xf32> to vector<32x256xf32>
    %cst_6 = arith.constant 0.000000e+00 : f32
    %9 = vector.broadcast %cst_6 : f32 to vector<32x256xf32>
    %10 = arith.subf %9, %8 : vector<32x256xf32>
    %11 = math.exp %10 : vector<32x256xf32>
    %cst_7 = arith.constant 1.000000e+00 : f32
    %12 = vector.broadcast %cst_7 : f32 to vector<32x256xf32>
    %13 = arith.addf %12, %11 : vector<32x256xf32>
    %cst_8 = arith.constant 1.000000e+00 : f32
    %14 = vector.broadcast %cst_8 : f32 to vector<32x256xf32>
    %15 = arith.divf %14, %13 : vector<32x256xf32>
    %16 = arith.mulf %7, %15 : vector<32x256xf32>
    %17 = arith.truncf %16 : vector<32x256xf32> to vector<32x256xbf16>
    %c0_9 = arith.constant 0 : index
    %c0_10 = arith.constant 0 : index
    %18 = vector.load %arg1[%c0_9, %c0_10] : memref<256x1024xbf16, #tpu.memory_space<vmem>>, vector<256x1024xbf16>
    %cst_11 = arith.constant dense<0.000000e+00> : vector<32x1024xf32>
    %19 = tpu.matmul %17, %18, %cst_11 {dimension_numbers = #tpu.dot_dimension_numbers<[1], [0], [0], [1], [0, 0, 1, 1], [], []>} : vector<32x256xbf16>, vector<256x1024xbf16>, vector<32x1024xf32> -> vector<32x1024xf32>
    %c0_12 = arith.constant 0 : index
    %c0_13 = arith.constant 0 : index
    %20 = vector.load %arg2[%c0_12, %c0_13] : memref<15x1024xf32, #tpu.memory_space<vmem>>, vector<1x1024xf32>
    %c1 = arith.constant 1 : index
    %c0_14 = arith.constant 0 : index
    %21 = vector.load %arg2[%c1, %c0_14] : memref<15x1024xf32, #tpu.memory_space<vmem>>, vector<1x1024xf32>
    %c2 = arith.constant 2 : index
    %c0_15 = arith.constant 0 : index
    %22 = vector.load %arg2[%c2, %c0_15] : memref<15x1024xf32, #tpu.memory_space<vmem>>, vector<1x1024xf32>
    %c3 = arith.constant 3 : index
    %c0_16 = arith.constant 0 : index
    %23 = vector.load %arg2[%c3, %c0_16] : memref<15x1024xf32, #tpu.memory_space<vmem>>, vector<1x1024xf32>
    %c4 = arith.constant 4 : index
    %c0_17 = arith.constant 0 : index
    %24 = vector.load %arg2[%c4, %c0_17] : memref<15x1024xf32, #tpu.memory_space<vmem>>, vector<1x1024xf32>
    %c5 = arith.constant 5 : index
    %c0_18 = arith.constant 0 : index
    %25 = vector.load %arg2[%c5, %c0_18] : memref<15x1024xf32, #tpu.memory_space<vmem>>, vector<1x1024xf32>
    %c6 = arith.constant 6 : index
    %c0_19 = arith.constant 0 : index
    %26 = vector.load %arg2[%c6, %c0_19] : memref<15x1024xf32, #tpu.memory_space<vmem>>, vector<9x1024xf32>
    %27 = tpu.iota {dimensions = array<i32: 0>} : vector<16x1024xi32>
    %28 = arith.sitofp %27 : vector<16x1024xi32> to vector<16x1024xf32>
    %29 = tpu.iota {dimensions = array<i32: 0>} : vector<16x1024xi32>
    %30 = arith.sitofp %29 : vector<16x1024xi32> to vector<16x1024xf32>
    %cst_20 = arith.constant 0.000000e+00 : f32
    %31 = vector.broadcast %cst_20 : f32 to vector<1x1024xf32>
    %cst_21 = arith.constant 0.000000e+00 : f32
    %32 = vector.broadcast %cst_21 : f32 to vector<1x1024xf32>
    %33 = vector.extract_strided_slice %19 {offsets = [0, 0], sizes = [1, 1024], strides = [1, 1]} : vector<32x1024xf32> to vector<1x1024xf32>
    %34 = arith.mulf %20, %33 : vector<1x1024xf32>
    %35 = arith.addf %31, %34 : vector<1x1024xf32>
    %36 = vector.extract_strided_slice %19 {offsets = [1, 0], sizes = [1, 1024], strides = [1, 1]} : vector<32x1024xf32> to vector<1x1024xf32>
    %37 = arith.mulf %20, %36 : vector<1x1024xf32>
    %38 = arith.addf %32, %37 : vector<1x1024xf32>
    %39 = vector.extract_strided_slice %19 {offsets = [2, 0], sizes = [1, 1024], strides = [1, 1]} : vector<32x1024xf32> to vector<1x1024xf32>
    %40 = arith.mulf %21, %39 : vector<1x1024xf32>
    %41 = arith.addf %35, %40 : vector<1x1024xf32>
    %42 = vector.extract_strided_slice %19 {offsets = [3, 0], sizes = [1, 1024], strides = [1, 1]} : vector<32x1024xf32> to vector<1x1024xf32>
    %43 = arith.mulf %21, %42 : vector<1x1024xf32>
    %44 = arith.addf %38, %43 : vector<1x1024xf32>
    %45 = vector.extract_strided_slice %19 {offsets = [4, 0], sizes = [1, 1024], strides = [1, 1]} : vector<32x1024xf32> to vector<1x1024xf32>
    %46 = arith.mulf %22, %45 : vector<1x1024xf32>
    %47 = arith.addf %41, %46 : vector<1x1024xf32>
    %48 = vector.extract_strided_slice %19 {offsets = [5, 0], sizes = [1, 1024], strides = [1, 1]} : vector<32x1024xf32> to vector<1x1024xf32>
    %49 = arith.mulf %22, %48 : vector<1x1024xf32>
    %50 = arith.addf %44, %49 : vector<1x1024xf32>
    %51 = vector.extract_strided_slice %19 {offsets = [6, 0], sizes = [1, 1024], strides = [1, 1]} : vector<32x1024xf32> to vector<1x1024xf32>
    %52 = arith.mulf %23, %51 : vector<1x1024xf32>
    %53 = arith.addf %47, %52 : vector<1x1024xf32>
    %54 = vector.extract_strided_slice %19 {offsets = [7, 0], sizes = [1, 1024], strides = [1, 1]} : vector<32x1024xf32> to vector<1x1024xf32>
    %55 = arith.mulf %23, %54 : vector<1x1024xf32>
    %56 = arith.addf %50, %55 : vector<1x1024xf32>
    %cst_22 = arith.constant 5.000000e-01 : f32
    %57 = vector.broadcast %cst_22 : f32 to vector<1x1024xf32>
    %58 = arith.mulf %53, %57 : vector<1x1024xf32>
    %59 = arith.addf %24, %58 : vector<1x1024xf32>
    %cst_23 = arith.constant 0.000000e+00 : f32
    %cst_24 = arith.constant 1.500000e+01 : f32
    %60 = vector.broadcast %cst_23 : f32 to vector<1x1024xf32>
    %61 = arith.maximumf %60, %59 : vector<1x1024xf32>
    %62 = vector.broadcast %cst_24 : f32 to vector<1x1024xf32>
    %63 = arith.minimumf %62, %61 : vector<1x1024xf32>
    %cst_25 = arith.constant 5.000000e-01 : f32
    %64 = vector.broadcast %cst_25 : f32 to vector<1x1024xf32>
    %65 = arith.mulf %56, %64 : vector<1x1024xf32>
    %66 = arith.addf %25, %65 : vector<1x1024xf32>
    %cst_26 = arith.constant 0.000000e+00 : f32
    %cst_27 = arith.constant 1.500000e+01 : f32
    %67 = vector.broadcast %cst_26 : f32 to vector<1x1024xf32>
    %68 = arith.maximumf %67, %66 : vector<1x1024xf32>
    %69 = vector.broadcast %cst_27 : f32 to vector<1x1024xf32>
    %70 = arith.minimumf %69, %68 : vector<1x1024xf32>
    %71 = math.floor %63 : vector<1x1024xf32>
    %72 = math.floor %70 : vector<1x1024xf32>
    %73 = arith.subf %63, %71 : vector<1x1024xf32>
    %74 = arith.subf %70, %72 : vector<1x1024xf32>
    %cst_28 = arith.constant 1.000000e+00 : f32
    %75 = vector.broadcast %cst_28 : f32 to vector<1x1024xf32>
    %76 = arith.addf %71, %75 : vector<1x1024xf32>
    %cst_29 = arith.constant 1.500000e+01 : f32
    %77 = vector.broadcast %cst_29 : f32 to vector<1x1024xf32>
    %78 = arith.minimumf %76, %77 : vector<1x1024xf32>
    %cst_30 = arith.constant 1.000000e+00 : f32
    %79 = vector.broadcast %cst_30 : f32 to vector<1x1024xf32>
    %80 = arith.addf %72, %79 : vector<1x1024xf32>
    %cst_31 = arith.constant 1.500000e+01 : f32
    %81 = vector.broadcast %cst_31 : f32 to vector<1x1024xf32>
    %82 = arith.minimumf %80, %81 : vector<1x1024xf32>
    %83 = vector.broadcast %72 : vector<1x1024xf32> to vector<16x1024xf32>
    %84 = arith.cmpf oeq, %28, %83 : vector<16x1024xf32>
    %cst_32 = arith.constant 1.000000e+00 : f32
    %85 = vector.broadcast %cst_32 : f32 to vector<1x1024xf32>
    %86 = arith.subf %85, %74 : vector<1x1024xf32>
    %cst_33 = arith.constant 0.000000e+00 : f32
    %87 = vector.shape_cast %86 : vector<1x1024xf32> to vector<1x1024xf32>
    %88 = vector.broadcast %87 : vector<1x1024xf32> to vector<16x1024xf32>
    %89 = vector.broadcast %cst_33 : f32 to vector<16x1024xf32>
    %90 = arith.select %84, %88, %89 : vector<16x1024xi1>, vector<16x1024xf32>
    %91 = vector.broadcast %82 : vector<1x1024xf32> to vector<16x1024xf32>
    %92 = arith.cmpf oeq, %28, %91 : vector<16x1024xf32>
    %cst_34 = arith.constant 0.000000e+00 : f32
    %93 = vector.shape_cast %74 : vector<1x1024xf32> to vector<1x1024xf32>
    %94 = vector.broadcast %93 : vector<1x1024xf32> to vector<16x1024xf32>
    %95 = vector.broadcast %cst_34 : f32 to vector<16x1024xf32>
    %96 = arith.select %92, %94, %95 : vector<16x1024xi1>, vector<16x1024xf32>
    %97 = arith.addf %90, %96 : vector<16x1024xf32>
    %98 = vector.broadcast %71 : vector<1x1024xf32> to vector<16x1024xf32>
    %99 = arith.cmpf oeq, %30, %98 : vector<16x1024xf32>
    %cst_35 = arith.constant 1.000000e+00 : f32
    %100 = vector.broadcast %cst_35 : f32 to vector<1x1024xf32>
    %101 = arith.subf %100, %73 : vector<1x1024xf32>
    %cst_36 = arith.constant 0.000000e+00 : f32
    %102 = vector.shape_cast %101 : vector<1x1024xf32> to vector<1x1024xf32>
    %103 = vector.broadcast %102 : vector<1x1024xf32> to vector<16x1024xf32>
    %104 = vector.broadcast %cst_36 : f32 to vector<16x1024xf32>
    %105 = arith.select %99, %103, %104 : vector<16x1024xi1>, vector<16x1024xf32>
    %106 = vector.broadcast %78 : vector<1x1024xf32> to vector<16x1024xf32>
    %107 = arith.cmpf oeq, %30, %106 : vector<16x1024xf32>
    %cst_37 = arith.constant 0.000000e+00 : f32
    %108 = vector.shape_cast %73 : vector<1x1024xf32> to vector<1x1024xf32>
    %109 = vector.broadcast %108 : vector<1x1024xf32> to vector<16x1024xf32>
    %110 = vector.broadcast %cst_37 : f32 to vector<16x1024xf32>
    %111 = arith.select %107, %109, %110 : vector<16x1024xi1>, vector<16x1024xf32>
    %112 = arith.addf %105, %111 : vector<16x1024xf32>
    %113 = vector.extract_strided_slice %97 {offsets = [0, 0], sizes = [1, 1024], strides = [1, 1]} : vector<16x1024xf32> to vector<1x1024xf32>
    %114 = vector.broadcast %113 : vector<1x1024xf32> to vector<16x1024xf32>
    %115 = arith.mulf %114, %112 : vector<16x1024xf32>
    %116 = vector.extract_strided_slice %97 {offsets = [1, 0], sizes = [1, 1024], strides = [1, 1]} : vector<16x1024xf32> to vector<1x1024xf32>
    %117 = vector.broadcast %116 : vector<1x1024xf32> to vector<16x1024xf32>
    %118 = arith.mulf %117, %112 : vector<16x1024xf32>
    %119 = vector.extract_strided_slice %97 {offsets = [2, 0], sizes = [1, 1024], strides = [1, 1]} : vector<16x1024xf32> to vector<1x1024xf32>
    %120 = vector.broadcast %119 : vector<1x1024xf32> to vector<16x1024xf32>
    %121 = arith.mulf %120, %112 : vector<16x1024xf32>
    %122 = vector.extract_strided_slice %97 {offsets = [3, 0], sizes = [1, 1024], strides = [1, 1]} : vector<16x1024xf32> to vector<1x1024xf32>
    %123 = vector.broadcast %122 : vector<1x1024xf32> to vector<16x1024xf32>
    %124 = arith.mulf %123, %112 : vector<16x1024xf32>
    %125 = vector.extract_strided_slice %97 {offsets = [4, 0], sizes = [1, 1024], strides = [1, 1]} : vector<16x1024xf32> to vector<1x1024xf32>
    %126 = vector.broadcast %125 : vector<1x1024xf32> to vector<16x1024xf32>
    %127 = arith.mulf %126, %112 : vector<16x1024xf32>
    %128 = vector.extract_strided_slice %97 {offsets = [5, 0], sizes = [1, 1024], strides = [1, 1]} : vector<16x1024xf32> to vector<1x1024xf32>
    %129 = vector.broadcast %128 : vector<1x1024xf32> to vector<16x1024xf32>
    %130 = arith.mulf %129, %112 : vector<16x1024xf32>
    %131 = vector.extract_strided_slice %97 {offsets = [6, 0], sizes = [1, 1024], strides = [1, 1]} : vector<16x1024xf32> to vector<1x1024xf32>
    %132 = vector.broadcast %131 : vector<1x1024xf32> to vector<16x1024xf32>
    %133 = arith.mulf %132, %112 : vector<16x1024xf32>
    %134 = vector.extract_strided_slice %97 {offsets = [7, 0], sizes = [1, 1024], strides = [1, 1]} : vector<16x1024xf32> to vector<1x1024xf32>
    %135 = vector.broadcast %134 : vector<1x1024xf32> to vector<16x1024xf32>
    %136 = arith.mulf %135, %112 : vector<16x1024xf32>
    %137 = vector.extract_strided_slice %97 {offsets = [8, 0], sizes = [1, 1024], strides = [1, 1]} : vector<16x1024xf32> to vector<1x1024xf32>
    %138 = vector.broadcast %137 : vector<1x1024xf32> to vector<16x1024xf32>
    %139 = arith.mulf %138, %112 : vector<16x1024xf32>
    %140 = vector.extract_strided_slice %97 {offsets = [9, 0], sizes = [1, 1024], strides = [1, 1]} : vector<16x1024xf32> to vector<1x1024xf32>
    %141 = vector.broadcast %140 : vector<1x1024xf32> to vector<16x1024xf32>
    %142 = arith.mulf %141, %112 : vector<16x1024xf32>
    %143 = vector.extract_strided_slice %97 {offsets = [10, 0], sizes = [1, 1024], strides = [1, 1]} : vector<16x1024xf32> to vector<1x1024xf32>
    %144 = vector.broadcast %143 : vector<1x1024xf32> to vector<16x1024xf32>
    %145 = arith.mulf %144, %112 : vector<16x1024xf32>
    %146 = vector.extract_strided_slice %97 {offsets = [11, 0], sizes = [1, 1024], strides = [1, 1]} : vector<16x1024xf32> to vector<1x1024xf32>
    %147 = vector.broadcast %146 : vector<1x1024xf32> to vector<16x1024xf32>
    %148 = arith.mulf %147, %112 : vector<16x1024xf32>
    %149 = vector.extract_strided_slice %97 {offsets = [12, 0], sizes = [1, 1024], strides = [1, 1]} : vector<16x1024xf32> to vector<1x1024xf32>
    %150 = vector.broadcast %149 : vector<1x1024xf32> to vector<16x1024xf32>
    %151 = arith.mulf %150, %112 : vector<16x1024xf32>
    %152 = vector.extract_strided_slice %97 {offsets = [13, 0], sizes = [1, 1024], strides = [1, 1]} : vector<16x1024xf32> to vector<1x1024xf32>
    %153 = vector.broadcast %152 : vector<1x1024xf32> to vector<16x1024xf32>
    %154 = arith.mulf %153, %112 : vector<16x1024xf32>
    %155 = vector.extract_strided_slice %97 {offsets = [14, 0], sizes = [1, 1024], strides = [1, 1]} : vector<16x1024xf32> to vector<1x1024xf32>
    %156 = vector.broadcast %155 : vector<1x1024xf32> to vector<16x1024xf32>
    %157 = arith.mulf %156, %112 : vector<16x1024xf32>
    %158 = vector.extract_strided_slice %97 {offsets = [15, 0], sizes = [1, 1024], strides = [1, 1]} : vector<16x1024xf32> to vector<1x1024xf32>
    %159 = vector.broadcast %158 : vector<1x1024xf32> to vector<16x1024xf32>
    %160 = arith.mulf %159, %112 : vector<16x1024xf32>
    %161 = tpu.concatenate %115, %118, %121, %124, %127, %130, %133, %136, %139, %142, %145, %148, %151, %154, %157, %160 in 0 : vector<16x1024xf32>, vector<16x1024xf32>, vector<16x1024xf32>, vector<16x1024xf32>, vector<16x1024xf32>, vector<16x1024xf32>, vector<16x1024xf32>, vector<16x1024xf32>, vector<16x1024xf32>, vector<16x1024xf32>, vector<16x1024xf32>, vector<16x1024xf32>, vector<16x1024xf32>, vector<16x1024xf32>, vector<16x1024xf32>, vector<16x1024xf32> -> vector<256x1024xf32>
    %162 = arith.truncf %161 : vector<256x1024xf32> to vector<256x1024xbf16>
    %163 = vector.extract_strided_slice %1 {offsets = [0, 0], sizes = [2, 256], strides = [1, 1]} : vector<8x256xf32> to vector<2x256xf32>
    %164 = arith.truncf %163 : vector<2x256xf32> to vector<2x256xbf16>
    %cst_38 = arith.constant dense<0.000000e+00> : vector<2x1024xf32>
    %165 = tpu.matmul %164, %162, %cst_38 {dimension_numbers = #tpu.dot_dimension_numbers<[1], [0], [0], [1], [0, 0, 1, 1], [], []>} : vector<2x256xbf16>, vector<256x1024xbf16>, vector<2x1024xf32> -> vector<2x1024xf32>
    %cst_39 = arith.constant 0.000000e+00 : f32
    %166 = vector.broadcast %cst_39 : f32 to vector<1x1024xf32>
    %cst_40 = arith.constant 0.000000e+00 : f32
    %167 = vector.broadcast %cst_40 : f32 to vector<1x1024xf32>
    %168 = vector.extract_strided_slice %19 {offsets = [8, 0], sizes = [1, 1024], strides = [1, 1]} : vector<32x1024xf32> to vector<1x1024xf32>
    %169 = arith.mulf %20, %168 : vector<1x1024xf32>
    %170 = arith.addf %166, %169 : vector<1x1024xf32>
    %171 = vector.extract_strided_slice %19 {offsets = [9, 0], sizes = [1, 1024], strides = [1, 1]} : vector<32x1024xf32> to vector<1x1024xf32>
    %172 = arith.mulf %20, %171 : vector<1x1024xf32>
    %173 = arith.addf %167, %172 : vector<1x1024xf32>
    %174 = vector.extract_strided_slice %19 {offsets = [10, 0], sizes = [1, 1024], strides = [1, 1]} : vector<32x1024xf32> to vector<1x1024xf32>
    %175 = arith.mulf %21, %174 : vector<1x1024xf32>
    %176 = arith.addf %170, %175 : vector<1x1024xf32>
    %177 = vector.extract_strided_slice %19 {offsets = [11, 0], sizes = [1, 1024], strides = [1, 1]} : vector<32x1024xf32> to vector<1x1024xf32>
    %178 = arith.mulf %21, %177 : vector<1x1024xf32>
    %179 = arith.addf %173, %178 : vector<1x1024xf32>
    %180 = vector.extract_strided_slice %19 {offsets = [12, 0], sizes = [1, 1024], strides = [1, 1]} : vector<32x1024xf32> to vector<1x1024xf32>
    %181 = arith.mulf %22, %180 : vector<1x1024xf32>
    %182 = arith.addf %176, %181 : vector<1x1024xf32>
    %183 = vector.extract_strided_slice %19 {offsets = [13, 0], sizes = [1, 1024], strides = [1, 1]} : vector<32x1024xf32> to vector<1x1024xf32>
    %184 = arith.mulf %22, %183 : vector<1x1024xf32>
    %185 = arith.addf %179, %184 : vector<1x1024xf32>
    %186 = vector.extract_strided_slice %19 {offsets = [14, 0], sizes = [1, 1024], strides = [1, 1]} : vector<32x1024xf32> to vector<1x1024xf32>
    %187 = arith.mulf %23, %186 : vector<1x1024xf32>
    %188 = arith.addf %182, %187 : vector<1x1024xf32>
    %189 = vector.extract_strided_slice %19 {offsets = [15, 0], sizes = [1, 1024], strides = [1, 1]} : vector<32x1024xf32> to vector<1x1024xf32>
    %190 = arith.mulf %23, %189 : vector<1x1024xf32>
    %191 = arith.addf %185, %190 : vector<1x1024xf32>
    %cst_41 = arith.constant 5.000000e-01 : f32
    %192 = vector.broadcast %cst_41 : f32 to vector<1x1024xf32>
    %193 = arith.mulf %188, %192 : vector<1x1024xf32>
    %194 = arith.addf %24, %193 : vector<1x1024xf32>
    %cst_42 = arith.constant 0.000000e+00 : f32
    %cst_43 = arith.constant 1.500000e+01 : f32
    %195 = vector.broadcast %cst_42 : f32 to vector<1x1024xf32>
    %196 = arith.maximumf %195, %194 : vector<1x1024xf32>
    %197 = vector.broadcast %cst_43 : f32 to vector<1x1024xf32>
    %198 = arith.minimumf %197, %196 : vector<1x1024xf32>
    %cst_44 = arith.constant 5.000000e-01 : f32
    %199 = vector.broadcast %cst_44 : f32 to vector<1x1024xf32>
    %200 = arith.mulf %191, %199 : vector<1x1024xf32>
    %201 = arith.addf %25, %200 : vector<1x1024xf32>
    %cst_45 = arith.constant 0.000000e+00 : f32
    %cst_46 = arith.constant 1.500000e+01 : f32
    %202 = vector.broadcast %cst_45 : f32 to vector<1x1024xf32>
    %203 = arith.maximumf %202, %201 : vector<1x1024xf32>
    %204 = vector.broadcast %cst_46 : f32 to vector<1x1024xf32>
    %205 = arith.minimumf %204, %203 : vector<1x1024xf32>
    %206 = math.floor %198 : vector<1x1024xf32>
    %207 = math.floor %205 : vector<1x1024xf32>
    %208 = arith.subf %198, %206 : vector<1x1024xf32>
    %209 = arith.subf %205, %207 : vector<1x1024xf32>
    %cst_47 = arith.constant 1.000000e+00 : f32
    %210 = vector.broadcast %cst_47 : f32 to vector<1x1024xf32>
    %211 = arith.addf %206, %210 : vector<1x1024xf32>
    %cst_48 = arith.constant 1.500000e+01 : f32
    %212 = vector.broadcast %cst_48 : f32 to vector<1x1024xf32>
    %213 = arith.minimumf %211, %212 : vector<1x1024xf32>
    %cst_49 = arith.constant 1.000000e+00 : f32
    %214 = vector.broadcast %cst_49 : f32 to vector<1x1024xf32>
    %215 = arith.addf %207, %214 : vector<1x1024xf32>
    %cst_50 = arith.constant 1.500000e+01 : f32
    %216 = vector.broadcast %cst_50 : f32 to vector<1x1024xf32>
    %217 = arith.minimumf %215, %216 : vector<1x1024xf32>
    %218 = vector.broadcast %207 : vector<1x1024xf32> to vector<16x1024xf32>
    %219 = arith.cmpf oeq, %28, %218 : vector<16x1024xf32>
    %cst_51 = arith.constant 1.000000e+00 : f32
    %220 = vector.broadcast %cst_51 : f32 to vector<1x1024xf32>
    %221 = arith.subf %220, %209 : vector<1x1024xf32>
    %cst_52 = arith.constant 0.000000e+00 : f32
    %222 = vector.shape_cast %221 : vector<1x1024xf32> to vector<1x1024xf32>
    %223 = vector.broadcast %222 : vector<1x1024xf32> to vector<16x1024xf32>
    %224 = vector.broadcast %cst_52 : f32 to vector<16x1024xf32>
    %225 = arith.select %219, %223, %224 : vector<16x1024xi1>, vector<16x1024xf32>
    %226 = vector.broadcast %217 : vector<1x1024xf32> to vector<16x1024xf32>
    %227 = arith.cmpf oeq, %28, %226 : vector<16x1024xf32>
    %cst_53 = arith.constant 0.000000e+00 : f32
    %228 = vector.shape_cast %209 : vector<1x1024xf32> to vector<1x1024xf32>
    %229 = vector.broadcast %228 : vector<1x1024xf32> to vector<16x1024xf32>
    %230 = vector.broadcast %cst_53 : f32 to vector<16x1024xf32>
    %231 = arith.select %227, %229, %230 : vector<16x1024xi1>, vector<16x1024xf32>
    %232 = arith.addf %225, %231 : vector<16x1024xf32>
    %233 = vector.broadcast %206 : vector<1x1024xf32> to vector<16x1024xf32>
    %234 = arith.cmpf oeq, %30, %233 : vector<16x1024xf32>
    %cst_54 = arith.constant 1.000000e+00 : f32
    %235 = vector.broadcast %cst_54 : f32 to vector<1x1024xf32>
    %236 = arith.subf %235, %208 : vector<1x1024xf32>
    %cst_55 = arith.constant 0.000000e+00 : f32
    %237 = vector.shape_cast %236 : vector<1x1024xf32> to vector<1x1024xf32>
    %238 = vector.broadcast %237 : vector<1x1024xf32> to vector<16x1024xf32>
    %239 = vector.broadcast %cst_55 : f32 to vector<16x1024xf32>
    %240 = arith.select %234, %238, %239 : vector<16x1024xi1>, vector<16x1024xf32>
    %241 = vector.broadcast %213 : vector<1x1024xf32> to vector<16x1024xf32>
    %242 = arith.cmpf oeq, %30, %241 : vector<16x1024xf32>
    %cst_56 = arith.constant 0.000000e+00 : f32
    %243 = vector.shape_cast %208 : vector<1x1024xf32> to vector<1x1024xf32>
    %244 = vector.broadcast %243 : vector<1x1024xf32> to vector<16x1024xf32>
    %245 = vector.broadcast %cst_56 : f32 to vector<16x1024xf32>
    %246 = arith.select %242, %244, %245 : vector<16x1024xi1>, vector<16x1024xf32>
    %247 = arith.addf %240, %246 : vector<16x1024xf32>
    %248 = vector.extract_strided_slice %232 {offsets = [0, 0], sizes = [1, 1024], strides = [1, 1]} : vector<16x1024xf32> to vector<1x1024xf32>
    %249 = vector.broadcast %248 : vector<1x1024xf32> to vector<16x1024xf32>
    %250 = arith.mulf %249, %247 : vector<16x1024xf32>
    %251 = vector.extract_strided_slice %232 {offsets = [1, 0], sizes = [1, 1024], strides = [1, 1]} : vector<16x1024xf32> to vector<1x1024xf32>
    %252 = vector.broadcast %251 : vector<1x1024xf32> to vector<16x1024xf32>
    %253 = arith.mulf %252, %247 : vector<16x1024xf32>
    %254 = vector.extract_strided_slice %232 {offsets = [2, 0], sizes = [1, 1024], strides = [1, 1]} : vector<16x1024xf32> to vector<1x1024xf32>
    %255 = vector.broadcast %254 : vector<1x1024xf32> to vector<16x1024xf32>
    %256 = arith.mulf %255, %247 : vector<16x1024xf32>
    %257 = vector.extract_strided_slice %232 {offsets = [3, 0], sizes = [1, 1024], strides = [1, 1]} : vector<16x1024xf32> to vector<1x1024xf32>
    %258 = vector.broadcast %257 : vector<1x1024xf32> to vector<16x1024xf32>
    %259 = arith.mulf %258, %247 : vector<16x1024xf32>
    %260 = vector.extract_strided_slice %232 {offsets = [4, 0], sizes = [1, 1024], strides = [1, 1]} : vector<16x1024xf32> to vector<1x1024xf32>
    %261 = vector.broadcast %260 : vector<1x1024xf32> to vector<16x1024xf32>
    %262 = arith.mulf %261, %247 : vector<16x1024xf32>
    %263 = vector.extract_strided_slice %232 {offsets = [5, 0], sizes = [1, 1024], strides = [1, 1]} : vector<16x1024xf32> to vector<1x1024xf32>
    %264 = vector.broadcast %263 : vector<1x1024xf32> to vector<16x1024xf32>
    %265 = arith.mulf %264, %247 : vector<16x1024xf32>
    %266 = vector.extract_strided_slice %232 {offsets = [6, 0], sizes = [1, 1024], strides = [1, 1]} : vector<16x1024xf32> to vector<1x1024xf32>
    %267 = vector.broadcast %266 : vector<1x1024xf32> to vector<16x1024xf32>
    %268 = arith.mulf %267, %247 : vector<16x1024xf32>
    %269 = vector.extract_strided_slice %232 {offsets = [7, 0], sizes = [1, 1024], strides = [1, 1]} : vector<16x1024xf32> to vector<1x1024xf32>
    %270 = vector.broadcast %269 : vector<1x1024xf32> to vector<16x1024xf32>
    %271 = arith.mulf %270, %247 : vector<16x1024xf32>
    %272 = vector.extract_strided_slice %232 {offsets = [8, 0], sizes = [1, 1024], strides = [1, 1]} : vector<16x1024xf32> to vector<1x1024xf32>
    %273 = vector.broadcast %272 : vector<1x1024xf32> to vector<16x1024xf32>
    %274 = arith.mulf %273, %247 : vector<16x1024xf32>
    %275 = vector.extract_strided_slice %232 {offsets = [9, 0], sizes = [1, 1024], strides = [1, 1]} : vector<16x1024xf32> to vector<1x1024xf32>
    %276 = vector.broadcast %275 : vector<1x1024xf32> to vector<16x1024xf32>
    %277 = arith.mulf %276, %247 : vector<16x1024xf32>
    %278 = vector.extract_strided_slice %232 {offsets = [10, 0], sizes = [1, 1024], strides = [1, 1]} : vector<16x1024xf32> to vector<1x1024xf32>
    %279 = vector.broadcast %278 : vector<1x1024xf32> to vector<16x1024xf32>
    %280 = arith.mulf %279, %247 : vector<16x1024xf32>
    %281 = vector.extract_strided_slice %232 {offsets = [11, 0], sizes = [1, 1024], strides = [1, 1]} : vector<16x1024xf32> to vector<1x1024xf32>
    %282 = vector.broadcast %281 : vector<1x1024xf32> to vector<16x1024xf32>
    %283 = arith.mulf %282, %247 : vector<16x1024xf32>
    %284 = vector.extract_strided_slice %232 {offsets = [12, 0], sizes = [1, 1024], strides = [1, 1]} : vector<16x1024xf32> to vector<1x1024xf32>
    %285 = vector.broadcast %284 : vector<1x1024xf32> to vector<16x1024xf32>
    %286 = arith.mulf %285, %247 : vector<16x1024xf32>
    %287 = vector.extract_strided_slice %232 {offsets = [13, 0], sizes = [1, 1024], strides = [1, 1]} : vector<16x1024xf32> to vector<1x1024xf32>
    %288 = vector.broadcast %287 : vector<1x1024xf32> to vector<16x1024xf32>
    %289 = arith.mulf %288, %247 : vector<16x1024xf32>
    %290 = vector.extract_strided_slice %232 {offsets = [14, 0], sizes = [1, 1024], strides = [1, 1]} : vector<16x1024xf32> to vector<1x1024xf32>
    %291 = vector.broadcast %290 : vector<1x1024xf32> to vector<16x1024xf32>
    %292 = arith.mulf %291, %247 : vector<16x1024xf32>
    %293 = vector.extract_strided_slice %232 {offsets = [15, 0], sizes = [1, 1024], strides = [1, 1]} : vector<16x1024xf32> to vector<1x1024xf32>
    %294 = vector.broadcast %293 : vector<1x1024xf32> to vector<16x1024xf32>
    %295 = arith.mulf %294, %247 : vector<16x1024xf32>
    %296 = tpu.concatenate %250, %253, %256, %259, %262, %265, %268, %271, %274, %277, %280, %283, %286, %289, %292, %295 in 0 : vector<16x1024xf32>, vector<16x1024xf32>, vector<16x1024xf32>, vector<16x1024xf32>, vector<16x1024xf32>, vector<16x1024xf32>, vector<16x1024xf32>, vector<16x1024xf32>, vector<16x1024xf32>, vector<16x1024xf32>, vector<16x1024xf32>, vector<16x1024xf32>, vector<16x1024xf32>, vector<16x1024xf32>, vector<16x1024xf32>, vector<16x1024xf32> -> vector<256x1024xf32>
    %297 = arith.truncf %296 : vector<256x1024xf32> to vector<256x1024xbf16>
    %298 = vector.extract_strided_slice %1 {offsets = [2, 0], sizes = [2, 256], strides = [1, 1]} : vector<8x256xf32> to vector<2x256xf32>
    %299 = arith.truncf %298 : vector<2x256xf32> to vector<2x256xbf16>
    %cst_57 = arith.constant dense<0.000000e+00> : vector<2x1024xf32>
    %300 = tpu.matmul %299, %297, %cst_57 {dimension_numbers = #tpu.dot_dimension_numbers<[1], [0], [0], [1], [0, 0, 1, 1], [], []>} : vector<2x256xbf16>, vector<256x1024xbf16>, vector<2x1024xf32> -> vector<2x1024xf32>
    %cst_58 = arith.constant 0.000000e+00 : f32
    %301 = vector.broadcast %cst_58 : f32 to vector<1x1024xf32>
    %cst_59 = arith.constant 0.000000e+00 : f32
    %302 = vector.broadcast %cst_59 : f32 to vector<1x1024xf32>
    %303 = vector.extract_strided_slice %19 {offsets = [16, 0], sizes = [1, 1024], strides = [1, 1]} : vector<32x1024xf32> to vector<1x1024xf32>
    %304 = arith.mulf %20, %303 : vector<1x1024xf32>
    %305 = arith.addf %301, %304 : vector<1x1024xf32>
    %306 = vector.extract_strided_slice %19 {offsets = [17, 0], sizes = [1, 1024], strides = [1, 1]} : vector<32x1024xf32> to vector<1x1024xf32>
    %307 = arith.mulf %20, %306 : vector<1x1024xf32>
    %308 = arith.addf %302, %307 : vector<1x1024xf32>
    %309 = vector.extract_strided_slice %19 {offsets = [18, 0], sizes = [1, 1024], strides = [1, 1]} : vector<32x1024xf32> to vector<1x1024xf32>
    %310 = arith.mulf %21, %309 : vector<1x1024xf32>
    %311 = arith.addf %305, %310 : vector<1x1024xf32>
    %312 = vector.extract_strided_slice %19 {offsets = [19, 0], sizes = [1, 1024], strides = [1, 1]} : vector<32x1024xf32> to vector<1x1024xf32>
    %313 = arith.mulf %21, %312 : vector<1x1024xf32>
    %314 = arith.addf %308, %313 : vector<1x1024xf32>
    %315 = vector.extract_strided_slice %19 {offsets = [20, 0], sizes = [1, 1024], strides = [1, 1]} : vector<32x1024xf32> to vector<1x1024xf32>
    %316 = arith.mulf %22, %315 : vector<1x1024xf32>
    %317 = arith.addf %311, %316 : vector<1x1024xf32>
    %318 = vector.extract_strided_slice %19 {offsets = [21, 0], sizes = [1, 1024], strides = [1, 1]} : vector<32x1024xf32> to vector<1x1024xf32>
    %319 = arith.mulf %22, %318 : vector<1x1024xf32>
    %320 = arith.addf %314, %319 : vector<1x1024xf32>
    %321 = vector.extract_strided_slice %19 {offsets = [22, 0], sizes = [1, 1024], strides = [1, 1]} : vector<32x1024xf32> to vector<1x1024xf32>
    %322 = arith.mulf %23, %321 : vector<1x1024xf32>
    %323 = arith.addf %317, %322 : vector<1x1024xf32>
    %324 = vector.extract_strided_slice %19 {offsets = [23, 0], sizes = [1, 1024], strides = [1, 1]} : vector<32x1024xf32> to vector<1x1024xf32>
    %325 = arith.mulf %23, %324 : vector<1x1024xf32>
    %326 = arith.addf %320, %325 : vector<1x1024xf32>
    %cst_60 = arith.constant 5.000000e-01 : f32
    %327 = vector.broadcast %cst_60 : f32 to vector<1x1024xf32>
    %328 = arith.mulf %323, %327 : vector<1x1024xf32>
    %329 = arith.addf %24, %328 : vector<1x1024xf32>
    %cst_61 = arith.constant 0.000000e+00 : f32
    %cst_62 = arith.constant 1.500000e+01 : f32
    %330 = vector.broadcast %cst_61 : f32 to vector<1x1024xf32>
    %331 = arith.maximumf %330, %329 : vector<1x1024xf32>
    %332 = vector.broadcast %cst_62 : f32 to vector<1x1024xf32>
    %333 = arith.minimumf %332, %331 : vector<1x1024xf32>
    %cst_63 = arith.constant 5.000000e-01 : f32
    %334 = vector.broadcast %cst_63 : f32 to vector<1x1024xf32>
    %335 = arith.mulf %326, %334 : vector<1x1024xf32>
    %336 = arith.addf %25, %335 : vector<1x1024xf32>
    %cst_64 = arith.constant 0.000000e+00 : f32
    %cst_65 = arith.constant 1.500000e+01 : f32
    %337 = vector.broadcast %cst_64 : f32 to vector<1x1024xf32>
    %338 = arith.maximumf %337, %336 : vector<1x1024xf32>
    %339 = vector.broadcast %cst_65 : f32 to vector<1x1024xf32>
    %340 = arith.minimumf %339, %338 : vector<1x1024xf32>
    %341 = math.floor %333 : vector<1x1024xf32>
    %342 = math.floor %340 : vector<1x1024xf32>
    %343 = arith.subf %333, %341 : vector<1x1024xf32>
    %344 = arith.subf %340, %342 : vector<1x1024xf32>
    %cst_66 = arith.constant 1.000000e+00 : f32
    %345 = vector.broadcast %cst_66 : f32 to vector<1x1024xf32>
    %346 = arith.addf %341, %345 : vector<1x1024xf32>
    %cst_67 = arith.constant 1.500000e+01 : f32
    %347 = vector.broadcast %cst_67 : f32 to vector<1x1024xf32>
    %348 = arith.minimumf %346, %347 : vector<1x1024xf32>
    %cst_68 = arith.constant 1.000000e+00 : f32
    %349 = vector.broadcast %cst_68 : f32 to vector<1x1024xf32>
    %350 = arith.addf %342, %349 : vector<1x1024xf32>
    %cst_69 = arith.constant 1.500000e+01 : f32
    %351 = vector.broadcast %cst_69 : f32 to vector<1x1024xf32>
    %352 = arith.minimumf %350, %351 : vector<1x1024xf32>
    %353 = vector.broadcast %342 : vector<1x1024xf32> to vector<16x1024xf32>
    %354 = arith.cmpf oeq, %28, %353 : vector<16x1024xf32>
    %cst_70 = arith.constant 1.000000e+00 : f32
    %355 = vector.broadcast %cst_70 : f32 to vector<1x1024xf32>
    %356 = arith.subf %355, %344 : vector<1x1024xf32>
    %cst_71 = arith.constant 0.000000e+00 : f32
    %357 = vector.shape_cast %356 : vector<1x1024xf32> to vector<1x1024xf32>
    %358 = vector.broadcast %357 : vector<1x1024xf32> to vector<16x1024xf32>
    %359 = vector.broadcast %cst_71 : f32 to vector<16x1024xf32>
    %360 = arith.select %354, %358, %359 : vector<16x1024xi1>, vector<16x1024xf32>
    %361 = vector.broadcast %352 : vector<1x1024xf32> to vector<16x1024xf32>
    %362 = arith.cmpf oeq, %28, %361 : vector<16x1024xf32>
    %cst_72 = arith.constant 0.000000e+00 : f32
    %363 = vector.shape_cast %344 : vector<1x1024xf32> to vector<1x1024xf32>
    %364 = vector.broadcast %363 : vector<1x1024xf32> to vector<16x1024xf32>
    %365 = vector.broadcast %cst_72 : f32 to vector<16x1024xf32>
    %366 = arith.select %362, %364, %365 : vector<16x1024xi1>, vector<16x1024xf32>
    %367 = arith.addf %360, %366 : vector<16x1024xf32>
    %368 = vector.broadcast %341 : vector<1x1024xf32> to vector<16x1024xf32>
    %369 = arith.cmpf oeq, %30, %368 : vector<16x1024xf32>
    %cst_73 = arith.constant 1.000000e+00 : f32
    %370 = vector.broadcast %cst_73 : f32 to vector<1x1024xf32>
    %371 = arith.subf %370, %343 : vector<1x1024xf32>
    %cst_74 = arith.constant 0.000000e+00 : f32
    %372 = vector.shape_cast %371 : vector<1x1024xf32> to vector<1x1024xf32>
    %373 = vector.broadcast %372 : vector<1x1024xf32> to vector<16x1024xf32>
    %374 = vector.broadcast %cst_74 : f32 to vector<16x1024xf32>
    %375 = arith.select %369, %373, %374 : vector<16x1024xi1>, vector<16x1024xf32>
    %376 = vector.broadcast %348 : vector<1x1024xf32> to vector<16x1024xf32>
    %377 = arith.cmpf oeq, %30, %376 : vector<16x1024xf32>
    %cst_75 = arith.constant 0.000000e+00 : f32
    %378 = vector.shape_cast %343 : vector<1x1024xf32> to vector<1x1024xf32>
    %379 = vector.broadcast %378 : vector<1x1024xf32> to vector<16x1024xf32>
    %380 = vector.broadcast %cst_75 : f32 to vector<16x1024xf32>
    %381 = arith.select %377, %379, %380 : vector<16x1024xi1>, vector<16x1024xf32>
    %382 = arith.addf %375, %381 : vector<16x1024xf32>
    %383 = vector.extract_strided_slice %367 {offsets = [0, 0], sizes = [1, 1024], strides = [1, 1]} : vector<16x1024xf32> to vector<1x1024xf32>
    %384 = vector.broadcast %383 : vector<1x1024xf32> to vector<16x1024xf32>
    %385 = arith.mulf %384, %382 : vector<16x1024xf32>
    %386 = vector.extract_strided_slice %367 {offsets = [1, 0], sizes = [1, 1024], strides = [1, 1]} : vector<16x1024xf32> to vector<1x1024xf32>
    %387 = vector.broadcast %386 : vector<1x1024xf32> to vector<16x1024xf32>
    %388 = arith.mulf %387, %382 : vector<16x1024xf32>
    %389 = vector.extract_strided_slice %367 {offsets = [2, 0], sizes = [1, 1024], strides = [1, 1]} : vector<16x1024xf32> to vector<1x1024xf32>
    %390 = vector.broadcast %389 : vector<1x1024xf32> to vector<16x1024xf32>
    %391 = arith.mulf %390, %382 : vector<16x1024xf32>
    %392 = vector.extract_strided_slice %367 {offsets = [3, 0], sizes = [1, 1024], strides = [1, 1]} : vector<16x1024xf32> to vector<1x1024xf32>
    %393 = vector.broadcast %392 : vector<1x1024xf32> to vector<16x1024xf32>
    %394 = arith.mulf %393, %382 : vector<16x1024xf32>
    %395 = vector.extract_strided_slice %367 {offsets = [4, 0], sizes = [1, 1024], strides = [1, 1]} : vector<16x1024xf32> to vector<1x1024xf32>
    %396 = vector.broadcast %395 : vector<1x1024xf32> to vector<16x1024xf32>
    %397 = arith.mulf %396, %382 : vector<16x1024xf32>
    %398 = vector.extract_strided_slice %367 {offsets = [5, 0], sizes = [1, 1024], strides = [1, 1]} : vector<16x1024xf32> to vector<1x1024xf32>
    %399 = vector.broadcast %398 : vector<1x1024xf32> to vector<16x1024xf32>
    %400 = arith.mulf %399, %382 : vector<16x1024xf32>
    %401 = vector.extract_strided_slice %367 {offsets = [6, 0], sizes = [1, 1024], strides = [1, 1]} : vector<16x1024xf32> to vector<1x1024xf32>
    %402 = vector.broadcast %401 : vector<1x1024xf32> to vector<16x1024xf32>
    %403 = arith.mulf %402, %382 : vector<16x1024xf32>
    %404 = vector.extract_strided_slice %367 {offsets = [7, 0], sizes = [1, 1024], strides = [1, 1]} : vector<16x1024xf32> to vector<1x1024xf32>
    %405 = vector.broadcast %404 : vector<1x1024xf32> to vector<16x1024xf32>
    %406 = arith.mulf %405, %382 : vector<16x1024xf32>
    %407 = vector.extract_strided_slice %367 {offsets = [8, 0], sizes = [1, 1024], strides = [1, 1]} : vector<16x1024xf32> to vector<1x1024xf32>
    %408 = vector.broadcast %407 : vector<1x1024xf32> to vector<16x1024xf32>
    %409 = arith.mulf %408, %382 : vector<16x1024xf32>
    %410 = vector.extract_strided_slice %367 {offsets = [9, 0], sizes = [1, 1024], strides = [1, 1]} : vector<16x1024xf32> to vector<1x1024xf32>
    %411 = vector.broadcast %410 : vector<1x1024xf32> to vector<16x1024xf32>
    %412 = arith.mulf %411, %382 : vector<16x1024xf32>
    %413 = vector.extract_strided_slice %367 {offsets = [10, 0], sizes = [1, 1024], strides = [1, 1]} : vector<16x1024xf32> to vector<1x1024xf32>
    %414 = vector.broadcast %413 : vector<1x1024xf32> to vector<16x1024xf32>
    %415 = arith.mulf %414, %382 : vector<16x1024xf32>
    %416 = vector.extract_strided_slice %367 {offsets = [11, 0], sizes = [1, 1024], strides = [1, 1]} : vector<16x1024xf32> to vector<1x1024xf32>
    %417 = vector.broadcast %416 : vector<1x1024xf32> to vector<16x1024xf32>
    %418 = arith.mulf %417, %382 : vector<16x1024xf32>
    %419 = vector.extract_strided_slice %367 {offsets = [12, 0], sizes = [1, 1024], strides = [1, 1]} : vector<16x1024xf32> to vector<1x1024xf32>
    %420 = vector.broadcast %419 : vector<1x1024xf32> to vector<16x1024xf32>
    %421 = arith.mulf %420, %382 : vector<16x1024xf32>
    %422 = vector.extract_strided_slice %367 {offsets = [13, 0], sizes = [1, 1024], strides = [1, 1]} : vector<16x1024xf32> to vector<1x1024xf32>
    %423 = vector.broadcast %422 : vector<1x1024xf32> to vector<16x1024xf32>
    %424 = arith.mulf %423, %382 : vector<16x1024xf32>
    %425 = vector.extract_strided_slice %367 {offsets = [14, 0], sizes = [1, 1024], strides = [1, 1]} : vector<16x1024xf32> to vector<1x1024xf32>
    %426 = vector.broadcast %425 : vector<1x1024xf32> to vector<16x1024xf32>
    %427 = arith.mulf %426, %382 : vector<16x1024xf32>
    %428 = vector.extract_strided_slice %367 {offsets = [15, 0], sizes = [1, 1024], strides = [1, 1]} : vector<16x1024xf32> to vector<1x1024xf32>
    %429 = vector.broadcast %428 : vector<1x1024xf32> to vector<16x1024xf32>
    %430 = arith.mulf %429, %382 : vector<16x1024xf32>
    %431 = tpu.concatenate %385, %388, %391, %394, %397, %400, %403, %406, %409, %412, %415, %418, %421, %424, %427, %430 in 0 : vector<16x1024xf32>, vector<16x1024xf32>, vector<16x1024xf32>, vector<16x1024xf32>, vector<16x1024xf32>, vector<16x1024xf32>, vector<16x1024xf32>, vector<16x1024xf32>, vector<16x1024xf32>, vector<16x1024xf32>, vector<16x1024xf32>, vector<16x1024xf32>, vector<16x1024xf32>, vector<16x1024xf32>, vector<16x1024xf32>, vector<16x1024xf32> -> vector<256x1024xf32>
    %432 = arith.truncf %431 : vector<256x1024xf32> to vector<256x1024xbf16>
    %433 = vector.extract_strided_slice %1 {offsets = [4, 0], sizes = [2, 256], strides = [1, 1]} : vector<8x256xf32> to vector<2x256xf32>
    %434 = arith.truncf %433 : vector<2x256xf32> to vector<2x256xbf16>
    %cst_76 = arith.constant dense<0.000000e+00> : vector<2x1024xf32>
    %435 = tpu.matmul %434, %432, %cst_76 {dimension_numbers = #tpu.dot_dimension_numbers<[1], [0], [0], [1], [0, 0, 1, 1], [], []>} : vector<2x256xbf16>, vector<256x1024xbf16>, vector<2x1024xf32> -> vector<2x1024xf32>
    %cst_77 = arith.constant 0.000000e+00 : f32
    %436 = vector.broadcast %cst_77 : f32 to vector<1x1024xf32>
    %cst_78 = arith.constant 0.000000e+00 : f32
    %437 = vector.broadcast %cst_78 : f32 to vector<1x1024xf32>
    %438 = vector.extract_strided_slice %19 {offsets = [24, 0], sizes = [1, 1024], strides = [1, 1]} : vector<32x1024xf32> to vector<1x1024xf32>
    %439 = arith.mulf %20, %438 : vector<1x1024xf32>
    %440 = arith.addf %436, %439 : vector<1x1024xf32>
    %441 = vector.extract_strided_slice %19 {offsets = [25, 0], sizes = [1, 1024], strides = [1, 1]} : vector<32x1024xf32> to vector<1x1024xf32>
    %442 = arith.mulf %20, %441 : vector<1x1024xf32>
    %443 = arith.addf %437, %442 : vector<1x1024xf32>
    %444 = vector.extract_strided_slice %19 {offsets = [26, 0], sizes = [1, 1024], strides = [1, 1]} : vector<32x1024xf32> to vector<1x1024xf32>
    %445 = arith.mulf %21, %444 : vector<1x1024xf32>
    %446 = arith.addf %440, %445 : vector<1x1024xf32>
    %447 = vector.extract_strided_slice %19 {offsets = [27, 0], sizes = [1, 1024], strides = [1, 1]} : vector<32x1024xf32> to vector<1x1024xf32>
    %448 = arith.mulf %21, %447 : vector<1x1024xf32>
    %449 = arith.addf %443, %448 : vector<1x1024xf32>
    %450 = vector.extract_strided_slice %19 {offsets = [28, 0], sizes = [1, 1024], strides = [1, 1]} : vector<32x1024xf32> to vector<1x1024xf32>
    %451 = arith.mulf %22, %450 : vector<1x1024xf32>
    %452 = arith.addf %446, %451 : vector<1x1024xf32>
    %453 = vector.extract_strided_slice %19 {offsets = [29, 0], sizes = [1, 1024], strides = [1, 1]} : vector<32x1024xf32> to vector<1x1024xf32>
    %454 = arith.mulf %22, %453 : vector<1x1024xf32>
    %455 = arith.addf %449, %454 : vector<1x1024xf32>
    %456 = vector.extract_strided_slice %19 {offsets = [30, 0], sizes = [1, 1024], strides = [1, 1]} : vector<32x1024xf32> to vector<1x1024xf32>
    %457 = arith.mulf %23, %456 : vector<1x1024xf32>
    %458 = arith.addf %452, %457 : vector<1x1024xf32>
    %459 = vector.extract_strided_slice %19 {offsets = [31, 0], sizes = [1, 1024], strides = [1, 1]} : vector<32x1024xf32> to vector<1x1024xf32>
    %460 = arith.mulf %23, %459 : vector<1x1024xf32>
    %461 = arith.addf %455, %460 : vector<1x1024xf32>
    %cst_79 = arith.constant 5.000000e-01 : f32
    %462 = vector.broadcast %cst_79 : f32 to vector<1x1024xf32>
    %463 = arith.mulf %458, %462 : vector<1x1024xf32>
    %464 = arith.addf %24, %463 : vector<1x1024xf32>
    %cst_80 = arith.constant 0.000000e+00 : f32
    %cst_81 = arith.constant 1.500000e+01 : f32
    %465 = vector.broadcast %cst_80 : f32 to vector<1x1024xf32>
    %466 = arith.maximumf %465, %464 : vector<1x1024xf32>
    %467 = vector.broadcast %cst_81 : f32 to vector<1x1024xf32>
    %468 = arith.minimumf %467, %466 : vector<1x1024xf32>
    %cst_82 = arith.constant 5.000000e-01 : f32
    %469 = vector.broadcast %cst_82 : f32 to vector<1x1024xf32>
    %470 = arith.mulf %461, %469 : vector<1x1024xf32>
    %471 = arith.addf %25, %470 : vector<1x1024xf32>
    %cst_83 = arith.constant 0.000000e+00 : f32
    %cst_84 = arith.constant 1.500000e+01 : f32
    %472 = vector.broadcast %cst_83 : f32 to vector<1x1024xf32>
    %473 = arith.maximumf %472, %471 : vector<1x1024xf32>
    %474 = vector.broadcast %cst_84 : f32 to vector<1x1024xf32>
    %475 = arith.minimumf %474, %473 : vector<1x1024xf32>
    %476 = math.floor %468 : vector<1x1024xf32>
    %477 = math.floor %475 : vector<1x1024xf32>
    %478 = arith.subf %468, %476 : vector<1x1024xf32>
    %479 = arith.subf %475, %477 : vector<1x1024xf32>
    %cst_85 = arith.constant 1.000000e+00 : f32
    %480 = vector.broadcast %cst_85 : f32 to vector<1x1024xf32>
    %481 = arith.addf %476, %480 : vector<1x1024xf32>
    %cst_86 = arith.constant 1.500000e+01 : f32
    %482 = vector.broadcast %cst_86 : f32 to vector<1x1024xf32>
    %483 = arith.minimumf %481, %482 : vector<1x1024xf32>
    %cst_87 = arith.constant 1.000000e+00 : f32
    %484 = vector.broadcast %cst_87 : f32 to vector<1x1024xf32>
    %485 = arith.addf %477, %484 : vector<1x1024xf32>
    %cst_88 = arith.constant 1.500000e+01 : f32
    %486 = vector.broadcast %cst_88 : f32 to vector<1x1024xf32>
    %487 = arith.minimumf %485, %486 : vector<1x1024xf32>
    %488 = vector.broadcast %477 : vector<1x1024xf32> to vector<16x1024xf32>
    %489 = arith.cmpf oeq, %28, %488 : vector<16x1024xf32>
    %cst_89 = arith.constant 1.000000e+00 : f32
    %490 = vector.broadcast %cst_89 : f32 to vector<1x1024xf32>
    %491 = arith.subf %490, %479 : vector<1x1024xf32>
    %cst_90 = arith.constant 0.000000e+00 : f32
    %492 = vector.shape_cast %491 : vector<1x1024xf32> to vector<1x1024xf32>
    %493 = vector.broadcast %492 : vector<1x1024xf32> to vector<16x1024xf32>
    %494 = vector.broadcast %cst_90 : f32 to vector<16x1024xf32>
    %495 = arith.select %489, %493, %494 : vector<16x1024xi1>, vector<16x1024xf32>
    %496 = vector.broadcast %487 : vector<1x1024xf32> to vector<16x1024xf32>
    %497 = arith.cmpf oeq, %28, %496 : vector<16x1024xf32>
    %cst_91 = arith.constant 0.000000e+00 : f32
    %498 = vector.shape_cast %479 : vector<1x1024xf32> to vector<1x1024xf32>
    %499 = vector.broadcast %498 : vector<1x1024xf32> to vector<16x1024xf32>
    %500 = vector.broadcast %cst_91 : f32 to vector<16x1024xf32>
    %501 = arith.select %497, %499, %500 : vector<16x1024xi1>, vector<16x1024xf32>
    %502 = arith.addf %495, %501 : vector<16x1024xf32>
    %503 = vector.broadcast %476 : vector<1x1024xf32> to vector<16x1024xf32>
    %504 = arith.cmpf oeq, %30, %503 : vector<16x1024xf32>
    %cst_92 = arith.constant 1.000000e+00 : f32
    %505 = vector.broadcast %cst_92 : f32 to vector<1x1024xf32>
    %506 = arith.subf %505, %478 : vector<1x1024xf32>
    %cst_93 = arith.constant 0.000000e+00 : f32
    %507 = vector.shape_cast %506 : vector<1x1024xf32> to vector<1x1024xf32>
    %508 = vector.broadcast %507 : vector<1x1024xf32> to vector<16x1024xf32>
    %509 = vector.broadcast %cst_93 : f32 to vector<16x1024xf32>
    %510 = arith.select %504, %508, %509 : vector<16x1024xi1>, vector<16x1024xf32>
    %511 = vector.broadcast %483 : vector<1x1024xf32> to vector<16x1024xf32>
    %512 = arith.cmpf oeq, %30, %511 : vector<16x1024xf32>
    %cst_94 = arith.constant 0.000000e+00 : f32
    %513 = vector.shape_cast %478 : vector<1x1024xf32> to vector<1x1024xf32>
    %514 = vector.broadcast %513 : vector<1x1024xf32> to vector<16x1024xf32>
    %515 = vector.broadcast %cst_94 : f32 to vector<16x1024xf32>
    %516 = arith.select %512, %514, %515 : vector<16x1024xi1>, vector<16x1024xf32>
    %517 = arith.addf %510, %516 : vector<16x1024xf32>
    %518 = vector.extract_strided_slice %502 {offsets = [0, 0], sizes = [1, 1024], strides = [1, 1]} : vector<16x1024xf32> to vector<1x1024xf32>
    %519 = vector.broadcast %518 : vector<1x1024xf32> to vector<16x1024xf32>
    %520 = arith.mulf %519, %517 : vector<16x1024xf32>
    %521 = vector.extract_strided_slice %502 {offsets = [1, 0], sizes = [1, 1024], strides = [1, 1]} : vector<16x1024xf32> to vector<1x1024xf32>
    %522 = vector.broadcast %521 : vector<1x1024xf32> to vector<16x1024xf32>
    %523 = arith.mulf %522, %517 : vector<16x1024xf32>
    %524 = vector.extract_strided_slice %502 {offsets = [2, 0], sizes = [1, 1024], strides = [1, 1]} : vector<16x1024xf32> to vector<1x1024xf32>
    %525 = vector.broadcast %524 : vector<1x1024xf32> to vector<16x1024xf32>
    %526 = arith.mulf %525, %517 : vector<16x1024xf32>
    %527 = vector.extract_strided_slice %502 {offsets = [3, 0], sizes = [1, 1024], strides = [1, 1]} : vector<16x1024xf32> to vector<1x1024xf32>
    %528 = vector.broadcast %527 : vector<1x1024xf32> to vector<16x1024xf32>
    %529 = arith.mulf %528, %517 : vector<16x1024xf32>
    %530 = vector.extract_strided_slice %502 {offsets = [4, 0], sizes = [1, 1024], strides = [1, 1]} : vector<16x1024xf32> to vector<1x1024xf32>
    %531 = vector.broadcast %530 : vector<1x1024xf32> to vector<16x1024xf32>
    %532 = arith.mulf %531, %517 : vector<16x1024xf32>
    %533 = vector.extract_strided_slice %502 {offsets = [5, 0], sizes = [1, 1024], strides = [1, 1]} : vector<16x1024xf32> to vector<1x1024xf32>
    %534 = vector.broadcast %533 : vector<1x1024xf32> to vector<16x1024xf32>
    %535 = arith.mulf %534, %517 : vector<16x1024xf32>
    %536 = vector.extract_strided_slice %502 {offsets = [6, 0], sizes = [1, 1024], strides = [1, 1]} : vector<16x1024xf32> to vector<1x1024xf32>
    %537 = vector.broadcast %536 : vector<1x1024xf32> to vector<16x1024xf32>
    %538 = arith.mulf %537, %517 : vector<16x1024xf32>
    %539 = vector.extract_strided_slice %502 {offsets = [7, 0], sizes = [1, 1024], strides = [1, 1]} : vector<16x1024xf32> to vector<1x1024xf32>
    %540 = vector.broadcast %539 : vector<1x1024xf32> to vector<16x1024xf32>
    %541 = arith.mulf %540, %517 : vector<16x1024xf32>
    %542 = vector.extract_strided_slice %502 {offsets = [8, 0], sizes = [1, 1024], strides = [1, 1]} : vector<16x1024xf32> to vector<1x1024xf32>
    %543 = vector.broadcast %542 : vector<1x1024xf32> to vector<16x1024xf32>
    %544 = arith.mulf %543, %517 : vector<16x1024xf32>
    %545 = vector.extract_strided_slice %502 {offsets = [9, 0], sizes = [1, 1024], strides = [1, 1]} : vector<16x1024xf32> to vector<1x1024xf32>
    %546 = vector.broadcast %545 : vector<1x1024xf32> to vector<16x1024xf32>
    %547 = arith.mulf %546, %517 : vector<16x1024xf32>
    %548 = vector.extract_strided_slice %502 {offsets = [10, 0], sizes = [1, 1024], strides = [1, 1]} : vector<16x1024xf32> to vector<1x1024xf32>
    %549 = vector.broadcast %548 : vector<1x1024xf32> to vector<16x1024xf32>
    %550 = arith.mulf %549, %517 : vector<16x1024xf32>
    %551 = vector.extract_strided_slice %502 {offsets = [11, 0], sizes = [1, 1024], strides = [1, 1]} : vector<16x1024xf32> to vector<1x1024xf32>
    %552 = vector.broadcast %551 : vector<1x1024xf32> to vector<16x1024xf32>
    %553 = arith.mulf %552, %517 : vector<16x1024xf32>
    %554 = vector.extract_strided_slice %502 {offsets = [12, 0], sizes = [1, 1024], strides = [1, 1]} : vector<16x1024xf32> to vector<1x1024xf32>
    %555 = vector.broadcast %554 : vector<1x1024xf32> to vector<16x1024xf32>
    %556 = arith.mulf %555, %517 : vector<16x1024xf32>
    %557 = vector.extract_strided_slice %502 {offsets = [13, 0], sizes = [1, 1024], strides = [1, 1]} : vector<16x1024xf32> to vector<1x1024xf32>
    %558 = vector.broadcast %557 : vector<1x1024xf32> to vector<16x1024xf32>
    %559 = arith.mulf %558, %517 : vector<16x1024xf32>
    %560 = vector.extract_strided_slice %502 {offsets = [14, 0], sizes = [1, 1024], strides = [1, 1]} : vector<16x1024xf32> to vector<1x1024xf32>
    %561 = vector.broadcast %560 : vector<1x1024xf32> to vector<16x1024xf32>
    %562 = arith.mulf %561, %517 : vector<16x1024xf32>
    %563 = vector.extract_strided_slice %502 {offsets = [15, 0], sizes = [1, 1024], strides = [1, 1]} : vector<16x1024xf32> to vector<1x1024xf32>
    %564 = vector.broadcast %563 : vector<1x1024xf32> to vector<16x1024xf32>
    %565 = arith.mulf %564, %517 : vector<16x1024xf32>
    %566 = tpu.concatenate %520, %523, %526, %529, %532, %535, %538, %541, %544, %547, %550, %553, %556, %559, %562, %565 in 0 : vector<16x1024xf32>, vector<16x1024xf32>, vector<16x1024xf32>, vector<16x1024xf32>, vector<16x1024xf32>, vector<16x1024xf32>, vector<16x1024xf32>, vector<16x1024xf32>, vector<16x1024xf32>, vector<16x1024xf32>, vector<16x1024xf32>, vector<16x1024xf32>, vector<16x1024xf32>, vector<16x1024xf32>, vector<16x1024xf32>, vector<16x1024xf32> -> vector<256x1024xf32>
    %567 = arith.truncf %566 : vector<256x1024xf32> to vector<256x1024xbf16>
    %568 = vector.extract_strided_slice %1 {offsets = [6, 0], sizes = [2, 256], strides = [1, 1]} : vector<8x256xf32> to vector<2x256xf32>
    %569 = arith.truncf %568 : vector<2x256xf32> to vector<2x256xbf16>
    %cst_95 = arith.constant dense<0.000000e+00> : vector<2x1024xf32>
    %570 = tpu.matmul %569, %567, %cst_95 {dimension_numbers = #tpu.dot_dimension_numbers<[1], [0], [0], [1], [0, 0, 1, 1], [], []>} : vector<2x256xbf16>, vector<256x1024xbf16>, vector<2x1024xf32> -> vector<2x1024xf32>
    %571 = tpu.concatenate %165, %300, %435, %570 in 0 : vector<2x1024xf32>, vector<2x1024xf32>, vector<2x1024xf32>, vector<2x1024xf32> -> vector<8x1024xf32>
    %c0_96 = arith.constant 0 : index
    %c0_97 = arith.constant 0 : index
    %572 = vector.load %arg6[%c0_96, %c0_97] : memref<18x8xf32, #tpu.memory_space<vmem>>, vector<18x8xf32>
    %cst_98 = arith.constant dense<0.000000e+00> : vector<18x1024xf32>
    %573 = tpu.matmul %572, %571, %cst_98 {dimension_numbers = #tpu.dot_dimension_numbers<[1], [0], [0], [1], [0, 0, 1, 1], [], []>} : vector<18x8xf32>, vector<8x1024xf32>, vector<18x1024xf32> -> vector<18x1024xf32>
    %c0_99 = arith.constant 0 : index
    %c0_100 = arith.constant 0 : index
    %574 = vector.load %arg7[%c0_99, %c0_100] : memref<18x1xf32, #tpu.memory_space<vmem>>, vector<18x1xf32>
    %575 = vector.broadcast %574 : vector<18x1xf32> to vector<18x1024xf32>
    %576 = arith.addf %573, %575 : vector<18x1024xf32>
    %577 = vector.extract_strided_slice %576 {offsets = [0, 0], sizes = [9, 1024], strides = [1, 1]} : vector<18x1024xf32> to vector<9x1024xf32>
    %578 = vector.extract_strided_slice %576 {offsets = [9, 0], sizes = [9, 1024], strides = [1, 1]} : vector<18x1024xf32> to vector<9x1024xf32>
    %cst_101 = arith.constant 0.000000e+00 : f32
    %579 = vector.broadcast %cst_101 : f32 to vector<9x1024xf32>
    %580 = arith.subf %579, %578 : vector<9x1024xf32>
    %581 = math.exp %580 : vector<9x1024xf32>
    %cst_102 = arith.constant 1.000000e+00 : f32
    %582 = vector.broadcast %cst_102 : f32 to vector<9x1024xf32>
    %583 = arith.addf %582, %581 : vector<9x1024xf32>
    %cst_103 = arith.constant 1.000000e+00 : f32
    %584 = vector.broadcast %cst_103 : f32 to vector<9x1024xf32>
    %585 = arith.divf %584, %583 : vector<9x1024xf32>
    %586 = arith.mulf %577, %585 : vector<9x1024xf32>
    %cst_104 = arith.constant dense<0xFF800000> : vector<1024xf32>
    %587 = vector.multi_reduction <maximumf>, %586, %cst_104 [0] : vector<9x1024xf32> to vector<1024xf32>
    %588 = vector.shape_cast %587 : vector<1024xf32> to vector<1x1024xf32>
    %589 = vector.broadcast %588 : vector<1x1024xf32> to vector<9x1024xf32>
    %590 = arith.subf %586, %589 : vector<9x1024xf32>
    %591 = math.exp %590 : vector<9x1024xf32>
    %cst_105 = arith.constant dense<0.000000e+00> : vector<1024xf32>
    %592 = vector.multi_reduction <add>, %591, %cst_105 [0] : vector<9x1024xf32> to vector<1024xf32>
    %593 = vector.shape_cast %592 : vector<1024xf32> to vector<1x1024xf32>
    %594 = tpu.reciprocal %593 {approx = true} : vector<1x1024xf32> -> vector<1x1024xf32>
    %595 = vector.broadcast %594 : vector<1x1024xf32> to vector<9x1024xf32>
    %596 = arith.mulf %591, %595 : vector<9x1024xf32>
    %597 = arith.mulf %596, %26 : vector<9x1024xf32>
    %cst_106 = arith.constant 0.000000e+00 : f32
    %598 = vector.broadcast %cst_106 : f32 to vector<8x1024xf32>
    %599 = vector.extract_strided_slice %571 {offsets = [0, 991], sizes = [8, 33], strides = [1, 1]} : vector<8x1024xf32> to vector<8x33xf32>
    %600 = vector.extract_strided_slice %571 {offsets = [0, 0], sizes = [8, 991], strides = [1, 1]} : vector<8x1024xf32> to vector<8x991xf32>
    %601 = tpu.concatenate %599, %600 in 1 : vector<8x33xf32>, vector<8x991xf32> -> vector<8x1024xf32>
    %602 = vector.extract_strided_slice %597 {offsets = [0, 0], sizes = [1, 1024], strides = [1, 1]} : vector<9x1024xf32> to vector<1x1024xf32>
    %603 = vector.broadcast %602 : vector<1x1024xf32> to vector<8x1024xf32>
    %604 = arith.mulf %603, %601 : vector<8x1024xf32>
    %605 = arith.addf %598, %604 : vector<8x1024xf32>
    %606 = vector.extract_strided_slice %571 {offsets = [0, 992], sizes = [8, 32], strides = [1, 1]} : vector<8x1024xf32> to vector<8x32xf32>
    %607 = vector.extract_strided_slice %571 {offsets = [0, 0], sizes = [8, 992], strides = [1, 1]} : vector<8x1024xf32> to vector<8x992xf32>
    %608 = tpu.concatenate %606, %607 in 1 : vector<8x32xf32>, vector<8x992xf32> -> vector<8x1024xf32>
    %609 = vector.extract_strided_slice %597 {offsets = [1, 0], sizes = [1, 1024], strides = [1, 1]} : vector<9x1024xf32> to vector<1x1024xf32>
    %610 = vector.broadcast %609 : vector<1x1024xf32> to vector<8x1024xf32>
    %611 = arith.mulf %610, %608 : vector<8x1024xf32>
    %612 = arith.addf %605, %611 : vector<8x1024xf32>
    %613 = vector.extract_strided_slice %571 {offsets = [0, 993], sizes = [8, 31], strides = [1, 1]} : vector<8x1024xf32> to vector<8x31xf32>
    %614 = vector.extract_strided_slice %571 {offsets = [0, 0], sizes = [8, 993], strides = [1, 1]} : vector<8x1024xf32> to vector<8x993xf32>
    %615 = tpu.concatenate %613, %614 in 1 : vector<8x31xf32>, vector<8x993xf32> -> vector<8x1024xf32>
    %616 = vector.extract_strided_slice %597 {offsets = [2, 0], sizes = [1, 1024], strides = [1, 1]} : vector<9x1024xf32> to vector<1x1024xf32>
    %617 = vector.broadcast %616 : vector<1x1024xf32> to vector<8x1024xf32>
    %618 = arith.mulf %617, %615 : vector<8x1024xf32>
    %619 = arith.addf %612, %618 : vector<8x1024xf32>
    %620 = vector.extract_strided_slice %571 {offsets = [0, 1023], sizes = [8, 1], strides = [1, 1]} : vector<8x1024xf32> to vector<8x1xf32>
    %621 = vector.extract_strided_slice %571 {offsets = [0, 0], sizes = [8, 1023], strides = [1, 1]} : vector<8x1024xf32> to vector<8x1023xf32>
    %622 = tpu.concatenate %620, %621 in 1 : vector<8x1xf32>, vector<8x1023xf32> -> vector<8x1024xf32>
    %623 = vector.extract_strided_slice %597 {offsets = [3, 0], sizes = [1, 1024], strides = [1, 1]} : vector<9x1024xf32> to vector<1x1024xf32>
    %624 = vector.broadcast %623 : vector<1x1024xf32> to vector<8x1024xf32>
    %625 = arith.mulf %624, %622 : vector<8x1024xf32>
    %626 = arith.addf %619, %625 : vector<8x1024xf32>
    %627 = vector.extract_strided_slice %597 {offsets = [4, 0], sizes = [1, 1024], strides = [1, 1]} : vector<9x1024xf32> to vector<1x1024xf32>
    %628 = vector.broadcast %627 : vector<1x1024xf32> to vector<8x1024xf32>
    %629 = arith.mulf %628, %571 : vector<8x1024xf32>
    %630 = arith.addf %626, %629 : vector<8x1024xf32>
    %631 = vector.extract_strided_slice %571 {offsets = [0, 1], sizes = [8, 1023], strides = [1, 1]} : vector<8x1024xf32> to vector<8x1023xf32>
    %632 = vector.extract_strided_slice %571 {offsets = [0, 0], sizes = [8, 1], strides = [1, 1]} : vector<8x1024xf32> to vector<8x1xf32>
    %633 = tpu.concatenate %631, %632 in 1 : vector<8x1023xf32>, vector<8x1xf32> -> vector<8x1024xf32>
    %634 = vector.extract_strided_slice %597 {offsets = [5, 0], sizes = [1, 1024], strides = [1, 1]} : vector<9x1024xf32> to vector<1x1024xf32>
    %635 = vector.broadcast %634 : vector<1x1024xf32> to vector<8x1024xf32>
    %636 = arith.mulf %635, %633 : vector<8x1024xf32>
    %637 = arith.addf %630, %636 : vector<8x1024xf32>
    %638 = vector.extract_strided_slice %571 {offsets = [0, 31], sizes = [8, 993], strides = [1, 1]} : vector<8x1024xf32> to vector<8x993xf32>
    %639 = vector.extract_strided_slice %571 {offsets = [0, 0], sizes = [8, 31], strides = [1, 1]} : vector<8x1024xf32> to vector<8x31xf32>
    %640 = tpu.concatenate %638, %639 in 1 : vector<8x993xf32>, vector<8x31xf32> -> vector<8x1024xf32>
    %641 = vector.extract_strided_slice %597 {offsets = [6, 0], sizes = [1, 1024], strides = [1, 1]} : vector<9x1024xf32> to vector<1x1024xf32>
    %642 = vector.broadcast %641 : vector<1x1024xf32> to vector<8x1024xf32>
    %643 = arith.mulf %642, %640 : vector<8x1024xf32>
    %644 = arith.addf %637, %643 : vector<8x1024xf32>
    %645 = vector.extract_strided_slice %571 {offsets = [0, 32], sizes = [8, 992], strides = [1, 1]} : vector<8x1024xf32> to vector<8x992xf32>
    %646 = vector.extract_strided_slice %571 {offsets = [0, 0], sizes = [8, 32], strides = [1, 1]} : vector<8x1024xf32> to vector<8x32xf32>
    %647 = tpu.concatenate %645, %646 in 1 : vector<8x992xf32>, vector<8x32xf32> -> vector<8x1024xf32>
    %648 = vector.extract_strided_slice %597 {offsets = [7, 0], sizes = [1, 1024], strides = [1, 1]} : vector<9x1024xf32> to vector<1x1024xf32>
    %649 = vector.broadcast %648 : vector<1x1024xf32> to vector<8x1024xf32>
    %650 = arith.mulf %649, %647 : vector<8x1024xf32>
    %651 = arith.addf %644, %650 : vector<8x1024xf32>
    %652 = vector.extract_strided_slice %571 {offsets = [0, 33], sizes = [8, 991], strides = [1, 1]} : vector<8x1024xf32> to vector<8x991xf32>
    %653 = vector.extract_strided_slice %571 {offsets = [0, 0], sizes = [8, 33], strides = [1, 1]} : vector<8x1024xf32> to vector<8x33xf32>
    %654 = tpu.concatenate %652, %653 in 1 : vector<8x991xf32>, vector<8x33xf32> -> vector<8x1024xf32>
    %655 = vector.extract_strided_slice %597 {offsets = [8, 0], sizes = [1, 1024], strides = [1, 1]} : vector<9x1024xf32> to vector<1x1024xf32>
    %656 = vector.broadcast %655 : vector<1x1024xf32> to vector<8x1024xf32>
    %657 = arith.mulf %656, %654 : vector<8x1024xf32>
    %658 = arith.addf %651, %657 : vector<8x1024xf32>
    %c0_107 = arith.constant 0 : index
    %c0_108 = arith.constant 0 : index
    %c0_109 = arith.constant 0 : index
    %659 = vector.load %arg8[%c0_107, %c0_108, %c0_109] : memref<1x8x1024xf32, #tpu.memory_space<vmem>>, vector<1x8x1024xf32>
    %660 = vector.shape_cast %659 : vector<1x8x1024xf32> to vector<8x1024xf32>
    %661 = vector.shape_cast %658 : vector<8x1024xf32> to vector<1x8x1024xf32>
    tpu.vector_store %arg8[%c0_107, %c0_108, %c0_109], %661 {strides = array<i32>} : memref<1x8x1024xf32, #tpu.memory_space<vmem>>, vector<1x8x1024xf32>,
    return
  }
  func.func @transform_0(%arg0: i32) -> (i32, i32) {
    %c0_i32 = arith.constant 0 : i32
    %c0_i32_0 = arith.constant 0 : i32
    %c0_i32_1 = arith.constant 0 : i32
    return %c0_i32, %c0_i32_0 : i32, i32
  }
  func.func @transform_1(%arg0: i32) -> (i32, i32) {
    %c0_i32 = arith.constant 0 : i32
    %c0_i32_0 = arith.constant 0 : i32
    %c0_i32_1 = arith.constant 0 : i32
    return %c0_i32, %c0_i32_0 : i32, i32
  }
  func.func @transform_2(%arg0: i32) -> (i32, i32, i32) {
    %c0_i32 = arith.constant 0 : i32
    %c0_i32_0 = arith.constant 0 : i32
    %c0_i32_1 = arith.constant 0 : i32
    return %arg0, %c0_i32, %c0_i32_0 : i32, i32, i32
  }
  func.func @transform_3(%arg0: i32) -> (i32, i32) {
    %c0_i32 = arith.constant 0 : i32
    %c0_i32_0 = arith.constant 0 : i32
    %c0_i32_1 = arith.constant 0 : i32
    return %c0_i32, %c0_i32_0 : i32, i32
  }
  func.func @transform_4(%arg0: i32) -> (i32, i32) {
    %c0_i32 = arith.constant 0 : i32
    %c0_i32_0 = arith.constant 0 : i32
    %c0_i32_1 = arith.constant 0 : i32
    return %c0_i32, %c0_i32_0 : i32, i32
  }
  func.func @transform_5(%arg0: i32) -> (i32, i32) {
    %c0_i32 = arith.constant 0 : i32
    %c0_i32_0 = arith.constant 0 : i32
    %c0_i32_1 = arith.constant 0 : i32
    return %c0_i32, %c0_i32_0 : i32, i32
  }
  func.func @transform_6(%arg0: i32) -> (i32, i32) {
    %c0_i32 = arith.constant 0 : i32
    %c0_i32_0 = arith.constant 0 : i32
    %c0_i32_1 = arith.constant 0 : i32
    return %c0_i32, %c0_i32_0 : i32, i32
  }
  func.func @transform_7(%arg0: i32) -> (i32, i32, i32) {
    %c0_i32 = arith.constant 0 : i32
    %c0_i32_0 = arith.constant 0 : i32
    %c0_i32_1 = arith.constant 0 : i32
    return %arg0, %c0_i32, %c0_i32_0 : i32, i32, i32
  }
}

</mosaic_0001>

<llo_original>
// kernel: tpu_custom_call.1
$region0: #{tpu_custom_call.1}
  #allocation0 [shape = 'u32[]', space=smem, size = 0x4, offset = 0x4, fixed_abs, tag = 'smem constant byte address 0x4 - core index']
  #allocation1 [shape = 'u32[72,128]{1,0:T(1,128)}', space=vmem, size = 0x9000, scoped, tag = 'internal scratch']
  %s0 = inlined_call_operand.hbm [shape: bf16[256,1024], index: 0, kind: input, shape index: {}]
  %s1 = inlined_call_operand.vmem [shape: f32[15,1024], index: 1, kind: input, shape index: {}]
  %s2 = inlined_call_operand.vmem [shape: f32[2,8,256], index: 2, kind: input, shape index: {}]
  %s3 = inlined_call_operand.vmem [shape: f32[64,8], index: 3, kind: input, shape index: {}]
  %s4 = inlined_call_operand.vmem [shape: f32[64,1], index: 4, kind: input, shape index: {}]
  %s5 = inlined_call_operand.vmem [shape: f32[18,8], index: 5, kind: input, shape index: {}]
  %s6 = inlined_call_operand.vmem [shape: f32[18,1], index: 6, kind: input, shape index: {}]
  %s7 = inlined_call_operand.hbm [shape: f32[2,8,1024], index: 7, kind: output, shape index: {}]
  %s8 = sld [smem:[#allocation0]]
  $region65: #{tpu_custom_call.1} parent=0
    _
  %s10 = ssub.s32 1, %s8
  %s11 = scalar_select 0, %s10, %s8
  $region1: #{tpu_custom_call.1} parent=0
    #allocation2 [shape = 'u8[524288]{0}', space=vmem, size = 0x80000, scoped, tag = 'input window, operand 0, single buffered']
    #allocation3 [shape = 's32[2]{0}', space=sflag, size = 0x8, scoped, tag = 'scoped memory for tpu_custom_call.1']
    #allocation4 [shape = 's32[2]{0}', space=sflag, size = 0x8, scoped, tag = 'scoped memory for tpu_custom_call.1']
    #allocation5 [shape = 'u8[65536]{0}', space=vmem, size = 0x10000, scoped, tag = 'output window, operand 0']
    %12 = vsyncpa [#allocation3], 0
    %13 = vsyncpa [#allocation4], 0
    %s14 = scalar_lea.sflag [#allocation4], 1
    %15 = vsyncpa %s14, 0
    loop: start=0, step=1, limit=4
    $region2: #{tpu_custom_call.1} parent=1 // loop_pre_header
      _
    $region3: #{tpu_custom_call.1} parent=1 // loop_header
      %s17 = sphi 0, %s21
      %p18 = scmp.ge.s32.totalorder %s17, 4
      %s25 = sphi 0, %s25
      %s27 = sphi 0, %s25
      %s28 = sphi 0, %s27
      %s42 = sphi 0, %s28
      %s46 = sphi 0, %s46
      %s48 = sphi 0, %s46
      %s49 = sphi 0, %s48
      %s63 = sphi 0, %s49
      %s69 = sphi 0, %s71
      %s72 = sphi 0, %s69
      %s73 = sphi 0, %s72
      %s89 = sphi 0, %s73
      %s93 = sphi 0, %s93
      %s95 = sphi 0, %s93
      %s96 = sphi 0, %s95
      %s110 = sphi 0, %s96
      %s114 = sphi 0, %s114
      %s116 = sphi 0, %s114
      %s117 = sphi 0, %s116
      %s131 = sphi 0, %s117
      %s135 = sphi 0, %s135
      %s137 = sphi 0, %s135
      %s138 = sphi 0, %s137
      %s152 = sphi 0, %s138
      %s156 = sphi 0, %s156
      %s158 = sphi 0, %s156
      %s159 = sphi 0, %s158
      %s173 = sphi 0, %s159
      %s179 = sphi 0, %s181
      %s182 = sphi 0, %s179
      %s183 = sphi 0, %s182
      %s199 = sphi 0, %s183
    $region4: #{tpu_custom_call.1} parent=1 // loop_header_branch
      %20 = sbr.rel (%p18) target = $region8
    $region5: #{tpu_custom_call.1} parent=1 // loop_body
      %s22 = ssub.s32 %s17, 1
      %s23 = ssub.s32 %s17, 2
      %s24 = sadd.s32 %s17, 1
      %s26 = sadd.s32 %s25, 1
      %p29 = scmp.eq.s32.totalorder %s17, 1
      %p30 = scmp.ne.s32.totalorder %s25, %s27
      %p31 = scmp.eq.s32.totalorder %s17, 0
      %p32 = por %p30, %p31
      %p33 = scmp.ne.s32.totalorder %s25, %s27
      %p34 = scmp.eq.s32.totalorder %s22, 1
      %p35 = por %p33, %p34
      %p36 = scmp.ne.s32.totalorder %s27, %s28
      %p37 = scmp.eq.s32.totalorder %s22, 0
      %p38 = por %p36, %p37
      %p39 = scmp.ne.s32.totalorder %s27, %s28
      %p40 = scmp.eq.s32.totalorder %s23, 1
      %p41 = por %p39, %p40
      %p43 = scmp.ne.s32.totalorder %s28, %s42
      %p44 = scmp.eq.s32.totalorder %s23, 0
      %p45 = por %p43, %p44
      %s47 = sadd.s32 %s46, 1
      %p50 = scmp.eq.s32.totalorder %s17, 1
      %p51 = scmp.ne.s32.totalorder %s46, %s48
      %p52 = scmp.eq.s32.totalorder %s17, 0
      %p53 = por %p51, %p52
      %p54 = scmp.ne.s32.totalorder %s46, %s48
      %p55 = scmp.eq.s32.totalorder %s22, 1
      %p56 = por %p54, %p55
      %p57 = scmp.ne.s32.totalorder %s48, %s49
      %p58 = scmp.eq.s32.totalorder %s22, 0
      %p59 = por %p57, %p58
      %p60 = scmp.ne.s32.totalorder %s48, %s49
      %p61 = scmp.eq.s32.totalorder %s23, 1
      %p62 = por %p60, %p61
      %p64 = scmp.ne.s32.totalorder %s49, %s63
      %p65 = scmp.eq.s32.totalorder %s23, 0
      %p66 = por %p64, %p65
      %s67 = ssub.s32 %s17, %s24
      %p68 = scmp.eq.s32.totalorder %s67, 0
      %s70 = sadd.s32 %s69, 1
      %s71 = scalar_select %p68, %s69, %s70
      %p74 = pneg %p68
      %p75 = scmp.eq.s32.totalorder %s17, 1
      %p76 = por %p74, %p75
      %p77 = scmp.ne.s32.totalorder %s69, %s72
      %p78 = scmp.eq.s32.totalorder %s17, 0
      %p79 = por %p77, %p78
      %p80 = scmp.ne.s32.totalorder %s69, %s72
      %p81 = scmp.eq.s32.totalorder %s22, 1
      %p82 = por %p80, %p81
      %p83 = scmp.ne.s32.totalorder %s72, %s73
      %p84 = scmp.eq.s32.totalorder %s22, 0
      %p85 = por %p83, %p84
      %p86 = scmp.ne.s32.totalorder %s72, %s73
      %p87 = scmp.eq.s32.totalorder %s23, 1
      %p88 = por %p86, %p87
      %p90 = scmp.ne.s32.totalorder %s73, %s89
      %p91 = scmp.eq.s32.totalorder %s23, 0
      %p92 = por %p90, %p91
      %s94 = sadd.s32 %s93, 1
      %p97 = scmp.eq.s32.totalorder %s17, 1
      %p98 = scmp.ne.s32.totalorder %s93, %s95
      %p99 = scmp.eq.s32.totalorder %s17, 0
      %p100 = por %p98, %p99
      %p101 = scmp.ne.s32.totalorder %s93, %s95
      %p102 = scmp.eq.s32.totalorder %s22, 1
      %p103 = por %p101, %p102
      %p104 = scmp.ne.s32.totalorder %s95, %s96
      %p105 = scmp.eq.s32.totalorder %s22, 0
      %p106 = por %p104, %p105
      %p107 = scmp.ne.s32.totalorder %s95, %s96
      %p108 = scmp.eq.s32.totalorder %s23, 1
      %p109 = por %p107, %p108
      %p111 = scmp.ne.s32.totalorder %s96, %s110
      %p112 = scmp.eq.s32.totalorder %s23, 0
      %p113 = por %p111, %p112
      %s115 = sadd.s32 %s114, 1
      %p118 = scmp.eq.s32.totalorder %s17, 1
      %p119 = scmp.ne.s32.totalorder %s114, %s116
      %p120 = scmp.eq.s32.totalorder %s17, 0
      %p121 = por %p119, %p120
      %p122 = scmp.ne.s32.totalorder %s114, %s116
      %p123 = scmp.eq.s32.totalorder %s22, 1
      %p124 = por %p122, %p123
      %p125 = scmp.ne.s32.totalorder %s116, %s117
      %p126 = scmp.eq.s32.totalorder %s22, 0
      %p127 = por %p125, %p126
      %p128 = scmp.ne.s32.totalorder %s116, %s117
      %p129 = scmp.eq.s32.totalorder %s23, 1
      %p130 = por %p128, %p129
      %p132 = scmp.ne.s32.totalorder %s117, %s131
      %p133 = scmp.eq.s32.totalorder %s23, 0
      %p134 = por %p132, %p133
      %s136 = sadd.s32 %s135, 1
      %p139 = scmp.eq.s32.totalorder %s17, 1
      %p140 = scmp.ne.s32.totalorder %s135, %s137
      %p141 = scmp.eq.s32.totalorder %s17, 0
      %p142 = por %p140, %p141
      %p143 = scmp.ne.s32.totalorder %s135, %s137
      %p144 = scmp.eq.s32.totalorder %s22, 1
      %p145 = por %p143, %p144
      %p146 = scmp.ne.s32.totalorder %s137, %s138
      %p147 = scmp.eq.s32.totalorder %s22, 0
      %p148 = por %p146, %p147
      %p149 = scmp.ne.s32.totalorder %s137, %s138
      %p150 = scmp.eq.s32.totalorder %s23, 1
      %p151 = por %p149, %p150
      %p153 = scmp.ne.s32.totalorder %s138, %s152
      %p154 = scmp.eq.s32.totalorder %s23, 0
      %p155 = por %p153, %p154
      %s157 = sadd.s32 %s156, 1
      %p160 = scmp.eq.s32.totalorder %s17, 1
      %p161 = scmp.ne.s32.totalorder %s156, %s158
      %p162 = scmp.eq.s32.totalorder %s17, 0
      %p163 = por %p161, %p162
      %p164 = scmp.ne.s32.totalorder %s156, %s158
      %p165 = scmp.eq.s32.totalorder %s22, 1
      %p166 = por %p164, %p165
      %p167 = scmp.ne.s32.totalorder %s158, %s159
      %p168 = scmp.eq.s32.totalorder %s22, 0
      %p169 = por %p167, %p168
      %p170 = scmp.ne.s32.totalorder %s158, %s159
      %p171 = scmp.eq.s32.totalorder %s23, 1
      %p172 = por %p170, %p171
      %p174 = scmp.ne.s32.totalorder %s159, %s173
      %p175 = scmp.eq.s32.totalorder %s23, 0
      %p176 = por %p174, %p175
      %s177 = ssub.s32 %s17, %s24
      %p178 = scmp.eq.s32.totalorder %s177, 0
      %s180 = sadd.s32 %s179, 1
      %s181 = scalar_select %p178, %s179, %s180
      %p184 = pneg %p178
      %p185 = scmp.eq.s32.totalorder %s17, 1
      %p186 = por %p184, %p185
      %p187 = scmp.ne.s32.totalorder %s179, %s182
      %p188 = scmp.eq.s32.totalorder %s17, 0
      %p189 = por %p187, %p188
      %p190 = scmp.ne.s32.totalorder %s179, %s182
      %p191 = scmp.eq.s32.totalorder %s22, 1
      %p192 = por %p190, %p191
      %p193 = scmp.ne.s32.totalorder %s182, %s183
      %p194 = scmp.eq.s32.totalorder %s22, 0
      %p195 = por %p193, %p194
      %p196 = scmp.ne.s32.totalorder %s182, %s183
      %p197 = scmp.eq.s32.totalorder %s23, 1
      %p198 = por %p196, %p197
      %p200 = scmp.ne.s32.totalorder %s183, %s199
      %p201 = scmp.eq.s32.totalorder %s23, 0
      %p202 = por %p200, %p201
      %p203 = scmp.le.s32.totalorder 1, %s17
      %p204 = scmp.lt.s32.totalorder %s17, 3
      %p205 = pnand %p203, %p204
      %p206 = pneg %p205
      // Predicated region
      $region9: #{tpu_custom_call.1} parent=5 // pred_check
        _
      $region10: #{tpu_custom_call.1} parent=5 // pred_check_branch
        %208 = sbr.rel (%p205) target = $region12
      $region11: #{tpu_custom_call.1} parent=5 // pred_region
        %s209 = ssub.s32 %s17, 1
        // Predicated region
        $region13: #{tpu_custom_call.1} parent=11 // pred_check
          %p210 = pneg %p38
        $region14: #{tpu_custom_call.1} parent=11 // pred_check_branch
          %212 = sbr.rel (%p210) target = $region16
        $region15: #{tpu_custom_call.1} parent=11 // pred_region
          %214 = vsyncadd [#allocation3], 0
          %s215 = sshll.u32 %s0, 4
          %s216 = int_to_ptr.hbm [resolvable:$true] %s215
          %s217 = sshll.u32 [#allocation2], 4
          %s218 = int_to_ptr.vmem [resolvable:$true] %s217
          %223 = dma.hbm_to_vmem [thread:$0]  %s216, 16384, %s218, [#allocation3], 512, 512, 32
        $region16: #{tpu_custom_call.1} parent=11 // pred_fallthru
          _
        // Predicated region
        $region17: #{tpu_custom_call.1} parent=11 // pred_check
          %p224 = pneg %p59
        $region18: #{tpu_custom_call.1} parent=11 // pred_check_branch
          %226 = sbr.rel (%p224) target = $region20
        $region19: #{tpu_custom_call.1} parent=11 // pred_region
          _
        $region20: #{tpu_custom_call.1} parent=11 // pred_fallthru
          _
        // Predicated region
        $region21: #{tpu_custom_call.1} parent=11 // pred_check
          %p227 = pneg %p106
        $region22: #{tpu_custom_call.1} parent=11 // pred_check_branch
          %229 = sbr.rel (%p227) target = $region24
        $region23: #{tpu_custom_call.1} parent=11 // pred_region
          _
        $region24: #{tpu_custom_call.1} parent=11 // pred_fallthru
          _
        // Predicated region
        $region25: #{tpu_custom_call.1} parent=11 // pred_check
          %p230 = pneg %p127
        $region26: #{tpu_custom_call.1} parent=11 // pred_check_branch
          %232 = sbr.rel (%p230) target = $region28
        $region27: #{tpu_custom_call.1} parent=11 // pred_region
          _
        $region28: #{tpu_custom_call.1} parent=11 // pred_fallthru
          _
        // Predicated region
        $region29: #{tpu_custom_call.1} parent=11 // pred_check
          %p233 = pneg %p148
        $region30: #{tpu_custom_call.1} parent=11 // pred_check_branch
          %235 = sbr.rel (%p233) target = $region32
        $region31: #{tpu_custom_call.1} parent=11 // pred_region
          _
        $region32: #{tpu_custom_call.1} parent=11 // pred_fallthru
          _
        // Predicated region
        $region33: #{tpu_custom_call.1} parent=11 // pred_check
          %p236 = pneg %p169
        $region34: #{tpu_custom_call.1} parent=11 // pred_check_branch
          %238 = sbr.rel (%p236) target = $region36
        $region35: #{tpu_custom_call.1} parent=11 // pred_region
          _
        $region36: #{tpu_custom_call.1} parent=11 // pred_fallthru
          _
      $region12: #{tpu_custom_call.1} parent=5 // pred_fallthru
        _
      %p239 = scmp.lt.s32.totalorder %s17, 2
      // Predicated region
      $region37: #{tpu_custom_call.1} parent=5 // pred_check
        %p240 = pneg %p239
      $region38: #{tpu_custom_call.1} parent=5 // pred_check_branch
        %242 = sbr.rel (%p240) target = $region40
      $region39: #{tpu_custom_call.1} parent=5 // pred_region
        // Predicated region
        $region41: #{tpu_custom_call.1} parent=39 // pred_check
          %p243 = pneg %p79
        $region42: #{tpu_custom_call.1} parent=39 // pred_check_branch
          %245 = sbr.rel (%p243) target = $region44
        $region43: #{tpu_custom_call.1} parent=39 // pred_region
          %p246 = scmp.lt.s32.totalorder %s17, 1
          %s247 = scalar_select %p246, %s17, 1
          %s248 = smul.addr %s247, 2
          %s249 = smul.addr %s248, 8
          %s250 = scalar_lea.vmem %s2, %s249
        $region44: #{tpu_custom_call.1} parent=39 // pred_fallthru
          _
      $region40: #{tpu_custom_call.1} parent=5 // pred_fallthru
        _
      %p251 = scmp.le.s32.totalorder 1, %s17
      %p252 = scmp.lt.s32.totalorder %s17, 3
      %p253 = pnand %p251, %p252
      %p254 = pneg %p253
      // Predicated region
      $region45: #{tpu_custom_call.1} parent=5 // pred_check
        _
      $region46: #{tpu_custom_call.1} parent=5 // pred_check_branch
        %256 = sbr.rel (%p253) target = $region48
      $region47: #{tpu_custom_call.1} parent=5 // pred_region
        %s257 = ssub.s32 %s17, 1
        // Predicated region
        $region49: #{tpu_custom_call.1} parent=47 // pred_check
          %p258 = pneg %p38
        $region50: #{tpu_custom_call.1} parent=47 // pred_check_branch
          %260 = sbr.rel (%p258) target = $region52
        $region51: #{tpu_custom_call.1} parent=47 // pred_region
          %262 = dma.done [#allocation3], 16384
        $region52: #{tpu_custom_call.1} parent=47 // pred_fallthru
          _
        %p263 = pneg %p38
        %p264 = pneg %p35
        %p265 = pneg %p59
        %p266 = pneg %p56
        %p267 = scmp.lt.s32.totalorder %s22, 1
        %s268 = scalar_select %p267, %s22, 1
        %s269 = smul.addr %s268, 2
        %s270 = smul.addr %s269, 8
        %s271 = scalar_lea.vmem %s2, %s270
        %p272 = pneg %p85
        %p273 = pneg %p82
        %p274 = pneg %p106
        %p275 = pneg %p103
        %p276 = pneg %p127
        %p277 = pneg %p124
        %p278 = pneg %p148
        %p279 = pneg %p145
        %p280 = pneg %p169
        %p281 = pneg %p166
        %p282 = pneg %p195
        %p283 = pneg %p192
        %s284 = sand.u32 %s182, 1
        %s285 = scalar_lea.sflag [#allocation4], %s284
        %s286 = sand.u32 %s182, 1
        %s287 = smul.addr %s286, 64
        %s288 = scalar_lea.vmem [#allocation5], %s287
        %p289 = scmp.lt.s32.totalorder %s22, 1
        %s290 = scalar_select %p289, %s22, 1
        %s291 = smul.addr %s290, 2
        %s292 = smul.addr %s291, 8
        %s293 = scalar_lea.vmem %s2, %s292
        %v294 = vld [vmem:[%s293] sm:$0xff]
        %v295 = vld [vmem:[%s293 + $0x8] sm:$0xff]
        %v296 = vld [vmem:[%s3] sm:$0xff]
        %v297 = vld [vmem:[%s3 + $0x8] sm:$0xff]
        %v298 = vld [vmem:[%s3 + $0x10] sm:$0xff]
        %v299 = vld [vmem:[%s3 + $0x18] sm:$0xff]
        %v300 = vld [vmem:[%s3 + $0x20] sm:$0xff]
        %v301 = vld [vmem:[%s3 + $0x28] sm:$0xff]
        %v302 = vld [vmem:[%s3 + $0x30] sm:$0xff]
        %v303 = vld [vmem:[%s3 + $0x38] sm:$0xff]
        %v304 = vld [vmem:[%s4] sm:$0xff]
        %v305 = vld [vmem:[%s4 + $0x8] sm:$0xff]
        %v306 = vld [vmem:[%s4 + $0x10] sm:$0xff]
        %v307 = vld [vmem:[%s4 + $0x18] sm:$0xff]
        %v308 = vld [vmem:[%s4 + $0x20] sm:$0xff]
        %v309 = vld [vmem:[%s4 + $0x28] sm:$0xff]
        %v310 = vld [vmem:[%s4 + $0x30] sm:$0xff]
        %v311 = vld [vmem:[%s4 + $0x38] sm:$0xff]
        %313 = vset.pattern.permute.xlu0 0
        %314 = vperm.xlu0 %313, %v304
        %v315 = vpop.permute.xlu0 %314
        %318 = vset.pattern.permute.xlu0 0
        %319 = vperm.xlu0 %318, %v305
        %v320 = vpop.permute.xlu0 %319
        %323 = vset.pattern.permute.xlu0 0
        %324 = vperm.xlu0 %323, %v306
        %v325 = vpop.permute.xlu0 %324
        %328 = vset.pattern.permute.xlu0 0
        %329 = vperm.xlu0 %328, %v307
        %v330 = vpop.permute.xlu0 %329
        %333 = vset.pattern.permute.xlu0 0
        %334 = vperm.xlu0 %333, %v308
        %v335 = vpop.permute.xlu0 %334
        %338 = vset.pattern.permute.xlu0 0
        %339 = vperm.xlu0 %338, %v309
        %v340 = vpop.permute.xlu0 %339
        %343 = vset.pattern.permute.xlu0 0
        %344 = vperm.xlu0 %343, %v310
        %v345 = vpop.permute.xlu0 %344
        %348 = vset.pattern.permute.xlu0 0
        %349 = vperm.xlu0 %348, %v311
        %v350 = vpop.permute.xlu0 %349
        %vm352 = vcmask 64512
        %v354 = vsel %vm352, %v296, 0
        %v357 = vsel %vm352, %v297, 0
        %v360 = vsel %vm352, %v298, 0
        %v363 = vsel %vm352, %v299, 0
        %v366 = vsel %vm352, %v300, 0
        %v369 = vsel %vm352, %v301, 0
        %v372 = vsel %vm352, %v302, 0
        %v375 = vsel %vm352, %v303, 0
        %377 = vmatpush.msra.mxu0 0.0
        %378 = vmatpush.msra.mxu0 0.0
        %379 = vmatpush.msra.mxu0 0.0
        %380 = vmatpush.msra.mxu0 0.0
        %381 = vmatpush.msra.mxu0 0.0
        %382 = vmatpush.msra.mxu0 0.0
        %383 = vmatpush.msra.mxu0 0.0
        %384 = vmatpush.msra.mxu0 0.0
        %385 = vmatpush.msra.mxu0 0.0
        %386 = vmatpush.msra.mxu0 0.0
        %387 = vmatpush.msra.mxu0 0.0
        %388 = vmatpush.msra.mxu0 0.0
        %389 = vmatpush.msra.mxu0 0.0
        %390 = vmatpush.msra.mxu0 0.0
        %391 = vmatpush.msra.mxu0 0.0
        %392 = vmatpush.msra.mxu0 %v294
        %393 = vmatmul.f32.gmra.mxu0 %v354
        %v394 = vpop.f32.mrf.mxu0
        %v395 = vadd.f32 %v315, %v394
        %396 = vmatmul.f32.gmra.mxu0 %v357
        %v397 = vpop.f32.mrf.mxu0
        %v398 = vadd.f32 %v320, %v397
        %399 = vmatmul.f32.gmra.mxu0 %v360
        %v400 = vpop.f32.mrf.mxu0
        %v401 = vadd.f32 %v325, %v400
        %402 = vmatmul.f32.gmra.mxu0 %v363
        %v403 = vpop.f32.mrf.mxu0
        %v404 = vadd.f32 %v330, %v403
        %405 = vmatmul.f32.gmra.mxu0 %v366
        %v406 = vpop.f32.mrf.mxu0
        %v407 = vadd.f32 %v335, %v406
        %408 = vmatmul.f32.gmra.mxu0 %v369
        %v409 = vpop.f32.mrf.mxu0
        %v410 = vadd.f32 %v340, %v409
        %411 = vmatmul.f32.gmra.mxu0 %v372
        %v412 = vpop.f32.mrf.mxu0
        %v413 = vadd.f32 %v345, %v412
        %414 = vmatmul.f32.gmra.mxu0 %v375
        %v415 = vpop.f32.mrf.mxu0
        %v416 = vadd.f32 %v350, %v415
        %417 = vdwg.mxu0
        %418 = vmatpush.msra.mxu0 0.0
        %419 = vmatpush.msra.mxu0 0.0
        %420 = vmatpush.msra.mxu0 0.0
        %421 = vmatpush.msra.mxu0 0.0
        %422 = vmatpush.msra.mxu0 0.0
        %423 = vmatpush.msra.mxu0 0.0
        %424 = vmatpush.msra.mxu0 0.0
        %425 = vmatpush.msra.mxu0 0.0
        %426 = vmatpush.msra.mxu0 0.0
        %427 = vmatpush.msra.mxu0 0.0
        %428 = vmatpush.msra.mxu0 0.0
        %429 = vmatpush.msra.mxu0 0.0
        %430 = vmatpush.msra.mxu0 0.0
        %431 = vmatpush.msra.mxu0 0.0
        %432 = vmatpush.msra.mxu0 0.0
        %433 = vmatpush.msra.mxu0 %v295
        %434 = vmatmul.f32.gmra.mxu0 %v354
        %v435 = vpop.f32.mrf.mxu0
        %v436 = vadd.f32 %v315, %v435
        %437 = vmatmul.f32.gmra.mxu0 %v357
        %v438 = vpop.f32.mrf.mxu0
        %v439 = vadd.f32 %v320, %v438
        %440 = vmatmul.f32.gmra.mxu0 %v360
        %v441 = vpop.f32.mrf.mxu0
        %v442 = vadd.f32 %v325, %v441
        %443 = vmatmul.f32.gmra.mxu0 %v363
        %v444 = vpop.f32.mrf.mxu0
        %v445 = vadd.f32 %v330, %v444
        %446 = vmatmul.f32.gmra.mxu0 %v366
        %v447 = vpop.f32.mrf.mxu0
        %v448 = vadd.f32 %v335, %v447
        %449 = vmatmul.f32.gmra.mxu0 %v369
        %v450 = vpop.f32.mrf.mxu0
        %v451 = vadd.f32 %v340, %v450
        %452 = vmatmul.f32.gmra.mxu0 %v372
        %v453 = vpop.f32.mrf.mxu0
        %v454 = vadd.f32 %v345, %v453
        %455 = vmatmul.f32.gmra.mxu0 %v375
        %v456 = vpop.f32.mrf.mxu0
        %v457 = vadd.f32 %v350, %v456
        %458 = vdwg.mxu0
        %v459 = vsub.f32 0.0, %v407
        %v460 = vsub.f32 0.0, %v448
        %v461 = vsub.f32 0.0, %v410
        %v462 = vsub.f32 0.0, %v451
        %v463 = vsub.f32 0.0, %v413
        %v464 = vsub.f32 0.0, %v454
        %v465 = vsub.f32 0.0, %v416
        %v466 = vsub.f32 0.0, %v457
        %v467 = vmul.f32 %v459, 1.442695
        %v468 = vpow.pop %v467
        %v469 = vmul.f32 %v460, 1.442695
        %v470 = vpow.pop %v469
        %v471 = vmul.f32 %v461, 1.442695
        %v472 = vpow.pop %v471
        %v473 = vmul.f32 %v462, 1.442695
        %v474 = vpow.pop %v473
        %v475 = vmul.f32 %v463, 1.442695
        %v476 = vpow.pop %v475
        %v477 = vmul.f32 %v464, 1.442695
        %v478 = vpow.pop %v477
        %v479 = vmul.f32 %v465, 1.442695
        %v480 = vpow.pop %v479
        %v481 = vmul.f32 %v466, 1.442695
        %v482 = vpow.pop %v481
        %v483 = vadd.f32 %v468, 1.0
        %v484 = vadd.f32 %v470, 1.0
        %v485 = vadd.f32 %v472, 1.0
        %v486 = vadd.f32 %v474, 1.0
        %v487 = vadd.f32 %v476, 1.0
        %v488 = vadd.f32 %v478, 1.0
        %v489 = vadd.f32 %v480, 1.0
        %v490 = vadd.f32 %v482, 1.0
        %v491 = vrcp.pop %v483
        %v492 = vmul.f32 %v483, %v491
        %v493 = vsub.f32 1.0, %v492
        %v494 = vmul.f32 %v491, %v493
        %v495 = vadd.f32 %v491, %v494
        %vm496 = vweird.f32 %v483
        %vm497 = vweird.f32 %v491
        %vm498 = vmor %vm496, %vm497
        %v499 = vsel %vm498, %v491, %v495
        %v500 = vand.u32 2147483647, %v483
        %vm501 = vcmp.eq.f32.partialorder %v500, 8.507059e+37
        %v502 = vand.u32 %v483, 2147483648
        %v503 = vor.u32 1.1754944e-38, %v502
        %v504 = vsel %vm501, %v503, %v499
        %v505 = vmul.f32 1.0, %v504
        %v506 = vrcp.pop %v484
        %v507 = vmul.f32 %v484, %v506
        %v508 = vsub.f32 1.0, %v507
        %v509 = vmul.f32 %v506, %v508
        %v510 = vadd.f32 %v506, %v509
        %vm511 = vweird.f32 %v484
        %vm512 = vweird.f32 %v506
        %vm513 = vmor %vm511, %vm512
        %v514 = vsel %vm513, %v506, %v510
        %v515 = vand.u32 2147483647, %v484
        %vm516 = vcmp.eq.f32.partialorder %v515, 8.507059e+37
        %v517 = vand.u32 %v484, 2147483648
        %v518 = vor.u32 1.1754944e-38, %v517
        %v519 = vsel %vm516, %v518, %v514
        %v520 = vmul.f32 1.0, %v519
        %v521 = vrcp.pop %v485
        %v522 = vmul.f32 %v485, %v521
        %v523 = vsub.f32 1.0, %v522
        %v524 = vmul.f32 %v521, %v523
        %v525 = vadd.f32 %v521, %v524
        %vm526 = vweird.f32 %v485
        %vm527 = vweird.f32 %v521
        %vm528 = vmor %vm526, %vm527
        %v529 = vsel %vm528, %v521, %v525
        %v530 = vand.u32 2147483647, %v485
        %vm531 = vcmp.eq.f32.partialorder %v530, 8.507059e+37
        %v532 = vand.u32 %v485, 2147483648
        %v533 = vor.u32 1.1754944e-38, %v532
        %v534 = vsel %vm531, %v533, %v529
        %v535 = vmul.f32 1.0, %v534
        %v536 = vrcp.pop %v486
        %v537 = vmul.f32 %v486, %v536
        %v538 = vsub.f32 1.0, %v537
        %v539 = vmul.f32 %v536, %v538
        %v540 = vadd.f32 %v536, %v539
        %vm541 = vweird.f32 %v486
        %vm542 = vweird.f32 %v536
        %vm543 = vmor %vm541, %vm542
        %v544 = vsel %vm543, %v536, %v540
        %v545 = vand.u32 2147483647, %v486
        %vm546 = vcmp.eq.f32.partialorder %v545, 8.507059e+37
        %v547 = vand.u32 %v486, 2147483648
        %v548 = vor.u32 1.1754944e-38, %v547
        %v549 = vsel %vm546, %v548, %v544
        %v550 = vmul.f32 1.0, %v549
        %v551 = vrcp.pop %v487
        %v552 = vmul.f32 %v487, %v551
        %v553 = vsub.f32 1.0, %v552
        %v554 = vmul.f32 %v551, %v553
        %v555 = vadd.f32 %v551, %v554
        %vm556 = vweird.f32 %v487
        %vm557 = vweird.f32 %v551
        %vm558 = vmor %vm556, %vm557
        %v559 = vsel %vm558, %v551, %v555
        %v560 = vand.u32 2147483647, %v487
        %vm561 = vcmp.eq.f32.partialorder %v560, 8.507059e+37
        %v562 = vand.u32 %v487, 2147483648
        %v563 = vor.u32 1.1754944e-38, %v562
        %v564 = vsel %vm561, %v563, %v559
        %v565 = vmul.f32 1.0, %v564
        %v566 = vrcp.pop %v488
        %v567 = vmul.f32 %v488, %v566
        %v568 = vsub.f32 1.0, %v567
        %v569 = vmul.f32 %v566, %v568
        %v570 = vadd.f32 %v566, %v569
        %vm571 = vweird.f32 %v488
        %vm572 = vweird.f32 %v566
        %vm573 = vmor %vm571, %vm572
        %v574 = vsel %vm573, %v566, %v570
        %v575 = vand.u32 2147483647, %v488
        %vm576 = vcmp.eq.f32.partialorder %v575, 8.507059e+37
        %v577 = vand.u32 %v488, 2147483648
        %v578 = vor.u32 1.1754944e-38, %v577
        %v579 = vsel %vm576, %v578, %v574
        %v580 = vmul.f32 1.0, %v579
        %v581 = vrcp.pop %v489
        %v582 = vmul.f32 %v489, %v581
        %v583 = vsub.f32 1.0, %v582
        %v584 = vmul.f32 %v581, %v583
        %v585 = vadd.f32 %v581, %v584
        %vm586 = vweird.f32 %v489
        %vm587 = vweird.f32 %v581
        %vm588 = vmor %vm586, %vm587
        %v589 = vsel %vm588, %v581, %v585
        %v590 = vand.u32 2147483647, %v489
        %vm591 = vcmp.eq.f32.partialorder %v590, 8.507059e+37
        %v592 = vand.u32 %v489, 2147483648
        %v593 = vor.u32 1.1754944e-38, %v592
        %v594 = vsel %vm591, %v593, %v589
        %v595 = vmul.f32 1.0, %v594
        %v596 = vrcp.pop %v490
        %v597 = vmul.f32 %v490, %v596
        %v598 = vsub.f32 1.0, %v597
        %v599 = vmul.f32 %v596, %v598
        %v600 = vadd.f32 %v596, %v599
        %vm601 = vweird.f32 %v490
        %vm602 = vweird.f32 %v596
        %vm603 = vmor %vm601, %vm602
        %v604 = vsel %vm603, %v596, %v600
        %v605 = vand.u32 2147483647, %v490
        %vm606 = vcmp.eq.f32.partialorder %v605, 8.507059e+37
        %v607 = vand.u32 %v490, 2147483648
        %v608 = vor.u32 1.1754944e-38, %v607
        %v609 = vsel %vm606, %v608, %v604
        %v610 = vmul.f32 1.0, %v609
        %v611 = vmul.f32 %v395, %v505
        %v612 = vmul.f32 %v436, %v520
        %v613 = vmul.f32 %v398, %v535
        %v614 = vmul.f32 %v439, %v550
        %v615 = vmul.f32 %v401, %v565
        %v616 = vmul.f32 %v442, %v580
        %v617 = vmul.f32 %v404, %v595
        %v618 = vmul.f32 %v445, %v610
        %v619 = vpack.c.bf16 %v613, %v611
        %v620 = vpack.c.bf16 %v614, %v612
        %v621 = vpack.c.bf16 %v617, %v615
        %v622 = vpack.c.bf16 %v618, %v616
        %v623 = vld [vmem:[#allocation2] sm:$0xff]
        %v624 = vld [vmem:[#allocation2 + $0x8] sm:$0xff]
        %v625 = vld [vmem:[#allocation2 + $0x10] sm:$0xff]
        %v626 = vld [vmem:[#allocation2 + $0x18] sm:$0xff]
        %v627 = vld [vmem:[#allocation2 + $0x20] sm:$0xff]
        %v628 = vld [vmem:[#allocation2 + $0x28] sm:$0xff]
        %v629 = vld [vmem:[#allocation2 + $0x30] sm:$0xff]
        %v630 = vld [vmem:[#allocation2 + $0x38] sm:$0xff]
        %v631 = vld [vmem:[#allocation2 + $0x40] sm:$0xff]
        %v632 = vld [vmem:[#allocation2 + $0x48] sm:$0xff]
        %v633 = vld [vmem:[#allocation2 + $0x50] sm:$0xff]
        %v634 = vld [vmem:[#allocation2 + $0x58] sm:$0xff]
        %v635 = vld [vmem:[#allocation2 + $0x60] sm:$0xff]
        %v636 = vld [vmem:[#allocation2 + $0x68] sm:$0xff]
        %v637 = vld [vmem:[#allocation2 + $0x70] sm:$0xff]
        %v638 = vld [vmem:[#allocation2 + $0x78] sm:$0xff]
        %v639 = vld [vmem:[#allocation2 + $0x80] sm:$0xff]
        %v640 = vld [vmem:[#allocation2 + $0x88] sm:$0xff]
        %v641 = vld [vmem:[#allocation2 + $0x90] sm:$0xff]
        %v642 = vld [vmem:[#allocation2 + $0x98] sm:$0xff]
        %v643 = vld [vmem:[#allocation2 + $0xa0] sm:$0xff]
        %v644 = vld [vmem:[#allocation2 + $0xa8] sm:$0xff]
        %v645 = vld [vmem:[#allocation2 + $0xb0] sm:$0xff]
        %v646 = vld [vmem:[#allocation2 + $0xb8] sm:$0xff]
        %v647 = vld [vmem:[#allocation2 + $0xc0] sm:$0xff]
        %v648 = vld [vmem:[#allocation2 + $0xc8] sm:$0xff]
        %v649 = vld [vmem:[#allocation2 + $0xd0] sm:$0xff]
        %v650 = vld [vmem:[#allocation2 + $0xd8] sm:$0xff]
        %v651 = vld [vmem:[#allocation2 + $0xe0] sm:$0xff]
        %v652 = vld [vmem:[#allocation2 + $0xe8] sm:$0xff]
        %v653 = vld [vmem:[#allocation2 + $0xf0] sm:$0xff]
        %v654 = vld [vmem:[#allocation2 + $0xf8] sm:$0xff]
        %v655 = vld [vmem:[#allocation2 + $0x100] sm:$0xff]
        %v656 = vld [vmem:[#allocation2 + $0x108] sm:$0xff]
        %v657 = vld [vmem:[#allocation2 + $0x110] sm:$0xff]
        %v658 = vld [vmem:[#allocation2 + $0x118] sm:$0xff]
        %v659 = vld [vmem:[#allocation2 + $0x120] sm:$0xff]
        %v660 = vld [vmem:[#allocation2 + $0x128] sm:$0xff]
        %v661 = vld [vmem:[#allocation2 + $0x130] sm:$0xff]
        %v662 = vld [vmem:[#allocation2 + $0x138] sm:$0xff]
        %v663 = vld [vmem:[#allocation2 + $0x140] sm:$0xff]
        %v664 = vld [vmem:[#allocation2 + $0x148] sm:$0xff]
        %v665 = vld [vmem:[#allocation2 + $0x150] sm:$0xff]
        %v666 = vld [vmem:[#allocation2 + $0x158] sm:$0xff]
        %v667 = vld [vmem:[#allocation2 + $0x160] sm:$0xff]
        %v668 = vld [vmem:[#allocation2 + $0x168] sm:$0xff]
        %v669 = vld [vmem:[#allocation2 + $0x170] sm:$0xff]
        %v670 = vld [vmem:[#allocation2 + $0x178] sm:$0xff]
        %v671 = vld [vmem:[#allocation2 + $0x180] sm:$0xff]
        %v672 = vld [vmem:[#allocation2 + $0x188] sm:$0xff]
        %v673 = vld [vmem:[#allocation2 + $0x190] sm:$0xff]
        %v674 = vld [vmem:[#allocation2 + $0x198] sm:$0xff]
        %v675 = vld [vmem:[#allocation2 + $0x1a0] sm:$0xff]
        %v676 = vld [vmem:[#allocation2 + $0x1a8] sm:$0xff]
        %v677 = vld [vmem:[#allocation2 + $0x1b0] sm:$0xff]
        %v678 = vld [vmem:[#allocation2 + $0x1b8] sm:$0xff]
        %v679 = vld [vmem:[#allocation2 + $0x1c0] sm:$0xff]
        %v680 = vld [vmem:[#allocation2 + $0x1c8] sm:$0xff]
        %v681 = vld [vmem:[#allocation2 + $0x1d0] sm:$0xff]
        %v682 = vld [vmem:[#allocation2 + $0x1d8] sm:$0xff]
        %v683 = vld [vmem:[#allocation2 + $0x1e0] sm:$0xff]
        %v684 = vld [vmem:[#allocation2 + $0x1e8] sm:$0xff]
        %v685 = vld [vmem:[#allocation2 + $0x1f0] sm:$0xff]
        %v686 = vld [vmem:[#allocation2 + $0x1f8] sm:$0xff]
        %v687 = vld [vmem:[#allocation2 + $0x200] sm:$0xff]
        %v688 = vld [vmem:[#allocation2 + $0x208] sm:$0xff]
        %v689 = vld [vmem:[#allocation2 + $0x210] sm:$0xff]
        %v690 = vld [vmem:[#allocation2 + $0x218] sm:$0xff]
        %v691 = vld [vmem:[#allocation2 + $0x220] sm:$0xff]
        %v692 = vld [vmem:[#allocation2 + $0x228] sm:$0xff]
        %v693 = vld [vmem:[#allocation2 + $0x230] sm:$0xff]
        %v694 = vld [vmem:[#allocation2 + $0x238] sm:$0xff]
        %v695 = vld [vmem:[#allocation2 + $0x240] sm:$0xff]
        %v696 = vld [vmem:[#allocation2 + $0x248] sm:$0xff]
        %v697 = vld [vmem:[#allocation2 + $0x250] sm:$0xff]
        %v698 = vld [vmem:[#allocation2 + $0x258] sm:$0xff]
        %v699 = vld [vmem:[#allocation2 + $0x260] sm:$0xff]
        %v700 = vld [vmem:[#allocation2 + $0x268] sm:$0xff]
        %v701 = vld [vmem:[#allocation2 + $0x270] sm:$0xff]
        %v702 = vld [vmem:[#allocation2 + $0x278] sm:$0xff]
        %v703 = vld [vmem:[#allocation2 + $0x280] sm:$0xff]
        %v704 = vld [vmem:[#allocation2 + $0x288] sm:$0xff]
        %v705 = vld [vmem:[#allocation2 + $0x290] sm:$0xff]
        %v706 = vld [vmem:[#allocation2 + $0x298] sm:$0xff]
        %v707 = vld [vmem:[#allocation2 + $0x2a0] sm:$0xff]
        %v708 = vld [vmem:[#allocation2 + $0x2a8] sm:$0xff]
        %v709 = vld [vmem:[#allocation2 + $0x2b0] sm:$0xff]
        %v710 = vld [vmem:[#allocation2 + $0x2b8] sm:$0xff]
        %v711 = vld [vmem:[#allocation2 + $0x2c0] sm:$0xff]
        %v712 = vld [vmem:[#allocation2 + $0x2c8] sm:$0xff]
        %v713 = vld [vmem:[#allocation2 + $0x2d0] sm:$0xff]
        %v714 = vld [vmem:[#allocation2 + $0x2d8] sm:$0xff]
        %v715 = vld [vmem:[#allocation2 + $0x2e0] sm:$0xff]
        %v716 = vld [vmem:[#allocation2 + $0x2e8] sm:$0xff]
        %v717 = vld [vmem:[#allocation2 + $0x2f0] sm:$0xff]
        %v718 = vld [vmem:[#allocation2 + $0x2f8] sm:$0xff]
        %v719 = vld [vmem:[#allocation2 + $0x300] sm:$0xff]
        %v720 = vld [vmem:[#allocation2 + $0x308] sm:$0xff]
        %v721 = vld [vmem:[#allocation2 + $0x310] sm:$0xff]
        %v722 = vld [vmem:[#allocation2 + $0x318] sm:$0xff]
        %v723 = vld [vmem:[#allocation2 + $0x320] sm:$0xff]
        %v724 = vld [vmem:[#allocation2 + $0x328] sm:$0xff]
        %v725 = vld [vmem:[#allocation2 + $0x330] sm:$0xff]
        %v726 = vld [vmem:[#allocation2 + $0x338] sm:$0xff]
        %v727 = vld [vmem:[#allocation2 + $0x340] sm:$0xff]
        %v728 = vld [vmem:[#allocation2 + $0x348] sm:$0xff]
        %v729 = vld [vmem:[#allocation2 + $0x350] sm:$0xff]
        %v730 = vld [vmem:[#allocation2 + $0x358] sm:$0xff]
        %v731 = vld [vmem:[#allocation2 + $0x360] sm:$0xff]
        %v732 = vld [vmem:[#allocation2 + $0x368] sm:$0xff]
        %v733 = vld [vmem:[#allocation2 + $0x370] sm:$0xff]
        %v734 = vld [vmem:[#allocation2 + $0x378] sm:$0xff]
        %v735 = vld [vmem:[#allocation2 + $0x380] sm:$0xff]
        %v736 = vld [vmem:[#allocation2 + $0x388] sm:$0xff]
        %v737 = vld [vmem:[#allocation2 + $0x390] sm:$0xff]
        %v738 = vld [vmem:[#allocation2 + $0x398] sm:$0xff]
        %v739 = vld [vmem:[#allocation2 + $0x3a0] sm:$0xff]
        %v740 = vld [vmem:[#allocation2 + $0x3a8] sm:$0xff]
        %v741 = vld [vmem:[#allocation2 + $0x3b0] sm:$0xff]
        %v742 = vld [vmem:[#allocation2 + $0x3b8] sm:$0xff]
        %v743 = vld [vmem:[#allocation2 + $0x3c0] sm:$0xff]
        %v744 = vld [vmem:[#allocation2 + $0x3c8] sm:$0xff]
        %v745 = vld [vmem:[#allocation2 + $0x3d0] sm:$0xff]
        %v746 = vld [vmem:[#allocation2 + $0x3d8] sm:$0xff]
        %v747 = vld [vmem:[#allocation2 + $0x3e0] sm:$0xff]
        %v748 = vld [vmem:[#allocation2 + $0x3e8] sm:$0xff]
        %v749 = vld [vmem:[#allocation2 + $0x3f0] sm:$0xff]
        %v750 = vld [vmem:[#allocation2 + $0x3f8] sm:$0xff]
        %v879 = vunpack.c.l.b16 %v623
        %v880 = vunpack.c.h.b16 %v623
        %v881 = vunpack.c.l.b16 %v624
        %v882 = vunpack.c.h.b16 %v624
        %v883 = vunpack.c.l.b16 %v625
        %v884 = vunpack.c.h.b16 %v625
        %v885 = vunpack.c.l.b16 %v626
        %v886 = vunpack.c.h.b16 %v626
        %v887 = vunpack.c.l.b16 %v627
        %v888 = vunpack.c.h.b16 %v627
        %v889 = vunpack.c.l.b16 %v628
        %v890 = vunpack.c.h.b16 %v628
        %v891 = vunpack.c.l.b16 %v629
        %v892 = vunpack.c.h.b16 %v629
        %v893 = vunpack.c.l.b16 %v630
        %v894 = vunpack.c.h.b16 %v630
        %v895 = vunpack.c.l.b16 %v631
        %v896 = vunpack.c.h.b16 %v631
        %v897 = vunpack.c.l.b16 %v632
        %v898 = vunpack.c.h.b16 %v632
        %v899 = vunpack.c.l.b16 %v633
        %v900 = vunpack.c.h.b16 %v633
        %v901 = vunpack.c.l.b16 %v634
        %v902 = vunpack.c.h.b16 %v634
        %v903 = vunpack.c.l.b16 %v635
        %v904 = vunpack.c.h.b16 %v635
        %v905 = vunpack.c.l.b16 %v636
        %v906 = vunpack.c.h.b16 %v636
        %v907 = vunpack.c.l.b16 %v637
        %v908 = vunpack.c.h.b16 %v637
        %v909 = vunpack.c.l.b16 %v638
        %v910 = vunpack.c.h.b16 %v638
        %v911 = vunpack.c.l.b16 %v639
        %v912 = vunpack.c.h.b16 %v639
        %v913 = vunpack.c.l.b16 %v640
        %v914 = vunpack.c.h.b16 %v640
        %v915 = vunpack.c.l.b16 %v641
        %v916 = vunpack.c.h.b16 %v641
        %v917 = vunpack.c.l.b16 %v642
        %v918 = vunpack.c.h.b16 %v642
        %v919 = vunpack.c.l.b16 %v643
        %v920 = vunpack.c.h.b16 %v643
        %v921 = vunpack.c.l.b16 %v644
        %v922 = vunpack.c.h.b16 %v644
        %v923 = vunpack.c.l.b16 %v645
        %v924 = vunpack.c.h.b16 %v645
        %v925 = vunpack.c.l.b16 %v646
        %v926 = vunpack.c.h.b16 %v646
        %v927 = vunpack.c.l.b16 %v647
        %v928 = vunpack.c.h.b16 %v647
        %v929 = vunpack.c.l.b16 %v648
        %v930 = vunpack.c.h.b16 %v648
        %v931 = vunpack.c.l.b16 %v649
        %v932 = vunpack.c.h.b16 %v649
        %v933 = vunpack.c.l.b16 %v650
        %v934 = vunpack.c.h.b16 %v650
        %v935 = vunpack.c.l.b16 %v651
        %v936 = vunpack.c.h.b16 %v651
        %v937 = vunpack.c.l.b16 %v652
        %v938 = vunpack.c.h.b16 %v652
        %v939 = vunpack.c.l.b16 %v653
        %v940 = vunpack.c.h.b16 %v653
        %v941 = vunpack.c.l.b16 %v654
        %v942 = vunpack.c.h.b16 %v654
        %v943 = vunpack.c.l.b16 %v655
        %v944 = vunpack.c.h.b16 %v655
        %v945 = vunpack.c.l.b16 %v656
        %v946 = vunpack.c.h.b16 %v656
        %v947 = vunpack.c.l.b16 %v657
        %v948 = vunpack.c.h.b16 %v657
        %v949 = vunpack.c.l.b16 %v658
        %v950 = vunpack.c.h.b16 %v658
        %v951 = vunpack.c.l.b16 %v659
        %v952 = vunpack.c.h.b16 %v659
        %v953 = vunpack.c.l.b16 %v660
        %v954 = vunpack.c.h.b16 %v660
        %v955 = vunpack.c.l.b16 %v661
        %v956 = vunpack.c.h.b16 %v661
        %v957 = vunpack.c.l.b16 %v662
        %v958 = vunpack.c.h.b16 %v662
        %v959 = vunpack.c.l.b16 %v663
        %v960 = vunpack.c.h.b16 %v663
        %v961 = vunpack.c.l.b16 %v664
        %v962 = vunpack.c.h.b16 %v664
        %v963 = vunpack.c.l.b16 %v665
        %v964 = vunpack.c.h.b16 %v665
        %v965 = vunpack.c.l.b16 %v666
        %v966 = vunpack.c.h.b16 %v666
        %v967 = vunpack.c.l.b16 %v667
        %v968 = vunpack.c.h.b16 %v667
        %v969 = vunpack.c.l.b16 %v668
        %v970 = vunpack.c.h.b16 %v668
        %v971 = vunpack.c.l.b16 %v669
        %v972 = vunpack.c.h.b16 %v669
        %v973 = vunpack.c.l.b16 %v670
        %v974 = vunpack.c.h.b16 %v670
        %v975 = vunpack.c.l.b16 %v671
        %v976 = vunpack.c.h.b16 %v671
        %v977 = vunpack.c.l.b16 %v672
        %v978 = vunpack.c.h.b16 %v672
        %v979 = vunpack.c.l.b16 %v673
        %v980 = vunpack.c.h.b16 %v673
        %v981 = vunpack.c.l.b16 %v674
        %v982 = vunpack.c.h.b16 %v674
        %v983 = vunpack.c.l.b16 %v675
        %v984 = vunpack.c.h.b16 %v675
        %v985 = vunpack.c.l.b16 %v676
        %v986 = vunpack.c.h.b16 %v676
        %v987 = vunpack.c.l.b16 %v677
        %v988 = vunpack.c.h.b16 %v677
        %v989 = vunpack.c.l.b16 %v678
        %v990 = vunpack.c.h.b16 %v678
        %v991 = vunpack.c.l.b16 %v679
        %v992 = vunpack.c.h.b16 %v679
        %v993 = vunpack.c.l.b16 %v680
        %v994 = vunpack.c.h.b16 %v680
        %v995 = vunpack.c.l.b16 %v681
        %v996 = vunpack.c.h.b16 %v681
        %v997 = vunpack.c.l.b16 %v682
        %v998 = vunpack.c.h.b16 %v682
        %v999 = vunpack.c.l.b16 %v683
        %v1000 = vunpack.c.h.b16 %v683
        %v1001 = vunpack.c.l.b16 %v684
        %v1002 = vunpack.c.h.b16 %v684
        %v1003 = vunpack.c.l.b16 %v685
        %v1004 = vunpack.c.h.b16 %v685
        %v1005 = vunpack.c.l.b16 %v686
        %v1006 = vunpack.c.h.b16 %v686
        %v1007 = vunpack.c.l.b16 %v687
        %v1008 = vunpack.c.h.b16 %v687
        %v1009 = vunpack.c.l.b16 %v688
        %v1010 = vunpack.c.h.b16 %v688
        %v1011 = vunpack.c.l.b16 %v689
        %v1012 = vunpack.c.h.b16 %v689
        %v1013 = vunpack.c.l.b16 %v690
        %v1014 = vunpack.c.h.b16 %v690
        %v1015 = vunpack.c.l.b16 %v691
        %v1016 = vunpack.c.h.b16 %v691
        %v1017 = vunpack.c.l.b16 %v692
        %v1018 = vunpack.c.h.b16 %v692
        %v1019 = vunpack.c.l.b16 %v693
        %v1020 = vunpack.c.h.b16 %v693
        %v1021 = vunpack.c.l.b16 %v694
        %v1022 = vunpack.c.h.b16 %v694
        %v1023 = vunpack.c.l.b16 %v695
        %v1024 = vunpack.c.h.b16 %v695
        %v1025 = vunpack.c.l.b16 %v696
        %v1026 = vunpack.c.h.b16 %v696
        %v1027 = vunpack.c.l.b16 %v697
        %v1028 = vunpack.c.h.b16 %v697
        %v1029 = vunpack.c.l.b16 %v698
        %v1030 = vunpack.c.h.b16 %v698
        %v1031 = vunpack.c.l.b16 %v699
        %v1032 = vunpack.c.h.b16 %v699
        %v1033 = vunpack.c.l.b16 %v700
        %v1034 = vunpack.c.h.b16 %v700
        %v1035 = vunpack.c.l.b16 %v701
        %v1036 = vunpack.c.h.b16 %v701
        %v1037 = vunpack.c.l.b16 %v702
        %v1038 = vunpack.c.h.b16 %v702
        %v1039 = vunpack.c.l.b16 %v703
        %v1040 = vunpack.c.h.b16 %v703
        %v1041 = vunpack.c.l.b16 %v704
        %v1042 = vunpack.c.h.b16 %v704
        %v1043 = vunpack.c.l.b16 %v705
        %v1044 = vunpack.c.h.b16 %v705
        %v1045 = vunpack.c.l.b16 %v706
        %v1046 = vunpack.c.h.b16 %v706
        %v1047 = vunpack.c.l.b16 %v707
        %v1048 = vunpack.c.h.b16 %v707
        %v1049 = vunpack.c.l.b16 %v708
        %v1050 = vunpack.c.h.b16 %v708
        %v1051 = vunpack.c.l.b16 %v709
        %v1052 = vunpack.c.h.b16 %v709
        %v1053 = vunpack.c.l.b16 %v710
        %v1054 = vunpack.c.h.b16 %v710
        %v1055 = vunpack.c.l.b16 %v711
        %v1056 = vunpack.c.h.b16 %v711
        %v1057 = vunpack.c.l.b16 %v712
        %v1058 = vunpack.c.h.b16 %v712
        %v1059 = vunpack.c.l.b16 %v713
        %v1060 = vunpack.c.h.b16 %v713
        %v1061 = vunpack.c.l.b16 %v714
        %v1062 = vunpack.c.h.b16 %v714
        %v1063 = vunpack.c.l.b16 %v715
        %v1064 = vunpack.c.h.b16 %v715
        %v1065 = vunpack.c.l.b16 %v716
        %v1066 = vunpack.c.h.b16 %v716
        %v1067 = vunpack.c.l.b16 %v717
        %v1068 = vunpack.c.h.b16 %v717
        %v1069 = vunpack.c.l.b16 %v718
        %v1070 = vunpack.c.h.b16 %v718
        %v1071 = vunpack.c.l.b16 %v719
        %v1072 = vunpack.c.h.b16 %v719
        %v1073 = vunpack.c.l.b16 %v720
        %v1074 = vunpack.c.h.b16 %v720
        %v1075 = vunpack.c.l.b16 %v721
        %v1076 = vunpack.c.h.b16 %v721
        %v1077 = vunpack.c.l.b16 %v722
        %v1078 = vunpack.c.h.b16 %v722
        %v1079 = vunpack.c.l.b16 %v723
        %v1080 = vunpack.c.h.b16 %v723
        %v1081 = vunpack.c.l.b16 %v724
        %v1082 = vunpack.c.h.b16 %v724
        %v1083 = vunpack.c.l.b16 %v725
        %v1084 = vunpack.c.h.b16 %v725
        %v1085 = vunpack.c.l.b16 %v726
        %v1086 = vunpack.c.h.b16 %v726
        %v1087 = vunpack.c.l.b16 %v727
        %v1088 = vunpack.c.h.b16 %v727
        %v1089 = vunpack.c.l.b16 %v728
        %v1090 = vunpack.c.h.b16 %v728
        %v1091 = vunpack.c.l.b16 %v729
        %v1092 = vunpack.c.h.b16 %v729
        %v1093 = vunpack.c.l.b16 %v730
        %v1094 = vunpack.c.h.b16 %v730
        %v1095 = vunpack.c.l.b16 %v731
        %v1096 = vunpack.c.h.b16 %v731
        %v1097 = vunpack.c.l.b16 %v732
        %v1098 = vunpack.c.h.b16 %v732
        %v1099 = vunpack.c.l.b16 %v733
        %v1100 = vunpack.c.h.b16 %v733
        %v1101 = vunpack.c.l.b16 %v734
        %v1102 = vunpack.c.h.b16 %v734
        %v1103 = vunpack.c.l.b16 %v735
        %v1104 = vunpack.c.h.b16 %v735
        %v1105 = vunpack.c.l.b16 %v736
        %v1106 = vunpack.c.h.b16 %v736
        %v1107 = vunpack.c.l.b16 %v737
        %v1108 = vunpack.c.h.b16 %v737
        %v1109 = vunpack.c.l.b16 %v738
        %v1110 = vunpack.c.h.b16 %v738
        %v1111 = vunpack.c.l.b16 %v739
        %v1112 = vunpack.c.h.b16 %v739
        %v1113 = vunpack.c.l.b16 %v740
        %v1114 = vunpack.c.h.b16 %v740
        %v1115 = vunpack.c.l.b16 %v741
        %v1116 = vunpack.c.h.b16 %v741
        %v1117 = vunpack.c.l.b16 %v742
        %v1118 = vunpack.c.h.b16 %v742
        %v1119 = vunpack.c.l.b16 %v743
        %v1120 = vunpack.c.h.b16 %v743
        %v1121 = vunpack.c.l.b16 %v744
        %v1122 = vunpack.c.h.b16 %v744
        %v1123 = vunpack.c.l.b16 %v745
        %v1124 = vunpack.c.h.b16 %v745
        %v1125 = vunpack.c.l.b16 %v746
        %v1126 = vunpack.c.h.b16 %v746
        %v1127 = vunpack.c.l.b16 %v747
        %v1128 = vunpack.c.h.b16 %v747
        %v1129 = vunpack.c.l.b16 %v748
        %v1130 = vunpack.c.h.b16 %v748
        %v1131 = vunpack.c.l.b16 %v749
        %v1132 = vunpack.c.h.b16 %v749
        %v1133 = vunpack.c.l.b16 %v750
        %v1134 = vunpack.c.h.b16 %v750
        %v1135 = vpack.c.b16 %v887, %v879
        %v1136 = vpack.c.b16 %v888, %v880
        %v1137 = vpack.c.b16 %v889, %v881
        %v1138 = vpack.c.b16 %v890, %v882
        %v1139 = vpack.c.b16 %v891, %v883
        %v1140 = vpack.c.b16 %v892, %v884
        %v1141 = vpack.c.b16 %v893, %v885
        %v1142 = vpack.c.b16 %v894, %v886
        %v1143 = vpack.c.b16 %v903, %v895
        %v1144 = vpack.c.b16 %v904, %v896
        %v1145 = vpack.c.b16 %v905, %v897
        %v1146 = vpack.c.b16 %v906, %v898
        %v1147 = vpack.c.b16 %v907, %v899
        %v1148 = vpack.c.b16 %v908, %v900
        %v1149 = vpack.c.b16 %v909, %v901
        %v1150 = vpack.c.b16 %v910, %v902
        %v1151 = vpack.c.b16 %v919, %v911
        %v1152 = vpack.c.b16 %v920, %v912
        %v1153 = vpack.c.b16 %v921, %v913
        %v1154 = vpack.c.b16 %v922, %v914
        %v1155 = vpack.c.b16 %v923, %v915
        %v1156 = vpack.c.b16 %v924, %v916
        %v1157 = vpack.c.b16 %v925, %v917
        %v1158 = vpack.c.b16 %v926, %v918
        %v1159 = vpack.c.b16 %v935, %v927
        %v1160 = vpack.c.b16 %v936, %v928
        %v1161 = vpack.c.b16 %v937, %v929
        %v1162 = vpack.c.b16 %v938, %v930
        %v1163 = vpack.c.b16 %v939, %v931
        %v1164 = vpack.c.b16 %v940, %v932
        %v1165 = vpack.c.b16 %v941, %v933
        %v1166 = vpack.c.b16 %v942, %v934
        %v1167 = vpack.c.b16 %v951, %v943
        %v1168 = vpack.c.b16 %v952, %v944
        %v1169 = vpack.c.b16 %v953, %v945
        %v1170 = vpack.c.b16 %v954, %v946
        %v1171 = vpack.c.b16 %v955, %v947
        %v1172 = vpack.c.b16 %v956, %v948
        %v1173 = vpack.c.b16 %v957, %v949
        %v1174 = vpack.c.b16 %v958, %v950
        %v1175 = vpack.c.b16 %v967, %v959
        %v1176 = vpack.c.b16 %v968, %v960
        %v1177 = vpack.c.b16 %v969, %v961
        %v1178 = vpack.c.b16 %v970, %v962
        %v1179 = vpack.c.b16 %v971, %v963
        %v1180 = vpack.c.b16 %v972, %v964
        %v1181 = vpack.c.b16 %v973, %v965
        %v1182 = vpack.c.b16 %v974, %v966
        %v1183 = vpack.c.b16 %v983, %v975
        %v1184 = vpack.c.b16 %v984, %v976
        %v1185 = vpack.c.b16 %v985, %v977
        %v1186 = vpack.c.b16 %v986, %v978
        %v1187 = vpack.c.b16 %v987, %v979
        %v1188 = vpack.c.b16 %v988, %v980
        %v1189 = vpack.c.b16 %v989, %v981
        %v1190 = vpack.c.b16 %v990, %v982
        %v1191 = vpack.c.b16 %v999, %v991
        %v1192 = vpack.c.b16 %v1000, %v992
        %v1193 = vpack.c.b16 %v1001, %v993
        %v1194 = vpack.c.b16 %v1002, %v994
        %v1195 = vpack.c.b16 %v1003, %v995
        %v1196 = vpack.c.b16 %v1004, %v996
        %v1197 = vpack.c.b16 %v1005, %v997
        %v1198 = vpack.c.b16 %v1006, %v998
        %v1199 = vpack.c.b16 %v1015, %v1007
        %v1200 = vpack.c.b16 %v1016, %v1008
        %v1201 = vpack.c.b16 %v1017, %v1009
        %v1202 = vpack.c.b16 %v1018, %v1010
        %v1203 = vpack.c.b16 %v1019, %v1011
        %v1204 = vpack.c.b16 %v1020, %v1012
        %v1205 = vpack.c.b16 %v1021, %v1013
        %v1206 = vpack.c.b16 %v1022, %v1014
        %v1207 = vpack.c.b16 %v1031, %v1023
        %v1208 = vpack.c.b16 %v1032, %v1024
        %v1209 = vpack.c.b16 %v1033, %v1025
        %v1210 = vpack.c.b16 %v1034, %v1026
        %v1211 = vpack.c.b16 %v1035, %v1027
        %v1212 = vpack.c.b16 %v1036, %v1028
        %v1213 = vpack.c.b16 %v1037, %v1029
        %v1214 = vpack.c.b16 %v1038, %v1030
        %v1215 = vpack.c.b16 %v1047, %v1039
        %v1216 = vpack.c.b16 %v1048, %v1040
        %v1217 = vpack.c.b16 %v1049, %v1041
        %v1218 = vpack.c.b16 %v1050, %v1042
        %v1219 = vpack.c.b16 %v1051, %v1043
        %v1220 = vpack.c.b16 %v1052, %v1044
        %v1221 = vpack.c.b16 %v1053, %v1045
        %v1222 = vpack.c.b16 %v1054, %v1046
        %v1223 = vpack.c.b16 %v1063, %v1055
        %v1224 = vpack.c.b16 %v1064, %v1056
        %v1225 = vpack.c.b16 %v1065, %v1057
        %v1226 = vpack.c.b16 %v1066, %v1058
        %v1227 = vpack.c.b16 %v1067, %v1059
        %v1228 = vpack.c.b16 %v1068, %v1060
        %v1229 = vpack.c.b16 %v1069, %v1061
        %v1230 = vpack.c.b16 %v1070, %v1062
        %v1231 = vpack.c.b16 %v1079, %v1071
        %v1232 = vpack.c.b16 %v1080, %v1072
        %v1233 = vpack.c.b16 %v1081, %v1073
        %v1234 = vpack.c.b16 %v1082, %v1074
        %v1235 = vpack.c.b16 %v1083, %v1075
        %v1236 = vpack.c.b16 %v1084, %v1076
        %v1237 = vpack.c.b16 %v1085, %v1077
        %v1238 = vpack.c.b16 %v1086, %v1078
        %v1239 = vpack.c.b16 %v1095, %v1087
        %v1240 = vpack.c.b16 %v1096, %v1088
        %v1241 = vpack.c.b16 %v1097, %v1089
        %v1242 = vpack.c.b16 %v1098, %v1090
        %v1243 = vpack.c.b16 %v1099, %v1091
        %v1244 = vpack.c.b16 %v1100, %v1092
        %v1245 = vpack.c.b16 %v1101, %v1093
        %v1246 = vpack.c.b16 %v1102, %v1094
        %v1247 = vpack.c.b16 %v1111, %v1103
        %v1248 = vpack.c.b16 %v1112, %v1104
        %v1249 = vpack.c.b16 %v1113, %v1105
        %v1250 = vpack.c.b16 %v1114, %v1106
        %v1251 = vpack.c.b16 %v1115, %v1107
        %v1252 = vpack.c.b16 %v1116, %v1108
        %v1253 = vpack.c.b16 %v1117, %v1109
        %v1254 = vpack.c.b16 %v1118, %v1110
        %v1255 = vpack.c.b16 %v1127, %v1119
        %v1256 = vpack.c.b16 %v1128, %v1120
        %v1257 = vpack.c.b16 %v1129, %v1121
        %v1258 = vpack.c.b16 %v1130, %v1122
        %v1259 = vpack.c.b16 %v1131, %v1123
        %v1260 = vpack.c.b16 %v1132, %v1124
        %v1261 = vpack.c.b16 %v1133, %v1125
        %v1262 = vpack.c.b16 %v1134, %v1126
        %1391 = vmatpush.bf16.msra.mxu0 %v1191
        %1392 = vmatpush.bf16.msra.mxu0 %v1183
        %1393 = vmatpush.bf16.msra.mxu0 %v1175
        %1394 = vmatpush.bf16.msra.mxu0 %v1167
        %1395 = vmatpush.bf16.msra.mxu0 %v1159
        %1396 = vmatpush.bf16.msra.mxu0 %v1151
        %1397 = vmatpush.bf16.msra.mxu0 %v1143
        %1398 = vmatpush.bf16.msra.mxu0 %v1135
        %1399 = vmatmul.bf16.gmra.mxu0 %v619
        %v1400 = vpop.f32.mrf.mxu0
        %v1401 = vadd.f32 0.0, %v1400
        %v1402 = vpop.f32.mrf.mxu0
        %v1403 = vadd.f32 0.0, %v1402
        %1404 = vmatmul.bf16.gmra.mxu0 %v621
        %v1405 = vpop.f32.mrf.mxu0
        %v1406 = vadd.f32 0.0, %v1405
        %v1407 = vpop.f32.mrf.mxu0
        %v1408 = vadd.f32 0.0, %v1407
        %1409 = vdwg.mxu0
        %1410 = vmatpush.bf16.msra.mxu0 %v1255
        %1411 = vmatpush.bf16.msra.mxu0 %v1247
        %1412 = vmatpush.bf16.msra.mxu0 %v1239
        %1413 = vmatpush.bf16.msra.mxu0 %v1231
        %1414 = vmatpush.bf16.msra.mxu0 %v1223
        %1415 = vmatpush.bf16.msra.mxu0 %v1215
        %1416 = vmatpush.bf16.msra.mxu0 %v1207
        %1417 = vmatpush.bf16.msra.mxu0 %v1199
        %1418 = vmatmul.bf16.gmra.mxu0 %v620
        %v1419 = vpop.f32.mrf.mxu0
        %v1420 = vadd.f32 %v1401, %v1419
        %v1421 = vpop.f32.mrf.mxu0
        %v1422 = vadd.f32 %v1403, %v1421
        %1423 = vmatmul.bf16.gmra.mxu0 %v622
        %v1424 = vpop.f32.mrf.mxu0
        %v1425 = vadd.f32 %v1406, %v1424
        %v1426 = vpop.f32.mrf.mxu0
        %v1427 = vadd.f32 %v1408, %v1426
        %1428 = vdwg.mxu0
        %1429 = vmatpush.bf16.msra.mxu0 %v1192
        %1430 = vmatpush.bf16.msra.mxu0 %v1184
        %1431 = vmatpush.bf16.msra.mxu0 %v1176
        %1432 = vmatpush.bf16.msra.mxu0 %v1168
        %1433 = vmatpush.bf16.msra.mxu0 %v1160
        %1434 = vmatpush.bf16.msra.mxu0 %v1152
        %1435 = vmatpush.bf16.msra.mxu0 %v1144
        %1436 = vmatpush.bf16.msra.mxu0 %v1136
        %1437 = vmatmul.bf16.gmra.mxu0 %v619
        %v1438 = vpop.f32.mrf.mxu0
        %v1439 = vadd.f32 0.0, %v1438
        %v1440 = vpop.f32.mrf.mxu0
        %v1441 = vadd.f32 0.0, %v1440
        %1442 = vmatmul.bf16.gmra.mxu0 %v621
        %v1443 = vpop.f32.mrf.mxu0
        %v1444 = vadd.f32 0.0, %v1443
        %v1445 = vpop.f32.mrf.mxu0
        %v1446 = vadd.f32 0.0, %v1445
        %1447 = vdwg.mxu0
        %1448 = vmatpush.bf16.msra.mxu0 %v1256
        %1449 = vmatpush.bf16.msra.mxu0 %v1248
        %1450 = vmatpush.bf16.msra.mxu0 %v1240
        %1451 = vmatpush.bf16.msra.mxu0 %v1232
        %1452 = vmatpush.bf16.msra.mxu0 %v1224
        %1453 = vmatpush.bf16.msra.mxu0 %v1216
        %1454 = vmatpush.bf16.msra.mxu0 %v1208
        %1455 = vmatpush.bf16.msra.mxu0 %v1200
        %1456 = vmatmul.bf16.gmra.mxu0 %v620
        %v1457 = vpop.f32.mrf.mxu0
        %v1458 = vadd.f32 %v1439, %v1457
        %v1459 = vpop.f32.mrf.mxu0
        %v1460 = vadd.f32 %v1441, %v1459
        %1461 = vmatmul.bf16.gmra.mxu0 %v622
        %v1462 = vpop.f32.mrf.mxu0
        %v1463 = vadd.f32 %v1444, %v1462
        %v1464 = vpop.f32.mrf.mxu0
        %v1465 = vadd.f32 %v1446, %v1464
        %1466 = vdwg.mxu0
        %1467 = vmatpush.bf16.msra.mxu0 %v1193
        %1468 = vmatpush.bf16.msra.mxu0 %v1185
        %1469 = vmatpush.bf16.msra.mxu0 %v1177
        %1470 = vmatpush.bf16.msra.mxu0 %v1169
        %1471 = vmatpush.bf16.msra.mxu0 %v1161
        %1472 = vmatpush.bf16.msra.mxu0 %v1153
        %1473 = vmatpush.bf16.msra.mxu0 %v1145
        %1474 = vmatpush.bf16.msra.mxu0 %v1137
        %1475 = vmatmul.bf16.gmra.mxu0 %v619
        %v1476 = vpop.f32.mrf.mxu0
        %v1477 = vadd.f32 0.0, %v1476
        %v1478 = vpop.f32.mrf.mxu0
        %v1479 = vadd.f32 0.0, %v1478
        %1480 = vmatmul.bf16.gmra.mxu0 %v621
        %v1481 = vpop.f32.mrf.mxu0
        %v1482 = vadd.f32 0.0, %v1481
        %v1483 = vpop.f32.mrf.mxu0
        %v1484 = vadd.f32 0.0, %v1483
        %1485 = vdwg.mxu0
        %1486 = vmatpush.bf16.msra.mxu0 %v1257
        %1487 = vmatpush.bf16.msra.mxu0 %v1249
        %1488 = vmatpush.bf16.msra.mxu0 %v1241
        %1489 = vmatpush.bf16.msra.mxu0 %v1233
        %1490 = vmatpush.bf16.msra.mxu0 %v1225
        %1491 = vmatpush.bf16.msra.mxu0 %v1217
        %1492 = vmatpush.bf16.msra.mxu0 %v1209
        %1493 = vmatpush.bf16.msra.mxu0 %v1201
        %1494 = vmatmul.bf16.gmra.mxu0 %v620
        %v1495 = vpop.f32.mrf.mxu0
        %v1496 = vadd.f32 %v1477, %v1495
        %v1497 = vpop.f32.mrf.mxu0
        %v1498 = vadd.f32 %v1479, %v1497
        %1499 = vmatmul.bf16.gmra.mxu0 %v622
        %v1500 = vpop.f32.mrf.mxu0
        %v1501 = vadd.f32 %v1482, %v1500
        %v1502 = vpop.f32.mrf.mxu0
        %v1503 = vadd.f32 %v1484, %v1502
        %1504 = vdwg.mxu0
        %1505 = vmatpush.bf16.msra.mxu0 %v1194
        %1506 = vmatpush.bf16.msra.mxu0 %v1186
        %1507 = vmatpush.bf16.msra.mxu0 %v1178
        %1508 = vmatpush.bf16.msra.mxu0 %v1170
        %1509 = vmatpush.bf16.msra.mxu0 %v1162
        %1510 = vmatpush.bf16.msra.mxu0 %v1154
        %1511 = vmatpush.bf16.msra.mxu0 %v1146
        %1512 = vmatpush.bf16.msra.mxu0 %v1138
        %1513 = vmatmul.bf16.gmra.mxu0 %v619
        %v1514 = vpop.f32.mrf.mxu0
        %v1515 = vadd.f32 0.0, %v1514
        %v1516 = vpop.f32.mrf.mxu0
        %v1517 = vadd.f32 0.0, %v1516
        %1518 = vmatmul.bf16.gmra.mxu0 %v621
        %v1519 = vpop.f32.mrf.mxu0
        %v1520 = vadd.f32 0.0, %v1519
        %v1521 = vpop.f32.mrf.mxu0
        %v1522 = vadd.f32 0.0, %v1521
        %1523 = vdwg.mxu0
        %1524 = vmatpush.bf16.msra.mxu0 %v1258
        %1525 = vmatpush.bf16.msra.mxu0 %v1250
        %1526 = vmatpush.bf16.msra.mxu0 %v1242
        %1527 = vmatpush.bf16.msra.mxu0 %v1234
        %1528 = vmatpush.bf16.msra.mxu0 %v1226
        %1529 = vmatpush.bf16.msra.mxu0 %v1218
        %1530 = vmatpush.bf16.msra.mxu0 %v1210
        %1531 = vmatpush.bf16.msra.mxu0 %v1202
        %1532 = vmatmul.bf16.gmra.mxu0 %v620
        %v1533 = vpop.f32.mrf.mxu0
        %v1534 = vadd.f32 %v1515, %v1533
        %v1535 = vpop.f32.mrf.mxu0
        %v1536 = vadd.f32 %v1517, %v1535
        %1537 = vmatmul.bf16.gmra.mxu0 %v622
        %v1538 = vpop.f32.mrf.mxu0
        %v1539 = vadd.f32 %v1520, %v1538
        %v1540 = vpop.f32.mrf.mxu0
        %v1541 = vadd.f32 %v1522, %v1540
        %1542 = vdwg.mxu0
        %1543 = vmatpush.bf16.msra.mxu0 %v1195
        %1544 = vmatpush.bf16.msra.mxu0 %v1187
        %1545 = vmatpush.bf16.msra.mxu0 %v1179
        %1546 = vmatpush.bf16.msra.mxu0 %v1171
        %1547 = vmatpush.bf16.msra.mxu0 %v1163
        %1548 = vmatpush.bf16.msra.mxu0 %v1155
        %1549 = vmatpush.bf16.msra.mxu0 %v1147
        %1550 = vmatpush.bf16.msra.mxu0 %v1139
        %1551 = vmatmul.bf16.gmra.mxu0 %v619
        %v1552 = vpop.f32.mrf.mxu0
        %v1553 = vadd.f32 0.0, %v1552
        %v1554 = vpop.f32.mrf.mxu0
        %v1555 = vadd.f32 0.0, %v1554
        %1556 = vmatmul.bf16.gmra.mxu0 %v621
        %v1557 = vpop.f32.mrf.mxu0
        %v1558 = vadd.f32 0.0, %v1557
        %v1559 = vpop.f32.mrf.mxu0
        %v1560 = vadd.f32 0.0, %v1559
        %1561 = vdwg.mxu0
        %1562 = vmatpush.bf16.msra.mxu0 %v1259
        %1563 = vmatpush.bf16.msra.mxu0 %v1251
        %1564 = vmatpush.bf16.msra.mxu0 %v1243
        %1565 = vmatpush.bf16.msra.mxu0 %v1235
        %1566 = vmatpush.bf16.msra.mxu0 %v1227
        %1567 = vmatpush.bf16.msra.mxu0 %v1219
        %1568 = vmatpush.bf16.msra.mxu0 %v1211
        %1569 = vmatpush.bf16.msra.mxu0 %v1203
        %1570 = vmatmul.bf16.gmra.mxu0 %v620
        %v1571 = vpop.f32.mrf.mxu0
        %v1572 = vadd.f32 %v1553, %v1571
        %v1573 = vpop.f32.mrf.mxu0
        %v1574 = vadd.f32 %v1555, %v1573
        %1575 = vmatmul.bf16.gmra.mxu0 %v622
        %v1576 = vpop.f32.mrf.mxu0
        %v1577 = vadd.f32 %v1558, %v1576
        %v1578 = vpop.f32.mrf.mxu0
        %v1579 = vadd.f32 %v1560, %v1578
        %1580 = vdwg.mxu0
        %1581 = vmatpush.bf16.msra.mxu0 %v1196
        %1582 = vmatpush.bf16.msra.mxu0 %v1188
        %1583 = vmatpush.bf16.msra.mxu0 %v1180
        %1584 = vmatpush.bf16.msra.mxu0 %v1172
        %1585 = vmatpush.bf16.msra.mxu0 %v1164
        %1586 = vmatpush.bf16.msra.mxu0 %v1156
        %1587 = vmatpush.bf16.msra.mxu0 %v1148
        %1588 = vmatpush.bf16.msra.mxu0 %v1140
        %1589 = vmatmul.bf16.gmra.mxu0 %v619
        %v1590 = vpop.f32.mrf.mxu0
        %v1591 = vadd.f32 0.0, %v1590
        %v1592 = vpop.f32.mrf.mxu0
        %v1593 = vadd.f32 0.0, %v1592
        %1594 = vmatmul.bf16.gmra.mxu0 %v621
        %v1595 = vpop.f32.mrf.mxu0
        %v1596 = vadd.f32 0.0, %v1595
        %v1597 = vpop.f32.mrf.mxu0
        %v1598 = vadd.f32 0.0, %v1597
        %1599 = vdwg.mxu0
        %1600 = vmatpush.bf16.msra.mxu0 %v1260
        %1601 = vmatpush.bf16.msra.mxu0 %v1252
        %1602 = vmatpush.bf16.msra.mxu0 %v1244
        %1603 = vmatpush.bf16.msra.mxu0 %v1236
        %1604 = vmatpush.bf16.msra.mxu0 %v1228
        %1605 = vmatpush.bf16.msra.mxu0 %v1220
        %1606 = vmatpush.bf16.msra.mxu0 %v1212
        %1607 = vmatpush.bf16.msra.mxu0 %v1204
        %1608 = vmatmul.bf16.gmra.mxu0 %v620
        %v1609 = vpop.f32.mrf.mxu0
        %v1610 = vadd.f32 %v1591, %v1609
        %v1611 = vpop.f32.mrf.mxu0
        %v1612 = vadd.f32 %v1593, %v1611
        %1613 = vmatmul.bf16.gmra.mxu0 %v622
        %v1614 = vpop.f32.mrf.mxu0
        %v1615 = vadd.f32 %v1596, %v1614
        %v1616 = vpop.f32.mrf.mxu0
        %v1617 = vadd.f32 %v1598, %v1616
        %1618 = vdwg.mxu0
        %1619 = vmatpush.bf16.msra.mxu0 %v1197
        %1620 = vmatpush.bf16.msra.mxu0 %v1189
        %1621 = vmatpush.bf16.msra.mxu0 %v1181
        %1622 = vmatpush.bf16.msra.mxu0 %v1173
        %1623 = vmatpush.bf16.msra.mxu0 %v1165
        %1624 = vmatpush.bf16.msra.mxu0 %v1157
        %1625 = vmatpush.bf16.msra.mxu0 %v1149
        %1626 = vmatpush.bf16.msra.mxu0 %v1141
        %1627 = vmatmul.bf16.gmra.mxu0 %v619
        %v1628 = vpop.f32.mrf.mxu0
        %v1629 = vadd.f32 0.0, %v1628
        %v1630 = vpop.f32.mrf.mxu0
        %v1631 = vadd.f32 0.0, %v1630
        %1632 = vmatmul.bf16.gmra.mxu0 %v621
        %v1633 = vpop.f32.mrf.mxu0
        %v1634 = vadd.f32 0.0, %v1633
        %v1635 = vpop.f32.mrf.mxu0
        %v1636 = vadd.f32 0.0, %v1635
        %1637 = vdwg.mxu0
        %1638 = vmatpush.bf16.msra.mxu0 %v1261
        %1639 = vmatpush.bf16.msra.mxu0 %v1253
        %1640 = vmatpush.bf16.msra.mxu0 %v1245
        %1641 = vmatpush.bf16.msra.mxu0 %v1237
        %1642 = vmatpush.bf16.msra.mxu0 %v1229
        %1643 = vmatpush.bf16.msra.mxu0 %v1221
        %1644 = vmatpush.bf16.msra.mxu0 %v1213
        %1645 = vmatpush.bf16.msra.mxu0 %v1205
        %1646 = vmatmul.bf16.gmra.mxu0 %v620
        %v1647 = vpop.f32.mrf.mxu0
        %v1648 = vadd.f32 %v1629, %v1647
        %v1649 = vpop.f32.mrf.mxu0
        %v1650 = vadd.f32 %v1631, %v1649
        %1651 = vmatmul.bf16.gmra.mxu0 %v622
        %v1652 = vpop.f32.mrf.mxu0
        %v1653 = vadd.f32 %v1634, %v1652
        %v1654 = vpop.f32.mrf.mxu0
        %v1655 = vadd.f32 %v1636, %v1654
        %1656 = vdwg.mxu0
        %1657 = vmatpush.bf16.msra.mxu0 %v1198
        %1658 = vmatpush.bf16.msra.mxu0 %v1190
        %1659 = vmatpush.bf16.msra.mxu0 %v1182
        %1660 = vmatpush.bf16.msra.mxu0 %v1174
        %1661 = vmatpush.bf16.msra.mxu0 %v1166
        %1662 = vmatpush.bf16.msra.mxu0 %v1158
        %1663 = vmatpush.bf16.msra.mxu0 %v1150
        %1664 = vmatpush.bf16.msra.mxu0 %v1142
        %1665 = vmatmul.bf16.gmra.mxu0 %v619
        %v1666 = vpop.f32.mrf.mxu0
        %v1667 = vadd.f32 0.0, %v1666
        %v1668 = vpop.f32.mrf.mxu0
        %v1669 = vadd.f32 0.0, %v1668
        %1670 = vmatmul.bf16.gmra.mxu0 %v621
        %v1671 = vpop.f32.mrf.mxu0
        %v1672 = vadd.f32 0.0, %v1671
        %v1673 = vpop.f32.mrf.mxu0
        %v1674 = vadd.f32 0.0, %v1673
        %1675 = vdwg.mxu0
        %1676 = vmatpush.bf16.msra.mxu0 %v1262
        %1677 = vmatpush.bf16.msra.mxu0 %v1254
        %1678 = vmatpush.bf16.msra.mxu0 %v1246
        %1679 = vmatpush.bf16.msra.mxu0 %v1238
        %1680 = vmatpush.bf16.msra.mxu0 %v1230
        %1681 = vmatpush.bf16.msra.mxu0 %v1222
        %1682 = vmatpush.bf16.msra.mxu0 %v1214
        %1683 = vmatpush.bf16.msra.mxu0 %v1206
        %1684 = vmatmul.bf16.gmra.mxu0 %v620
        %v1685 = vpop.f32.mrf.mxu0
        %v1686 = vadd.f32 %v1667, %v1685
        %v1687 = vpop.f32.mrf.mxu0
        %v1688 = vadd.f32 %v1669, %v1687
        %1689 = vmatmul.bf16.gmra.mxu0 %v622
        %v1690 = vpop.f32.mrf.mxu0
        %v1691 = vadd.f32 %v1672, %v1690
        %v1692 = vpop.f32.mrf.mxu0
        %v1693 = vadd.f32 %v1674, %v1692
        %1694 = vdwg.mxu0
        %v1695 = vld [vmem:[%s1] ss:$8 sm:$0xf]
        %v1696 = vld [vmem:[%s1] ss:$8 sm:$0xf0]
        %v1697 = vor.u32 %v1695, %v1696
        %s1698 = scalar_lea.vmem %s1, 1
        %v1699 = vld [vmem:[%s1698] ss:$8 sm:$0xf]
        %v1700 = vld [vmem:[%s1698] ss:$8 sm:$0xf0]
        %v1701 = vor.u32 %v1699, %v1700
        %s1702 = scalar_lea.vmem %s1, 2
        %v1703 = vld [vmem:[%s1702] ss:$8 sm:$0xf]
        %v1704 = vld [vmem:[%s1702] ss:$8 sm:$0xf0]
        %v1705 = vor.u32 %v1703, %v1704
        %s1706 = scalar_lea.vmem %s1, 3
        %v1707 = vld [vmem:[%s1706] ss:$8 sm:$0xf]
        %v1708 = vld [vmem:[%s1706] ss:$8 sm:$0xf0]
        %v1709 = vor.u32 %v1707, %v1708
        %s1710 = scalar_lea.vmem %s1, 4
        %v1711 = vld [vmem:[%s1710] ss:$8 sm:$0xf]
        %v1712 = vld [vmem:[%s1710] ss:$8 sm:$0xf0]
        %v1713 = vor.u32 %v1711, %v1712
        %s1714 = scalar_lea.vmem %s1, 5
        %v1715 = vld [vmem:[%s1714] ss:$8 sm:$0xf]
        %v1716 = vld [vmem:[%s1714] ss:$8 sm:$0xf0]
        %v1717 = vor.u32 %v1715, %v1716
        %v1718 = vld [vmem:[%s1] sm:$0xc0]
        %v1719 = vld [vmem:[%s1 + $0x8] sm:$0xc0]
        %v1720 = vld [vmem:[%s1 + $0x10] sm:$0xc0]
        %v1721 = vld [vmem:[%s1 + $0x18] sm:$0xc0]
        %v1722 = vld [vmem:[%s1 + $0x20] sm:$0xc0]
        %v1723 = vld [vmem:[%s1 + $0x28] sm:$0xc0]
        %v1724 = vld [vmem:[%s1 + $0x30] sm:$0xc0]
        %v1725 = vld [vmem:[%s1 + $0x38] sm:$0xc0]
        %v1726 = vld [vmem:[%s1 + $0x40] sm:$0x7f]
        %v1727 = vld [vmem:[%s1 + $0x48] sm:$0x7f]
        %v1728 = vld [vmem:[%s1 + $0x50] sm:$0x7f]
        %v1729 = vld [vmem:[%s1 + $0x58] sm:$0x7f]
        %v1730 = vld [vmem:[%s1 + $0x60] sm:$0x7f]
        %v1731 = vld [vmem:[%s1 + $0x68] sm:$0x7f]
        %v1732 = vld [vmem:[%s1 + $0x70] sm:$0x7f]
        %v1733 = vld [vmem:[%s1 + $0x78] sm:$0x7f]
        %v1734 = vlaneseq
        %v1735 = vshrl.u32 %v1734, 7
        %v1736 = vadd.s32 %v1735, 8
        %v1737 = vcvt.s32.f32 %v1735
        %v1738 = vcvt.s32.f32 %v1736
        %v1747 = vrot.slane %v1458, 7
        %v1748 = vrot.slane %v1496, 6
        %v1749 = vrot.slane %v1534, 5
        %v1750 = vrot.slane %v1572, 4
        %v1751 = vrot.slane %v1610, 3
        %v1752 = vrot.slane %v1648, 2
        %v1753 = vrot.slane %v1686, 1
        %vm1754 = vcmask 1040384
        %v1755 = vsel %vm1754, %v1420, %v1747
        %vm1756 = vcmask 1042434
        %v1757 = vsel %vm1756, %v1748, %v1749
        %vm1758 = vcmask 1041408
        %v1759 = vsel %vm1758, %v1755, %v1757
        %vm1760 = vcmask 1044484
        %v1761 = vsel %vm1760, %v1750, %v1751
        %vm1762 = vcmask 1046534
        %v1763 = vsel %vm1762, %v1752, %v1753
        %vm1764 = vcmask 1045508
        %v1765 = vsel %vm1764, %v1761, %v1763
        %vm1766 = vcmask 1043456
        %v1767 = vsel %vm1766, %v1759, %v1765
        %v1769 = vmul.f32 %v1697, %v1767
        %v1770 = vadd.f32 %v1769, 0.0
        %1771 = vst [vmem:[#allocation1] sm:$0xff] %v1420
        %1772 = vst [vmem:[#allocation1 + $0x9] sm:$0xff] %v1458
        %1773 = vst [vmem:[#allocation1 + $0x12] sm:$0xff] %v1496
        %1774 = vst [vmem:[#allocation1 + $0x1b] sm:$0xff] %v1534
        %1775 = vst [vmem:[#allocation1 + $0x24] sm:$0xff] %v1572
        %1776 = vst [vmem:[#allocation1 + $0x2d] sm:$0xff] %v1610
        %1777 = vst [vmem:[#allocation1 + $0x36] sm:$0xff] %v1648
        %1778 = vst [vmem:[#allocation1 + $0x3f] sm:$0xff] %v1686
        %s1779 = scalar_lea.vmem [#allocation1], 1
        %v1780 = vld [vmem:[%s1779] ss:$9 sm:$0xff]
        %v1782 = vmul.f32 %v1697, %v1780
        %v1783 = vadd.f32 %v1782, 0.0
        %1784 = vst [vmem:[#allocation1] sm:$0xff] %v1420
        %1785 = vst [vmem:[#allocation1 + $0x9] sm:$0xff] %v1458
        %1786 = vst [vmem:[#allocation1 + $0x12] sm:$0xff] %v1496
        %1787 = vst [vmem:[#allocation1 + $0x1b] sm:$0xff] %v1534
        %1788 = vst [vmem:[#allocation1 + $0x24] sm:$0xff] %v1572
        %1789 = vst [vmem:[#allocation1 + $0x2d] sm:$0xff] %v1610
        %1790 = vst [vmem:[#allocation1 + $0x36] sm:$0xff] %v1648
        %1791 = vst [vmem:[#allocation1 + $0x3f] sm:$0xff] %v1686
        %s1792 = scalar_lea.vmem [#allocation1], 2
        %v1793 = vld [vmem:[%s1792] ss:$9 sm:$0xff]
        %v1795 = vmul.f32 %v1701, %v1793
        %v1796 = vadd.f32 %v1770, %v1795
        %1797 = vst [vmem:[#allocation1] sm:$0xff] %v1420
        %1798 = vst [vmem:[#allocation1 + $0x9] sm:$0xff] %v1458
        %1799 = vst [vmem:[#allocation1 + $0x12] sm:$0xff] %v1496
        %1800 = vst [vmem:[#allocation1 + $0x1b] sm:$0xff] %v1534
        %1801 = vst [vmem:[#allocation1 + $0x24] sm:$0xff] %v1572
        %1802 = vst [vmem:[#allocation1 + $0x2d] sm:$0xff] %v1610
        %1803 = vst [vmem:[#allocation1 + $0x36] sm:$0xff] %v1648
        %1804 = vst [vmem:[#allocation1 + $0x3f] sm:$0xff] %v1686
        %s1805 = scalar_lea.vmem [#allocation1], 3
        %v1806 = vld [vmem:[%s1805] ss:$9 sm:$0xff]
        %v1808 = vmul.f32 %v1701, %v1806
        %v1809 = vadd.f32 %v1783, %v1808
        %1810 = vst [vmem:[#allocation1] sm:$0xff] %v1420
        %1811 = vst [vmem:[#allocation1 + $0x9] sm:$0xff] %v1458
        %1812 = vst [vmem:[#allocation1 + $0x12] sm:$0xff] %v1496
        %1813 = vst [vmem:[#allocation1 + $0x1b] sm:$0xff] %v1534
        %1814 = vst [vmem:[#allocation1 + $0x24] sm:$0xff] %v1572
        %1815 = vst [vmem:[#allocation1 + $0x2d] sm:$0xff] %v1610
        %1816 = vst [vmem:[#allocation1 + $0x36] sm:$0xff] %v1648
        %1817 = vst [vmem:[#allocation1 + $0x3f] sm:$0xff] %v1686
        %s1818 = scalar_lea.vmem [#allocation1], 4
        %v1819 = vld [vmem:[%s1818] ss:$9 sm:$0xff]
        %v1821 = vmul.f32 %v1705, %v1819
        %v1822 = vadd.f32 %v1796, %v1821
        %1823 = vst [vmem:[#allocation1] sm:$0xff] %v1420
        %1824 = vst [vmem:[#allocation1 + $0x9] sm:$0xff] %v1458
        %1825 = vst [vmem:[#allocation1 + $0x12] sm:$0xff] %v1496
        %1826 = vst [vmem:[#allocation1 + $0x1b] sm:$0xff] %v1534
        %1827 = vst [vmem:[#allocation1 + $0x24] sm:$0xff] %v1572
        %1828 = vst [vmem:[#allocation1 + $0x2d] sm:$0xff] %v1610
        %1829 = vst [vmem:[#allocation1 + $0x36] sm:$0xff] %v1648
        %1830 = vst [vmem:[#allocation1 + $0x3f] sm:$0xff] %v1686
        %s1831 = scalar_lea.vmem [#allocation1], 5
        %v1832 = vld [vmem:[%s1831] ss:$9 sm:$0xff]
        %v1834 = vmul.f32 %v1705, %v1832
        %v1835 = vadd.f32 %v1809, %v1834
        %1836 = vst [vmem:[#allocation1] sm:$0xff] %v1420
        %1837 = vst [vmem:[#allocation1 + $0x9] sm:$0xff] %v1458
        %1838 = vst [vmem:[#allocation1 + $0x12] sm:$0xff] %v1496
        %1839 = vst [vmem:[#allocation1 + $0x1b] sm:$0xff] %v1534
        %1840 = vst [vmem:[#allocation1 + $0x24] sm:$0xff] %v1572
        %1841 = vst [vmem:[#allocation1 + $0x2d] sm:$0xff] %v1610
        %1842 = vst [vmem:[#allocation1 + $0x36] sm:$0xff] %v1648
        %1843 = vst [vmem:[#allocation1 + $0x3f] sm:$0xff] %v1686
        %s1844 = scalar_lea.vmem [#allocation1], 6
        %v1845 = vld [vmem:[%s1844] ss:$9 sm:$0xff]
        %v1847 = vmul.f32 %v1709, %v1845
        %v1848 = vadd.f32 %v1822, %v1847
        %1849 = vst [vmem:[#allocation1] sm:$0xff] %v1420
        %1850 = vst [vmem:[#allocation1 + $0x9] sm:$0xff] %v1458
        %1851 = vst [vmem:[#allocation1 + $0x12] sm:$0xff] %v1496
        %1852 = vst [vmem:[#allocation1 + $0x1b] sm:$0xff] %v1534
        %1853 = vst [vmem:[#allocation1 + $0x24] sm:$0xff] %v1572
        %1854 = vst [vmem:[#allocation1 + $0x2d] sm:$0xff] %v1610
        %1855 = vst [vmem:[#allocation1 + $0x36] sm:$0xff] %v1648
        %1856 = vst [vmem:[#allocation1 + $0x3f] sm:$0xff] %v1686
        %s1857 = scalar_lea.vmem [#allocation1], 7
        %v1858 = vld [vmem:[%s1857] ss:$9 sm:$0xff]
        %v1860 = vmul.f32 %v1709, %v1858
        %v1861 = vadd.f32 %v1835, %v1860
        %v1862 = vmul.f32 %v1848, 0.5
        %v1863 = vadd.f32 %v1713, %v1862
        %v1864 = vmax.f32 %v1863, 0.0
        %v1865 = vmin.f32 %v1864, 15.0
        %v1866 = vmul.f32 %v1861, 0.5
        %v1867 = vadd.f32 %v1717, %v1866
        %v1868 = vmax.f32 %v1867, 0.0
        %v1869 = vmin.f32 %v1868, 15.0
        %v1870 = vfloor.f32 %v1865
        %v1871 = vfloor.f32 %v1869
        %v1872 = vsub.f32 %v1865, %v1870
        %v1873 = vsub.f32 %v1869, %v1871
        %v1874 = vadd.f32 %v1870, 1.0
        %v1875 = vmin.f32 %v1874, 15.0
        %v1876 = vadd.f32 %v1871, 1.0
        %v1877 = vmin.f32 %v1876, 15.0
        %v1879 = vperm.slane %v1871, 0
        %v1880 = vperm.slane %v1871, 1
        %v1881 = vperm.slane %v1871, 2
        %v1882 = vperm.slane %v1871, 3
        %v1883 = vperm.slane %v1871, 4
        %v1884 = vperm.slane %v1871, 5
        %v1885 = vperm.slane %v1871, 6
        %v1886 = vperm.slane %v1871, 7
        %vm1895 = vcmp.eq.f32.partialorder %v1737, %v1879
        %vm1896 = vcmp.eq.f32.partialorder %v1737, %v1880
        %vm1897 = vcmp.eq.f32.partialorder %v1737, %v1881
        %vm1898 = vcmp.eq.f32.partialorder %v1737, %v1882
        %vm1899 = vcmp.eq.f32.partialorder %v1737, %v1883
        %vm1900 = vcmp.eq.f32.partialorder %v1737, %v1884
        %vm1901 = vcmp.eq.f32.partialorder %v1737, %v1885
        %vm1902 = vcmp.eq.f32.partialorder %v1737, %v1886
        %vm1903 = vcmp.eq.f32.partialorder %v1738, %v1879
        %vm1904 = vcmp.eq.f32.partialorder %v1738, %v1880
        %vm1905 = vcmp.eq.f32.partialorder %v1738, %v1881
        %vm1906 = vcmp.eq.f32.partialorder %v1738, %v1882
        %vm1907 = vcmp.eq.f32.partialorder %v1738, %v1883
        %vm1908 = vcmp.eq.f32.partialorder %v1738, %v1884
        %vm1909 = vcmp.eq.f32.partialorder %v1738, %v1885
        %vm1910 = vcmp.eq.f32.partialorder %v1738, %v1886
        %v1911 = vsub.f32 1.0, %v1873
        %v1913 = vperm.slane %v1911, 0
        %v1914 = vperm.slane %v1911, 1
        %v1915 = vperm.slane %v1911, 2
        %v1916 = vperm.slane %v1911, 3
        %v1917 = vperm.slane %v1911, 4
        %v1918 = vperm.slane %v1911, 5
        %v1919 = vperm.slane %v1911, 6
        %v1920 = vperm.slane %v1911, 7
        %v1929 = vsel %vm1895, %v1913, 0.0
        %v1930 = vsel %vm1896, %v1914, 0.0
        %v1931 = vsel %vm1897, %v1915, 0.0
        %v1932 = vsel %vm1898, %v1916, 0.0
        %v1933 = vsel %vm1899, %v1917, 0.0
        %v1934 = vsel %vm1900, %v1918, 0.0
        %v1935 = vsel %vm1901, %v1919, 0.0
        %v1936 = vsel %vm1902, %v1920, 0.0
        %v1937 = vsel %vm1903, %v1913, 0.0
        %v1938 = vsel %vm1904, %v1914, 0.0
        %v1939 = vsel %vm1905, %v1915, 0.0
        %v1940 = vsel %vm1906, %v1916, 0.0
        %v1941 = vsel %vm1907, %v1917, 0.0
        %v1942 = vsel %vm1908, %v1918, 0.0
        %v1943 = vsel %vm1909, %v1919, 0.0
        %v1944 = vsel %vm1910, %v1920, 0.0
        %v1946 = vperm.slane %v1877, 0
        %v1947 = vperm.slane %v1877, 1
        %v1948 = vperm.slane %v1877, 2
        %v1949 = vperm.slane %v1877, 3
        %v1950 = vperm.slane %v1877, 4
        %v1951 = vperm.slane %v1877, 5
        %v1952 = vperm.slane %v1877, 6
        %v1953 = vperm.slane %v1877, 7
        %vm1962 = vcmp.eq.f32.partialorder %v1737, %v1946
        %vm1963 = vcmp.eq.f32.partialorder %v1737, %v1947
        %vm1964 = vcmp.eq.f32.partialorder %v1737, %v1948
        %vm1965 = vcmp.eq.f32.partialorder %v1737, %v1949
        %vm1966 = vcmp.eq.f32.partialorder %v1737, %v1950
        %vm1967 = vcmp.eq.f32.partialorder %v1737, %v1951
        %vm1968 = vcmp.eq.f32.partialorder %v1737, %v1952
        %vm1969 = vcmp.eq.f32.partialorder %v1737, %v1953
        %vm1970 = vcmp.eq.f32.partialorder %v1738, %v1946
        %vm1971 = vcmp.eq.f32.partialorder %v1738, %v1947
        %vm1972 = vcmp.eq.f32.partialorder %v1738, %v1948
        %vm1973 = vcmp.eq.f32.partialorder %v1738, %v1949
        %vm1974 = vcmp.eq.f32.partialorder %v1738, %v1950
        %vm1975 = vcmp.eq.f32.partialorder %v1738, %v1951
        %vm1976 = vcmp.eq.f32.partialorder %v1738, %v1952
        %vm1977 = vcmp.eq.f32.partialorder %v1738, %v1953
        %v1979 = vperm.slane %v1873, 0
        %v1980 = vperm.slane %v1873, 1
        %v1981 = vperm.slane %v1873, 2
        %v1982 = vperm.slane %v1873, 3
        %v1983 = vperm.slane %v1873, 4
        %v1984 = vperm.slane %v1873, 5
        %v1985 = vperm.slane %v1873, 6
        %v1986 = vperm.slane %v1873, 7
        %v1995 = vsel %vm1962, %v1979, 0.0
        %v1996 = vsel %vm1963, %v1980, 0.0
        %v1997 = vsel %vm1964, %v1981, 0.0
        %v1998 = vsel %vm1965, %v1982, 0.0
        %v1999 = vsel %vm1966, %v1983, 0.0
        %v2000 = vsel %vm1967, %v1984, 0.0
        %v2001 = vsel %vm1968, %v1985, 0.0
        %v2002 = vsel %vm1969, %v1986, 0.0
        %v2003 = vsel %vm1970, %v1979, 0.0
        %v2004 = vsel %vm1971, %v1980, 0.0
        %v2005 = vsel %vm1972, %v1981, 0.0
        %v2006 = vsel %vm1973, %v1982, 0.0
        %v2007 = vsel %vm1974, %v1983, 0.0
        %v2008 = vsel %vm1975, %v1984, 0.0
        %v2009 = vsel %vm1976, %v1985, 0.0
        %v2010 = vsel %vm1977, %v1986, 0.0
        %v2011 = vadd.f32 %v1929, %v1995
        %v2012 = vadd.f32 %v1930, %v1996
        %v2013 = vadd.f32 %v1931, %v1997
        %v2014 = vadd.f32 %v1932, %v1998
        %v2015 = vadd.f32 %v1933, %v1999
        %v2016 = vadd.f32 %v1934, %v2000
        %v2017 = vadd.f32 %v1935, %v2001
        %v2018 = vadd.f32 %v1936, %v2002
        %v2019 = vadd.f32 %v1937, %v2003
        %v2020 = vadd.f32 %v1938, %v2004
        %v2021 = vadd.f32 %v1939, %v2005
        %v2022 = vadd.f32 %v1940, %v2006
        %v2023 = vadd.f32 %v1941, %v2007
        %v2024 = vadd.f32 %v1942, %v2008
        %v2025 = vadd.f32 %v1943, %v2009
        %v2026 = vadd.f32 %v1944, %v2010
        %v2028 = vperm.slane %v1870, 0
        %v2029 = vperm.slane %v1870, 1
        %v2030 = vperm.slane %v1870, 2
        %v2031 = vperm.slane %v1870, 3
        %v2032 = vperm.slane %v1870, 4
        %v2033 = vperm.slane %v1870, 5
        %v2034 = vperm.slane %v1870, 6
        %v2035 = vperm.slane %v1870, 7
        %vm2044 = vcmp.eq.f32.partialorder %v1737, %v2028
        %vm2045 = vcmp.eq.f32.partialorder %v1737, %v2029
        %vm2046 = vcmp.eq.f32.partialorder %v1737, %v2030
        %vm2047 = vcmp.eq.f32.partialorder %v1737, %v2031
        %vm2048 = vcmp.eq.f32.partialorder %v1737, %v2032
        %vm2049 = vcmp.eq.f32.partialorder %v1737, %v2033
        %vm2050 = vcmp.eq.f32.partialorder %v1737, %v2034
        %vm2051 = vcmp.eq.f32.partialorder %v1737, %v2035
        %vm2052 = vcmp.eq.f32.partialorder %v1738, %v2028
        %vm2053 = vcmp.eq.f32.partialorder %v1738, %v2029
        %vm2054 = vcmp.eq.f32.partialorder %v1738, %v2030
        %vm2055 = vcmp.eq.f32.partialorder %v1738, %v2031
        %vm2056 = vcmp.eq.f32.partialorder %v1738, %v2032
        %vm2057 = vcmp.eq.f32.partialorder %v1738, %v2033
        %vm2058 = vcmp.eq.f32.partialorder %v1738, %v2034
        %vm2059 = vcmp.eq.f32.partialorder %v1738, %v2035
        %v2060 = vsub.f32 1.0, %v1872
        %v2062 = vperm.slane %v2060, 0
        %v2063 = vperm.slane %v2060, 1
        %v2064 = vperm.slane %v2060, 2
        %v2065 = vperm.slane %v2060, 3
        %v2066 = vperm.slane %v2060, 4
        %v2067 = vperm.slane %v2060, 5
        %v2068 = vperm.slane %v2060, 6
        %v2069 = vperm.slane %v2060, 7
        %v2078 = vsel %vm2044, %v2062, 0.0
        %v2079 = vsel %vm2045, %v2063, 0.0
        %v2080 = vsel %vm2046, %v2064, 0.0
        %v2081 = vsel %vm2047, %v2065, 0.0
        %v2082 = vsel %vm2048, %v2066, 0.0
        %v2083 = vsel %vm2049, %v2067, 0.0
        %v2084 = vsel %vm2050, %v2068, 0.0
        %v2085 = vsel %vm2051, %v2069, 0.0
        %v2086 = vsel %vm2052, %v2062, 0.0
        %v2087 = vsel %vm2053, %v2063, 0.0
        %v2088 = vsel %vm2054, %v2064, 0.0
        %v2089 = vsel %vm2055, %v2065, 0.0
        %v2090 = vsel %vm2056, %v2066, 0.0
        %v2091 = vsel %vm2057, %v2067, 0.0
        %v2092 = vsel %vm2058, %v2068, 0.0
        %v2093 = vsel %vm2059, %v2069, 0.0
        %v2095 = vperm.slane %v1875, 0
        %v2096 = vperm.slane %v1875, 1
        %v2097 = vperm.slane %v1875, 2
        %v2098 = vperm.slane %v1875, 3
        %v2099 = vperm.slane %v1875, 4
        %v2100 = vperm.slane %v1875, 5
        %v2101 = vperm.slane %v1875, 6
        %v2102 = vperm.slane %v1875, 7
        %vm2111 = vcmp.eq.f32.partialorder %v1737, %v2095
        %vm2112 = vcmp.eq.f32.partialorder %v1737, %v2096
        %vm2113 = vcmp.eq.f32.partialorder %v1737, %v2097
        %vm2114 = vcmp.eq.f32.partialorder %v1737, %v2098
        %vm2115 = vcmp.eq.f32.partialorder %v1737, %v2099
        %vm2116 = vcmp.eq.f32.partialorder %v1737, %v2100
        %vm2117 = vcmp.eq.f32.partialorder %v1737, %v2101
        %vm2118 = vcmp.eq.f32.partialorder %v1737, %v2102
        %vm2119 = vcmp.eq.f32.partialorder %v1738, %v2095
        %vm2120 = vcmp.eq.f32.partialorder %v1738, %v2096
        %vm2121 = vcmp.eq.f32.partialorder %v1738, %v2097
        %vm2122 = vcmp.eq.f32.partialorder %v1738, %v2098
        %vm2123 = vcmp.eq.f32.partialorder %v1738, %v2099
        %vm2124 = vcmp.eq.f32.partialorder %v1738, %v2100
        %vm2125 = vcmp.eq.f32.partialorder %v1738, %v2101
        %vm2126 = vcmp.eq.f32.partialorder %v1738, %v2102
        %v2128 = vperm.slane %v1872, 0
        %v2129 = vperm.slane %v1872, 1
        %v2130 = vperm.slane %v1872, 2
        %v2131 = vperm.slane %v1872, 3
        %v2132 = vperm.slane %v1872, 4
        %v2133 = vperm.slane %v1872, 5
        %v2134 = vperm.slane %v1872, 6
        %v2135 = vperm.slane %v1872, 7
        %v2144 = vsel %vm2111, %v2128, 0.0
        %v2145 = vsel %vm2112, %v2129, 0.0
        %v2146 = vsel %vm2113, %v2130, 0.0
        %v2147 = vsel %vm2114, %v2131, 0.0
        %v2148 = vsel %vm2115, %v2132, 0.0
        %v2149 = vsel %vm2116, %v2133, 0.0
        %v2150 = vsel %vm2117, %v2134, 0.0
        %v2151 = vsel %vm2118, %v2135, 0.0
        %v2152 = vsel %vm2119, %v2128, 0.0
        %v2153 = vsel %vm2120, %v2129, 0.0
        %v2154 = vsel %vm2121, %v2130, 0.0
        %v2155 = vsel %vm2122, %v2131, 0.0
        %v2156 = vsel %vm2123, %v2132, 0.0
        %v2157 = vsel %vm2124, %v2133, 0.0
        %v2158 = vsel %vm2125, %v2134, 0.0
        %v2159 = vsel %vm2126, %v2135, 0.0
        %v2160 = vadd.f32 %v2078, %v2144
        %v2161 = vadd.f32 %v2079, %v2145
        %v2162 = vadd.f32 %v2080, %v2146
        %v2163 = vadd.f32 %v2081, %v2147
        %v2164 = vadd.f32 %v2082, %v2148
        %v2165 = vadd.f32 %v2083, %v2149
        %v2166 = vadd.f32 %v2084, %v2150
        %v2167 = vadd.f32 %v2085, %v2151
        %v2168 = vadd.f32 %v2086, %v2152
        %v2169 = vadd.f32 %v2087, %v2153
        %v2170 = vadd.f32 %v2088, %v2154
        %v2171 = vadd.f32 %v2089, %v2155
        %v2172 = vadd.f32 %v2090, %v2156
        %v2173 = vadd.f32 %v2091, %v2157
        %v2174 = vadd.f32 %v2092, %v2158
        %v2175 = vadd.f32 %v2093, %v2159
        %v2176 = vperm.slane %v2011, 0
        %v2177 = vperm.slane %v2012, 0
        %v2178 = vperm.slane %v2013, 0
        %v2179 = vperm.slane %v2014, 0
        %v2180 = vperm.slane %v2015, 0
        %v2181 = vperm.slane %v2016, 0
        %v2182 = vperm.slane %v2017, 0
        %v2183 = vperm.slane %v2018, 0
        %v2184 = vmul.f32 %v2176, %v2160
        %v2185 = vmul.f32 %v2177, %v2161
        %v2186 = vmul.f32 %v2178, %v2162
        %v2187 = vmul.f32 %v2179, %v2163
        %v2188 = vmul.f32 %v2180, %v2164
        %v2189 = vmul.f32 %v2181, %v2165
        %v2190 = vmul.f32 %v2182, %v2166
        %v2191 = vmul.f32 %v2183, %v2167
        %v2192 = vmul.f32 %v2176, %v2168
        %v2193 = vmul.f32 %v2177, %v2169
        %v2194 = vmul.f32 %v2178, %v2170
        %v2195 = vmul.f32 %v2179, %v2171
        %v2196 = vmul.f32 %v2180, %v2172
        %v2197 = vmul.f32 %v2181, %v2173
        %v2198 = vmul.f32 %v2182, %v2174
        %v2199 = vmul.f32 %v2183, %v2175
        %v2200 = vperm.slane %v2011, 1
        %v2201 = vperm.slane %v2012, 1
        %v2202 = vperm.slane %v2013, 1
        %v2203 = vperm.slane %v2014, 1
        %v2204 = vperm.slane %v2015, 1
        %v2205 = vperm.slane %v2016, 1
        %v2206 = vperm.slane %v2017, 1
        %v2207 = vperm.slane %v2018, 1
        %v2208 = vmul.f32 %v2200, %v2160
        %v2209 = vmul.f32 %v2201, %v2161
        %v2210 = vmul.f32 %v2202, %v2162
        %v2211 = vmul.f32 %v2203, %v2163
        %v2212 = vmul.f32 %v2204, %v2164
        %v2213 = vmul.f32 %v2205, %v2165
        %v2214 = vmul.f32 %v2206, %v2166
        %v2215 = vmul.f32 %v2207, %v2167
        %v2216 = vmul.f32 %v2200, %v2168
        %v2217 = vmul.f32 %v2201, %v2169
        %v2218 = vmul.f32 %v2202, %v2170
        %v2219 = vmul.f32 %v2203, %v2171
        %v2220 = vmul.f32 %v2204, %v2172
        %v2221 = vmul.f32 %v2205, %v2173
        %v2222 = vmul.f32 %v2206, %v2174
        %v2223 = vmul.f32 %v2207, %v2175
        %v2224 = vperm.slane %v2011, 2
        %v2225 = vperm.slane %v2012, 2
        %v2226 = vperm.slane %v2013, 2
        %v2227 = vperm.slane %v2014, 2
        %v2228 = vperm.slane %v2015, 2
        %v2229 = vperm.slane %v2016, 2
        %v2230 = vperm.slane %v2017, 2
        %v2231 = vperm.slane %v2018, 2
        %v2232 = vmul.f32 %v2224, %v2160
        %v2233 = vmul.f32 %v2225, %v2161
        %v2234 = vmul.f32 %v2226, %v2162
        %v2235 = vmul.f32 %v2227, %v2163
        %v2236 = vmul.f32 %v2228, %v2164
        %v2237 = vmul.f32 %v2229, %v2165
        %v2238 = vmul.f32 %v2230, %v2166
        %v2239 = vmul.f32 %v2231, %v2167
        %v2240 = vmul.f32 %v2224, %v2168
        %v2241 = vmul.f32 %v2225, %v2169
        %v2242 = vmul.f32 %v2226, %v2170
        %v2243 = vmul.f32 %v2227, %v2171
        %v2244 = vmul.f32 %v2228, %v2172
        %v2245 = vmul.f32 %v2229, %v2173
        %v2246 = vmul.f32 %v2230, %v2174
        %v2247 = vmul.f32 %v2231, %v2175
        %v2248 = vperm.slane %v2011, 3
        %v2249 = vperm.slane %v2012, 3
        %v2250 = vperm.slane %v2013, 3
        %v2251 = vperm.slane %v2014, 3
        %v2252 = vperm.slane %v2015, 3
        %v2253 = vperm.slane %v2016, 3
        %v2254 = vperm.slane %v2017, 3
        %v2255 = vperm.slane %v2018, 3
        %v2256 = vmul.f32 %v2248, %v2160
        %v2257 = vmul.f32 %v2249, %v2161
        %v2258 = vmul.f32 %v2250, %v2162
        %v2259 = vmul.f32 %v2251, %v2163
        %v2260 = vmul.f32 %v2252, %v2164
        %v2261 = vmul.f32 %v2253, %v2165
        %v2262 = vmul.f32 %v2254, %v2166
        %v2263 = vmul.f32 %v2255, %v2167
        %v2264 = vmul.f32 %v2248, %v2168
        %v2265 = vmul.f32 %v2249, %v2169
        %v2266 = vmul.f32 %v2250, %v2170
        %v2267 = vmul.f32 %v2251, %v2171
        %v2268 = vmul.f32 %v2252, %v2172
        %v2269 = vmul.f32 %v2253, %v2173
        %v2270 = vmul.f32 %v2254, %v2174
        %v2271 = vmul.f32 %v2255, %v2175
        %v2272 = vperm.slane %v2011, 4
        %v2273 = vperm.slane %v2012, 4
        %v2274 = vperm.slane %v2013, 4
        %v2275 = vperm.slane %v2014, 4
        %v2276 = vperm.slane %v2015, 4
        %v2277 = vperm.slane %v2016, 4
        %v2278 = vperm.slane %v2017, 4
        %v2279 = vperm.slane %v2018, 4
        %v2280 = vmul.f32 %v2272, %v2160
        %v2281 = vmul.f32 %v2273, %v2161
        %v2282 = vmul.f32 %v2274, %v2162
        %v2283 = vmul.f32 %v2275, %v2163
        %v2284 = vmul.f32 %v2276, %v2164
        %v2285 = vmul.f32 %v2277, %v2165
        %v2286 = vmul.f32 %v2278, %v2166
        %v2287 = vmul.f32 %v2279, %v2167
        %v2288 = vmul.f32 %v2272, %v2168
        %v2289 = vmul.f32 %v2273, %v2169
        %v2290 = vmul.f32 %v2274, %v2170
        %v2291 = vmul.f32 %v2275, %v2171
        %v2292 = vmul.f32 %v2276, %v2172
        %v2293 = vmul.f32 %v2277, %v2173
        %v2294 = vmul.f32 %v2278, %v2174
        %v2295 = vmul.f32 %v2279, %v2175
        %v2296 = vperm.slane %v2011, 5
        %v2297 = vperm.slane %v2012, 5
        %v2298 = vperm.slane %v2013, 5
        %v2299 = vperm.slane %v2014, 5
        %v2300 = vperm.slane %v2015, 5
        %v2301 = vperm.slane %v2016, 5
        %v2302 = vperm.slane %v2017, 5
        %v2303 = vperm.slane %v2018, 5
        %v2304 = vmul.f32 %v2296, %v2160
        %v2305 = vmul.f32 %v2297, %v2161
        %v2306 = vmul.f32 %v2298, %v2162
        %v2307 = vmul.f32 %v2299, %v2163
        %v2308 = vmul.f32 %v2300, %v2164
        %v2309 = vmul.f32 %v2301, %v2165
        %v2310 = vmul.f32 %v2302, %v2166
        %v2311 = vmul.f32 %v2303, %v2167
        %v2312 = vmul.f32 %v2296, %v2168
        %v2313 = vmul.f32 %v2297, %v2169
        %v2314 = vmul.f32 %v2298, %v2170
        %v2315 = vmul.f32 %v2299, %v2171
        %v2316 = vmul.f32 %v2300, %v2172
        %v2317 = vmul.f32 %v2301, %v2173
        %v2318 = vmul.f32 %v2302, %v2174
        %v2319 = vmul.f32 %v2303, %v2175
        %v2320 = vperm.slane %v2011, 6
        %v2321 = vperm.slane %v2012, 6
        %v2322 = vperm.slane %v2013, 6
        %v2323 = vperm.slane %v2014, 6
        %v2324 = vperm.slane %v2015, 6
        %v2325 = vperm.slane %v2016, 6
        %v2326 = vperm.slane %v2017, 6
        %v2327 = vperm.slane %v2018, 6
        %v2328 = vmul.f32 %v2320, %v2160
        %v2329 = vmul.f32 %v2321, %v2161
        %v2330 = vmul.f32 %v2322, %v2162
        %v2331 = vmul.f32 %v2323, %v2163
        %v2332 = vmul.f32 %v2324, %v2164
        %v2333 = vmul.f32 %v2325, %v2165
        %v2334 = vmul.f32 %v2326, %v2166
        %v2335 = vmul.f32 %v2327, %v2167
        %v2336 = vmul.f32 %v2320, %v2168
        %v2337 = vmul.f32 %v2321, %v2169
        %v2338 = vmul.f32 %v2322, %v2170
        %v2339 = vmul.f32 %v2323, %v2171
        %v2340 = vmul.f32 %v2324, %v2172
        %v2341 = vmul.f32 %v2325, %v2173
        %v2342 = vmul.f32 %v2326, %v2174
        %v2343 = vmul.f32 %v2327, %v2175
        %v2344 = vperm.slane %v2011, 7
        %v2345 = vperm.slane %v2012, 7
        %v2346 = vperm.slane %v2013, 7
        %v2347 = vperm.slane %v2014, 7
        %v2348 = vperm.slane %v2015, 7
        %v2349 = vperm.slane %v2016, 7
        %v2350 = vperm.slane %v2017, 7
        %v2351 = vperm.slane %v2018, 7
        %v2352 = vmul.f32 %v2344, %v2160
        %v2353 = vmul.f32 %v2345, %v2161
        %v2354 = vmul.f32 %v2346, %v2162
        %v2355 = vmul.f32 %v2347, %v2163
        %v2356 = vmul.f32 %v2348, %v2164
        %v2357 = vmul.f32 %v2349, %v2165
        %v2358 = vmul.f32 %v2350, %v2166
        %v2359 = vmul.f32 %v2351, %v2167
        %v2360 = vmul.f32 %v2344, %v2168
        %v2361 = vmul.f32 %v2345, %v2169
        %v2362 = vmul.f32 %v2346, %v2170
        %v2363 = vmul.f32 %v2347, %v2171
        %v2364 = vmul.f32 %v2348, %v2172
        %v2365 = vmul.f32 %v2349, %v2173
        %v2366 = vmul.f32 %v2350, %v2174
        %v2367 = vmul.f32 %v2351, %v2175
        %v2368 = vperm.slane %v2019, 0
        %v2369 = vperm.slane %v2020, 0
        %v2370 = vperm.slane %v2021, 0
        %v2371 = vperm.slane %v2022, 0
        %v2372 = vperm.slane %v2023, 0
        %v2373 = vperm.slane %v2024, 0
        %v2374 = vperm.slane %v2025, 0
        %v2375 = vperm.slane %v2026, 0
        %v2376 = vmul.f32 %v2368, %v2160
        %v2377 = vmul.f32 %v2369, %v2161
        %v2378 = vmul.f32 %v2370, %v2162
        %v2379 = vmul.f32 %v2371, %v2163
        %v2380 = vmul.f32 %v2372, %v2164
        %v2381 = vmul.f32 %v2373, %v2165
        %v2382 = vmul.f32 %v2374, %v2166
        %v2383 = vmul.f32 %v2375, %v2167
        %v2384 = vmul.f32 %v2368, %v2168
        %v2385 = vmul.f32 %v2369, %v2169
        %v2386 = vmul.f32 %v2370, %v2170
        %v2387 = vmul.f32 %v2371, %v2171
        %v2388 = vmul.f32 %v2372, %v2172
        %v2389 = vmul.f32 %v2373, %v2173
        %v2390 = vmul.f32 %v2374, %v2174
        %v2391 = vmul.f32 %v2375, %v2175
        %v2392 = vperm.slane %v2019, 1
        %v2393 = vperm.slane %v2020, 1
        %v2394 = vperm.slane %v2021, 1
        %v2395 = vperm.slane %v2022, 1
        %v2396 = vperm.slane %v2023, 1
        %v2397 = vperm.slane %v2024, 1
        %v2398 = vperm.slane %v2025, 1
        %v2399 = vperm.slane %v2026, 1
        %v2400 = vmul.f32 %v2392, %v2160
        %v2401 = vmul.f32 %v2393, %v2161
        %v2402 = vmul.f32 %v2394, %v2162
        %v2403 = vmul.f32 %v2395, %v2163
        %v2404 = vmul.f32 %v2396, %v2164
        %v2405 = vmul.f32 %v2397, %v2165
        %v2406 = vmul.f32 %v2398, %v2166
        %v2407 = vmul.f32 %v2399, %v2167
        %v2408 = vmul.f32 %v2392, %v2168
        %v2409 = vmul.f32 %v2393, %v2169
        %v2410 = vmul.f32 %v2394, %v2170
        %v2411 = vmul.f32 %v2395, %v2171
        %v2412 = vmul.f32 %v2396, %v2172
        %v2413 = vmul.f32 %v2397, %v2173
        %v2414 = vmul.f32 %v2398, %v2174
        %v2415 = vmul.f32 %v2399, %v2175
        %v2416 = vperm.slane %v2019, 2
        %v2417 = vperm.slane %v2020, 2
        %v2418 = vperm.slane %v2021, 2
        %v2419 = vperm.slane %v2022, 2
        %v2420 = vperm.slane %v2023, 2
        %v2421 = vperm.slane %v2024, 2
        %v2422 = vperm.slane %v2025, 2
        %v2423 = vperm.slane %v2026, 2
        %v2424 = vmul.f32 %v2416, %v2160
        %v2425 = vmul.f32 %v2417, %v2161
        %v2426 = vmul.f32 %v2418, %v2162
        %v2427 = vmul.f32 %v2419, %v2163
        %v2428 = vmul.f32 %v2420, %v2164
        %v2429 = vmul.f32 %v2421, %v2165
        %v2430 = vmul.f32 %v2422, %v2166
        %v2431 = vmul.f32 %v2423, %v2167
        %v2432 = vmul.f32 %v2416, %v2168
        %v2433 = vmul.f32 %v2417, %v2169
        %v2434 = vmul.f32 %v2418, %v2170
        %v2435 = vmul.f32 %v2419, %v2171
        %v2436 = vmul.f32 %v2420, %v2172
        %v2437 = vmul.f32 %v2421, %v2173
        %v2438 = vmul.f32 %v2422, %v2174
        %v2439 = vmul.f32 %v2423, %v2175
        %v2440 = vperm.slane %v2019, 3
        %v2441 = vperm.slane %v2020, 3
        %v2442 = vperm.slane %v2021, 3
        %v2443 = vperm.slane %v2022, 3
        %v2444 = vperm.slane %v2023, 3
        %v2445 = vperm.slane %v2024, 3
        %v2446 = vperm.slane %v2025, 3
        %v2447 = vperm.slane %v2026, 3
        %v2448 = vmul.f32 %v2440, %v2160
        %v2449 = vmul.f32 %v2441, %v2161
        %v2450 = vmul.f32 %v2442, %v2162
        %v2451 = vmul.f32 %v2443, %v2163
        %v2452 = vmul.f32 %v2444, %v2164
        %v2453 = vmul.f32 %v2445, %v2165
        %v2454 = vmul.f32 %v2446, %v2166
        %v2455 = vmul.f32 %v2447, %v2167
        %v2456 = vmul.f32 %v2440, %v2168
        %v2457 = vmul.f32 %v2441, %v2169
        %v2458 = vmul.f32 %v2442, %v2170
        %v2459 = vmul.f32 %v2443, %v2171
        %v2460 = vmul.f32 %v2444, %v2172
        %v2461 = vmul.f32 %v2445, %v2173
        %v2462 = vmul.f32 %v2446, %v2174
        %v2463 = vmul.f32 %v2447, %v2175
        %v2464 = vperm.slane %v2019, 4
        %v2465 = vperm.slane %v2020, 4
        %v2466 = vperm.slane %v2021, 4
        %v2467 = vperm.slane %v2022, 4
        %v2468 = vperm.slane %v2023, 4
        %v2469 = vperm.slane %v2024, 4
        %v2470 = vperm.slane %v2025, 4
        %v2471 = vperm.slane %v2026, 4
        %v2472 = vmul.f32 %v2464, %v2160
        %v2473 = vmul.f32 %v2465, %v2161
        %v2474 = vmul.f32 %v2466, %v2162
        %v2475 = vmul.f32 %v2467, %v2163
        %v2476 = vmul.f32 %v2468, %v2164
        %v2477 = vmul.f32 %v2469, %v2165
        %v2478 = vmul.f32 %v2470, %v2166
        %v2479 = vmul.f32 %v2471, %v2167
        %v2480 = vmul.f32 %v2464, %v2168
        %v2481 = vmul.f32 %v2465, %v2169
        %v2482 = vmul.f32 %v2466, %v2170
        %v2483 = vmul.f32 %v2467, %v2171
        %v2484 = vmul.f32 %v2468, %v2172
        %v2485 = vmul.f32 %v2469, %v2173
        %v2486 = vmul.f32 %v2470, %v2174
        %v2487 = vmul.f32 %v2471, %v2175
        %v2488 = vperm.slane %v2019, 5
        %v2489 = vperm.slane %v2020, 5
        %v2490 = vperm.slane %v2021, 5
        %v2491 = vperm.slane %v2022, 5
        %v2492 = vperm.slane %v2023, 5
        %v2493 = vperm.slane %v2024, 5
        %v2494 = vperm.slane %v2025, 5
        %v2495 = vperm.slane %v2026, 5
        %v2496 = vmul.f32 %v2488, %v2160
        %v2497 = vmul.f32 %v2489, %v2161
        %v2498 = vmul.f32 %v2490, %v2162
        %v2499 = vmul.f32 %v2491, %v2163
        %v2500 = vmul.f32 %v2492, %v2164
        %v2501 = vmul.f32 %v2493, %v2165
        %v2502 = vmul.f32 %v2494, %v2166
        %v2503 = vmul.f32 %v2495, %v2167
        %v2504 = vmul.f32 %v2488, %v2168
        %v2505 = vmul.f32 %v2489, %v2169
        %v2506 = vmul.f32 %v2490, %v2170
        %v2507 = vmul.f32 %v2491, %v2171
        %v2508 = vmul.f32 %v2492, %v2172
        %v2509 = vmul.f32 %v2493, %v2173
        %v2510 = vmul.f32 %v2494, %v2174
        %v2511 = vmul.f32 %v2495, %v2175
        %v2512 = vperm.slane %v2019, 6
        %v2513 = vperm.slane %v2020, 6
        %v2514 = vperm.slane %v2021, 6
        %v2515 = vperm.slane %v2022, 6
        %v2516 = vperm.slane %v2023, 6
        %v2517 = vperm.slane %v2024, 6
        %v2518 = vperm.slane %v2025, 6
        %v2519 = vperm.slane %v2026, 6
        %v2520 = vmul.f32 %v2512, %v2160
        %v2521 = vmul.f32 %v2513, %v2161
        %v2522 = vmul.f32 %v2514, %v2162
        %v2523 = vmul.f32 %v2515, %v2163
        %v2524 = vmul.f32 %v2516, %v2164
        %v2525 = vmul.f32 %v2517, %v2165
        %v2526 = vmul.f32 %v2518, %v2166
        %v2527 = vmul.f32 %v2519, %v2167
        %v2528 = vmul.f32 %v2512, %v2168
        %v2529 = vmul.f32 %v2513, %v2169
        %v2530 = vmul.f32 %v2514, %v2170
        %v2531 = vmul.f32 %v2515, %v2171
        %v2532 = vmul.f32 %v2516, %v2172
        %v2533 = vmul.f32 %v2517, %v2173
        %v2534 = vmul.f32 %v2518, %v2174
        %v2535 = vmul.f32 %v2519, %v2175
        %v2536 = vperm.slane %v2019, 7
        %v2537 = vperm.slane %v2020, 7
        %v2538 = vperm.slane %v2021, 7
        %v2539 = vperm.slane %v2022, 7
        %v2540 = vperm.slane %v2023, 7
        %v2541 = vperm.slane %v2024, 7
        %v2542 = vperm.slane %v2025, 7
        %v2543 = vperm.slane %v2026, 7
        %v2544 = vmul.f32 %v2536, %v2160
        %v2545 = vmul.f32 %v2537, %v2161
        %v2546 = vmul.f32 %v2538, %v2162
        %v2547 = vmul.f32 %v2539, %v2163
        %v2548 = vmul.f32 %v2540, %v2164
        %v2549 = vmul.f32 %v2541, %v2165
        %v2550 = vmul.f32 %v2542, %v2166
        %v2551 = vmul.f32 %v2543, %v2167
        %v2552 = vmul.f32 %v2536, %v2168
        %v2553 = vmul.f32 %v2537, %v2169
        %v2554 = vmul.f32 %v2538, %v2170
        %v2555 = vmul.f32 %v2539, %v2171
        %v2556 = vmul.f32 %v2540, %v2172
        %v2557 = vmul.f32 %v2541, %v2173
        %v2558 = vmul.f32 %v2542, %v2174
        %v2559 = vmul.f32 %v2543, %v2175
        %v2560 = vpack.c.bf16 %v2192, %v2184
        %v2561 = vpack.c.bf16 %v2193, %v2185
        %v2562 = vpack.c.bf16 %v2194, %v2186
        %v2563 = vpack.c.bf16 %v2195, %v2187
        %v2564 = vpack.c.bf16 %v2196, %v2188
        %v2565 = vpack.c.bf16 %v2197, %v2189
        %v2566 = vpack.c.bf16 %v2198, %v2190
        %v2567 = vpack.c.bf16 %v2199, %v2191
        %v2568 = vpack.c.bf16 %v2216, %v2208
        %v2569 = vpack.c.bf16 %v2217, %v2209
        %v2570 = vpack.c.bf16 %v2218, %v2210
        %v2571 = vpack.c.bf16 %v2219, %v2211
        %v2572 = vpack.c.bf16 %v2220, %v2212
        %v2573 = vpack.c.bf16 %v2221, %v2213
        %v2574 = vpack.c.bf16 %v2222, %v2214
        %v2575 = vpack.c.bf16 %v2223, %v2215
        %v2576 = vpack.c.bf16 %v2240, %v2232
        %v2577 = vpack.c.bf16 %v2241, %v2233
        %v2578 = vpack.c.bf16 %v2242, %v2234
        %v2579 = vpack.c.bf16 %v2243, %v2235
        %v2580 = vpack.c.bf16 %v2244, %v2236
        %v2581 = vpack.c.bf16 %v2245, %v2237
        %v2582 = vpack.c.bf16 %v2246, %v2238
        %v2583 = vpack.c.bf16 %v2247, %v2239
        %v2584 = vpack.c.bf16 %v2264, %v2256
        %v2585 = vpack.c.bf16 %v2265, %v2257
        %v2586 = vpack.c.bf16 %v2266, %v2258
        %v2587 = vpack.c.bf16 %v2267, %v2259
        %v2588 = vpack.c.bf16 %v2268, %v2260
        %v2589 = vpack.c.bf16 %v2269, %v2261
        %v2590 = vpack.c.bf16 %v2270, %v2262
        %v2591 = vpack.c.bf16 %v2271, %v2263
        %v2592 = vpack.c.bf16 %v2288, %v2280
        %v2593 = vpack.c.bf16 %v2289, %v2281
        %v2594 = vpack.c.bf16 %v2290, %v2282
        %v2595 = vpack.c.bf16 %v2291, %v2283
        %v2596 = vpack.c.bf16 %v2292, %v2284
        %v2597 = vpack.c.bf16 %v2293, %v2285
        %v2598 = vpack.c.bf16 %v2294, %v2286
        %v2599 = vpack.c.bf16 %v2295, %v2287
        %v2600 = vpack.c.bf16 %v2312, %v2304
        %v2601 = vpack.c.bf16 %v2313, %v2305
        %v2602 = vpack.c.bf16 %v2314, %v2306
        %v2603 = vpack.c.bf16 %v2315, %v2307
        %v2604 = vpack.c.bf16 %v2316, %v2308
        %v2605 = vpack.c.bf16 %v2317, %v2309
        %v2606 = vpack.c.bf16 %v2318, %v2310
        %v2607 = vpack.c.bf16 %v2319, %v2311
        %v2608 = vpack.c.bf16 %v2336, %v2328
        %v2609 = vpack.c.bf16 %v2337, %v2329
        %v2610 = vpack.c.bf16 %v2338, %v2330
        %v2611 = vpack.c.bf16 %v2339, %v2331
        %v2612 = vpack.c.bf16 %v2340, %v2332
        %v2613 = vpack.c.bf16 %v2341, %v2333
        %v2614 = vpack.c.bf16 %v2342, %v2334
        %v2615 = vpack.c.bf16 %v2343, %v2335
        %v2616 = vpack.c.bf16 %v2360, %v2352
        %v2617 = vpack.c.bf16 %v2361, %v2353
        %v2618 = vpack.c.bf16 %v2362, %v2354
        %v2619 = vpack.c.bf16 %v2363, %v2355
        %v2620 = vpack.c.bf16 %v2364, %v2356
        %v2621 = vpack.c.bf16 %v2365, %v2357
        %v2622 = vpack.c.bf16 %v2366, %v2358
        %v2623 = vpack.c.bf16 %v2367, %v2359
        %v2624 = vpack.c.bf16 %v2384, %v2376
        %v2625 = vpack.c.bf16 %v2385, %v2377
        %v2626 = vpack.c.bf16 %v2386, %v2378
        %v2627 = vpack.c.bf16 %v2387, %v2379
        %v2628 = vpack.c.bf16 %v2388, %v2380
        %v2629 = vpack.c.bf16 %v2389, %v2381
        %v2630 = vpack.c.bf16 %v2390, %v2382
        %v2631 = vpack.c.bf16 %v2391, %v2383
        %v2632 = vpack.c.bf16 %v2408, %v2400
        %v2633 = vpack.c.bf16 %v2409, %v2401
        %v2634 = vpack.c.bf16 %v2410, %v2402
        %v2635 = vpack.c.bf16 %v2411, %v2403
        %v2636 = vpack.c.bf16 %v2412, %v2404
        %v2637 = vpack.c.bf16 %v2413, %v2405
        %v2638 = vpack.c.bf16 %v2414, %v2406
        %v2639 = vpack.c.bf16 %v2415, %v2407
        %v2640 = vpack.c.bf16 %v2432, %v2424
        %v2641 = vpack.c.bf16 %v2433, %v2425
        %v2642 = vpack.c.bf16 %v2434, %v2426
        %v2643 = vpack.c.bf16 %v2435, %v2427
        %v2644 = vpack.c.bf16 %v2436, %v2428
        %v2645 = vpack.c.bf16 %v2437, %v2429
        %v2646 = vpack.c.bf16 %v2438, %v2430
        %v2647 = vpack.c.bf16 %v2439, %v2431
        %v2648 = vpack.c.bf16 %v2456, %v2448
        %v2649 = vpack.c.bf16 %v2457, %v2449
        %v2650 = vpack.c.bf16 %v2458, %v2450
        %v2651 = vpack.c.bf16 %v2459, %v2451
        %v2652 = vpack.c.bf16 %v2460, %v2452
        %v2653 = vpack.c.bf16 %v2461, %v2453
        %v2654 = vpack.c.bf16 %v2462, %v2454
        %v2655 = vpack.c.bf16 %v2463, %v2455
        %v2656 = vpack.c.bf16 %v2480, %v2472
        %v2657 = vpack.c.bf16 %v2481, %v2473
        %v2658 = vpack.c.bf16 %v2482, %v2474
        %v2659 = vpack.c.bf16 %v2483, %v2475
        %v2660 = vpack.c.bf16 %v2484, %v2476
        %v2661 = vpack.c.bf16 %v2485, %v2477
        %v2662 = vpack.c.bf16 %v2486, %v2478
        %v2663 = vpack.c.bf16 %v2487, %v2479
        %v2664 = vpack.c.bf16 %v2504, %v2496
        %v2665 = vpack.c.bf16 %v2505, %v2497
        %v2666 = vpack.c.bf16 %v2506, %v2498
        %v2667 = vpack.c.bf16 %v2507, %v2499
        %v2668 = vpack.c.bf16 %v2508, %v2500
        %v2669 = vpack.c.bf16 %v2509, %v2501
        %v2670 = vpack.c.bf16 %v2510, %v2502
        %v2671 = vpack.c.bf16 %v2511, %v2503
        %v2672 = vpack.c.bf16 %v2528, %v2520
        %v2673 = vpack.c.bf16 %v2529, %v2521
        %v2674 = vpack.c.bf16 %v2530, %v2522
        %v2675 = vpack.c.bf16 %v2531, %v2523
        %v2676 = vpack.c.bf16 %v2532, %v2524
        %v2677 = vpack.c.bf16 %v2533, %v2525
        %v2678 = vpack.c.bf16 %v2534, %v2526
        %v2679 = vpack.c.bf16 %v2535, %v2527
        %v2680 = vpack.c.bf16 %v2552, %v2544
        %v2681 = vpack.c.bf16 %v2553, %v2545
        %v2682 = vpack.c.bf16 %v2554, %v2546
        %v2683 = vpack.c.bf16 %v2555, %v2547
        %v2684 = vpack.c.bf16 %v2556, %v2548
        %v2685 = vpack.c.bf16 %v2557, %v2549
        %v2686 = vpack.c.bf16 %v2558, %v2550
        %v2687 = vpack.c.bf16 %v2559, %v2551
        %v2688 = vpack.c.bf16 %v294, %v294
        %v2689 = vpack.c.bf16 %v295, %v295
        %2690 = vmatpush.bf16.msra.mxu0 %v2616
        %2691 = vmatpush.bf16.msra.mxu0 %v2608
        %2692 = vmatpush.bf16.msra.mxu0 %v2600
        %2693 = vmatpush.bf16.msra.mxu0 %v2592
        %2694 = vmatpush.bf16.msra.mxu0 %v2584
        %2695 = vmatpush.bf16.msra.mxu0 %v2576
        %2696 = vmatpush.bf16.msra.mxu0 %v2568
        %2697 = vmatpush.bf16.msra.mxu0 %v2560
        %2698 = vmatmul.bf16.gmra.mxu0 %v2688
        %v2699 = vpop.f32.mrf.mxu0
        %v2700 = vadd.f32 0.0, %v2699
        %v2701 = vpop.f32.mrf.mxu0
        %2702 = vdwg.mxu0
        %2703 = vmatpush.bf16.msra.mxu0 %v2680
        %2704 = vmatpush.bf16.msra.mxu0 %v2672
        %2705 = vmatpush.bf16.msra.mxu0 %v2664
        %2706 = vmatpush.bf16.msra.mxu0 %v2656
        %2707 = vmatpush.bf16.msra.mxu0 %v2648
        %2708 = vmatpush.bf16.msra.mxu0 %v2640
        %2709 = vmatpush.bf16.msra.mxu0 %v2632
        %2710 = vmatpush.bf16.msra.mxu0 %v2624
        %2711 = vmatmul.bf16.gmra.mxu0 %v2689
        %v2712 = vpop.f32.mrf.mxu0
        %v2713 = vadd.f32 %v2700, %v2712
        %v2714 = vpop.f32.mrf.mxu0
        %2715 = vdwg.mxu0
        %2716 = vmatpush.bf16.msra.mxu0 %v2617
        %2717 = vmatpush.bf16.msra.mxu0 %v2609
        %2718 = vmatpush.bf16.msra.mxu0 %v2601
        %2719 = vmatpush.bf16.msra.mxu0 %v2593
        %2720 = vmatpush.bf16.msra.mxu0 %v2585
        %2721 = vmatpush.bf16.msra.mxu0 %v2577
        %2722 = vmatpush.bf16.msra.mxu0 %v2569
        %2723 = vmatpush.bf16.msra.mxu0 %v2561
        %2724 = vmatmul.bf16.gmra.mxu0 %v2688
        %v2725 = vpop.f32.mrf.mxu0
        %v2726 = vadd.f32 0.0, %v2725
        %v2727 = vpop.f32.mrf.mxu0
        %2728 = vdwg.mxu0
        %2729 = vmatpush.bf16.msra.mxu0 %v2681
        %2730 = vmatpush.bf16.msra.mxu0 %v2673
        %2731 = vmatpush.bf16.msra.mxu0 %v2665
        %2732 = vmatpush.bf16.msra.mxu0 %v2657
        %2733 = vmatpush.bf16.msra.mxu0 %v2649
        %2734 = vmatpush.bf16.msra.mxu0 %v2641
        %2735 = vmatpush.bf16.msra.mxu0 %v2633
        %2736 = vmatpush.bf16.msra.mxu0 %v2625
        %2737 = vmatmul.bf16.gmra.mxu0 %v2689
        %v2738 = vpop.f32.mrf.mxu0
        %v2739 = vadd.f32 %v2726, %v2738
        %v2740 = vpop.f32.mrf.mxu0
        %2741 = vdwg.mxu0
        %2742 = vmatpush.bf16.msra.mxu0 %v2618
        %2743 = vmatpush.bf16.msra.mxu0 %v2610
        %2744 = vmatpush.bf16.msra.mxu0 %v2602
        %2745 = vmatpush.bf16.msra.mxu0 %v2594
        %2746 = vmatpush.bf16.msra.mxu0 %v2586
        %2747 = vmatpush.bf16.msra.mxu0 %v2578
        %2748 = vmatpush.bf16.msra.mxu0 %v2570
        %2749 = vmatpush.bf16.msra.mxu0 %v2562
        %2750 = vmatmul.bf16.gmra.mxu0 %v2688
        %v2751 = vpop.f32.mrf.mxu0
        %v2752 = vadd.f32 0.0, %v2751
        %v2753 = vpop.f32.mrf.mxu0
        %2754 = vdwg.mxu0
        %2755 = vmatpush.bf16.msra.mxu0 %v2682
        %2756 = vmatpush.bf16.msra.mxu0 %v2674
        %2757 = vmatpush.bf16.msra.mxu0 %v2666
        %2758 = vmatpush.bf16.msra.mxu0 %v2658
        %2759 = vmatpush.bf16.msra.mxu0 %v2650
        %2760 = vmatpush.bf16.msra.mxu0 %v2642
        %2761 = vmatpush.bf16.msra.mxu0 %v2634
        %2762 = vmatpush.bf16.msra.mxu0 %v2626
        %2763 = vmatmul.bf16.gmra.mxu0 %v2689
        %v2764 = vpop.f32.mrf.mxu0
        %v2765 = vadd.f32 %v2752, %v2764
        %v2766 = vpop.f32.mrf.mxu0
        %2767 = vdwg.mxu0
        %2768 = vmatpush.bf16.msra.mxu0 %v2619
        %2769 = vmatpush.bf16.msra.mxu0 %v2611
        %2770 = vmatpush.bf16.msra.mxu0 %v2603
        %2771 = vmatpush.bf16.msra.mxu0 %v2595
        %2772 = vmatpush.bf16.msra.mxu0 %v2587
        %2773 = vmatpush.bf16.msra.mxu0 %v2579
        %2774 = vmatpush.bf16.msra.mxu0 %v2571
        %2775 = vmatpush.bf16.msra.mxu0 %v2563
        %2776 = vmatmul.bf16.gmra.mxu0 %v2688
        %v2777 = vpop.f32.mrf.mxu0
        %v2778 = vadd.f32 0.0, %v2777
        %v2779 = vpop.f32.mrf.mxu0
        %2780 = vdwg.mxu0
        %2781 = vmatpush.bf16.msra.mxu0 %v2683
        %2782 = vmatpush.bf16.msra.mxu0 %v2675
        %2783 = vmatpush.bf16.msra.mxu0 %v2667
        %2784 = vmatpush.bf16.msra.mxu0 %v2659
        %2785 = vmatpush.bf16.msra.mxu0 %v2651
        %2786 = vmatpush.bf16.msra.mxu0 %v2643
        %2787 = vmatpush.bf16.msra.mxu0 %v2635
        %2788 = vmatpush.bf16.msra.mxu0 %v2627
        %2789 = vmatmul.bf16.gmra.mxu0 %v2689
        %v2790 = vpop.f32.mrf.mxu0
        %v2791 = vadd.f32 %v2778, %v2790
        %v2792 = vpop.f32.mrf.mxu0
        %2793 = vdwg.mxu0
        %2794 = vmatpush.bf16.msra.mxu0 %v2620
        %2795 = vmatpush.bf16.msra.mxu0 %v2612
        %2796 = vmatpush.bf16.msra.mxu0 %v2604
        %2797 = vmatpush.bf16.msra.mxu0 %v2596
        %2798 = vmatpush.bf16.msra.mxu0 %v2588
        %2799 = vmatpush.bf16.msra.mxu0 %v2580
        %2800 = vmatpush.bf16.msra.mxu0 %v2572
        %2801 = vmatpush.bf16.msra.mxu0 %v2564
        %2802 = vmatmul.bf16.gmra.mxu0 %v2688
        %v2803 = vpop.f32.mrf.mxu0
        %v2804 = vadd.f32 0.0, %v2803
        %v2805 = vpop.f32.mrf.mxu0
        %2806 = vdwg.mxu0
        %2807 = vmatpush.bf16.msra.mxu0 %v2684
        %2808 = vmatpush.bf16.msra.mxu0 %v2676
        %2809 = vmatpush.bf16.msra.mxu0 %v2668
        %2810 = vmatpush.bf16.msra.mxu0 %v2660
        %2811 = vmatpush.bf16.msra.mxu0 %v2652
        %2812 = vmatpush.bf16.msra.mxu0 %v2644
        %2813 = vmatpush.bf16.msra.mxu0 %v2636
        %2814 = vmatpush.bf16.msra.mxu0 %v2628
        %2815 = vmatmul.bf16.gmra.mxu0 %v2689
        %v2816 = vpop.f32.mrf.mxu0
        %v2817 = vadd.f32 %v2804, %v2816
        %v2818 = vpop.f32.mrf.mxu0
        %2819 = vdwg.mxu0
        %2820 = vmatpush.bf16.msra.mxu0 %v2621
        %2821 = vmatpush.bf16.msra.mxu0 %v2613
        %2822 = vmatpush.bf16.msra.mxu0 %v2605
        %2823 = vmatpush.bf16.msra.mxu0 %v2597
        %2824 = vmatpush.bf16.msra.mxu0 %v2589
        %2825 = vmatpush.bf16.msra.mxu0 %v2581
        %2826 = vmatpush.bf16.msra.mxu0 %v2573
        %2827 = vmatpush.bf16.msra.mxu0 %v2565
        %2828 = vmatmul.bf16.gmra.mxu0 %v2688
        %v2829 = vpop.f32.mrf.mxu0
        %v2830 = vadd.f32 0.0, %v2829
        %v2831 = vpop.f32.mrf.mxu0
        %2832 = vdwg.mxu0
        %2833 = vmatpush.bf16.msra.mxu0 %v2685
        %2834 = vmatpush.bf16.msra.mxu0 %v2677
        %2835 = vmatpush.bf16.msra.mxu0 %v2669
        %2836 = vmatpush.bf16.msra.mxu0 %v2661
        %2837 = vmatpush.bf16.msra.mxu0 %v2653
        %2838 = vmatpush.bf16.msra.mxu0 %v2645
        %2839 = vmatpush.bf16.msra.mxu0 %v2637
        %2840 = vmatpush.bf16.msra.mxu0 %v2629
        %2841 = vmatmul.bf16.gmra.mxu0 %v2689
        %v2842 = vpop.f32.mrf.mxu0
        %v2843 = vadd.f32 %v2830, %v2842
        %v2844 = vpop.f32.mrf.mxu0
        %2845 = vdwg.mxu0
        %2846 = vmatpush.bf16.msra.mxu0 %v2622
        %2847 = vmatpush.bf16.msra.mxu0 %v2614
        %2848 = vmatpush.bf16.msra.mxu0 %v2606
        %2849 = vmatpush.bf16.msra.mxu0 %v2598
        %2850 = vmatpush.bf16.msra.mxu0 %v2590
        %2851 = vmatpush.bf16.msra.mxu0 %v2582
        %2852 = vmatpush.bf16.msra.mxu0 %v2574
        %2853 = vmatpush.bf16.msra.mxu0 %v2566
        %2854 = vmatmul.bf16.gmra.mxu0 %v2688
        %v2855 = vpop.f32.mrf.mxu0
        %v2856 = vadd.f32 0.0, %v2855
        %v2857 = vpop.f32.mrf.mxu0
        %2858 = vdwg.mxu0
        %2859 = vmatpush.bf16.msra.mxu0 %v2686
        %2860 = vmatpush.bf16.msra.mxu0 %v2678
        %2861 = vmatpush.bf16.msra.mxu0 %v2670
        %2862 = vmatpush.bf16.msra.mxu0 %v2662
        %2863 = vmatpush.bf16.msra.mxu0 %v2654
        %2864 = vmatpush.bf16.msra.mxu0 %v2646
        %2865 = vmatpush.bf16.msra.mxu0 %v2638
        %2866 = vmatpush.bf16.msra.mxu0 %v2630
        %2867 = vmatmul.bf16.gmra.mxu0 %v2689
        %v2868 = vpop.f32.mrf.mxu0
        %v2869 = vadd.f32 %v2856, %v2868
        %v2870 = vpop.f32.mrf.mxu0
        %2871 = vdwg.mxu0
        %2872 = vmatpush.bf16.msra.mxu0 %v2623
        %2873 = vmatpush.bf16.msra.mxu0 %v2615
        %2874 = vmatpush.bf16.msra.mxu0 %v2607
        %2875 = vmatpush.bf16.msra.mxu0 %v2599
        %2876 = vmatpush.bf16.msra.mxu0 %v2591
        %2877 = vmatpush.bf16.msra.mxu0 %v2583
        %2878 = vmatpush.bf16.msra.mxu0 %v2575
        %2879 = vmatpush.bf16.msra.mxu0 %v2567
        %2880 = vmatmul.bf16.gmra.mxu0 %v2688
        %v2881 = vpop.f32.mrf.mxu0
        %v2882 = vadd.f32 0.0, %v2881
        %v2883 = vpop.f32.mrf.mxu0
        %2884 = vdwg.mxu0
        %2885 = vmatpush.bf16.msra.mxu0 %v2687
        %2886 = vmatpush.bf16.msra.mxu0 %v2679
        %2887 = vmatpush.bf16.msra.mxu0 %v2671
        %2888 = vmatpush.bf16.msra.mxu0 %v2663
        %2889 = vmatpush.bf16.msra.mxu0 %v2655
        %2890 = vmatpush.bf16.msra.mxu0 %v2647
        %2891 = vmatpush.bf16.msra.mxu0 %v2639
        %2892 = vmatpush.bf16.msra.mxu0 %v2631
        %2893 = vmatmul.bf16.gmra.mxu0 %v2689
        %v2894 = vpop.f32.mrf.mxu0
        %v2895 = vadd.f32 %v2882, %v2894
        %v2896 = vpop.f32.mrf.mxu0
        %2897 = vdwg.mxu0
        %v2906 = vrot.slane %v1460, 7
        %v2907 = vrot.slane %v1498, 6
        %v2908 = vrot.slane %v1536, 5
        %v2909 = vrot.slane %v1574, 4
        %v2910 = vrot.slane %v1612, 3
        %v2911 = vrot.slane %v1650, 2
        %v2912 = vrot.slane %v1688, 1
        %v2913 = vsel %vm1754, %v1422, %v2906
        %v2914 = vsel %vm1756, %v2907, %v2908
        %v2915 = vsel %vm1758, %v2913, %v2914
        %v2916 = vsel %vm1760, %v2909, %v2910
        %v2917 = vsel %vm1762, %v2911, %v2912
        %v2918 = vsel %vm1764, %v2916, %v2917
        %v2919 = vsel %vm1766, %v2915, %v2918
        %v2921 = vmul.f32 %v1697, %v2919
        %v2922 = vadd.f32 %v2921, 0.0
        %2923 = vst [vmem:[#allocation1] sm:$0xff] %v1422
        %2924 = vst [vmem:[#allocation1 + $0x9] sm:$0xff] %v1460
        %2925 = vst [vmem:[#allocation1 + $0x12] sm:$0xff] %v1498
        %2926 = vst [vmem:[#allocation1 + $0x1b] sm:$0xff] %v1536
        %2927 = vst [vmem:[#allocation1 + $0x24] sm:$0xff] %v1574
        %2928 = vst [vmem:[#allocation1 + $0x2d] sm:$0xff] %v1612
        %2929 = vst [vmem:[#allocation1 + $0x36] sm:$0xff] %v1650
        %2930 = vst [vmem:[#allocation1 + $0x3f] sm:$0xff] %v1688
        %s2931 = scalar_lea.vmem [#allocation1], 1
        %v2932 = vld [vmem:[%s2931] ss:$9 sm:$0xff]
        %v2934 = vmul.f32 %v1697, %v2932
        %v2935 = vadd.f32 %v2934, 0.0
        %2936 = vst [vmem:[#allocation1] sm:$0xff] %v1422
        %2937 = vst [vmem:[#allocation1 + $0x9] sm:$0xff] %v1460
        %2938 = vst [vmem:[#allocation1 + $0x12] sm:$0xff] %v1498
        %2939 = vst [vmem:[#allocation1 + $0x1b] sm:$0xff] %v1536
        %2940 = vst [vmem:[#allocation1 + $0x24] sm:$0xff] %v1574
        %2941 = vst [vmem:[#allocation1 + $0x2d] sm:$0xff] %v1612
        %2942 = vst [vmem:[#allocation1 + $0x36] sm:$0xff] %v1650
        %2943 = vst [vmem:[#allocation1 + $0x3f] sm:$0xff] %v1688
        %s2944 = scalar_lea.vmem [#allocation1], 2
        %v2945 = vld [vmem:[%s2944] ss:$9 sm:$0xff]
        %v2947 = vmul.f32 %v1701, %v2945
        %v2948 = vadd.f32 %v2922, %v2947
        %2949 = vst [vmem:[#allocation1] sm:$0xff] %v1422
        %2950 = vst [vmem:[#allocation1 + $0x9] sm:$0xff] %v1460
        %2951 = vst [vmem:[#allocation1 + $0x12] sm:$0xff] %v1498
        %2952 = vst [vmem:[#allocation1 + $0x1b] sm:$0xff] %v1536
        %2953 = vst [vmem:[#allocation1 + $0x24] sm:$0xff] %v1574
        %2954 = vst [vmem:[#allocation1 + $0x2d] sm:$0xff] %v1612
        %2955 = vst [vmem:[#allocation1 + $0x36] sm:$0xff] %v1650
        %2956 = vst [vmem:[#allocation1 + $0x3f] sm:$0xff] %v1688
        %s2957 = scalar_lea.vmem [#allocation1], 3
        %v2958 = vld [vmem:[%s2957] ss:$9 sm:$0xff]
        %v2960 = vmul.f32 %v1701, %v2958
        %v2961 = vadd.f32 %v2935, %v2960
        %2962 = vst [vmem:[#allocation1] sm:$0xff] %v1422
        %2963 = vst [vmem:[#allocation1 + $0x9] sm:$0xff] %v1460
        %2964 = vst [vmem:[#allocation1 + $0x12] sm:$0xff] %v1498
        %2965 = vst [vmem:[#allocation1 + $0x1b] sm:$0xff] %v1536
        %2966 = vst [vmem:[#allocation1 + $0x24] sm:$0xff] %v1574
        %2967 = vst [vmem:[#allocation1 + $0x2d] sm:$0xff] %v1612
        %2968 = vst [vmem:[#allocation1 + $0x36] sm:$0xff] %v1650
        %2969 = vst [vmem:[#allocation1 + $0x3f] sm:$0xff] %v1688
        %s2970 = scalar_lea.vmem [#allocation1], 4
        %v2971 = vld [vmem:[%s2970] ss:$9 sm:$0xff]
        %v2973 = vmul.f32 %v1705, %v2971
        %v2974 = vadd.f32 %v2948, %v2973
        %2975 = vst [vmem:[#allocation1] sm:$0xff] %v1422
        %2976 = vst [vmem:[#allocation1 + $0x9] sm:$0xff] %v1460
        %2977 = vst [vmem:[#allocation1 + $0x12] sm:$0xff] %v1498
        %2978 = vst [vmem:[#allocation1 + $0x1b] sm:$0xff] %v1536
        %2979 = vst [vmem:[#allocation1 + $0x24] sm:$0xff] %v1574
        %2980 = vst [vmem:[#allocation1 + $0x2d] sm:$0xff] %v1612
        %2981 = vst [vmem:[#allocation1 + $0x36] sm:$0xff] %v1650
        %2982 = vst [vmem:[#allocation1 + $0x3f] sm:$0xff] %v1688
        %s2983 = scalar_lea.vmem [#allocation1], 5
        %v2984 = vld [vmem:[%s2983] ss:$9 sm:$0xff]
        %v2986 = vmul.f32 %v1705, %v2984
        %v2987 = vadd.f32 %v2961, %v2986
        %2988 = vst [vmem:[#allocation1] sm:$0xff] %v1422
        %2989 = vst [vmem:[#allocation1 + $0x9] sm:$0xff] %v1460
        %2990 = vst [vmem:[#allocation1 + $0x12] sm:$0xff] %v1498
        %2991 = vst [vmem:[#allocation1 + $0x1b] sm:$0xff] %v1536
        %2992 = vst [vmem:[#allocation1 + $0x24] sm:$0xff] %v1574
        %2993 = vst [vmem:[#allocation1 + $0x2d] sm:$0xff] %v1612
        %2994 = vst [vmem:[#allocation1 + $0x36] sm:$0xff] %v1650
        %2995 = vst [vmem:[#allocation1 + $0x3f] sm:$0xff] %v1688
        %s2996 = scalar_lea.vmem [#allocation1], 6
        %v2997 = vld [vmem:[%s2996] ss:$9 sm:$0xff]
        %v2999 = vmul.f32 %v1709, %v2997
        %v3000 = vadd.f32 %v2974, %v2999
        %3001 = vst [vmem:[#allocation1] sm:$0xff] %v1422
        %3002 = vst [vmem:[#allocation1 + $0x9] sm:$0xff] %v1460
        %3003 = vst [vmem:[#allocation1 + $0x12] sm:$0xff] %v1498
        %3004 = vst [vmem:[#allocation1 + $0x1b] sm:$0xff] %v1536
        %3005 = vst [vmem:[#allocation1 + $0x24] sm:$0xff] %v1574
        %3006 = vst [vmem:[#allocation1 + $0x2d] sm:$0xff] %v1612
        %3007 = vst [vmem:[#allocation1 + $0x36] sm:$0xff] %v1650
        %3008 = vst [vmem:[#allocation1 + $0x3f] sm:$0xff] %v1688
        %s3009 = scalar_lea.vmem [#allocation1], 7
        %v3010 = vld [vmem:[%s3009] ss:$9 sm:$0xff]
        %v3012 = vmul.f32 %v1709, %v3010
        %v3013 = vadd.f32 %v2987, %v3012
        %v3014 = vmul.f32 %v3000, 0.5
        %v3015 = vadd.f32 %v1713, %v3014
        %v3016 = vmax.f32 %v3015, 0.0
        %v3017 = vmin.f32 %v3016, 15.0
        %v3018 = vmul.f32 %v3013, 0.5
        %v3019 = vadd.f32 %v1717, %v3018
        %v3020 = vmax.f32 %v3019, 0.0
        %v3021 = vmin.f32 %v3020, 15.0
        %v3022 = vfloor.f32 %v3017
        %v3023 = vfloor.f32 %v3021
        %v3024 = vsub.f32 %v3017, %v3022
        %v3025 = vsub.f32 %v3021, %v3023
        %v3026 = vadd.f32 %v3022, 1.0
        %v3027 = vmin.f32 %v3026, 15.0
        %v3028 = vadd.f32 %v3023, 1.0
        %v3029 = vmin.f32 %v3028, 15.0
        %v3031 = vperm.slane %v3023, 0
        %v3032 = vperm.slane %v3023, 1
        %v3033 = vperm.slane %v3023, 2
        %v3034 = vperm.slane %v3023, 3
        %v3035 = vperm.slane %v3023, 4
        %v3036 = vperm.slane %v3023, 5
        %v3037 = vperm.slane %v3023, 6
        %v3038 = vperm.slane %v3023, 7
        %vm3047 = vcmp.eq.f32.partialorder %v1737, %v3031
        %vm3048 = vcmp.eq.f32.partialorder %v1737, %v3032
        %vm3049 = vcmp.eq.f32.partialorder %v1737, %v3033
        %vm3050 = vcmp.eq.f32.partialorder %v1737, %v3034
        %vm3051 = vcmp.eq.f32.partialorder %v1737, %v3035
        %vm3052 = vcmp.eq.f32.partialorder %v1737, %v3036
        %vm3053 = vcmp.eq.f32.partialorder %v1737, %v3037
        %vm3054 = vcmp.eq.f32.partialorder %v1737, %v3038
        %vm3055 = vcmp.eq.f32.partialorder %v1738, %v3031
        %vm3056 = vcmp.eq.f32.partialorder %v1738, %v3032
        %vm3057 = vcmp.eq.f32.partialorder %v1738, %v3033
        %vm3058 = vcmp.eq.f32.partialorder %v1738, %v3034
        %vm3059 = vcmp.eq.f32.partialorder %v1738, %v3035
        %vm3060 = vcmp.eq.f32.partialorder %v1738, %v3036
        %vm3061 = vcmp.eq.f32.partialorder %v1738, %v3037
        %vm3062 = vcmp.eq.f32.partialorder %v1738, %v3038
        %v3063 = vsub.f32 1.0, %v3025
        %v3065 = vperm.slane %v3063, 0
        %v3066 = vperm.slane %v3063, 1
        %v3067 = vperm.slane %v3063, 2
        %v3068 = vperm.slane %v3063, 3
        %v3069 = vperm.slane %v3063, 4
        %v3070 = vperm.slane %v3063, 5
        %v3071 = vperm.slane %v3063, 6
        %v3072 = vperm.slane %v3063, 7
        %v3081 = vsel %vm3047, %v3065, 0.0
        %v3082 = vsel %vm3048, %v3066, 0.0
        %v3083 = vsel %vm3049, %v3067, 0.0
        %v3084 = vsel %vm3050, %v3068, 0.0
        %v3085 = vsel %vm3051, %v3069, 0.0
        %v3086 = vsel %vm3052, %v3070, 0.0
        %v3087 = vsel %vm3053, %v3071, 0.0
        %v3088 = vsel %vm3054, %v3072, 0.0
        %v3089 = vsel %vm3055, %v3065, 0.0
        %v3090 = vsel %vm3056, %v3066, 0.0
        %v3091 = vsel %vm3057, %v3067, 0.0
        %v3092 = vsel %vm3058, %v3068, 0.0
        %v3093 = vsel %vm3059, %v3069, 0.0
        %v3094 = vsel %vm3060, %v3070, 0.0
        %v3095 = vsel %vm3061, %v3071, 0.0
        %v3096 = vsel %vm3062, %v3072, 0.0
        %v3098 = vperm.slane %v3029, 0
        %v3099 = vperm.slane %v3029, 1
        %v3100 = vperm.slane %v3029, 2
        %v3101 = vperm.slane %v3029, 3
        %v3102 = vperm.slane %v3029, 4
        %v3103 = vperm.slane %v3029, 5
        %v3104 = vperm.slane %v3029, 6
        %v3105 = vperm.slane %v3029, 7
        %vm3114 = vcmp.eq.f32.partialorder %v1737, %v3098
        %vm3115 = vcmp.eq.f32.partialorder %v1737, %v3099
        %vm3116 = vcmp.eq.f32.partialorder %v1737, %v3100
        %vm3117 = vcmp.eq.f32.partialorder %v1737, %v3101
        %vm3118 = vcmp.eq.f32.partialorder %v1737, %v3102
        %vm3119 = vcmp.eq.f32.partialorder %v1737, %v3103
        %vm3120 = vcmp.eq.f32.partialorder %v1737, %v3104
        %vm3121 = vcmp.eq.f32.partialorder %v1737, %v3105
        %vm3122 = vcmp.eq.f32.partialorder %v1738, %v3098
        %vm3123 = vcmp.eq.f32.partialorder %v1738, %v3099
        %vm3124 = vcmp.eq.f32.partialorder %v1738, %v3100
        %vm3125 = vcmp.eq.f32.partialorder %v1738, %v3101
        %vm3126 = vcmp.eq.f32.partialorder %v1738, %v3102
        %vm3127 = vcmp.eq.f32.partialorder %v1738, %v3103
        %vm3128 = vcmp.eq.f32.partialorder %v1738, %v3104
        %vm3129 = vcmp.eq.f32.partialorder %v1738, %v3105
        %v3131 = vperm.slane %v3025, 0
        %v3132 = vperm.slane %v3025, 1
        %v3133 = vperm.slane %v3025, 2
        %v3134 = vperm.slane %v3025, 3
        %v3135 = vperm.slane %v3025, 4
        %v3136 = vperm.slane %v3025, 5
        %v3137 = vperm.slane %v3025, 6
        %v3138 = vperm.slane %v3025, 7
        %v3147 = vsel %vm3114, %v3131, 0.0
        %v3148 = vsel %vm3115, %v3132, 0.0
        %v3149 = vsel %vm3116, %v3133, 0.0
        %v3150 = vsel %vm3117, %v3134, 0.0
        %v3151 = vsel %vm3118, %v3135, 0.0
        %v3152 = vsel %vm3119, %v3136, 0.0
        %v3153 = vsel %vm3120, %v3137, 0.0
        %v3154 = vsel %vm3121, %v3138, 0.0
        %v3155 = vsel %vm3122, %v3131, 0.0
        %v3156 = vsel %vm3123, %v3132, 0.0
        %v3157 = vsel %vm3124, %v3133, 0.0
        %v3158 = vsel %vm3125, %v3134, 0.0
        %v3159 = vsel %vm3126, %v3135, 0.0
        %v3160 = vsel %vm3127, %v3136, 0.0
        %v3161 = vsel %vm3128, %v3137, 0.0
        %v3162 = vsel %vm3129, %v3138, 0.0
        %v3163 = vadd.f32 %v3081, %v3147
        %v3164 = vadd.f32 %v3082, %v3148
        %v3165 = vadd.f32 %v3083, %v3149
        %v3166 = vadd.f32 %v3084, %v3150
        %v3167 = vadd.f32 %v3085, %v3151
        %v3168 = vadd.f32 %v3086, %v3152
        %v3169 = vadd.f32 %v3087, %v3153
        %v3170 = vadd.f32 %v3088, %v3154
        %v3171 = vadd.f32 %v3089, %v3155
        %v3172 = vadd.f32 %v3090, %v3156
        %v3173 = vadd.f32 %v3091, %v3157
        %v3174 = vadd.f32 %v3092, %v3158
        %v3175 = vadd.f32 %v3093, %v3159
        %v3176 = vadd.f32 %v3094, %v3160
        %v3177 = vadd.f32 %v3095, %v3161
        %v3178 = vadd.f32 %v3096, %v3162
        %v3180 = vperm.slane %v3022, 0
        %v3181 = vperm.slane %v3022, 1
        %v3182 = vperm.slane %v3022, 2
        %v3183 = vperm.slane %v3022, 3
        %v3184 = vperm.slane %v3022, 4
        %v3185 = vperm.slane %v3022, 5
        %v3186 = vperm.slane %v3022, 6
        %v3187 = vperm.slane %v3022, 7
        %vm3196 = vcmp.eq.f32.partialorder %v1737, %v3180
        %vm3197 = vcmp.eq.f32.partialorder %v1737, %v3181
        %vm3198 = vcmp.eq.f32.partialorder %v1737, %v3182
        %vm3199 = vcmp.eq.f32.partialorder %v1737, %v3183
        %vm3200 = vcmp.eq.f32.partialorder %v1737, %v3184
        %vm3201 = vcmp.eq.f32.partialorder %v1737, %v3185
        %vm3202 = vcmp.eq.f32.partialorder %v1737, %v3186
        %vm3203 = vcmp.eq.f32.partialorder %v1737, %v3187
        %vm3204 = vcmp.eq.f32.partialorder %v1738, %v3180
        %vm3205 = vcmp.eq.f32.partialorder %v1738, %v3181
        %vm3206 = vcmp.eq.f32.partialorder %v1738, %v3182
        %vm3207 = vcmp.eq.f32.partialorder %v1738, %v3183
        %vm3208 = vcmp.eq.f32.partialorder %v1738, %v3184
        %vm3209 = vcmp.eq.f32.partialorder %v1738, %v3185
        %vm3210 = vcmp.eq.f32.partialorder %v1738, %v3186
        %vm3211 = vcmp.eq.f32.partialorder %v1738, %v3187
        %v3212 = vsub.f32 1.0, %v3024
        %v3214 = vperm.slane %v3212, 0
        %v3215 = vperm.slane %v3212, 1
        %v3216 = vperm.slane %v3212, 2
        %v3217 = vperm.slane %v3212, 3
        %v3218 = vperm.slane %v3212, 4
        %v3219 = vperm.slane %v3212, 5
        %v3220 = vperm.slane %v3212, 6
        %v3221 = vperm.slane %v3212, 7
        %v3230 = vsel %vm3196, %v3214, 0.0
        %v3231 = vsel %vm3197, %v3215, 0.0
        %v3232 = vsel %vm3198, %v3216, 0.0
        %v3233 = vsel %vm3199, %v3217, 0.0
        %v3234 = vsel %vm3200, %v3218, 0.0
        %v3235 = vsel %vm3201, %v3219, 0.0
        %v3236 = vsel %vm3202, %v3220, 0.0
        %v3237 = vsel %vm3203, %v3221, 0.0
        %v3238 = vsel %vm3204, %v3214, 0.0
        %v3239 = vsel %vm3205, %v3215, 0.0
        %v3240 = vsel %vm3206, %v3216, 0.0
        %v3241 = vsel %vm3207, %v3217, 0.0
        %v3242 = vsel %vm3208, %v3218, 0.0
        %v3243 = vsel %vm3209, %v3219, 0.0
        %v3244 = vsel %vm3210, %v3220, 0.0
        %v3245 = vsel %vm3211, %v3221, 0.0
        %v3247 = vperm.slane %v3027, 0
        %v3248 = vperm.slane %v3027, 1
        %v3249 = vperm.slane %v3027, 2
        %v3250 = vperm.slane %v3027, 3
        %v3251 = vperm.slane %v3027, 4
        %v3252 = vperm.slane %v3027, 5
        %v3253 = vperm.slane %v3027, 6
        %v3254 = vperm.slane %v3027, 7
        %vm3263 = vcmp.eq.f32.partialorder %v1737, %v3247
        %vm3264 = vcmp.eq.f32.partialorder %v1737, %v3248
        %vm3265 = vcmp.eq.f32.partialorder %v1737, %v3249
        %vm3266 = vcmp.eq.f32.partialorder %v1737, %v3250
        %vm3267 = vcmp.eq.f32.partialorder %v1737, %v3251
        %vm3268 = vcmp.eq.f32.partialorder %v1737, %v3252
        %vm3269 = vcmp.eq.f32.partialorder %v1737, %v3253
        %vm3270 = vcmp.eq.f32.partialorder %v1737, %v3254
        %vm3271 = vcmp.eq.f32.partialorder %v1738, %v3247
        %vm3272 = vcmp.eq.f32.partialorder %v1738, %v3248
        %vm3273 = vcmp.eq.f32.partialorder %v1738, %v3249
        %vm3274 = vcmp.eq.f32.partialorder %v1738, %v3250
        %vm3275 = vcmp.eq.f32.partialorder %v1738, %v3251
        %vm3276 = vcmp.eq.f32.partialorder %v1738, %v3252
        %vm3277 = vcmp.eq.f32.partialorder %v1738, %v3253
        %vm3278 = vcmp.eq.f32.partialorder %v1738, %v3254
        %v3280 = vperm.slane %v3024, 0
        %v3281 = vperm.slane %v3024, 1
        %v3282 = vperm.slane %v3024, 2
        %v3283 = vperm.slane %v3024, 3
        %v3284 = vperm.slane %v3024, 4
        %v3285 = vperm.slane %v3024, 5
        %v3286 = vperm.slane %v3024, 6
        %v3287 = vperm.slane %v3024, 7
        %v3296 = vsel %vm3263, %v3280, 0.0
        %v3297 = vsel %vm3264, %v3281, 0.0
        %v3298 = vsel %vm3265, %v3282, 0.0
        %v3299 = vsel %vm3266, %v3283, 0.0
        %v3300 = vsel %vm3267, %v3284, 0.0
        %v3301 = vsel %vm3268, %v3285, 0.0
        %v3302 = vsel %vm3269, %v3286, 0.0
        %v3303 = vsel %vm3270, %v3287, 0.0
        %v3304 = vsel %vm3271, %v3280, 0.0
        %v3305 = vsel %vm3272, %v3281, 0.0
        %v3306 = vsel %vm3273, %v3282, 0.0
        %v3307 = vsel %vm3274, %v3283, 0.0
        %v3308 = vsel %vm3275, %v3284, 0.0
        %v3309 = vsel %vm3276, %v3285, 0.0
        %v3310 = vsel %vm3277, %v3286, 0.0
        %v3311 = vsel %vm3278, %v3287, 0.0
        %v3312 = vadd.f32 %v3230, %v3296
        %v3313 = vadd.f32 %v3231, %v3297
        %v3314 = vadd.f32 %v3232, %v3298
        %v3315 = vadd.f32 %v3233, %v3299
        %v3316 = vadd.f32 %v3234, %v3300
        %v3317 = vadd.f32 %v3235, %v3301
        %v3318 = vadd.f32 %v3236, %v3302
        %v3319 = vadd.f32 %v3237, %v3303
        %v3320 = vadd.f32 %v3238, %v3304
        %v3321 = vadd.f32 %v3239, %v3305
        %v3322 = vadd.f32 %v3240, %v3306
        %v3323 = vadd.f32 %v3241, %v3307
        %v3324 = vadd.f32 %v3242, %v3308
        %v3325 = vadd.f32 %v3243, %v3309
        %v3326 = vadd.f32 %v3244, %v3310
        %v3327 = vadd.f32 %v3245, %v3311
        %v3328 = vperm.slane %v3163, 0
        %v3329 = vperm.slane %v3164, 0
        %v3330 = vperm.slane %v3165, 0
        %v3331 = vperm.slane %v3166, 0
        %v3332 = vperm.slane %v3167, 0
        %v3333 = vperm.slane %v3168, 0
        %v3334 = vperm.slane %v3169, 0
        %v3335 = vperm.slane %v3170, 0
        %v3336 = vmul.f32 %v3328, %v3312
        %v3337 = vmul.f32 %v3329, %v3313
        %v3338 = vmul.f32 %v3330, %v3314
        %v3339 = vmul.f32 %v3331, %v3315
        %v3340 = vmul.f32 %v3332, %v3316
        %v3341 = vmul.f32 %v3333, %v3317
        %v3342 = vmul.f32 %v3334, %v3318
        %v3343 = vmul.f32 %v3335, %v3319
        %v3344 = vmul.f32 %v3328, %v3320
        %v3345 = vmul.f32 %v3329, %v3321
        %v3346 = vmul.f32 %v3330, %v3322
        %v3347 = vmul.f32 %v3331, %v3323
        %v3348 = vmul.f32 %v3332, %v3324
        %v3349 = vmul.f32 %v3333, %v3325
        %v3350 = vmul.f32 %v3334, %v3326
        %v3351 = vmul.f32 %v3335, %v3327
        %v3352 = vperm.slane %v3163, 1
        %v3353 = vperm.slane %v3164, 1
        %v3354 = vperm.slane %v3165, 1
        %v3355 = vperm.slane %v3166, 1
        %v3356 = vperm.slane %v3167, 1
        %v3357 = vperm.slane %v3168, 1
        %v3358 = vperm.slane %v3169, 1
        %v3359 = vperm.slane %v3170, 1
        %v3360 = vmul.f32 %v3352, %v3312
        %v3361 = vmul.f32 %v3353, %v3313
        %v3362 = vmul.f32 %v3354, %v3314
        %v3363 = vmul.f32 %v3355, %v3315
        %v3364 = vmul.f32 %v3356, %v3316
        %v3365 = vmul.f32 %v3357, %v3317
        %v3366 = vmul.f32 %v3358, %v3318
        %v3367 = vmul.f32 %v3359, %v3319
        %v3368 = vmul.f32 %v3352, %v3320
        %v3369 = vmul.f32 %v3353, %v3321
        %v3370 = vmul.f32 %v3354, %v3322
        %v3371 = vmul.f32 %v3355, %v3323
        %v3372 = vmul.f32 %v3356, %v3324
        %v3373 = vmul.f32 %v3357, %v3325
        %v3374 = vmul.f32 %v3358, %v3326
        %v3375 = vmul.f32 %v3359, %v3327
        %v3376 = vperm.slane %v3163, 2
        %v3377 = vperm.slane %v3164, 2
        %v3378 = vperm.slane %v3165, 2
        %v3379 = vperm.slane %v3166, 2
        %v3380 = vperm.slane %v3167, 2
        %v3381 = vperm.slane %v3168, 2
        %v3382 = vperm.slane %v3169, 2
        %v3383 = vperm.slane %v3170, 2
        %v3384 = vmul.f32 %v3376, %v3312
        %v3385 = vmul.f32 %v3377, %v3313
        %v3386 = vmul.f32 %v3378, %v3314
        %v3387 = vmul.f32 %v3379, %v3315
        %v3388 = vmul.f32 %v3380, %v3316
        %v3389 = vmul.f32 %v3381, %v3317
        %v3390 = vmul.f32 %v3382, %v3318
        %v3391 = vmul.f32 %v3383, %v3319
        %v3392 = vmul.f32 %v3376, %v3320
        %v3393 = vmul.f32 %v3377, %v3321
        %v3394 = vmul.f32 %v3378, %v3322
        %v3395 = vmul.f32 %v3379, %v3323
        %v3396 = vmul.f32 %v3380, %v3324
        %v3397 = vmul.f32 %v3381, %v3325
        %v3398 = vmul.f32 %v3382, %v3326
        %v3399 = vmul.f32 %v3383, %v3327
        %v3400 = vperm.slane %v3163, 3
        %v3401 = vperm.slane %v3164, 3
        %v3402 = vperm.slane %v3165, 3
        %v3403 = vperm.slane %v3166, 3
        %v3404 = vperm.slane %v3167, 3
        %v3405 = vperm.slane %v3168, 3
        %v3406 = vperm.slane %v3169, 3
        %v3407 = vperm.slane %v3170, 3
        %v3408 = vmul.f32 %v3400, %v3312
        %v3409 = vmul.f32 %v3401, %v3313
        %v3410 = vmul.f32 %v3402, %v3314
        %v3411 = vmul.f32 %v3403, %v3315
        %v3412 = vmul.f32 %v3404, %v3316
        %v3413 = vmul.f32 %v3405, %v3317
        %v3414 = vmul.f32 %v3406, %v3318
        %v3415 = vmul.f32 %v3407, %v3319
        %v3416 = vmul.f32 %v3400, %v3320
        %v3417 = vmul.f32 %v3401, %v3321
        %v3418 = vmul.f32 %v3402, %v3322
        %v3419 = vmul.f32 %v3403, %v3323
        %v3420 = vmul.f32 %v3404, %v3324
        %v3421 = vmul.f32 %v3405, %v3325
        %v3422 = vmul.f32 %v3406, %v3326
        %v3423 = vmul.f32 %v3407, %v3327
        %v3424 = vperm.slane %v3163, 4
        %v3425 = vperm.slane %v3164, 4
        %v3426 = vperm.slane %v3165, 4
        %v3427 = vperm.slane %v3166, 4
        %v3428 = vperm.slane %v3167, 4
        %v3429 = vperm.slane %v3168, 4
        %v3430 = vperm.slane %v3169, 4
        %v3431 = vperm.slane %v3170, 4
        %v3432 = vmul.f32 %v3424, %v3312
        %v3433 = vmul.f32 %v3425, %v3313
        %v3434 = vmul.f32 %v3426, %v3314
        %v3435 = vmul.f32 %v3427, %v3315
        %v3436 = vmul.f32 %v3428, %v3316
        %v3437 = vmul.f32 %v3429, %v3317
        %v3438 = vmul.f32 %v3430, %v3318
        %v3439 = vmul.f32 %v3431, %v3319
        %v3440 = vmul.f32 %v3424, %v3320
        %v3441 = vmul.f32 %v3425, %v3321
        %v3442 = vmul.f32 %v3426, %v3322
        %v3443 = vmul.f32 %v3427, %v3323
        %v3444 = vmul.f32 %v3428, %v3324
        %v3445 = vmul.f32 %v3429, %v3325
        %v3446 = vmul.f32 %v3430, %v3326
        %v3447 = vmul.f32 %v3431, %v3327
        %v3448 = vperm.slane %v3163, 5
        %v3449 = vperm.slane %v3164, 5
        %v3450 = vperm.slane %v3165, 5
        %v3451 = vperm.slane %v3166, 5
        %v3452 = vperm.slane %v3167, 5
        %v3453 = vperm.slane %v3168, 5
        %v3454 = vperm.slane %v3169, 5
        %v3455 = vperm.slane %v3170, 5
        %v3456 = vmul.f32 %v3448, %v3312
        %v3457 = vmul.f32 %v3449, %v3313
        %v3458 = vmul.f32 %v3450, %v3314
        %v3459 = vmul.f32 %v3451, %v3315
        %v3460 = vmul.f32 %v3452, %v3316
        %v3461 = vmul.f32 %v3453, %v3317
        %v3462 = vmul.f32 %v3454, %v3318
        %v3463 = vmul.f32 %v3455, %v3319
        %v3464 = vmul.f32 %v3448, %v3320
        %v3465 = vmul.f32 %v3449, %v3321
        %v3466 = vmul.f32 %v3450, %v3322
        %v3467 = vmul.f32 %v3451, %v3323
        %v3468 = vmul.f32 %v3452, %v3324
        %v3469 = vmul.f32 %v3453, %v3325
        %v3470 = vmul.f32 %v3454, %v3326
        %v3471 = vmul.f32 %v3455, %v3327
        %v3472 = vperm.slane %v3163, 6
        %v3473 = vperm.slane %v3164, 6
        %v3474 = vperm.slane %v3165, 6
        %v3475 = vperm.slane %v3166, 6
        %v3476 = vperm.slane %v3167, 6
        %v3477 = vperm.slane %v3168, 6
        %v3478 = vperm.slane %v3169, 6
        %v3479 = vperm.slane %v3170, 6
        %v3480 = vmul.f32 %v3472, %v3312
        %v3481 = vmul.f32 %v3473, %v3313
        %v3482 = vmul.f32 %v3474, %v3314
        %v3483 = vmul.f32 %v3475, %v3315
        %v3484 = vmul.f32 %v3476, %v3316
        %v3485 = vmul.f32 %v3477, %v3317
        %v3486 = vmul.f32 %v3478, %v3318
        %v3487 = vmul.f32 %v3479, %v3319
        %v3488 = vmul.f32 %v3472, %v3320
        %v3489 = vmul.f32 %v3473, %v3321
        %v3490 = vmul.f32 %v3474, %v3322
        %v3491 = vmul.f32 %v3475, %v3323
        %v3492 = vmul.f32 %v3476, %v3324
        %v3493 = vmul.f32 %v3477, %v3325
        %v3494 = vmul.f32 %v3478, %v3326
        %v3495 = vmul.f32 %v3479, %v3327
        %v3496 = vperm.slane %v3163, 7
        %v3497 = vperm.slane %v3164, 7
        %v3498 = vperm.slane %v3165, 7
        %v3499 = vperm.slane %v3166, 7
        %v3500 = vperm.slane %v3167, 7
        %v3501 = vperm.slane %v3168, 7
        %v3502 = vperm.slane %v3169, 7
        %v3503 = vperm.slane %v3170, 7
        %v3504 = vmul.f32 %v3496, %v3312
        %v3505 = vmul.f32 %v3497, %v3313
        %v3506 = vmul.f32 %v3498, %v3314
        %v3507 = vmul.f32 %v3499, %v3315
        %v3508 = vmul.f32 %v3500, %v3316
        %v3509 = vmul.f32 %v3501, %v3317
        %v3510 = vmul.f32 %v3502, %v3318
        %v3511 = vmul.f32 %v3503, %v3319
        %v3512 = vmul.f32 %v3496, %v3320
        %v3513 = vmul.f32 %v3497, %v3321
        %v3514 = vmul.f32 %v3498, %v3322
        %v3515 = vmul.f32 %v3499, %v3323
        %v3516 = vmul.f32 %v3500, %v3324
        %v3517 = vmul.f32 %v3501, %v3325
        %v3518 = vmul.f32 %v3502, %v3326
        %v3519 = vmul.f32 %v3503, %v3327
        %v3520 = vperm.slane %v3171, 0
        %v3521 = vperm.slane %v3172, 0
        %v3522 = vperm.slane %v3173, 0
        %v3523 = vperm.slane %v3174, 0
        %v3524 = vperm.slane %v3175, 0
        %v3525 = vperm.slane %v3176, 0
        %v3526 = vperm.slane %v3177, 0
        %v3527 = vperm.slane %v3178, 0
        %v3528 = vmul.f32 %v3520, %v3312
        %v3529 = vmul.f32 %v3521, %v3313
        %v3530 = vmul.f32 %v3522, %v3314
        %v3531 = vmul.f32 %v3523, %v3315
        %v3532 = vmul.f32 %v3524, %v3316
        %v3533 = vmul.f32 %v3525, %v3317
        %v3534 = vmul.f32 %v3526, %v3318
        %v3535 = vmul.f32 %v3527, %v3319
        %v3536 = vmul.f32 %v3520, %v3320
        %v3537 = vmul.f32 %v3521, %v3321
        %v3538 = vmul.f32 %v3522, %v3322
        %v3539 = vmul.f32 %v3523, %v3323
        %v3540 = vmul.f32 %v3524, %v3324
        %v3541 = vmul.f32 %v3525, %v3325
        %v3542 = vmul.f32 %v3526, %v3326
        %v3543 = vmul.f32 %v3527, %v3327
        %v3544 = vperm.slane %v3171, 1
        %v3545 = vperm.slane %v3172, 1
        %v3546 = vperm.slane %v3173, 1
        %v3547 = vperm.slane %v3174, 1
        %v3548 = vperm.slane %v3175, 1
        %v3549 = vperm.slane %v3176, 1
        %v3550 = vperm.slane %v3177, 1
        %v3551 = vperm.slane %v3178, 1
        %v3552 = vmul.f32 %v3544, %v3312
        %v3553 = vmul.f32 %v3545, %v3313
        %v3554 = vmul.f32 %v3546, %v3314
        %v3555 = vmul.f32 %v3547, %v3315
        %v3556 = vmul.f32 %v3548, %v3316
        %v3557 = vmul.f32 %v3549, %v3317
        %v3558 = vmul.f32 %v3550, %v3318
        %v3559 = vmul.f32 %v3551, %v3319
        %v3560 = vmul.f32 %v3544, %v3320
        %v3561 = vmul.f32 %v3545, %v3321
        %v3562 = vmul.f32 %v3546, %v3322
        %v3563 = vmul.f32 %v3547, %v3323
        %v3564 = vmul.f32 %v3548, %v3324
        %v3565 = vmul.f32 %v3549, %v3325
        %v3566 = vmul.f32 %v3550, %v3326
        %v3567 = vmul.f32 %v3551, %v3327
        %v3568 = vperm.slane %v3171, 2
        %v3569 = vperm.slane %v3172, 2
        %v3570 = vperm.slane %v3173, 2
        %v3571 = vperm.slane %v3174, 2
        %v3572 = vperm.slane %v3175, 2
        %v3573 = vperm.slane %v3176, 2
        %v3574 = vperm.slane %v3177, 2
        %v3575 = vperm.slane %v3178, 2
        %v3576 = vmul.f32 %v3568, %v3312
        %v3577 = vmul.f32 %v3569, %v3313
        %v3578 = vmul.f32 %v3570, %v3314
        %v3579 = vmul.f32 %v3571, %v3315
        %v3580 = vmul.f32 %v3572, %v3316
        %v3581 = vmul.f32 %v3573, %v3317
        %v3582 = vmul.f32 %v3574, %v3318
        %v3583 = vmul.f32 %v3575, %v3319
        %v3584 = vmul.f32 %v3568, %v3320
        %v3585 = vmul.f32 %v3569, %v3321
        %v3586 = vmul.f32 %v3570, %v3322
        %v3587 = vmul.f32 %v3571, %v3323
        %v3588 = vmul.f32 %v3572, %v3324
        %v3589 = vmul.f32 %v3573, %v3325
        %v3590 = vmul.f32 %v3574, %v3326
        %v3591 = vmul.f32 %v3575, %v3327
        %v3592 = vperm.slane %v3171, 3
        %v3593 = vperm.slane %v3172, 3
        %v3594 = vperm.slane %v3173, 3
        %v3595 = vperm.slane %v3174, 3
        %v3596 = vperm.slane %v3175, 3
        %v3597 = vperm.slane %v3176, 3
        %v3598 = vperm.slane %v3177, 3
        %v3599 = vperm.slane %v3178, 3
        %v3600 = vmul.f32 %v3592, %v3312
        %v3601 = vmul.f32 %v3593, %v3313
        %v3602 = vmul.f32 %v3594, %v3314
        %v3603 = vmul.f32 %v3595, %v3315
        %v3604 = vmul.f32 %v3596, %v3316
        %v3605 = vmul.f32 %v3597, %v3317
        %v3606 = vmul.f32 %v3598, %v3318
        %v3607 = vmul.f32 %v3599, %v3319
        %v3608 = vmul.f32 %v3592, %v3320
        %v3609 = vmul.f32 %v3593, %v3321
        %v3610 = vmul.f32 %v3594, %v3322
        %v3611 = vmul.f32 %v3595, %v3323
        %v3612 = vmul.f32 %v3596, %v3324
        %v3613 = vmul.f32 %v3597, %v3325
        %v3614 = vmul.f32 %v3598, %v3326
        %v3615 = vmul.f32 %v3599, %v3327
        %v3616 = vperm.slane %v3171, 4
        %v3617 = vperm.slane %v3172, 4
        %v3618 = vperm.slane %v3173, 4
        %v3619 = vperm.slane %v3174, 4
        %v3620 = vperm.slane %v3175, 4
        %v3621 = vperm.slane %v3176, 4
        %v3622 = vperm.slane %v3177, 4
        %v3623 = vperm.slane %v3178, 4
        %v3624 = vmul.f32 %v3616, %v3312
        %v3625 = vmul.f32 %v3617, %v3313
        %v3626 = vmul.f32 %v3618, %v3314
        %v3627 = vmul.f32 %v3619, %v3315
        %v3628 = vmul.f32 %v3620, %v3316
        %v3629 = vmul.f32 %v3621, %v3317
        %v3630 = vmul.f32 %v3622, %v3318
        %v3631 = vmul.f32 %v3623, %v3319
        %v3632 = vmul.f32 %v3616, %v3320
        %v3633 = vmul.f32 %v3617, %v3321
        %v3634 = vmul.f32 %v3618, %v3322
        %v3635 = vmul.f32 %v3619, %v3323
        %v3636 = vmul.f32 %v3620, %v3324
        %v3637 = vmul.f32 %v3621, %v3325
        %v3638 = vmul.f32 %v3622, %v3326
        %v3639 = vmul.f32 %v3623, %v3327
        %v3640 = vperm.slane %v3171, 5
        %v3641 = vperm.slane %v3172, 5
        %v3642 = vperm.slane %v3173, 5
        %v3643 = vperm.slane %v3174, 5
        %v3644 = vperm.slane %v3175, 5
        %v3645 = vperm.slane %v3176, 5
        %v3646 = vperm.slane %v3177, 5
        %v3647 = vperm.slane %v3178, 5
        %v3648 = vmul.f32 %v3640, %v3312
        %v3649 = vmul.f32 %v3641, %v3313
        %v3650 = vmul.f32 %v3642, %v3314
        %v3651 = vmul.f32 %v3643, %v3315
        %v3652 = vmul.f32 %v3644, %v3316
        %v3653 = vmul.f32 %v3645, %v3317
        %v3654 = vmul.f32 %v3646, %v3318
        %v3655 = vmul.f32 %v3647, %v3319
        %v3656 = vmul.f32 %v3640, %v3320
        %v3657 = vmul.f32 %v3641, %v3321
        %v3658 = vmul.f32 %v3642, %v3322
        %v3659 = vmul.f32 %v3643, %v3323
        %v3660 = vmul.f32 %v3644, %v3324
        %v3661 = vmul.f32 %v3645, %v3325
        %v3662 = vmul.f32 %v3646, %v3326
        %v3663 = vmul.f32 %v3647, %v3327
        %v3664 = vperm.slane %v3171, 6
        %v3665 = vperm.slane %v3172, 6
        %v3666 = vperm.slane %v3173, 6
        %v3667 = vperm.slane %v3174, 6
        %v3668 = vperm.slane %v3175, 6
        %v3669 = vperm.slane %v3176, 6
        %v3670 = vperm.slane %v3177, 6
        %v3671 = vperm.slane %v3178, 6
        %v3672 = vmul.f32 %v3664, %v3312
        %v3673 = vmul.f32 %v3665, %v3313
        %v3674 = vmul.f32 %v3666, %v3314
        %v3675 = vmul.f32 %v3667, %v3315
        %v3676 = vmul.f32 %v3668, %v3316
        %v3677 = vmul.f32 %v3669, %v3317
        %v3678 = vmul.f32 %v3670, %v3318
        %v3679 = vmul.f32 %v3671, %v3319
        %v3680 = vmul.f32 %v3664, %v3320
        %v3681 = vmul.f32 %v3665, %v3321
        %v3682 = vmul.f32 %v3666, %v3322
        %v3683 = vmul.f32 %v3667, %v3323
        %v3684 = vmul.f32 %v3668, %v3324
        %v3685 = vmul.f32 %v3669, %v3325
        %v3686 = vmul.f32 %v3670, %v3326
        %v3687 = vmul.f32 %v3671, %v3327
        %v3688 = vperm.slane %v3171, 7
        %v3689 = vperm.slane %v3172, 7
        %v3690 = vperm.slane %v3173, 7
        %v3691 = vperm.slane %v3174, 7
        %v3692 = vperm.slane %v3175, 7
        %v3693 = vperm.slane %v3176, 7
        %v3694 = vperm.slane %v3177, 7
        %v3695 = vperm.slane %v3178, 7
        %v3696 = vmul.f32 %v3688, %v3312
        %v3697 = vmul.f32 %v3689, %v3313
        %v3698 = vmul.f32 %v3690, %v3314
        %v3699 = vmul.f32 %v3691, %v3315
        %v3700 = vmul.f32 %v3692, %v3316
        %v3701 = vmul.f32 %v3693, %v3317
        %v3702 = vmul.f32 %v3694, %v3318
        %v3703 = vmul.f32 %v3695, %v3319
        %v3704 = vmul.f32 %v3688, %v3320
        %v3705 = vmul.f32 %v3689, %v3321
        %v3706 = vmul.f32 %v3690, %v3322
        %v3707 = vmul.f32 %v3691, %v3323
        %v3708 = vmul.f32 %v3692, %v3324
        %v3709 = vmul.f32 %v3693, %v3325
        %v3710 = vmul.f32 %v3694, %v3326
        %v3711 = vmul.f32 %v3695, %v3327
        %v3712 = vpack.c.bf16 %v3344, %v3336
        %v3713 = vpack.c.bf16 %v3345, %v3337
        %v3714 = vpack.c.bf16 %v3346, %v3338
        %v3715 = vpack.c.bf16 %v3347, %v3339
        %v3716 = vpack.c.bf16 %v3348, %v3340
        %v3717 = vpack.c.bf16 %v3349, %v3341
        %v3718 = vpack.c.bf16 %v3350, %v3342
        %v3719 = vpack.c.bf16 %v3351, %v3343
        %v3720 = vpack.c.bf16 %v3368, %v3360
        %v3721 = vpack.c.bf16 %v3369, %v3361
        %v3722 = vpack.c.bf16 %v3370, %v3362
        %v3723 = vpack.c.bf16 %v3371, %v3363
        %v3724 = vpack.c.bf16 %v3372, %v3364
        %v3725 = vpack.c.bf16 %v3373, %v3365
        %v3726 = vpack.c.bf16 %v3374, %v3366
        %v3727 = vpack.c.bf16 %v3375, %v3367
        %v3728 = vpack.c.bf16 %v3392, %v3384
        %v3729 = vpack.c.bf16 %v3393, %v3385
        %v3730 = vpack.c.bf16 %v3394, %v3386
        %v3731 = vpack.c.bf16 %v3395, %v3387
        %v3732 = vpack.c.bf16 %v3396, %v3388
        %v3733 = vpack.c.bf16 %v3397, %v3389
        %v3734 = vpack.c.bf16 %v3398, %v3390
        %v3735 = vpack.c.bf16 %v3399, %v3391
        %v3736 = vpack.c.bf16 %v3416, %v3408
        %v3737 = vpack.c.bf16 %v3417, %v3409
        %v3738 = vpack.c.bf16 %v3418, %v3410
        %v3739 = vpack.c.bf16 %v3419, %v3411
        %v3740 = vpack.c.bf16 %v3420, %v3412
        %v3741 = vpack.c.bf16 %v3421, %v3413
        %v3742 = vpack.c.bf16 %v3422, %v3414
        %v3743 = vpack.c.bf16 %v3423, %v3415
        %v3744 = vpack.c.bf16 %v3440, %v3432
        %v3745 = vpack.c.bf16 %v3441, %v3433
        %v3746 = vpack.c.bf16 %v3442, %v3434
        %v3747 = vpack.c.bf16 %v3443, %v3435
        %v3748 = vpack.c.bf16 %v3444, %v3436
        %v3749 = vpack.c.bf16 %v3445, %v3437
        %v3750 = vpack.c.bf16 %v3446, %v3438
        %v3751 = vpack.c.bf16 %v3447, %v3439
        %v3752 = vpack.c.bf16 %v3464, %v3456
        %v3753 = vpack.c.bf16 %v3465, %v3457
        %v3754 = vpack.c.bf16 %v3466, %v3458
        %v3755 = vpack.c.bf16 %v3467, %v3459
        %v3756 = vpack.c.bf16 %v3468, %v3460
        %v3757 = vpack.c.bf16 %v3469, %v3461
        %v3758 = vpack.c.bf16 %v3470, %v3462
        %v3759 = vpack.c.bf16 %v3471, %v3463
        %v3760 = vpack.c.bf16 %v3488, %v3480
        %v3761 = vpack.c.bf16 %v3489, %v3481
        %v3762 = vpack.c.bf16 %v3490, %v3482
        %v3763 = vpack.c.bf16 %v3491, %v3483
        %v3764 = vpack.c.bf16 %v3492, %v3484
        %v3765 = vpack.c.bf16 %v3493, %v3485
        %v3766 = vpack.c.bf16 %v3494, %v3486
        %v3767 = vpack.c.bf16 %v3495, %v3487
        %v3768 = vpack.c.bf16 %v3512, %v3504
        %v3769 = vpack.c.bf16 %v3513, %v3505
        %v3770 = vpack.c.bf16 %v3514, %v3506
        %v3771 = vpack.c.bf16 %v3515, %v3507
        %v3772 = vpack.c.bf16 %v3516, %v3508
        %v3773 = vpack.c.bf16 %v3517, %v3509
        %v3774 = vpack.c.bf16 %v3518, %v3510
        %v3775 = vpack.c.bf16 %v3519, %v3511
        %v3776 = vpack.c.bf16 %v3536, %v3528
        %v3777 = vpack.c.bf16 %v3537, %v3529
        %v3778 = vpack.c.bf16 %v3538, %v3530
        %v3779 = vpack.c.bf16 %v3539, %v3531
        %v3780 = vpack.c.bf16 %v3540, %v3532
        %v3781 = vpack.c.bf16 %v3541, %v3533
        %v3782 = vpack.c.bf16 %v3542, %v3534
        %v3783 = vpack.c.bf16 %v3543, %v3535
        %v3784 = vpack.c.bf16 %v3560, %v3552
        %v3785 = vpack.c.bf16 %v3561, %v3553
        %v3786 = vpack.c.bf16 %v3562, %v3554
        %v3787 = vpack.c.bf16 %v3563, %v3555
        %v3788 = vpack.c.bf16 %v3564, %v3556
        %v3789 = vpack.c.bf16 %v3565, %v3557
        %v3790 = vpack.c.bf16 %v3566, %v3558
        %v3791 = vpack.c.bf16 %v3567, %v3559
        %v3792 = vpack.c.bf16 %v3584, %v3576
        %v3793 = vpack.c.bf16 %v3585, %v3577
        %v3794 = vpack.c.bf16 %v3586, %v3578
        %v3795 = vpack.c.bf16 %v3587, %v3579
        %v3796 = vpack.c.bf16 %v3588, %v3580
        %v3797 = vpack.c.bf16 %v3589, %v3581
        %v3798 = vpack.c.bf16 %v3590, %v3582
        %v3799 = vpack.c.bf16 %v3591, %v3583
        %v3800 = vpack.c.bf16 %v3608, %v3600
        %v3801 = vpack.c.bf16 %v3609, %v3601
        %v3802 = vpack.c.bf16 %v3610, %v3602
        %v3803 = vpack.c.bf16 %v3611, %v3603
        %v3804 = vpack.c.bf16 %v3612, %v3604
        %v3805 = vpack.c.bf16 %v3613, %v3605
        %v3806 = vpack.c.bf16 %v3614, %v3606
        %v3807 = vpack.c.bf16 %v3615, %v3607
        %v3808 = vpack.c.bf16 %v3632, %v3624
        %v3809 = vpack.c.bf16 %v3633, %v3625
        %v3810 = vpack.c.bf16 %v3634, %v3626
        %v3811 = vpack.c.bf16 %v3635, %v3627
        %v3812 = vpack.c.bf16 %v3636, %v3628
        %v3813 = vpack.c.bf16 %v3637, %v3629
        %v3814 = vpack.c.bf16 %v3638, %v3630
        %v3815 = vpack.c.bf16 %v3639, %v3631
        %v3816 = vpack.c.bf16 %v3656, %v3648
        %v3817 = vpack.c.bf16 %v3657, %v3649
        %v3818 = vpack.c.bf16 %v3658, %v3650
        %v3819 = vpack.c.bf16 %v3659, %v3651
        %v3820 = vpack.c.bf16 %v3660, %v3652
        %v3821 = vpack.c.bf16 %v3661, %v3653
        %v3822 = vpack.c.bf16 %v3662, %v3654
        %v3823 = vpack.c.bf16 %v3663, %v3655
        %v3824 = vpack.c.bf16 %v3680, %v3672
        %v3825 = vpack.c.bf16 %v3681, %v3673
        %v3826 = vpack.c.bf16 %v3682, %v3674
        %v3827 = vpack.c.bf16 %v3683, %v3675
        %v3828 = vpack.c.bf16 %v3684, %v3676
        %v3829 = vpack.c.bf16 %v3685, %v3677
        %v3830 = vpack.c.bf16 %v3686, %v3678
        %v3831 = vpack.c.bf16 %v3687, %v3679
        %v3832 = vpack.c.bf16 %v3704, %v3696
        %v3833 = vpack.c.bf16 %v3705, %v3697
        %v3834 = vpack.c.bf16 %v3706, %v3698
        %v3835 = vpack.c.bf16 %v3707, %v3699
        %v3836 = vpack.c.bf16 %v3708, %v3700
        %v3837 = vpack.c.bf16 %v3709, %v3701
        %v3838 = vpack.c.bf16 %v3710, %v3702
        %v3839 = vpack.c.bf16 %v3711, %v3703
        %v3842 = vrot.slane %v2688, 1
        %v3843 = vrot.slane %v2689, 1
        %3846 = vmatpush.bf16.msra.mxu0 %v3768
        %3847 = vmatpush.bf16.msra.mxu0 %v3760
        %3848 = vmatpush.bf16.msra.mxu0 %v3752
        %3849 = vmatpush.bf16.msra.mxu0 %v3744
        %3850 = vmatpush.bf16.msra.mxu0 %v3736
        %3851 = vmatpush.bf16.msra.mxu0 %v3728
        %3852 = vmatpush.bf16.msra.mxu0 %v3720
        %3853 = vmatpush.bf16.msra.mxu0 %v3712
        %3854 = vmatmul.bf16.gmra.mxu0 %v3842
        %v3855 = vpop.f32.mrf.mxu0
        %v3856 = vadd.f32 0.0, %v3855
        %v3857 = vpop.f32.mrf.mxu0
        %3858 = vdwg.mxu0
        %3859 = vmatpush.bf16.msra.mxu0 %v3832
        %3860 = vmatpush.bf16.msra.mxu0 %v3824
        %3861 = vmatpush.bf16.msra.mxu0 %v3816
        %3862 = vmatpush.bf16.msra.mxu0 %v3808
        %3863 = vmatpush.bf16.msra.mxu0 %v3800
        %3864 = vmatpush.bf16.msra.mxu0 %v3792
        %3865 = vmatpush.bf16.msra.mxu0 %v3784
        %3866 = vmatpush.bf16.msra.mxu0 %v3776
        %3867 = vmatmul.bf16.gmra.mxu0 %v3843
        %v3868 = vpop.f32.mrf.mxu0
        %v3869 = vadd.f32 %v3856, %v3868
        %v3870 = vpop.f32.mrf.mxu0
        %3871 = vdwg.mxu0
        %3872 = vmatpush.bf16.msra.mxu0 %v3769
        %3873 = vmatpush.bf16.msra.mxu0 %v3761
        %3874 = vmatpush.bf16.msra.mxu0 %v3753
        %3875 = vmatpush.bf16.msra.mxu0 %v3745
        %3876 = vmatpush.bf16.msra.mxu0 %v3737
        %3877 = vmatpush.bf16.msra.mxu0 %v3729
        %3878 = vmatpush.bf16.msra.mxu0 %v3721
        %3879 = vmatpush.bf16.msra.mxu0 %v3713
        %3880 = vmatmul.bf16.gmra.mxu0 %v3842
        %v3881 = vpop.f32.mrf.mxu0
        %v3882 = vadd.f32 0.0, %v3881
        %v3883 = vpop.f32.mrf.mxu0
        %3884 = vdwg.mxu0
        %3885 = vmatpush.bf16.msra.mxu0 %v3833
        %3886 = vmatpush.bf16.msra.mxu0 %v3825
        %3887 = vmatpush.bf16.msra.mxu0 %v3817
        %3888 = vmatpush.bf16.msra.mxu0 %v3809
        %3889 = vmatpush.bf16.msra.mxu0 %v3801
        %3890 = vmatpush.bf16.msra.mxu0 %v3793
        %3891 = vmatpush.bf16.msra.mxu0 %v3785
        %3892 = vmatpush.bf16.msra.mxu0 %v3777
        %3893 = vmatmul.bf16.gmra.mxu0 %v3843
        %v3894 = vpop.f32.mrf.mxu0
        %v3895 = vadd.f32 %v3882, %v3894
        %v3896 = vpop.f32.mrf.mxu0
        %3897 = vdwg.mxu0
        %3898 = vmatpush.bf16.msra.mxu0 %v3770
        %3899 = vmatpush.bf16.msra.mxu0 %v3762
        %3900 = vmatpush.bf16.msra.mxu0 %v3754
        %3901 = vmatpush.bf16.msra.mxu0 %v3746
        %3902 = vmatpush.bf16.msra.mxu0 %v3738
        %3903 = vmatpush.bf16.msra.mxu0 %v3730
        %3904 = vmatpush.bf16.msra.mxu0 %v3722
        %3905 = vmatpush.bf16.msra.mxu0 %v3714
        %3906 = vmatmul.bf16.gmra.mxu0 %v3842
        %v3907 = vpop.f32.mrf.mxu0
        %v3908 = vadd.f32 0.0, %v3907
        %v3909 = vpop.f32.mrf.mxu0
        %3910 = vdwg.mxu0
        %3911 = vmatpush.bf16.msra.mxu0 %v3834
        %3912 = vmatpush.bf16.msra.mxu0 %v3826
        %3913 = vmatpush.bf16.msra.mxu0 %v3818
        %3914 = vmatpush.bf16.msra.mxu0 %v3810
        %3915 = vmatpush.bf16.msra.mxu0 %v3802
        %3916 = vmatpush.bf16.msra.mxu0 %v3794
        %3917 = vmatpush.bf16.msra.mxu0 %v3786
        %3918 = vmatpush.bf16.msra.mxu0 %v3778
        %3919 = vmatmul.bf16.gmra.mxu0 %v3843
        %v3920 = vpop.f32.mrf.mxu0
        %v3921 = vadd.f32 %v3908, %v3920
        %v3922 = vpop.f32.mrf.mxu0
        %3923 = vdwg.mxu0
        %3924 = vmatpush.bf16.msra.mxu0 %v3771
        %3925 = vmatpush.bf16.msra.mxu0 %v3763
        %3926 = vmatpush.bf16.msra.mxu0 %v3755
        %3927 = vmatpush.bf16.msra.mxu0 %v3747
        %3928 = vmatpush.bf16.msra.mxu0 %v3739
        %3929 = vmatpush.bf16.msra.mxu0 %v3731
        %3930 = vmatpush.bf16.msra.mxu0 %v3723
        %3931 = vmatpush.bf16.msra.mxu0 %v3715
        %3932 = vmatmul.bf16.gmra.mxu0 %v3842
        %v3933 = vpop.f32.mrf.mxu0
        %v3934 = vadd.f32 0.0, %v3933
        %v3935 = vpop.f32.mrf.mxu0
        %3936 = vdwg.mxu0
        %3937 = vmatpush.bf16.msra.mxu0 %v3835
        %3938 = vmatpush.bf16.msra.mxu0 %v3827
        %3939 = vmatpush.bf16.msra.mxu0 %v3819
        %3940 = vmatpush.bf16.msra.mxu0 %v3811
        %3941 = vmatpush.bf16.msra.mxu0 %v3803
        %3942 = vmatpush.bf16.msra.mxu0 %v3795
        %3943 = vmatpush.bf16.msra.mxu0 %v3787
        %3944 = vmatpush.bf16.msra.mxu0 %v3779
        %3945 = vmatmul.bf16.gmra.mxu0 %v3843
        %v3946 = vpop.f32.mrf.mxu0
        %v3947 = vadd.f32 %v3934, %v3946
        %v3948 = vpop.f32.mrf.mxu0
        %3949 = vdwg.mxu0
        %3950 = vmatpush.bf16.msra.mxu0 %v3772
        %3951 = vmatpush.bf16.msra.mxu0 %v3764
        %3952 = vmatpush.bf16.msra.mxu0 %v3756
        %3953 = vmatpush.bf16.msra.mxu0 %v3748
        %3954 = vmatpush.bf16.msra.mxu0 %v3740
        %3955 = vmatpush.bf16.msra.mxu0 %v3732
        %3956 = vmatpush.bf16.msra.mxu0 %v3724
        %3957 = vmatpush.bf16.msra.mxu0 %v3716
        %3958 = vmatmul.bf16.gmra.mxu0 %v3842
        %v3959 = vpop.f32.mrf.mxu0
        %v3960 = vadd.f32 0.0, %v3959
        %v3961 = vpop.f32.mrf.mxu0
        %3962 = vdwg.mxu0
        %3963 = vmatpush.bf16.msra.mxu0 %v3836
        %3964 = vmatpush.bf16.msra.mxu0 %v3828
        %3965 = vmatpush.bf16.msra.mxu0 %v3820
        %3966 = vmatpush.bf16.msra.mxu0 %v3812
        %3967 = vmatpush.bf16.msra.mxu0 %v3804
        %3968 = vmatpush.bf16.msra.mxu0 %v3796
        %3969 = vmatpush.bf16.msra.mxu0 %v3788
        %3970 = vmatpush.bf16.msra.mxu0 %v3780
        %3971 = vmatmul.bf16.gmra.mxu0 %v3843
        %v3972 = vpop.f32.mrf.mxu0
        %v3973 = vadd.f32 %v3960, %v3972
        %v3974 = vpop.f32.mrf.mxu0
        %3975 = vdwg.mxu0
        %3976 = vmatpush.bf16.msra.mxu0 %v3773
        %3977 = vmatpush.bf16.msra.mxu0 %v3765
        %3978 = vmatpush.bf16.msra.mxu0 %v3757
        %3979 = vmatpush.bf16.msra.mxu0 %v3749
        %3980 = vmatpush.bf16.msra.mxu0 %v3741
        %3981 = vmatpush.bf16.msra.mxu0 %v3733
        %3982 = vmatpush.bf16.msra.mxu0 %v3725
        %3983 = vmatpush.bf16.msra.mxu0 %v3717
        %3984 = vmatmul.bf16.gmra.mxu0 %v3842
        %v3985 = vpop.f32.mrf.mxu0
        %v3986 = vadd.f32 0.0, %v3985
        %v3987 = vpop.f32.mrf.mxu0
        %3988 = vdwg.mxu0
        %3989 = vmatpush.bf16.msra.mxu0 %v3837
        %3990 = vmatpush.bf16.msra.mxu0 %v3829
        %3991 = vmatpush.bf16.msra.mxu0 %v3821
        %3992 = vmatpush.bf16.msra.mxu0 %v3813
        %3993 = vmatpush.bf16.msra.mxu0 %v3805
        %3994 = vmatpush.bf16.msra.mxu0 %v3797
        %3995 = vmatpush.bf16.msra.mxu0 %v3789
        %3996 = vmatpush.bf16.msra.mxu0 %v3781
        %3997 = vmatmul.bf16.gmra.mxu0 %v3843
        %v3998 = vpop.f32.mrf.mxu0
        %v3999 = vadd.f32 %v3986, %v3998
        %v4000 = vpop.f32.mrf.mxu0
        %4001 = vdwg.mxu0
        %4002 = vmatpush.bf16.msra.mxu0 %v3774
        %4003 = vmatpush.bf16.msra.mxu0 %v3766
        %4004 = vmatpush.bf16.msra.mxu0 %v3758
        %4005 = vmatpush.bf16.msra.mxu0 %v3750
        %4006 = vmatpush.bf16.msra.mxu0 %v3742
        %4007 = vmatpush.bf16.msra.mxu0 %v3734
        %4008 = vmatpush.bf16.msra.mxu0 %v3726
        %4009 = vmatpush.bf16.msra.mxu0 %v3718
        %4010 = vmatmul.bf16.gmra.mxu0 %v3842
        %v4011 = vpop.f32.mrf.mxu0
        %v4012 = vadd.f32 0.0, %v4011
        %v4013 = vpop.f32.mrf.mxu0
        %4014 = vdwg.mxu0
        %4015 = vmatpush.bf16.msra.mxu0 %v3838
        %4016 = vmatpush.bf16.msra.mxu0 %v3830
        %4017 = vmatpush.bf16.msra.mxu0 %v3822
        %4018 = vmatpush.bf16.msra.mxu0 %v3814
        %4019 = vmatpush.bf16.msra.mxu0 %v3806
        %4020 = vmatpush.bf16.msra.mxu0 %v3798
        %4021 = vmatpush.bf16.msra.mxu0 %v3790
        %4022 = vmatpush.bf16.msra.mxu0 %v3782
        %4023 = vmatmul.bf16.gmra.mxu0 %v3843
        %v4024 = vpop.f32.mrf.mxu0
        %v4025 = vadd.f32 %v4012, %v4024
        %v4026 = vpop.f32.mrf.mxu0
        %4027 = vdwg.mxu0
        %4028 = vmatpush.bf16.msra.mxu0 %v3775
        %4029 = vmatpush.bf16.msra.mxu0 %v3767
        %4030 = vmatpush.bf16.msra.mxu0 %v3759
        %4031 = vmatpush.bf16.msra.mxu0 %v3751
        %4032 = vmatpush.bf16.msra.mxu0 %v3743
        %4033 = vmatpush.bf16.msra.mxu0 %v3735
        %4034 = vmatpush.bf16.msra.mxu0 %v3727
        %4035 = vmatpush.bf16.msra.mxu0 %v3719
        %4036 = vmatmul.bf16.gmra.mxu0 %v3842
        %v4037 = vpop.f32.mrf.mxu0
        %v4038 = vadd.f32 0.0, %v4037
        %v4039 = vpop.f32.mrf.mxu0
        %4040 = vdwg.mxu0
        %4041 = vmatpush.bf16.msra.mxu0 %v3839
        %4042 = vmatpush.bf16.msra.mxu0 %v3831
        %4043 = vmatpush.bf16.msra.mxu0 %v3823
        %4044 = vmatpush.bf16.msra.mxu0 %v3815
        %4045 = vmatpush.bf16.msra.mxu0 %v3807
        %4046 = vmatpush.bf16.msra.mxu0 %v3799
        %4047 = vmatpush.bf16.msra.mxu0 %v3791
        %4048 = vmatpush.bf16.msra.mxu0 %v3783
        %4049 = vmatmul.bf16.gmra.mxu0 %v3843
        %v4050 = vpop.f32.mrf.mxu0
        %v4051 = vadd.f32 %v4038, %v4050
        %v4052 = vpop.f32.mrf.mxu0
        %4053 = vdwg.mxu0
        %v4062 = vrot.slane %v1463, 7
        %v4063 = vrot.slane %v1501, 6
        %v4064 = vrot.slane %v1539, 5
        %v4065 = vrot.slane %v1577, 4
        %v4066 = vrot.slane %v1615, 3
        %v4067 = vrot.slane %v1653, 2
        %v4068 = vrot.slane %v1691, 1
        %v4069 = vsel %vm1754, %v1425, %v4062
        %v4070 = vsel %vm1756, %v4063, %v4064
        %v4071 = vsel %vm1758, %v4069, %v4070
        %v4072 = vsel %vm1760, %v4065, %v4066
        %v4073 = vsel %vm1762, %v4067, %v4068
        %v4074 = vsel %vm1764, %v4072, %v4073
        %v4075 = vsel %vm1766, %v4071, %v4074
        %v4077 = vmul.f32 %v1697, %v4075
        %v4078 = vadd.f32 %v4077, 0.0
        %4079 = vst [vmem:[#allocation1] sm:$0xff] %v1425
        %4080 = vst [vmem:[#allocation1 + $0x9] sm:$0xff] %v1463
        %4081 = vst [vmem:[#allocation1 + $0x12] sm:$0xff] %v1501
        %4082 = vst [vmem:[#allocation1 + $0x1b] sm:$0xff] %v1539
        %4083 = vst [vmem:[#allocation1 + $0x24] sm:$0xff] %v1577
        %4084 = vst [vmem:[#allocation1 + $0x2d] sm:$0xff] %v1615
        %4085 = vst [vmem:[#allocation1 + $0x36] sm:$0xff] %v1653
        %4086 = vst [vmem:[#allocation1 + $0x3f] sm:$0xff] %v1691
        %s4087 = scalar_lea.vmem [#allocation1], 1
        %v4088 = vld [vmem:[%s4087] ss:$9 sm:$0xff]
        %v4090 = vmul.f32 %v1697, %v4088
        %v4091 = vadd.f32 %v4090, 0.0
        %4092 = vst [vmem:[#allocation1] sm:$0xff] %v1425
        %4093 = vst [vmem:[#allocation1 + $0x9] sm:$0xff] %v1463
        %4094 = vst [vmem:[#allocation1 + $0x12] sm:$0xff] %v1501
        %4095 = vst [vmem:[#allocation1 + $0x1b] sm:$0xff] %v1539
        %4096 = vst [vmem:[#allocation1 + $0x24] sm:$0xff] %v1577
        %4097 = vst [vmem:[#allocation1 + $0x2d] sm:$0xff] %v1615
        %4098 = vst [vmem:[#allocation1 + $0x36] sm:$0xff] %v1653
        %4099 = vst [vmem:[#allocation1 + $0x3f] sm:$0xff] %v1691
        %s4100 = scalar_lea.vmem [#allocation1], 2
        %v4101 = vld [vmem:[%s4100] ss:$9 sm:$0xff]
        %v4103 = vmul.f32 %v1701, %v4101
        %v4104 = vadd.f32 %v4078, %v4103
        %4105 = vst [vmem:[#allocation1] sm:$0xff] %v1425
        %4106 = vst [vmem:[#allocation1 + $0x9] sm:$0xff] %v1463
        %4107 = vst [vmem:[#allocation1 + $0x12] sm:$0xff] %v1501
        %4108 = vst [vmem:[#allocation1 + $0x1b] sm:$0xff] %v1539
        %4109 = vst [vmem:[#allocation1 + $0x24] sm:$0xff] %v1577
        %4110 = vst [vmem:[#allocation1 + $0x2d] sm:$0xff] %v1615
        %4111 = vst [vmem:[#allocation1 + $0x36] sm:$0xff] %v1653
        %4112 = vst [vmem:[#allocation1 + $0x3f] sm:$0xff] %v1691
        %s4113 = scalar_lea.vmem [#allocation1], 3
        %v4114 = vld [vmem:[%s4113] ss:$9 sm:$0xff]
        %v4116 = vmul.f32 %v1701, %v4114
        %v4117 = vadd.f32 %v4091, %v4116
        %4118 = vst [vmem:[#allocation1] sm:$0xff] %v1425
        %4119 = vst [vmem:[#allocation1 + $0x9] sm:$0xff] %v1463
        %4120 = vst [vmem:[#allocation1 + $0x12] sm:$0xff] %v1501
        %4121 = vst [vmem:[#allocation1 + $0x1b] sm:$0xff] %v1539
        %4122 = vst [vmem:[#allocation1 + $0x24] sm:$0xff] %v1577
        %4123 = vst [vmem:[#allocation1 + $0x2d] sm:$0xff] %v1615
        %4124 = vst [vmem:[#allocation1 + $0x36] sm:$0xff] %v1653
        %4125 = vst [vmem:[#allocation1 + $0x3f] sm:$0xff] %v1691
        %s4126 = scalar_lea.vmem [#allocation1], 4
        %v4127 = vld [vmem:[%s4126] ss:$9 sm:$0xff]
        %v4129 = vmul.f32 %v1705, %v4127
        %v4130 = vadd.f32 %v4104, %v4129
        %4131 = vst [vmem:[#allocation1] sm:$0xff] %v1425
        %4132 = vst [vmem:[#allocation1 + $0x9] sm:$0xff] %v1463
        %4133 = vst [vmem:[#allocation1 + $0x12] sm:$0xff] %v1501
        %4134 = vst [vmem:[#allocation1 + $0x1b] sm:$0xff] %v1539
        %4135 = vst [vmem:[#allocation1 + $0x24] sm:$0xff] %v1577
        %4136 = vst [vmem:[#allocation1 + $0x2d] sm:$0xff] %v1615
        %4137 = vst [vmem:[#allocation1 + $0x36] sm:$0xff] %v1653
        %4138 = vst [vmem:[#allocation1 + $0x3f] sm:$0xff] %v1691
        %s4139 = scalar_lea.vmem [#allocation1], 5
        %v4140 = vld [vmem:[%s4139] ss:$9 sm:$0xff]
        %v4142 = vmul.f32 %v1705, %v4140
        %v4143 = vadd.f32 %v4117, %v4142
        %4144 = vst [vmem:[#allocation1] sm:$0xff] %v1425
        %4145 = vst [vmem:[#allocation1 + $0x9] sm:$0xff] %v1463
        %4146 = vst [vmem:[#allocation1 + $0x12] sm:$0xff] %v1501
        %4147 = vst [vmem:[#allocation1 + $0x1b] sm:$0xff] %v1539
        %4148 = vst [vmem:[#allocation1 + $0x24] sm:$0xff] %v1577
        %4149 = vst [vmem:[#allocation1 + $0x2d] sm:$0xff] %v1615
        %4150 = vst [vmem:[#allocation1 + $0x36] sm:$0xff] %v1653
        %4151 = vst [vmem:[#allocation1 + $0x3f] sm:$0xff] %v1691
        %s4152 = scalar_lea.vmem [#allocation1], 6
        %v4153 = vld [vmem:[%s4152] ss:$9 sm:$0xff]
        %v4155 = vmul.f32 %v1709, %v4153
        %v4156 = vadd.f32 %v4130, %v4155
        %4157 = vst [vmem:[#allocation1] sm:$0xff] %v1425
        %4158 = vst [vmem:[#allocation1 + $0x9] sm:$0xff] %v1463
        %4159 = vst [vmem:[#allocation1 + $0x12] sm:$0xff] %v1501
        %4160 = vst [vmem:[#allocation1 + $0x1b] sm:$0xff] %v1539
        %4161 = vst [vmem:[#allocation1 + $0x24] sm:$0xff] %v1577
        %4162 = vst [vmem:[#allocation1 + $0x2d] sm:$0xff] %v1615
        %4163 = vst [vmem:[#allocation1 + $0x36] sm:$0xff] %v1653
        %4164 = vst [vmem:[#allocation1 + $0x3f] sm:$0xff] %v1691
        %s4165 = scalar_lea.vmem [#allocation1], 7
        %v4166 = vld [vmem:[%s4165] ss:$9 sm:$0xff]
        %v4168 = vmul.f32 %v1709, %v4166
        %v4169 = vadd.f32 %v4143, %v4168
        %v4170 = vmul.f32 %v4156, 0.5
        %v4171 = vadd.f32 %v1713, %v4170
        %v4172 = vmax.f32 %v4171, 0.0
        %v4173 = vmin.f32 %v4172, 15.0
        %v4174 = vmul.f32 %v4169, 0.5
        %v4175 = vadd.f32 %v1717, %v4174
        %v4176 = vmax.f32 %v4175, 0.0
        %v4177 = vmin.f32 %v4176, 15.0
        %v4178 = vfloor.f32 %v4173
        %v4179 = vfloor.f32 %v4177
        %v4180 = vsub.f32 %v4173, %v4178
        %v4181 = vsub.f32 %v4177, %v4179
        %v4182 = vadd.f32 %v4178, 1.0
        %v4183 = vmin.f32 %v4182, 15.0
        %v4184 = vadd.f32 %v4179, 1.0
        %v4185 = vmin.f32 %v4184, 15.0
        %v4187 = vperm.slane %v4179, 0
        %v4188 = vperm.slane %v4179, 1
        %v4189 = vperm.slane %v4179, 2
        %v4190 = vperm.slane %v4179, 3
        %v4191 = vperm.slane %v4179, 4
        %v4192 = vperm.slane %v4179, 5
        %v4193 = vperm.slane %v4179, 6
        %v4194 = vperm.slane %v4179, 7
        %vm4203 = vcmp.eq.f32.partialorder %v1737, %v4187
        %vm4204 = vcmp.eq.f32.partialorder %v1737, %v4188
        %vm4205 = vcmp.eq.f32.partialorder %v1737, %v4189
        %vm4206 = vcmp.eq.f32.partialorder %v1737, %v4190
        %vm4207 = vcmp.eq.f32.partialorder %v1737, %v4191
        %vm4208 = vcmp.eq.f32.partialorder %v1737, %v4192
        %vm4209 = vcmp.eq.f32.partialorder %v1737, %v4193
        %vm4210 = vcmp.eq.f32.partialorder %v1737, %v4194
        %vm4211 = vcmp.eq.f32.partialorder %v1738, %v4187
        %vm4212 = vcmp.eq.f32.partialorder %v1738, %v4188
        %vm4213 = vcmp.eq.f32.partialorder %v1738, %v4189
        %vm4214 = vcmp.eq.f32.partialorder %v1738, %v4190
        %vm4215 = vcmp.eq.f32.partialorder %v1738, %v4191
        %vm4216 = vcmp.eq.f32.partialorder %v1738, %v4192
        %vm4217 = vcmp.eq.f32.partialorder %v1738, %v4193
        %vm4218 = vcmp.eq.f32.partialorder %v1738, %v4194
        %v4219 = vsub.f32 1.0, %v4181
        %v4221 = vperm.slane %v4219, 0
        %v4222 = vperm.slane %v4219, 1
        %v4223 = vperm.slane %v4219, 2
        %v4224 = vperm.slane %v4219, 3
        %v4225 = vperm.slane %v4219, 4
        %v4226 = vperm.slane %v4219, 5
        %v4227 = vperm.slane %v4219, 6
        %v4228 = vperm.slane %v4219, 7
        %v4237 = vsel %vm4203, %v4221, 0.0
        %v4238 = vsel %vm4204, %v4222, 0.0
        %v4239 = vsel %vm4205, %v4223, 0.0
        %v4240 = vsel %vm4206, %v4224, 0.0
        %v4241 = vsel %vm4207, %v4225, 0.0
        %v4242 = vsel %vm4208, %v4226, 0.0
        %v4243 = vsel %vm4209, %v4227, 0.0
        %v4244 = vsel %vm4210, %v4228, 0.0
        %v4245 = vsel %vm4211, %v4221, 0.0
        %v4246 = vsel %vm4212, %v4222, 0.0
        %v4247 = vsel %vm4213, %v4223, 0.0
        %v4248 = vsel %vm4214, %v4224, 0.0
        %v4249 = vsel %vm4215, %v4225, 0.0
        %v4250 = vsel %vm4216, %v4226, 0.0
        %v4251 = vsel %vm4217, %v4227, 0.0
        %v4252 = vsel %vm4218, %v4228, 0.0
        %v4254 = vperm.slane %v4185, 0
        %v4255 = vperm.slane %v4185, 1
        %v4256 = vperm.slane %v4185, 2
        %v4257 = vperm.slane %v4185, 3
        %v4258 = vperm.slane %v4185, 4
        %v4259 = vperm.slane %v4185, 5
        %v4260 = vperm.slane %v4185, 6
        %v4261 = vperm.slane %v4185, 7
        %vm4270 = vcmp.eq.f32.partialorder %v1737, %v4254
        %vm4271 = vcmp.eq.f32.partialorder %v1737, %v4255
        %vm4272 = vcmp.eq.f32.partialorder %v1737, %v4256
        %vm4273 = vcmp.eq.f32.partialorder %v1737, %v4257
        %vm4274 = vcmp.eq.f32.partialorder %v1737, %v4258
        %vm4275 = vcmp.eq.f32.partialorder %v1737, %v4259
        %vm4276 = vcmp.eq.f32.partialorder %v1737, %v4260
        %vm4277 = vcmp.eq.f32.partialorder %v1737, %v4261
        %vm4278 = vcmp.eq.f32.partialorder %v1738, %v4254
        %vm4279 = vcmp.eq.f32.partialorder %v1738, %v4255
        %vm4280 = vcmp.eq.f32.partialorder %v1738, %v4256
        %vm4281 = vcmp.eq.f32.partialorder %v1738, %v4257
        %vm4282 = vcmp.eq.f32.partialorder %v1738, %v4258
        %vm4283 = vcmp.eq.f32.partialorder %v1738, %v4259
        %vm4284 = vcmp.eq.f32.partialorder %v1738, %v4260
        %vm4285 = vcmp.eq.f32.partialorder %v1738, %v4261
        %v4287 = vperm.slane %v4181, 0
        %v4288 = vperm.slane %v4181, 1
        %v4289 = vperm.slane %v4181, 2
        %v4290 = vperm.slane %v4181, 3
        %v4291 = vperm.slane %v4181, 4
        %v4292 = vperm.slane %v4181, 5
        %v4293 = vperm.slane %v4181, 6
        %v4294 = vperm.slane %v4181, 7
        %v4303 = vsel %vm4270, %v4287, 0.0
        %v4304 = vsel %vm4271, %v4288, 0.0
        %v4305 = vsel %vm4272, %v4289, 0.0
        %v4306 = vsel %vm4273, %v4290, 0.0
        %v4307 = vsel %vm4274, %v4291, 0.0
        %v4308 = vsel %vm4275, %v4292, 0.0
        %v4309 = vsel %vm4276, %v4293, 0.0
        %v4310 = vsel %vm4277, %v4294, 0.0
        %v4311 = vsel %vm4278, %v4287, 0.0
        %v4312 = vsel %vm4279, %v4288, 0.0
        %v4313 = vsel %vm4280, %v4289, 0.0
        %v4314 = vsel %vm4281, %v4290, 0.0
        %v4315 = vsel %vm4282, %v4291, 0.0
        %v4316 = vsel %vm4283, %v4292, 0.0
        %v4317 = vsel %vm4284, %v4293, 0.0
        %v4318 = vsel %vm4285, %v4294, 0.0
        %v4319 = vadd.f32 %v4237, %v4303
        %v4320 = vadd.f32 %v4238, %v4304
        %v4321 = vadd.f32 %v4239, %v4305
        %v4322 = vadd.f32 %v4240, %v4306
        %v4323 = vadd.f32 %v4241, %v4307
        %v4324 = vadd.f32 %v4242, %v4308
        %v4325 = vadd.f32 %v4243, %v4309
        %v4326 = vadd.f32 %v4244, %v4310
        %v4327 = vadd.f32 %v4245, %v4311
        %v4328 = vadd.f32 %v4246, %v4312
        %v4329 = vadd.f32 %v4247, %v4313
        %v4330 = vadd.f32 %v4248, %v4314
        %v4331 = vadd.f32 %v4249, %v4315
        %v4332 = vadd.f32 %v4250, %v4316
        %v4333 = vadd.f32 %v4251, %v4317
        %v4334 = vadd.f32 %v4252, %v4318
        %v4336 = vperm.slane %v4178, 0
        %v4337 = vperm.slane %v4178, 1
        %v4338 = vperm.slane %v4178, 2
        %v4339 = vperm.slane %v4178, 3
        %v4340 = vperm.slane %v4178, 4
        %v4341 = vperm.slane %v4178, 5
        %v4342 = vperm.slane %v4178, 6
        %v4343 = vperm.slane %v4178, 7
        %vm4352 = vcmp.eq.f32.partialorder %v1737, %v4336
        %vm4353 = vcmp.eq.f32.partialorder %v1737, %v4337
        %vm4354 = vcmp.eq.f32.partialorder %v1737, %v4338
        %vm4355 = vcmp.eq.f32.partialorder %v1737, %v4339
        %vm4356 = vcmp.eq.f32.partialorder %v1737, %v4340
        %vm4357 = vcmp.eq.f32.partialorder %v1737, %v4341
        %vm4358 = vcmp.eq.f32.partialorder %v1737, %v4342
        %vm4359 = vcmp.eq.f32.partialorder %v1737, %v4343
        %vm4360 = vcmp.eq.f32.partialorder %v1738, %v4336
        %vm4361 = vcmp.eq.f32.partialorder %v1738, %v4337
        %vm4362 = vcmp.eq.f32.partialorder %v1738, %v4338
        %vm4363 = vcmp.eq.f32.partialorder %v1738, %v4339
        %vm4364 = vcmp.eq.f32.partialorder %v1738, %v4340
        %vm4365 = vcmp.eq.f32.partialorder %v1738, %v4341
        %vm4366 = vcmp.eq.f32.partialorder %v1738, %v4342
        %vm4367 = vcmp.eq.f32.partialorder %v1738, %v4343
        %v4368 = vsub.f32 1.0, %v4180
        %v4370 = vperm.slane %v4368, 0
        %v4371 = vperm.slane %v4368, 1
        %v4372 = vperm.slane %v4368, 2
        %v4373 = vperm.slane %v4368, 3
        %v4374 = vperm.slane %v4368, 4
        %v4375 = vperm.slane %v4368, 5
        %v4376 = vperm.slane %v4368, 6
        %v4377 = vperm.slane %v4368, 7
        %v4386 = vsel %vm4352, %v4370, 0.0
        %v4387 = vsel %vm4353, %v4371, 0.0
        %v4388 = vsel %vm4354, %v4372, 0.0
        %v4389 = vsel %vm4355, %v4373, 0.0
        %v4390 = vsel %vm4356, %v4374, 0.0
        %v4391 = vsel %vm4357, %v4375, 0.0
        %v4392 = vsel %vm4358, %v4376, 0.0
        %v4393 = vsel %vm4359, %v4377, 0.0
        %v4394 = vsel %vm4360, %v4370, 0.0
        %v4395 = vsel %vm4361, %v4371, 0.0
        %v4396 = vsel %vm4362, %v4372, 0.0
        %v4397 = vsel %vm4363, %v4373, 0.0
        %v4398 = vsel %vm4364, %v4374, 0.0
        %v4399 = vsel %vm4365, %v4375, 0.0
        %v4400 = vsel %vm4366, %v4376, 0.0
        %v4401 = vsel %vm4367, %v4377, 0.0
        %v4403 = vperm.slane %v4183, 0
        %v4404 = vperm.slane %v4183, 1
        %v4405 = vperm.slane %v4183, 2
        %v4406 = vperm.slane %v4183, 3
        %v4407 = vperm.slane %v4183, 4
        %v4408 = vperm.slane %v4183, 5
        %v4409 = vperm.slane %v4183, 6
        %v4410 = vperm.slane %v4183, 7
        %vm4419 = vcmp.eq.f32.partialorder %v1737, %v4403
        %vm4420 = vcmp.eq.f32.partialorder %v1737, %v4404
        %vm4421 = vcmp.eq.f32.partialorder %v1737, %v4405
        %vm4422 = vcmp.eq.f32.partialorder %v1737, %v4406
        %vm4423 = vcmp.eq.f32.partialorder %v1737, %v4407
        %vm4424 = vcmp.eq.f32.partialorder %v1737, %v4408
        %vm4425 = vcmp.eq.f32.partialorder %v1737, %v4409
        %vm4426 = vcmp.eq.f32.partialorder %v1737, %v4410
        %vm4427 = vcmp.eq.f32.partialorder %v1738, %v4403
        %vm4428 = vcmp.eq.f32.partialorder %v1738, %v4404
        %vm4429 = vcmp.eq.f32.partialorder %v1738, %v4405
        %vm4430 = vcmp.eq.f32.partialorder %v1738, %v4406
        %vm4431 = vcmp.eq.f32.partialorder %v1738, %v4407
        %vm4432 = vcmp.eq.f32.partialorder %v1738, %v4408
        %vm4433 = vcmp.eq.f32.partialorder %v1738, %v4409
        %vm4434 = vcmp.eq.f32.partialorder %v1738, %v4410
        %v4436 = vperm.slane %v4180, 0
        %v4437 = vperm.slane %v4180, 1
        %v4438 = vperm.slane %v4180, 2
        %v4439 = vperm.slane %v4180, 3
        %v4440 = vperm.slane %v4180, 4
        %v4441 = vperm.slane %v4180, 5
        %v4442 = vperm.slane %v4180, 6
        %v4443 = vperm.slane %v4180, 7
        %v4452 = vsel %vm4419, %v4436, 0.0
        %v4453 = vsel %vm4420, %v4437, 0.0
        %v4454 = vsel %vm4421, %v4438, 0.0
        %v4455 = vsel %vm4422, %v4439, 0.0
        %v4456 = vsel %vm4423, %v4440, 0.0
        %v4457 = vsel %vm4424, %v4441, 0.0
        %v4458 = vsel %vm4425, %v4442, 0.0
        %v4459 = vsel %vm4426, %v4443, 0.0
        %v4460 = vsel %vm4427, %v4436, 0.0
        %v4461 = vsel %vm4428, %v4437, 0.0
        %v4462 = vsel %vm4429, %v4438, 0.0
        %v4463 = vsel %vm4430, %v4439, 0.0
        %v4464 = vsel %vm4431, %v4440, 0.0
        %v4465 = vsel %vm4432, %v4441, 0.0
        %v4466 = vsel %vm4433, %v4442, 0.0
        %v4467 = vsel %vm4434, %v4443, 0.0
        %v4468 = vadd.f32 %v4386, %v4452
        %v4469 = vadd.f32 %v4387, %v4453
        %v4470 = vadd.f32 %v4388, %v4454
        %v4471 = vadd.f32 %v4389, %v4455
        %v4472 = vadd.f32 %v4390, %v4456
        %v4473 = vadd.f32 %v4391, %v4457
        %v4474 = vadd.f32 %v4392, %v4458
        %v4475 = vadd.f32 %v4393, %v4459
        %v4476 = vadd.f32 %v4394, %v4460
        %v4477 = vadd.f32 %v4395, %v4461
        %v4478 = vadd.f32 %v4396, %v4462
        %v4479 = vadd.f32 %v4397, %v4463
        %v4480 = vadd.f32 %v4398, %v4464
        %v4481 = vadd.f32 %v4399, %v4465
        %v4482 = vadd.f32 %v4400, %v4466
        %v4483 = vadd.f32 %v4401, %v4467
        %v4484 = vperm.slane %v4319, 0
        %v4485 = vperm.slane %v4320, 0
        %v4486 = vperm.slane %v4321, 0
        %v4487 = vperm.slane %v4322, 0
        %v4488 = vperm.slane %v4323, 0
        %v4489 = vperm.slane %v4324, 0
        %v4490 = vperm.slane %v4325, 0
        %v4491 = vperm.slane %v4326, 0
        %v4492 = vmul.f32 %v4484, %v4468
        %v4493 = vmul.f32 %v4485, %v4469
        %v4494 = vmul.f32 %v4486, %v4470
        %v4495 = vmul.f32 %v4487, %v4471
        %v4496 = vmul.f32 %v4488, %v4472
        %v4497 = vmul.f32 %v4489, %v4473
        %v4498 = vmul.f32 %v4490, %v4474
        %v4499 = vmul.f32 %v4491, %v4475
        %v4500 = vmul.f32 %v4484, %v4476
        %v4501 = vmul.f32 %v4485, %v4477
        %v4502 = vmul.f32 %v4486, %v4478
        %v4503 = vmul.f32 %v4487, %v4479
        %v4504 = vmul.f32 %v4488, %v4480
        %v4505 = vmul.f32 %v4489, %v4481
        %v4506 = vmul.f32 %v4490, %v4482
        %v4507 = vmul.f32 %v4491, %v4483
        %v4508 = vperm.slane %v4319, 1
        %v4509 = vperm.slane %v4320, 1
        %v4510 = vperm.slane %v4321, 1
        %v4511 = vperm.slane %v4322, 1
        %v4512 = vperm.slane %v4323, 1
        %v4513 = vperm.slane %v4324, 1
        %v4514 = vperm.slane %v4325, 1
        %v4515 = vperm.slane %v4326, 1
        %v4516 = vmul.f32 %v4508, %v4468
        %v4517 = vmul.f32 %v4509, %v4469
        %v4518 = vmul.f32 %v4510, %v4470
        %v4519 = vmul.f32 %v4511, %v4471
        %v4520 = vmul.f32 %v4512, %v4472
        %v4521 = vmul.f32 %v4513, %v4473
        %v4522 = vmul.f32 %v4514, %v4474
        %v4523 = vmul.f32 %v4515, %v4475
        %v4524 = vmul.f32 %v4508, %v4476
        %v4525 = vmul.f32 %v4509, %v4477
        %v4526 = vmul.f32 %v4510, %v4478
        %v4527 = vmul.f32 %v4511, %v4479
        %v4528 = vmul.f32 %v4512, %v4480
        %v4529 = vmul.f32 %v4513, %v4481
        %v4530 = vmul.f32 %v4514, %v4482
        %v4531 = vmul.f32 %v4515, %v4483
        %v4532 = vperm.slane %v4319, 2
        %v4533 = vperm.slane %v4320, 2
        %v4534 = vperm.slane %v4321, 2
        %v4535 = vperm.slane %v4322, 2
        %v4536 = vperm.slane %v4323, 2
        %v4537 = vperm.slane %v4324, 2
        %v4538 = vperm.slane %v4325, 2
        %v4539 = vperm.slane %v4326, 2
        %v4540 = vmul.f32 %v4532, %v4468
        %v4541 = vmul.f32 %v4533, %v4469
        %v4542 = vmul.f32 %v4534, %v4470
        %v4543 = vmul.f32 %v4535, %v4471
        %v4544 = vmul.f32 %v4536, %v4472
        %v4545 = vmul.f32 %v4537, %v4473
        %v4546 = vmul.f32 %v4538, %v4474
        %v4547 = vmul.f32 %v4539, %v4475
        %v4548 = vmul.f32 %v4532, %v4476
        %v4549 = vmul.f32 %v4533, %v4477
        %v4550 = vmul.f32 %v4534, %v4478
        %v4551 = vmul.f32 %v4535, %v4479
        %v4552 = vmul.f32 %v4536, %v4480
        %v4553 = vmul.f32 %v4537, %v4481
        %v4554 = vmul.f32 %v4538, %v4482
        %v4555 = vmul.f32 %v4539, %v4483
        %v4556 = vperm.slane %v4319, 3
        %v4557 = vperm.slane %v4320, 3
        %v4558 = vperm.slane %v4321, 3
        %v4559 = vperm.slane %v4322, 3
        %v4560 = vperm.slane %v4323, 3
        %v4561 = vperm.slane %v4324, 3
        %v4562 = vperm.slane %v4325, 3
        %v4563 = vperm.slane %v4326, 3
        %v4564 = vmul.f32 %v4556, %v4468
        %v4565 = vmul.f32 %v4557, %v4469
        %v4566 = vmul.f32 %v4558, %v4470
        %v4567 = vmul.f32 %v4559, %v4471
        %v4568 = vmul.f32 %v4560, %v4472
        %v4569 = vmul.f32 %v4561, %v4473
        %v4570 = vmul.f32 %v4562, %v4474
        %v4571 = vmul.f32 %v4563, %v4475
        %v4572 = vmul.f32 %v4556, %v4476
        %v4573 = vmul.f32 %v4557, %v4477
        %v4574 = vmul.f32 %v4558, %v4478
        %v4575 = vmul.f32 %v4559, %v4479
        %v4576 = vmul.f32 %v4560, %v4480
        %v4577 = vmul.f32 %v4561, %v4481
        %v4578 = vmul.f32 %v4562, %v4482
        %v4579 = vmul.f32 %v4563, %v4483
        %v4580 = vperm.slane %v4319, 4
        %v4581 = vperm.slane %v4320, 4
        %v4582 = vperm.slane %v4321, 4
        %v4583 = vperm.slane %v4322, 4
        %v4584 = vperm.slane %v4323, 4
        %v4585 = vperm.slane %v4324, 4
        %v4586 = vperm.slane %v4325, 4
        %v4587 = vperm.slane %v4326, 4
        %v4588 = vmul.f32 %v4580, %v4468
        %v4589 = vmul.f32 %v4581, %v4469
        %v4590 = vmul.f32 %v4582, %v4470
        %v4591 = vmul.f32 %v4583, %v4471
        %v4592 = vmul.f32 %v4584, %v4472
        %v4593 = vmul.f32 %v4585, %v4473
        %v4594 = vmul.f32 %v4586, %v4474
        %v4595 = vmul.f32 %v4587, %v4475
        %v4596 = vmul.f32 %v4580, %v4476
        %v4597 = vmul.f32 %v4581, %v4477
        %v4598 = vmul.f32 %v4582, %v4478
        %v4599 = vmul.f32 %v4583, %v4479
        %v4600 = vmul.f32 %v4584, %v4480
        %v4601 = vmul.f32 %v4585, %v4481
        %v4602 = vmul.f32 %v4586, %v4482
        %v4603 = vmul.f32 %v4587, %v4483
        %v4604 = vperm.slane %v4319, 5
        %v4605 = vperm.slane %v4320, 5
        %v4606 = vperm.slane %v4321, 5
        %v4607 = vperm.slane %v4322, 5
        %v4608 = vperm.slane %v4323, 5
        %v4609 = vperm.slane %v4324, 5
        %v4610 = vperm.slane %v4325, 5
        %v4611 = vperm.slane %v4326, 5
        %v4612 = vmul.f32 %v4604, %v4468
        %v4613 = vmul.f32 %v4605, %v4469
        %v4614 = vmul.f32 %v4606, %v4470
        %v4615 = vmul.f32 %v4607, %v4471
        %v4616 = vmul.f32 %v4608, %v4472
        %v4617 = vmul.f32 %v4609, %v4473
        %v4618 = vmul.f32 %v4610, %v4474
        %v4619 = vmul.f32 %v4611, %v4475
        %v4620 = vmul.f32 %v4604, %v4476
        %v4621 = vmul.f32 %v4605, %v4477
        %v4622 = vmul.f32 %v4606, %v4478
        %v4623 = vmul.f32 %v4607, %v4479
        %v4624 = vmul.f32 %v4608, %v4480
        %v4625 = vmul.f32 %v4609, %v4481
        %v4626 = vmul.f32 %v4610, %v4482
        %v4627 = vmul.f32 %v4611, %v4483
        %v4628 = vperm.slane %v4319, 6
        %v4629 = vperm.slane %v4320, 6
        %v4630 = vperm.slane %v4321, 6
        %v4631 = vperm.slane %v4322, 6
        %v4632 = vperm.slane %v4323, 6
        %v4633 = vperm.slane %v4324, 6
        %v4634 = vperm.slane %v4325, 6
        %v4635 = vperm.slane %v4326, 6
        %v4636 = vmul.f32 %v4628, %v4468
        %v4637 = vmul.f32 %v4629, %v4469
        %v4638 = vmul.f32 %v4630, %v4470
        %v4639 = vmul.f32 %v4631, %v4471
        %v4640 = vmul.f32 %v4632, %v4472
        %v4641 = vmul.f32 %v4633, %v4473
        %v4642 = vmul.f32 %v4634, %v4474
        %v4643 = vmul.f32 %v4635, %v4475
        %v4644 = vmul.f32 %v4628, %v4476
        %v4645 = vmul.f32 %v4629, %v4477
        %v4646 = vmul.f32 %v4630, %v4478
        %v4647 = vmul.f32 %v4631, %v4479
        %v4648 = vmul.f32 %v4632, %v4480
        %v4649 = vmul.f32 %v4633, %v4481
        %v4650 = vmul.f32 %v4634, %v4482
        %v4651 = vmul.f32 %v4635, %v4483
        %v4652 = vperm.slane %v4319, 7
        %v4653 = vperm.slane %v4320, 7
        %v4654 = vperm.slane %v4321, 7
        %v4655 = vperm.slane %v4322, 7
        %v4656 = vperm.slane %v4323, 7
        %v4657 = vperm.slane %v4324, 7
        %v4658 = vperm.slane %v4325, 7
        %v4659 = vperm.slane %v4326, 7
        %v4660 = vmul.f32 %v4652, %v4468
        %v4661 = vmul.f32 %v4653, %v4469
        %v4662 = vmul.f32 %v4654, %v4470
        %v4663 = vmul.f32 %v4655, %v4471
        %v4664 = vmul.f32 %v4656, %v4472
        %v4665 = vmul.f32 %v4657, %v4473
        %v4666 = vmul.f32 %v4658, %v4474
        %v4667 = vmul.f32 %v4659, %v4475
        %v4668 = vmul.f32 %v4652, %v4476
        %v4669 = vmul.f32 %v4653, %v4477
        %v4670 = vmul.f32 %v4654, %v4478
        %v4671 = vmul.f32 %v4655, %v4479
        %v4672 = vmul.f32 %v4656, %v4480
        %v4673 = vmul.f32 %v4657, %v4481
        %v4674 = vmul.f32 %v4658, %v4482
        %v4675 = vmul.f32 %v4659, %v4483
        %v4676 = vperm.slane %v4327, 0
        %v4677 = vperm.slane %v4328, 0
        %v4678 = vperm.slane %v4329, 0
        %v4679 = vperm.slane %v4330, 0
        %v4680 = vperm.slane %v4331, 0
        %v4681 = vperm.slane %v4332, 0
        %v4682 = vperm.slane %v4333, 0
        %v4683 = vperm.slane %v4334, 0
        %v4684 = vmul.f32 %v4676, %v4468
        %v4685 = vmul.f32 %v4677, %v4469
        %v4686 = vmul.f32 %v4678, %v4470
        %v4687 = vmul.f32 %v4679, %v4471
        %v4688 = vmul.f32 %v4680, %v4472
        %v4689 = vmul.f32 %v4681, %v4473
        %v4690 = vmul.f32 %v4682, %v4474
        %v4691 = vmul.f32 %v4683, %v4475
        %v4692 = vmul.f32 %v4676, %v4476
        %v4693 = vmul.f32 %v4677, %v4477
        %v4694 = vmul.f32 %v4678, %v4478
        %v4695 = vmul.f32 %v4679, %v4479
        %v4696 = vmul.f32 %v4680, %v4480
        %v4697 = vmul.f32 %v4681, %v4481
        %v4698 = vmul.f32 %v4682, %v4482
        %v4699 = vmul.f32 %v4683, %v4483
        %v4700 = vperm.slane %v4327, 1
        %v4701 = vperm.slane %v4328, 1
        %v4702 = vperm.slane %v4329, 1
        %v4703 = vperm.slane %v4330, 1
        %v4704 = vperm.slane %v4331, 1
        %v4705 = vperm.slane %v4332, 1
        %v4706 = vperm.slane %v4333, 1
        %v4707 = vperm.slane %v4334, 1
        %v4708 = vmul.f32 %v4700, %v4468
        %v4709 = vmul.f32 %v4701, %v4469
        %v4710 = vmul.f32 %v4702, %v4470
        %v4711 = vmul.f32 %v4703, %v4471
        %v4712 = vmul.f32 %v4704, %v4472
        %v4713 = vmul.f32 %v4705, %v4473
        %v4714 = vmul.f32 %v4706, %v4474
        %v4715 = vmul.f32 %v4707, %v4475
        %v4716 = vmul.f32 %v4700, %v4476
        %v4717 = vmul.f32 %v4701, %v4477
        %v4718 = vmul.f32 %v4702, %v4478
        %v4719 = vmul.f32 %v4703, %v4479
        %v4720 = vmul.f32 %v4704, %v4480
        %v4721 = vmul.f32 %v4705, %v4481
        %v4722 = vmul.f32 %v4706, %v4482
        %v4723 = vmul.f32 %v4707, %v4483
        %v4724 = vperm.slane %v4327, 2
        %v4725 = vperm.slane %v4328, 2
        %v4726 = vperm.slane %v4329, 2
        %v4727 = vperm.slane %v4330, 2
        %v4728 = vperm.slane %v4331, 2
        %v4729 = vperm.slane %v4332, 2
        %v4730 = vperm.slane %v4333, 2
        %v4731 = vperm.slane %v4334, 2
        %v4732 = vmul.f32 %v4724, %v4468
        %v4733 = vmul.f32 %v4725, %v4469
        %v4734 = vmul.f32 %v4726, %v4470
        %v4735 = vmul.f32 %v4727, %v4471
        %v4736 = vmul.f32 %v4728, %v4472
        %v4737 = vmul.f32 %v4729, %v4473
        %v4738 = vmul.f32 %v4730, %v4474
        %v4739 = vmul.f32 %v4731, %v4475
        %v4740 = vmul.f32 %v4724, %v4476
        %v4741 = vmul.f32 %v4725, %v4477
        %v4742 = vmul.f32 %v4726, %v4478
        %v4743 = vmul.f32 %v4727, %v4479
        %v4744 = vmul.f32 %v4728, %v4480
        %v4745 = vmul.f32 %v4729, %v4481
        %v4746 = vmul.f32 %v4730, %v4482
        %v4747 = vmul.f32 %v4731, %v4483
        %v4748 = vperm.slane %v4327, 3
        %v4749 = vperm.slane %v4328, 3
        %v4750 = vperm.slane %v4329, 3
        %v4751 = vperm.slane %v4330, 3
        %v4752 = vperm.slane %v4331, 3
        %v4753 = vperm.slane %v4332, 3
        %v4754 = vperm.slane %v4333, 3
        %v4755 = vperm.slane %v4334, 3
        %v4756 = vmul.f32 %v4748, %v4468
        %v4757 = vmul.f32 %v4749, %v4469
        %v4758 = vmul.f32 %v4750, %v4470
        %v4759 = vmul.f32 %v4751, %v4471
        %v4760 = vmul.f32 %v4752, %v4472
        %v4761 = vmul.f32 %v4753, %v4473
        %v4762 = vmul.f32 %v4754, %v4474
        %v4763 = vmul.f32 %v4755, %v4475
        %v4764 = vmul.f32 %v4748, %v4476
        %v4765 = vmul.f32 %v4749, %v4477
        %v4766 = vmul.f32 %v4750, %v4478
        %v4767 = vmul.f32 %v4751, %v4479
        %v4768 = vmul.f32 %v4752, %v4480
        %v4769 = vmul.f32 %v4753, %v4481
        %v4770 = vmul.f32 %v4754, %v4482
        %v4771 = vmul.f32 %v4755, %v4483
        %v4772 = vperm.slane %v4327, 4
        %v4773 = vperm.slane %v4328, 4
        %v4774 = vperm.slane %v4329, 4
        %v4775 = vperm.slane %v4330, 4
        %v4776 = vperm.slane %v4331, 4
        %v4777 = vperm.slane %v4332, 4
        %v4778 = vperm.slane %v4333, 4
        %v4779 = vperm.slane %v4334, 4
        %v4780 = vmul.f32 %v4772, %v4468
        %v4781 = vmul.f32 %v4773, %v4469
        %v4782 = vmul.f32 %v4774, %v4470
        %v4783 = vmul.f32 %v4775, %v4471
        %v4784 = vmul.f32 %v4776, %v4472
        %v4785 = vmul.f32 %v4777, %v4473
        %v4786 = vmul.f32 %v4778, %v4474
        %v4787 = vmul.f32 %v4779, %v4475
        %v4788 = vmul.f32 %v4772, %v4476
        %v4789 = vmul.f32 %v4773, %v4477
        %v4790 = vmul.f32 %v4774, %v4478
        %v4791 = vmul.f32 %v4775, %v4479
        %v4792 = vmul.f32 %v4776, %v4480
        %v4793 = vmul.f32 %v4777, %v4481
        %v4794 = vmul.f32 %v4778, %v4482
        %v4795 = vmul.f32 %v4779, %v4483
        %v4796 = vperm.slane %v4327, 5
        %v4797 = vperm.slane %v4328, 5
        %v4798 = vperm.slane %v4329, 5
        %v4799 = vperm.slane %v4330, 5
        %v4800 = vperm.slane %v4331, 5
        %v4801 = vperm.slane %v4332, 5
        %v4802 = vperm.slane %v4333, 5
        %v4803 = vperm.slane %v4334, 5
        %v4804 = vmul.f32 %v4796, %v4468
        %v4805 = vmul.f32 %v4797, %v4469
        %v4806 = vmul.f32 %v4798, %v4470
        %v4807 = vmul.f32 %v4799, %v4471
        %v4808 = vmul.f32 %v4800, %v4472
        %v4809 = vmul.f32 %v4801, %v4473
        %v4810 = vmul.f32 %v4802, %v4474
        %v4811 = vmul.f32 %v4803, %v4475
        %v4812 = vmul.f32 %v4796, %v4476
        %v4813 = vmul.f32 %v4797, %v4477
        %v4814 = vmul.f32 %v4798, %v4478
        %v4815 = vmul.f32 %v4799, %v4479
        %v4816 = vmul.f32 %v4800, %v4480
        %v4817 = vmul.f32 %v4801, %v4481
        %v4818 = vmul.f32 %v4802, %v4482
        %v4819 = vmul.f32 %v4803, %v4483
        %v4820 = vperm.slane %v4327, 6
        %v4821 = vperm.slane %v4328, 6
        %v4822 = vperm.slane %v4329, 6
        %v4823 = vperm.slane %v4330, 6
        %v4824 = vperm.slane %v4331, 6
        %v4825 = vperm.slane %v4332, 6
        %v4826 = vperm.slane %v4333, 6
        %v4827 = vperm.slane %v4334, 6
        %v4828 = vmul.f32 %v4820, %v4468
        %v4829 = vmul.f32 %v4821, %v4469
        %v4830 = vmul.f32 %v4822, %v4470
        %v4831 = vmul.f32 %v4823, %v4471
        %v4832 = vmul.f32 %v4824, %v4472
        %v4833 = vmul.f32 %v4825, %v4473
        %v4834 = vmul.f32 %v4826, %v4474
        %v4835 = vmul.f32 %v4827, %v4475
        %v4836 = vmul.f32 %v4820, %v4476
        %v4837 = vmul.f32 %v4821, %v4477
        %v4838 = vmul.f32 %v4822, %v4478
        %v4839 = vmul.f32 %v4823, %v4479
        %v4840 = vmul.f32 %v4824, %v4480
        %v4841 = vmul.f32 %v4825, %v4481
        %v4842 = vmul.f32 %v4826, %v4482
        %v4843 = vmul.f32 %v4827, %v4483
        %v4844 = vperm.slane %v4327, 7
        %v4845 = vperm.slane %v4328, 7
        %v4846 = vperm.slane %v4329, 7
        %v4847 = vperm.slane %v4330, 7
        %v4848 = vperm.slane %v4331, 7
        %v4849 = vperm.slane %v4332, 7
        %v4850 = vperm.slane %v4333, 7
        %v4851 = vperm.slane %v4334, 7
        %v4852 = vmul.f32 %v4844, %v4468
        %v4853 = vmul.f32 %v4845, %v4469
        %v4854 = vmul.f32 %v4846, %v4470
        %v4855 = vmul.f32 %v4847, %v4471
        %v4856 = vmul.f32 %v4848, %v4472
        %v4857 = vmul.f32 %v4849, %v4473
        %v4858 = vmul.f32 %v4850, %v4474
        %v4859 = vmul.f32 %v4851, %v4475
        %v4860 = vmul.f32 %v4844, %v4476
        %v4861 = vmul.f32 %v4845, %v4477
        %v4862 = vmul.f32 %v4846, %v4478
        %v4863 = vmul.f32 %v4847, %v4479
        %v4864 = vmul.f32 %v4848, %v4480
        %v4865 = vmul.f32 %v4849, %v4481
        %v4866 = vmul.f32 %v4850, %v4482
        %v4867 = vmul.f32 %v4851, %v4483
        %v4868 = vpack.c.bf16 %v4500, %v4492
        %v4869 = vpack.c.bf16 %v4501, %v4493
        %v4870 = vpack.c.bf16 %v4502, %v4494
        %v4871 = vpack.c.bf16 %v4503, %v4495
        %v4872 = vpack.c.bf16 %v4504, %v4496
        %v4873 = vpack.c.bf16 %v4505, %v4497
        %v4874 = vpack.c.bf16 %v4506, %v4498
        %v4875 = vpack.c.bf16 %v4507, %v4499
        %v4876 = vpack.c.bf16 %v4524, %v4516
        %v4877 = vpack.c.bf16 %v4525, %v4517
        %v4878 = vpack.c.bf16 %v4526, %v4518
        %v4879 = vpack.c.bf16 %v4527, %v4519
        %v4880 = vpack.c.bf16 %v4528, %v4520
        %v4881 = vpack.c.bf16 %v4529, %v4521
        %v4882 = vpack.c.bf16 %v4530, %v4522
        %v4883 = vpack.c.bf16 %v4531, %v4523
        %v4884 = vpack.c.bf16 %v4548, %v4540
        %v4885 = vpack.c.bf16 %v4549, %v4541
        %v4886 = vpack.c.bf16 %v4550, %v4542
        %v4887 = vpack.c.bf16 %v4551, %v4543
        %v4888 = vpack.c.bf16 %v4552, %v4544
        %v4889 = vpack.c.bf16 %v4553, %v4545
        %v4890 = vpack.c.bf16 %v4554, %v4546
        %v4891 = vpack.c.bf16 %v4555, %v4547
        %v4892 = vpack.c.bf16 %v4572, %v4564
        %v4893 = vpack.c.bf16 %v4573, %v4565
        %v4894 = vpack.c.bf16 %v4574, %v4566
        %v4895 = vpack.c.bf16 %v4575, %v4567
        %v4896 = vpack.c.bf16 %v4576, %v4568
        %v4897 = vpack.c.bf16 %v4577, %v4569
        %v4898 = vpack.c.bf16 %v4578, %v4570
        %v4899 = vpack.c.bf16 %v4579, %v4571
        %v4900 = vpack.c.bf16 %v4596, %v4588
        %v4901 = vpack.c.bf16 %v4597, %v4589
        %v4902 = vpack.c.bf16 %v4598, %v4590
        %v4903 = vpack.c.bf16 %v4599, %v4591
        %v4904 = vpack.c.bf16 %v4600, %v4592
        %v4905 = vpack.c.bf16 %v4601, %v4593
        %v4906 = vpack.c.bf16 %v4602, %v4594
        %v4907 = vpack.c.bf16 %v4603, %v4595
        %v4908 = vpack.c.bf16 %v4620, %v4612
        %v4909 = vpack.c.bf16 %v4621, %v4613
        %v4910 = vpack.c.bf16 %v4622, %v4614
        %v4911 = vpack.c.bf16 %v4623, %v4615
        %v4912 = vpack.c.bf16 %v4624, %v4616
        %v4913 = vpack.c.bf16 %v4625, %v4617
        %v4914 = vpack.c.bf16 %v4626, %v4618
        %v4915 = vpack.c.bf16 %v4627, %v4619
        %v4916 = vpack.c.bf16 %v4644, %v4636
        %v4917 = vpack.c.bf16 %v4645, %v4637
        %v4918 = vpack.c.bf16 %v4646, %v4638
        %v4919 = vpack.c.bf16 %v4647, %v4639
        %v4920 = vpack.c.bf16 %v4648, %v4640
        %v4921 = vpack.c.bf16 %v4649, %v4641
        %v4922 = vpack.c.bf16 %v4650, %v4642
        %v4923 = vpack.c.bf16 %v4651, %v4643
        %v4924 = vpack.c.bf16 %v4668, %v4660
        %v4925 = vpack.c.bf16 %v4669, %v4661
        %v4926 = vpack.c.bf16 %v4670, %v4662
        %v4927 = vpack.c.bf16 %v4671, %v4663
        %v4928 = vpack.c.bf16 %v4672, %v4664
        %v4929 = vpack.c.bf16 %v4673, %v4665
        %v4930 = vpack.c.bf16 %v4674, %v4666
        %v4931 = vpack.c.bf16 %v4675, %v4667
        %v4932 = vpack.c.bf16 %v4692, %v4684
        %v4933 = vpack.c.bf16 %v4693, %v4685
        %v4934 = vpack.c.bf16 %v4694, %v4686
        %v4935 = vpack.c.bf16 %v4695, %v4687
        %v4936 = vpack.c.bf16 %v4696, %v4688
        %v4937 = vpack.c.bf16 %v4697, %v4689
        %v4938 = vpack.c.bf16 %v4698, %v4690
        %v4939 = vpack.c.bf16 %v4699, %v4691
        %v4940 = vpack.c.bf16 %v4716, %v4708
        %v4941 = vpack.c.bf16 %v4717, %v4709
        %v4942 = vpack.c.bf16 %v4718, %v4710
        %v4943 = vpack.c.bf16 %v4719, %v4711
        %v4944 = vpack.c.bf16 %v4720, %v4712
        %v4945 = vpack.c.bf16 %v4721, %v4713
        %v4946 = vpack.c.bf16 %v4722, %v4714
        %v4947 = vpack.c.bf16 %v4723, %v4715
        %v4948 = vpack.c.bf16 %v4740, %v4732
        %v4949 = vpack.c.bf16 %v4741, %v4733
        %v4950 = vpack.c.bf16 %v4742, %v4734
        %v4951 = vpack.c.bf16 %v4743, %v4735
        %v4952 = vpack.c.bf16 %v4744, %v4736
        %v4953 = vpack.c.bf16 %v4745, %v4737
        %v4954 = vpack.c.bf16 %v4746, %v4738
        %v4955 = vpack.c.bf16 %v4747, %v4739
        %v4956 = vpack.c.bf16 %v4764, %v4756
        %v4957 = vpack.c.bf16 %v4765, %v4757
        %v4958 = vpack.c.bf16 %v4766, %v4758
        %v4959 = vpack.c.bf16 %v4767, %v4759
        %v4960 = vpack.c.bf16 %v4768, %v4760
        %v4961 = vpack.c.bf16 %v4769, %v4761
        %v4962 = vpack.c.bf16 %v4770, %v4762
        %v4963 = vpack.c.bf16 %v4771, %v4763
        %v4964 = vpack.c.bf16 %v4788, %v4780
        %v4965 = vpack.c.bf16 %v4789, %v4781
        %v4966 = vpack.c.bf16 %v4790, %v4782
        %v4967 = vpack.c.bf16 %v4791, %v4783
        %v4968 = vpack.c.bf16 %v4792, %v4784
        %v4969 = vpack.c.bf16 %v4793, %v4785
        %v4970 = vpack.c.bf16 %v4794, %v4786
        %v4971 = vpack.c.bf16 %v4795, %v4787
        %v4972 = vpack.c.bf16 %v4812, %v4804
        %v4973 = vpack.c.bf16 %v4813, %v4805
        %v4974 = vpack.c.bf16 %v4814, %v4806
        %v4975 = vpack.c.bf16 %v4815, %v4807
        %v4976 = vpack.c.bf16 %v4816, %v4808
        %v4977 = vpack.c.bf16 %v4817, %v4809
        %v4978 = vpack.c.bf16 %v4818, %v4810
        %v4979 = vpack.c.bf16 %v4819, %v4811
        %v4980 = vpack.c.bf16 %v4836, %v4828
        %v4981 = vpack.c.bf16 %v4837, %v4829
        %v4982 = vpack.c.bf16 %v4838, %v4830
        %v4983 = vpack.c.bf16 %v4839, %v4831
        %v4984 = vpack.c.bf16 %v4840, %v4832
        %v4985 = vpack.c.bf16 %v4841, %v4833
        %v4986 = vpack.c.bf16 %v4842, %v4834
        %v4987 = vpack.c.bf16 %v4843, %v4835
        %v4988 = vpack.c.bf16 %v4860, %v4852
        %v4989 = vpack.c.bf16 %v4861, %v4853
        %v4990 = vpack.c.bf16 %v4862, %v4854
        %v4991 = vpack.c.bf16 %v4863, %v4855
        %v4992 = vpack.c.bf16 %v4864, %v4856
        %v4993 = vpack.c.bf16 %v4865, %v4857
        %v4994 = vpack.c.bf16 %v4866, %v4858
        %v4995 = vpack.c.bf16 %v4867, %v4859
        %v4996 = vrot.slane %v2688, 2
        %v4997 = vrot.slane %v2689, 2
        %5000 = vmatpush.bf16.msra.mxu0 %v4924
        %5001 = vmatpush.bf16.msra.mxu0 %v4916
        %5002 = vmatpush.bf16.msra.mxu0 %v4908
        %5003 = vmatpush.bf16.msra.mxu0 %v4900
        %5004 = vmatpush.bf16.msra.mxu0 %v4892
        %5005 = vmatpush.bf16.msra.mxu0 %v4884
        %5006 = vmatpush.bf16.msra.mxu0 %v4876
        %5007 = vmatpush.bf16.msra.mxu0 %v4868
        %5008 = vmatmul.bf16.gmra.mxu0 %v4996
        %v5009 = vpop.f32.mrf.mxu0
        %v5010 = vadd.f32 0.0, %v5009
        %v5011 = vpop.f32.mrf.mxu0
        %5012 = vdwg.mxu0
        %5013 = vmatpush.bf16.msra.mxu0 %v4988
        %5014 = vmatpush.bf16.msra.mxu0 %v4980
        %5015 = vmatpush.bf16.msra.mxu0 %v4972
        %5016 = vmatpush.bf16.msra.mxu0 %v4964
        %5017 = vmatpush.bf16.msra.mxu0 %v4956
        %5018 = vmatpush.bf16.msra.mxu0 %v4948
        %5019 = vmatpush.bf16.msra.mxu0 %v4940
        %5020 = vmatpush.bf16.msra.mxu0 %v4932
        %5021 = vmatmul.bf16.gmra.mxu0 %v4997
        %v5022 = vpop.f32.mrf.mxu0
        %v5023 = vadd.f32 %v5010, %v5022
        %v5024 = vpop.f32.mrf.mxu0
        %5025 = vdwg.mxu0
        %5026 = vmatpush.bf16.msra.mxu0 %v4925
        %5027 = vmatpush.bf16.msra.mxu0 %v4917
        %5028 = vmatpush.bf16.msra.mxu0 %v4909
        %5029 = vmatpush.bf16.msra.mxu0 %v4901
        %5030 = vmatpush.bf16.msra.mxu0 %v4893
        %5031 = vmatpush.bf16.msra.mxu0 %v4885
        %5032 = vmatpush.bf16.msra.mxu0 %v4877
        %5033 = vmatpush.bf16.msra.mxu0 %v4869
        %5034 = vmatmul.bf16.gmra.mxu0 %v4996
        %v5035 = vpop.f32.mrf.mxu0
        %v5036 = vadd.f32 0.0, %v5035
        %v5037 = vpop.f32.mrf.mxu0
        %5038 = vdwg.mxu0
        %5039 = vmatpush.bf16.msra.mxu0 %v4989
        %5040 = vmatpush.bf16.msra.mxu0 %v4981
        %5041 = vmatpush.bf16.msra.mxu0 %v4973
        %5042 = vmatpush.bf16.msra.mxu0 %v4965
        %5043 = vmatpush.bf16.msra.mxu0 %v4957
        %5044 = vmatpush.bf16.msra.mxu0 %v4949
        %5045 = vmatpush.bf16.msra.mxu0 %v4941
        %5046 = vmatpush.bf16.msra.mxu0 %v4933
        %5047 = vmatmul.bf16.gmra.mxu0 %v4997
        %v5048 = vpop.f32.mrf.mxu0
        %v5049 = vadd.f32 %v5036, %v5048
        %v5050 = vpop.f32.mrf.mxu0
        %5051 = vdwg.mxu0
        %5052 = vmatpush.bf16.msra.mxu0 %v4926
        %5053 = vmatpush.bf16.msra.mxu0 %v4918
        %5054 = vmatpush.bf16.msra.mxu0 %v4910
        %5055 = vmatpush.bf16.msra.mxu0 %v4902
        %5056 = vmatpush.bf16.msra.mxu0 %v4894
        %5057 = vmatpush.bf16.msra.mxu0 %v4886
        %5058 = vmatpush.bf16.msra.mxu0 %v4878
        %5059 = vmatpush.bf16.msra.mxu0 %v4870
        %5060 = vmatmul.bf16.gmra.mxu0 %v4996
        %v5061 = vpop.f32.mrf.mxu0
        %v5062 = vadd.f32 0.0, %v5061
        %v5063 = vpop.f32.mrf.mxu0
        %5064 = vdwg.mxu0
        %5065 = vmatpush.bf16.msra.mxu0 %v4990
        %5066 = vmatpush.bf16.msra.mxu0 %v4982
        %5067 = vmatpush.bf16.msra.mxu0 %v4974
        %5068 = vmatpush.bf16.msra.mxu0 %v4966
        %5069 = vmatpush.bf16.msra.mxu0 %v4958
        %5070 = vmatpush.bf16.msra.mxu0 %v4950
        %5071 = vmatpush.bf16.msra.mxu0 %v4942
        %5072 = vmatpush.bf16.msra.mxu0 %v4934
        %5073 = vmatmul.bf16.gmra.mxu0 %v4997
        %v5074 = vpop.f32.mrf.mxu0
        %v5075 = vadd.f32 %v5062, %v5074
        %v5076 = vpop.f32.mrf.mxu0
        %5077 = vdwg.mxu0
        %5078 = vmatpush.bf16.msra.mxu0 %v4927
        %5079 = vmatpush.bf16.msra.mxu0 %v4919
        %5080 = vmatpush.bf16.msra.mxu0 %v4911
        %5081 = vmatpush.bf16.msra.mxu0 %v4903
        %5082 = vmatpush.bf16.msra.mxu0 %v4895
        %5083 = vmatpush.bf16.msra.mxu0 %v4887
        %5084 = vmatpush.bf16.msra.mxu0 %v4879
        %5085 = vmatpush.bf16.msra.mxu0 %v4871
        %5086 = vmatmul.bf16.gmra.mxu0 %v4996
        %v5087 = vpop.f32.mrf.mxu0
        %v5088 = vadd.f32 0.0, %v5087
        %v5089 = vpop.f32.mrf.mxu0
        %5090 = vdwg.mxu0
        %5091 = vmatpush.bf16.msra.mxu0 %v4991
        %5092 = vmatpush.bf16.msra.mxu0 %v4983
        %5093 = vmatpush.bf16.msra.mxu0 %v4975
        %5094 = vmatpush.bf16.msra.mxu0 %v4967
        %5095 = vmatpush.bf16.msra.mxu0 %v4959
        %5096 = vmatpush.bf16.msra.mxu0 %v4951
        %5097 = vmatpush.bf16.msra.mxu0 %v4943
        %5098 = vmatpush.bf16.msra.mxu0 %v4935
        %5099 = vmatmul.bf16.gmra.mxu0 %v4997
        %v5100 = vpop.f32.mrf.mxu0
        %v5101 = vadd.f32 %v5088, %v5100
        %v5102 = vpop.f32.mrf.mxu0
        %5103 = vdwg.mxu0
        %5104 = vmatpush.bf16.msra.mxu0 %v4928
        %5105 = vmatpush.bf16.msra.mxu0 %v4920
        %5106 = vmatpush.bf16.msra.mxu0 %v4912
        %5107 = vmatpush.bf16.msra.mxu0 %v4904
        %5108 = vmatpush.bf16.msra.mxu0 %v4896
        %5109 = vmatpush.bf16.msra.mxu0 %v4888
        %5110 = vmatpush.bf16.msra.mxu0 %v4880
        %5111 = vmatpush.bf16.msra.mxu0 %v4872
        %5112 = vmatmul.bf16.gmra.mxu0 %v4996
        %v5113 = vpop.f32.mrf.mxu0
        %v5114 = vadd.f32 0.0, %v5113
        %v5115 = vpop.f32.mrf.mxu0
        %5116 = vdwg.mxu0
        %5117 = vmatpush.bf16.msra.mxu0 %v4992
        %5118 = vmatpush.bf16.msra.mxu0 %v4984
        %5119 = vmatpush.bf16.msra.mxu0 %v4976
        %5120 = vmatpush.bf16.msra.mxu0 %v4968
        %5121 = vmatpush.bf16.msra.mxu0 %v4960
        %5122 = vmatpush.bf16.msra.mxu0 %v4952
        %5123 = vmatpush.bf16.msra.mxu0 %v4944
        %5124 = vmatpush.bf16.msra.mxu0 %v4936
        %5125 = vmatmul.bf16.gmra.mxu0 %v4997
        %v5126 = vpop.f32.mrf.mxu0
        %v5127 = vadd.f32 %v5114, %v5126
        %v5128 = vpop.f32.mrf.mxu0
        %5129 = vdwg.mxu0
        %5130 = vmatpush.bf16.msra.mxu0 %v4929
        %5131 = vmatpush.bf16.msra.mxu0 %v4921
        %5132 = vmatpush.bf16.msra.mxu0 %v4913
        %5133 = vmatpush.bf16.msra.mxu0 %v4905
        %5134 = vmatpush.bf16.msra.mxu0 %v4897
        %5135 = vmatpush.bf16.msra.mxu0 %v4889
        %5136 = vmatpush.bf16.msra.mxu0 %v4881
        %5137 = vmatpush.bf16.msra.mxu0 %v4873
        %5138 = vmatmul.bf16.gmra.mxu0 %v4996
        %v5139 = vpop.f32.mrf.mxu0
        %v5140 = vadd.f32 0.0, %v5139
        %v5141 = vpop.f32.mrf.mxu0
        %5142 = vdwg.mxu0
        %5143 = vmatpush.bf16.msra.mxu0 %v4993
        %5144 = vmatpush.bf16.msra.mxu0 %v4985
        %5145 = vmatpush.bf16.msra.mxu0 %v4977
        %5146 = vmatpush.bf16.msra.mxu0 %v4969
        %5147 = vmatpush.bf16.msra.mxu0 %v4961
        %5148 = vmatpush.bf16.msra.mxu0 %v4953
        %5149 = vmatpush.bf16.msra.mxu0 %v4945
        %5150 = vmatpush.bf16.msra.mxu0 %v4937
        %5151 = vmatmul.bf16.gmra.mxu0 %v4997
        %v5152 = vpop.f32.mrf.mxu0
        %v5153 = vadd.f32 %v5140, %v5152
        %v5154 = vpop.f32.mrf.mxu0
        %5155 = vdwg.mxu0
        %5156 = vmatpush.bf16.msra.mxu0 %v4930
        %5157 = vmatpush.bf16.msra.mxu0 %v4922
        %5158 = vmatpush.bf16.msra.mxu0 %v4914
        %5159 = vmatpush.bf16.msra.mxu0 %v4906
        %5160 = vmatpush.bf16.msra.mxu0 %v4898
        %5161 = vmatpush.bf16.msra.mxu0 %v4890
        %5162 = vmatpush.bf16.msra.mxu0 %v4882
        %5163 = vmatpush.bf16.msra.mxu0 %v4874
        %5164 = vmatmul.bf16.gmra.mxu0 %v4996
        %v5165 = vpop.f32.mrf.mxu0
        %v5166 = vadd.f32 0.0, %v5165
        %v5167 = vpop.f32.mrf.mxu0
        %5168 = vdwg.mxu0
        %5169 = vmatpush.bf16.msra.mxu0 %v4994
        %5170 = vmatpush.bf16.msra.mxu0 %v4986
        %5171 = vmatpush.bf16.msra.mxu0 %v4978
        %5172 = vmatpush.bf16.msra.mxu0 %v4970
        %5173 = vmatpush.bf16.msra.mxu0 %v4962
        %5174 = vmatpush.bf16.msra.mxu0 %v4954
        %5175 = vmatpush.bf16.msra.mxu0 %v4946
        %5176 = vmatpush.bf16.msra.mxu0 %v4938
        %5177 = vmatmul.bf16.gmra.mxu0 %v4997
        %v5178 = vpop.f32.mrf.mxu0
        %v5179 = vadd.f32 %v5166, %v5178
        %v5180 = vpop.f32.mrf.mxu0
        %5181 = vdwg.mxu0
        %5182 = vmatpush.bf16.msra.mxu0 %v4931
        %5183 = vmatpush.bf16.msra.mxu0 %v4923
        %5184 = vmatpush.bf16.msra.mxu0 %v4915
        %5185 = vmatpush.bf16.msra.mxu0 %v4907
        %5186 = vmatpush.bf16.msra.mxu0 %v4899
        %5187 = vmatpush.bf16.msra.mxu0 %v4891
        %5188 = vmatpush.bf16.msra.mxu0 %v4883
        %5189 = vmatpush.bf16.msra.mxu0 %v4875
        %5190 = vmatmul.bf16.gmra.mxu0 %v4996
        %v5191 = vpop.f32.mrf.mxu0
        %v5192 = vadd.f32 0.0, %v5191
        %v5193 = vpop.f32.mrf.mxu0
        %5194 = vdwg.mxu0
        %5195 = vmatpush.bf16.msra.mxu0 %v4995
        %5196 = vmatpush.bf16.msra.mxu0 %v4987
        %5197 = vmatpush.bf16.msra.mxu0 %v4979
        %5198 = vmatpush.bf16.msra.mxu0 %v4971
        %5199 = vmatpush.bf16.msra.mxu0 %v4963
        %5200 = vmatpush.bf16.msra.mxu0 %v4955
        %5201 = vmatpush.bf16.msra.mxu0 %v4947
        %5202 = vmatpush.bf16.msra.mxu0 %v4939
        %5203 = vmatmul.bf16.gmra.mxu0 %v4997
        %v5204 = vpop.f32.mrf.mxu0
        %v5205 = vadd.f32 %v5192, %v5204
        %v5206 = vpop.f32.mrf.mxu0
        %5207 = vdwg.mxu0
        %v5216 = vrot.slane %v1465, 7
        %v5217 = vrot.slane %v1503, 6
        %v5218 = vrot.slane %v1541, 5
        %v5219 = vrot.slane %v1579, 4
        %v5220 = vrot.slane %v1617, 3
        %v5221 = vrot.slane %v1655, 2
        %v5222 = vrot.slane %v1693, 1
        %v5223 = vsel %vm1754, %v1427, %v5216
        %v5224 = vsel %vm1756, %v5217, %v5218
        %v5225 = vsel %vm1758, %v5223, %v5224
        %v5226 = vsel %vm1760, %v5219, %v5220
        %v5227 = vsel %vm1762, %v5221, %v5222
        %v5228 = vsel %vm1764, %v5226, %v5227
        %v5229 = vsel %vm1766, %v5225, %v5228
        %v5231 = vmul.f32 %v1697, %v5229
        %v5232 = vadd.f32 %v5231, 0.0
        %5233 = vst [vmem:[#allocation1] sm:$0xff] %v1427
        %5234 = vst [vmem:[#allocation1 + $0x9] sm:$0xff] %v1465
        %5235 = vst [vmem:[#allocation1 + $0x12] sm:$0xff] %v1503
        %5236 = vst [vmem:[#allocation1 + $0x1b] sm:$0xff] %v1541
        %5237 = vst [vmem:[#allocation1 + $0x24] sm:$0xff] %v1579
        %5238 = vst [vmem:[#allocation1 + $0x2d] sm:$0xff] %v1617
        %5239 = vst [vmem:[#allocation1 + $0x36] sm:$0xff] %v1655
        %5240 = vst [vmem:[#allocation1 + $0x3f] sm:$0xff] %v1693
        %s5241 = scalar_lea.vmem [#allocation1], 1
        %v5242 = vld [vmem:[%s5241] ss:$9 sm:$0xff]
        %v5244 = vmul.f32 %v1697, %v5242
        %v5245 = vadd.f32 %v5244, 0.0
        %5246 = vst [vmem:[#allocation1] sm:$0xff] %v1427
        %5247 = vst [vmem:[#allocation1 + $0x9] sm:$0xff] %v1465
        %5248 = vst [vmem:[#allocation1 + $0x12] sm:$0xff] %v1503
        %5249 = vst [vmem:[#allocation1 + $0x1b] sm:$0xff] %v1541
        %5250 = vst [vmem:[#allocation1 + $0x24] sm:$0xff] %v1579
        %5251 = vst [vmem:[#allocation1 + $0x2d] sm:$0xff] %v1617
        %5252 = vst [vmem:[#allocation1 + $0x36] sm:$0xff] %v1655
        %5253 = vst [vmem:[#allocation1 + $0x3f] sm:$0xff] %v1693
        %s5254 = scalar_lea.vmem [#allocation1], 2
        %v5255 = vld [vmem:[%s5254] ss:$9 sm:$0xff]
        %v5257 = vmul.f32 %v1701, %v5255
        %v5258 = vadd.f32 %v5232, %v5257
        %5259 = vst [vmem:[#allocation1] sm:$0xff] %v1427
        %5260 = vst [vmem:[#allocation1 + $0x9] sm:$0xff] %v1465
        %5261 = vst [vmem:[#allocation1 + $0x12] sm:$0xff] %v1503
        %5262 = vst [vmem:[#allocation1 + $0x1b] sm:$0xff] %v1541
        %5263 = vst [vmem:[#allocation1 + $0x24] sm:$0xff] %v1579
        %5264 = vst [vmem:[#allocation1 + $0x2d] sm:$0xff] %v1617
        %5265 = vst [vmem:[#allocation1 + $0x36] sm:$0xff] %v1655
        %5266 = vst [vmem:[#allocation1 + $0x3f] sm:$0xff] %v1693
        %s5267 = scalar_lea.vmem [#allocation1], 3
        %v5268 = vld [vmem:[%s5267] ss:$9 sm:$0xff]
        %v5270 = vmul.f32 %v1701, %v5268
        %v5271 = vadd.f32 %v5245, %v5270
        %5272 = vst [vmem:[#allocation1] sm:$0xff] %v1427
        %5273 = vst [vmem:[#allocation1 + $0x9] sm:$0xff] %v1465
        %5274 = vst [vmem:[#allocation1 + $0x12] sm:$0xff] %v1503
        %5275 = vst [vmem:[#allocation1 + $0x1b] sm:$0xff] %v1541
        %5276 = vst [vmem:[#allocation1 + $0x24] sm:$0xff] %v1579
        %5277 = vst [vmem:[#allocation1 + $0x2d] sm:$0xff] %v1617
        %5278 = vst [vmem:[#allocation1 + $0x36] sm:$0xff] %v1655
        %5279 = vst [vmem:[#allocation1 + $0x3f] sm:$0xff] %v1693
        %s5280 = scalar_lea.vmem [#allocation1], 4
        %v5281 = vld [vmem:[%s5280] ss:$9 sm:$0xff]
        %v5283 = vmul.f32 %v1705, %v5281
        %v5284 = vadd.f32 %v5258, %v5283
        %5285 = vst [vmem:[#allocation1] sm:$0xff] %v1427
        %5286 = vst [vmem:[#allocation1 + $0x9] sm:$0xff] %v1465
        %5287 = vst [vmem:[#allocation1 + $0x12] sm:$0xff] %v1503
        %5288 = vst [vmem:[#allocation1 + $0x1b] sm:$0xff] %v1541
        %5289 = vst [vmem:[#allocation1 + $0x24] sm:$0xff] %v1579
        %5290 = vst [vmem:[#allocation1 + $0x2d] sm:$0xff] %v1617
        %5291 = vst [vmem:[#allocation1 + $0x36] sm:$0xff] %v1655
        %5292 = vst [vmem:[#allocation1 + $0x3f] sm:$0xff] %v1693
        %s5293 = scalar_lea.vmem [#allocation1], 5
        %v5294 = vld [vmem:[%s5293] ss:$9 sm:$0xff]
        %v5296 = vmul.f32 %v1705, %v5294
        %v5297 = vadd.f32 %v5271, %v5296
        %5298 = vst [vmem:[#allocation1] sm:$0xff] %v1427
        %5299 = vst [vmem:[#allocation1 + $0x9] sm:$0xff] %v1465
        %5300 = vst [vmem:[#allocation1 + $0x12] sm:$0xff] %v1503
        %5301 = vst [vmem:[#allocation1 + $0x1b] sm:$0xff] %v1541
        %5302 = vst [vmem:[#allocation1 + $0x24] sm:$0xff] %v1579
        %5303 = vst [vmem:[#allocation1 + $0x2d] sm:$0xff] %v1617
        %5304 = vst [vmem:[#allocation1 + $0x36] sm:$0xff] %v1655
        %5305 = vst [vmem:[#allocation1 + $0x3f] sm:$0xff] %v1693
        %s5306 = scalar_lea.vmem [#allocation1], 6
        %v5307 = vld [vmem:[%s5306] ss:$9 sm:$0xff]
        %v5309 = vmul.f32 %v1709, %v5307
        %v5310 = vadd.f32 %v5284, %v5309
        %5311 = vst [vmem:[#allocation1] sm:$0xff] %v1427
        %5312 = vst [vmem:[#allocation1 + $0x9] sm:$0xff] %v1465
        %5313 = vst [vmem:[#allocation1 + $0x12] sm:$0xff] %v1503
        %5314 = vst [vmem:[#allocation1 + $0x1b] sm:$0xff] %v1541
        %5315 = vst [vmem:[#allocation1 + $0x24] sm:$0xff] %v1579
        %5316 = vst [vmem:[#allocation1 + $0x2d] sm:$0xff] %v1617
        %5317 = vst [vmem:[#allocation1 + $0x36] sm:$0xff] %v1655
        %5318 = vst [vmem:[#allocation1 + $0x3f] sm:$0xff] %v1693
        %s5319 = scalar_lea.vmem [#allocation1], 7
        %v5320 = vld [vmem:[%s5319] ss:$9 sm:$0xff]
        %v5322 = vmul.f32 %v1709, %v5320
        %v5323 = vadd.f32 %v5297, %v5322
        %v5324 = vmul.f32 %v5310, 0.5
        %v5325 = vadd.f32 %v1713, %v5324
        %v5326 = vmax.f32 %v5325, 0.0
        %v5327 = vmin.f32 %v5326, 15.0
        %v5328 = vmul.f32 %v5323, 0.5
        %v5329 = vadd.f32 %v1717, %v5328
        %v5330 = vmax.f32 %v5329, 0.0
        %v5331 = vmin.f32 %v5330, 15.0
        %v5332 = vfloor.f32 %v5327
        %v5333 = vfloor.f32 %v5331
        %v5334 = vsub.f32 %v5327, %v5332
        %v5335 = vsub.f32 %v5331, %v5333
        %v5336 = vadd.f32 %v5332, 1.0
        %v5337 = vmin.f32 %v5336, 15.0
        %v5338 = vadd.f32 %v5333, 1.0
        %v5339 = vmin.f32 %v5338, 15.0
        %v5341 = vperm.slane %v5333, 0
        %v5342 = vperm.slane %v5333, 1
        %v5343 = vperm.slane %v5333, 2
        %v5344 = vperm.slane %v5333, 3
        %v5345 = vperm.slane %v5333, 4
        %v5346 = vperm.slane %v5333, 5
        %v5347 = vperm.slane %v5333, 6
        %v5348 = vperm.slane %v5333, 7
        %vm5357 = vcmp.eq.f32.partialorder %v1737, %v5341
        %vm5358 = vcmp.eq.f32.partialorder %v1737, %v5342
        %vm5359 = vcmp.eq.f32.partialorder %v1737, %v5343
        %vm5360 = vcmp.eq.f32.partialorder %v1737, %v5344
        %vm5361 = vcmp.eq.f32.partialorder %v1737, %v5345
        %vm5362 = vcmp.eq.f32.partialorder %v1737, %v5346
        %vm5363 = vcmp.eq.f32.partialorder %v1737, %v5347
        %vm5364 = vcmp.eq.f32.partialorder %v1737, %v5348
        %vm5365 = vcmp.eq.f32.partialorder %v1738, %v5341
        %vm5366 = vcmp.eq.f32.partialorder %v1738, %v5342
        %vm5367 = vcmp.eq.f32.partialorder %v1738, %v5343
        %vm5368 = vcmp.eq.f32.partialorder %v1738, %v5344
        %vm5369 = vcmp.eq.f32.partialorder %v1738, %v5345
        %vm5370 = vcmp.eq.f32.partialorder %v1738, %v5346
        %vm5371 = vcmp.eq.f32.partialorder %v1738, %v5347
        %vm5372 = vcmp.eq.f32.partialorder %v1738, %v5348
        %v5373 = vsub.f32 1.0, %v5335
        %v5375 = vperm.slane %v5373, 0
        %v5376 = vperm.slane %v5373, 1
        %v5377 = vperm.slane %v5373, 2
        %v5378 = vperm.slane %v5373, 3
        %v5379 = vperm.slane %v5373, 4
        %v5380 = vperm.slane %v5373, 5
        %v5381 = vperm.slane %v5373, 6
        %v5382 = vperm.slane %v5373, 7
        %v5391 = vsel %vm5357, %v5375, 0.0
        %v5392 = vsel %vm5358, %v5376, 0.0
        %v5393 = vsel %vm5359, %v5377, 0.0
        %v5394 = vsel %vm5360, %v5378, 0.0
        %v5395 = vsel %vm5361, %v5379, 0.0
        %v5396 = vsel %vm5362, %v5380, 0.0
        %v5397 = vsel %vm5363, %v5381, 0.0
        %v5398 = vsel %vm5364, %v5382, 0.0
        %v5399 = vsel %vm5365, %v5375, 0.0
        %v5400 = vsel %vm5366, %v5376, 0.0
        %v5401 = vsel %vm5367, %v5377, 0.0
        %v5402 = vsel %vm5368, %v5378, 0.0
        %v5403 = vsel %vm5369, %v5379, 0.0
        %v5404 = vsel %vm5370, %v5380, 0.0
        %v5405 = vsel %vm5371, %v5381, 0.0
        %v5406 = vsel %vm5372, %v5382, 0.0
        %v5408 = vperm.slane %v5339, 0
        %v5409 = vperm.slane %v5339, 1
        %v5410 = vperm.slane %v5339, 2
        %v5411 = vperm.slane %v5339, 3
        %v5412 = vperm.slane %v5339, 4
        %v5413 = vperm.slane %v5339, 5
        %v5414 = vperm.slane %v5339, 6
        %v5415 = vperm.slane %v5339, 7
        %vm5424 = vcmp.eq.f32.partialorder %v1737, %v5408
        %vm5425 = vcmp.eq.f32.partialorder %v1737, %v5409
        %vm5426 = vcmp.eq.f32.partialorder %v1737, %v5410
        %vm5427 = vcmp.eq.f32.partialorder %v1737, %v5411
        %vm5428 = vcmp.eq.f32.partialorder %v1737, %v5412
        %vm5429 = vcmp.eq.f32.partialorder %v1737, %v5413
        %vm5430 = vcmp.eq.f32.partialorder %v1737, %v5414
        %vm5431 = vcmp.eq.f32.partialorder %v1737, %v5415
        %vm5432 = vcmp.eq.f32.partialorder %v1738, %v5408
        %vm5433 = vcmp.eq.f32.partialorder %v1738, %v5409
        %vm5434 = vcmp.eq.f32.partialorder %v1738, %v5410
        %vm5435 = vcmp.eq.f32.partialorder %v1738, %v5411
        %vm5436 = vcmp.eq.f32.partialorder %v1738, %v5412
        %vm5437 = vcmp.eq.f32.partialorder %v1738, %v5413
        %vm5438 = vcmp.eq.f32.partialorder %v1738, %v5414
        %vm5439 = vcmp.eq.f32.partialorder %v1738, %v5415
        %v5441 = vperm.slane %v5335, 0
        %v5442 = vperm.slane %v5335, 1
        %v5443 = vperm.slane %v5335, 2
        %v5444 = vperm.slane %v5335, 3
        %v5445 = vperm.slane %v5335, 4
        %v5446 = vperm.slane %v5335, 5
        %v5447 = vperm.slane %v5335, 6
        %v5448 = vperm.slane %v5335, 7
        %v5457 = vsel %vm5424, %v5441, 0.0
        %v5458 = vsel %vm5425, %v5442, 0.0
        %v5459 = vsel %vm5426, %v5443, 0.0
        %v5460 = vsel %vm5427, %v5444, 0.0
        %v5461 = vsel %vm5428, %v5445, 0.0
        %v5462 = vsel %vm5429, %v5446, 0.0
        %v5463 = vsel %vm5430, %v5447, 0.0
        %v5464 = vsel %vm5431, %v5448, 0.0
        %v5465 = vsel %vm5432, %v5441, 0.0
        %v5466 = vsel %vm5433, %v5442, 0.0
        %v5467 = vsel %vm5434, %v5443, 0.0
        %v5468 = vsel %vm5435, %v5444, 0.0
        %v5469 = vsel %vm5436, %v5445, 0.0
        %v5470 = vsel %vm5437, %v5446, 0.0
        %v5471 = vsel %vm5438, %v5447, 0.0
        %v5472 = vsel %vm5439, %v5448, 0.0
        %v5473 = vadd.f32 %v5391, %v5457
        %v5474 = vadd.f32 %v5392, %v5458
        %v5475 = vadd.f32 %v5393, %v5459
        %v5476 = vadd.f32 %v5394, %v5460
        %v5477 = vadd.f32 %v5395, %v5461
        %v5478 = vadd.f32 %v5396, %v5462
        %v5479 = vadd.f32 %v5397, %v5463
        %v5480 = vadd.f32 %v5398, %v5464
        %v5481 = vadd.f32 %v5399, %v5465
        %v5482 = vadd.f32 %v5400, %v5466
        %v5483 = vadd.f32 %v5401, %v5467
        %v5484 = vadd.f32 %v5402, %v5468
        %v5485 = vadd.f32 %v5403, %v5469
        %v5486 = vadd.f32 %v5404, %v5470
        %v5487 = vadd.f32 %v5405, %v5471
        %v5488 = vadd.f32 %v5406, %v5472
        %v5490 = vperm.slane %v5332, 0
        %v5491 = vperm.slane %v5332, 1
        %v5492 = vperm.slane %v5332, 2
        %v5493 = vperm.slane %v5332, 3
        %v5494 = vperm.slane %v5332, 4
        %v5495 = vperm.slane %v5332, 5
        %v5496 = vperm.slane %v5332, 6
        %v5497 = vperm.slane %v5332, 7
        %vm5506 = vcmp.eq.f32.partialorder %v1737, %v5490
        %vm5507 = vcmp.eq.f32.partialorder %v1737, %v5491
        %vm5508 = vcmp.eq.f32.partialorder %v1737, %v5492
        %vm5509 = vcmp.eq.f32.partialorder %v1737, %v5493
        %vm5510 = vcmp.eq.f32.partialorder %v1737, %v5494
        %vm5511 = vcmp.eq.f32.partialorder %v1737, %v5495
        %vm5512 = vcmp.eq.f32.partialorder %v1737, %v5496
        %vm5513 = vcmp.eq.f32.partialorder %v1737, %v5497
        %vm5514 = vcmp.eq.f32.partialorder %v1738, %v5490
        %vm5515 = vcmp.eq.f32.partialorder %v1738, %v5491
        %vm5516 = vcmp.eq.f32.partialorder %v1738, %v5492
        %vm5517 = vcmp.eq.f32.partialorder %v1738, %v5493
        %vm5518 = vcmp.eq.f32.partialorder %v1738, %v5494
        %vm5519 = vcmp.eq.f32.partialorder %v1738, %v5495
        %vm5520 = vcmp.eq.f32.partialorder %v1738, %v5496
        %vm5521 = vcmp.eq.f32.partialorder %v1738, %v5497
        %v5522 = vsub.f32 1.0, %v5334
        %v5524 = vperm.slane %v5522, 0
        %v5525 = vperm.slane %v5522, 1
        %v5526 = vperm.slane %v5522, 2
        %v5527 = vperm.slane %v5522, 3
        %v5528 = vperm.slane %v5522, 4
        %v5529 = vperm.slane %v5522, 5
        %v5530 = vperm.slane %v5522, 6
        %v5531 = vperm.slane %v5522, 7
        %v5540 = vsel %vm5506, %v5524, 0.0
        %v5541 = vsel %vm5507, %v5525, 0.0
        %v5542 = vsel %vm5508, %v5526, 0.0
        %v5543 = vsel %vm5509, %v5527, 0.0
        %v5544 = vsel %vm5510, %v5528, 0.0
        %v5545 = vsel %vm5511, %v5529, 0.0
        %v5546 = vsel %vm5512, %v5530, 0.0
        %v5547 = vsel %vm5513, %v5531, 0.0
        %v5548 = vsel %vm5514, %v5524, 0.0
        %v5549 = vsel %vm5515, %v5525, 0.0
        %v5550 = vsel %vm5516, %v5526, 0.0
        %v5551 = vsel %vm5517, %v5527, 0.0
        %v5552 = vsel %vm5518, %v5528, 0.0
        %v5553 = vsel %vm5519, %v5529, 0.0
        %v5554 = vsel %vm5520, %v5530, 0.0
        %v5555 = vsel %vm5521, %v5531, 0.0
        %v5557 = vperm.slane %v5337, 0
        %v5558 = vperm.slane %v5337, 1
        %v5559 = vperm.slane %v5337, 2
        %v5560 = vperm.slane %v5337, 3
        %v5561 = vperm.slane %v5337, 4
        %v5562 = vperm.slane %v5337, 5
        %v5563 = vperm.slane %v5337, 6
        %v5564 = vperm.slane %v5337, 7
        %vm5573 = vcmp.eq.f32.partialorder %v1737, %v5557
        %vm5574 = vcmp.eq.f32.partialorder %v1737, %v5558
        %vm5575 = vcmp.eq.f32.partialorder %v1737, %v5559
        %vm5576 = vcmp.eq.f32.partialorder %v1737, %v5560
        %vm5577 = vcmp.eq.f32.partialorder %v1737, %v5561
        %vm5578 = vcmp.eq.f32.partialorder %v1737, %v5562
        %vm5579 = vcmp.eq.f32.partialorder %v1737, %v5563
        %vm5580 = vcmp.eq.f32.partialorder %v1737, %v5564
        %vm5581 = vcmp.eq.f32.partialorder %v1738, %v5557
        %vm5582 = vcmp.eq.f32.partialorder %v1738, %v5558
        %vm5583 = vcmp.eq.f32.partialorder %v1738, %v5559
        %vm5584 = vcmp.eq.f32.partialorder %v1738, %v5560
        %vm5585 = vcmp.eq.f32.partialorder %v1738, %v5561
        %vm5586 = vcmp.eq.f32.partialorder %v1738, %v5562
        %vm5587 = vcmp.eq.f32.partialorder %v1738, %v5563
        %vm5588 = vcmp.eq.f32.partialorder %v1738, %v5564
        %v5590 = vperm.slane %v5334, 0
        %v5591 = vperm.slane %v5334, 1
        %v5592 = vperm.slane %v5334, 2
        %v5593 = vperm.slane %v5334, 3
        %v5594 = vperm.slane %v5334, 4
        %v5595 = vperm.slane %v5334, 5
        %v5596 = vperm.slane %v5334, 6
        %v5597 = vperm.slane %v5334, 7
        %v5606 = vsel %vm5573, %v5590, 0.0
        %v5607 = vsel %vm5574, %v5591, 0.0
        %v5608 = vsel %vm5575, %v5592, 0.0
        %v5609 = vsel %vm5576, %v5593, 0.0
        %v5610 = vsel %vm5577, %v5594, 0.0
        %v5611 = vsel %vm5578, %v5595, 0.0
        %v5612 = vsel %vm5579, %v5596, 0.0
        %v5613 = vsel %vm5580, %v5597, 0.0
        %v5614 = vsel %vm5581, %v5590, 0.0
        %v5615 = vsel %vm5582, %v5591, 0.0
        %v5616 = vsel %vm5583, %v5592, 0.0
        %v5617 = vsel %vm5584, %v5593, 0.0
        %v5618 = vsel %vm5585, %v5594, 0.0
        %v5619 = vsel %vm5586, %v5595, 0.0
        %v5620 = vsel %vm5587, %v5596, 0.0
        %v5621 = vsel %vm5588, %v5597, 0.0
        %v5622 = vadd.f32 %v5540, %v5606
        %v5623 = vadd.f32 %v5541, %v5607
        %v5624 = vadd.f32 %v5542, %v5608
        %v5625 = vadd.f32 %v5543, %v5609
        %v5626 = vadd.f32 %v5544, %v5610
        %v5627 = vadd.f32 %v5545, %v5611
        %v5628 = vadd.f32 %v5546, %v5612
        %v5629 = vadd.f32 %v5547, %v5613
        %v5630 = vadd.f32 %v5548, %v5614
        %v5631 = vadd.f32 %v5549, %v5615
        %v5632 = vadd.f32 %v5550, %v5616
        %v5633 = vadd.f32 %v5551, %v5617
        %v5634 = vadd.f32 %v5552, %v5618
        %v5635 = vadd.f32 %v5553, %v5619
        %v5636 = vadd.f32 %v5554, %v5620
        %v5637 = vadd.f32 %v5555, %v5621
        %v5638 = vperm.slane %v5473, 0
        %v5639 = vperm.slane %v5474, 0
        %v5640 = vperm.slane %v5475, 0
        %v5641 = vperm.slane %v5476, 0
        %v5642 = vperm.slane %v5477, 0
        %v5643 = vperm.slane %v5478, 0
        %v5644 = vperm.slane %v5479, 0
        %v5645 = vperm.slane %v5480, 0
        %v5646 = vmul.f32 %v5638, %v5622
        %v5647 = vmul.f32 %v5639, %v5623
        %v5648 = vmul.f32 %v5640, %v5624
        %v5649 = vmul.f32 %v5641, %v5625
        %v5650 = vmul.f32 %v5642, %v5626
        %v5651 = vmul.f32 %v5643, %v5627
        %v5652 = vmul.f32 %v5644, %v5628
        %v5653 = vmul.f32 %v5645, %v5629
        %v5654 = vmul.f32 %v5638, %v5630
        %v5655 = vmul.f32 %v5639, %v5631
        %v5656 = vmul.f32 %v5640, %v5632
        %v5657 = vmul.f32 %v5641, %v5633
        %v5658 = vmul.f32 %v5642, %v5634
        %v5659 = vmul.f32 %v5643, %v5635
        %v5660 = vmul.f32 %v5644, %v5636
        %v5661 = vmul.f32 %v5645, %v5637
        %v5662 = vperm.slane %v5473, 1
        %v5663 = vperm.slane %v5474, 1
        %v5664 = vperm.slane %v5475, 1
        %v5665 = vperm.slane %v5476, 1
        %v5666 = vperm.slane %v5477, 1
        %v5667 = vperm.slane %v5478, 1
        %v5668 = vperm.slane %v5479, 1
        %v5669 = vperm.slane %v5480, 1
        %v5670 = vmul.f32 %v5662, %v5622
        %v5671 = vmul.f32 %v5663, %v5623
        %v5672 = vmul.f32 %v5664, %v5624
        %v5673 = vmul.f32 %v5665, %v5625
        %v5674 = vmul.f32 %v5666, %v5626
        %v5675 = vmul.f32 %v5667, %v5627
        %v5676 = vmul.f32 %v5668, %v5628
        %v5677 = vmul.f32 %v5669, %v5629
        %v5678 = vmul.f32 %v5662, %v5630
        %v5679 = vmul.f32 %v5663, %v5631
        %v5680 = vmul.f32 %v5664, %v5632
        %v5681 = vmul.f32 %v5665, %v5633
        %v5682 = vmul.f32 %v5666, %v5634
        %v5683 = vmul.f32 %v5667, %v5635
        %v5684 = vmul.f32 %v5668, %v5636
        %v5685 = vmul.f32 %v5669, %v5637
        %v5686 = vperm.slane %v5473, 2
        %v5687 = vperm.slane %v5474, 2
        %v5688 = vperm.slane %v5475, 2
        %v5689 = vperm.slane %v5476, 2
        %v5690 = vperm.slane %v5477, 2
        %v5691 = vperm.slane %v5478, 2
        %v5692 = vperm.slane %v5479, 2
        %v5693 = vperm.slane %v5480, 2
        %v5694 = vmul.f32 %v5686, %v5622
        %v5695 = vmul.f32 %v5687, %v5623
        %v5696 = vmul.f32 %v5688, %v5624
        %v5697 = vmul.f32 %v5689, %v5625
        %v5698 = vmul.f32 %v5690, %v5626
        %v5699 = vmul.f32 %v5691, %v5627
        %v5700 = vmul.f32 %v5692, %v5628
        %v5701 = vmul.f32 %v5693, %v5629
        %v5702 = vmul.f32 %v5686, %v5630
        %v5703 = vmul.f32 %v5687, %v5631
        %v5704 = vmul.f32 %v5688, %v5632
        %v5705 = vmul.f32 %v5689, %v5633
        %v5706 = vmul.f32 %v5690, %v5634
        %v5707 = vmul.f32 %v5691, %v5635
        %v5708 = vmul.f32 %v5692, %v5636
        %v5709 = vmul.f32 %v5693, %v5637
        %v5710 = vperm.slane %v5473, 3
        %v5711 = vperm.slane %v5474, 3
        %v5712 = vperm.slane %v5475, 3
        %v5713 = vperm.slane %v5476, 3
        %v5714 = vperm.slane %v5477, 3
        %v5715 = vperm.slane %v5478, 3
        %v5716 = vperm.slane %v5479, 3
        %v5717 = vperm.slane %v5480, 3
        %v5718 = vmul.f32 %v5710, %v5622
        %v5719 = vmul.f32 %v5711, %v5623
        %v5720 = vmul.f32 %v5712, %v5624
        %v5721 = vmul.f32 %v5713, %v5625
        %v5722 = vmul.f32 %v5714, %v5626
        %v5723 = vmul.f32 %v5715, %v5627
        %v5724 = vmul.f32 %v5716, %v5628
        %v5725 = vmul.f32 %v5717, %v5629
        %v5726 = vmul.f32 %v5710, %v5630
        %v5727 = vmul.f32 %v5711, %v5631
        %v5728 = vmul.f32 %v5712, %v5632
        %v5729 = vmul.f32 %v5713, %v5633
        %v5730 = vmul.f32 %v5714, %v5634
        %v5731 = vmul.f32 %v5715, %v5635
        %v5732 = vmul.f32 %v5716, %v5636
        %v5733 = vmul.f32 %v5717, %v5637
        %v5734 = vperm.slane %v5473, 4
        %v5735 = vperm.slane %v5474, 4
        %v5736 = vperm.slane %v5475, 4
        %v5737 = vperm.slane %v5476, 4
        %v5738 = vperm.slane %v5477, 4
        %v5739 = vperm.slane %v5478, 4
        %v5740 = vperm.slane %v5479, 4
        %v5741 = vperm.slane %v5480, 4
        %v5742 = vmul.f32 %v5734, %v5622
        %v5743 = vmul.f32 %v5735, %v5623
        %v5744 = vmul.f32 %v5736, %v5624
        %v5745 = vmul.f32 %v5737, %v5625
        %v5746 = vmul.f32 %v5738, %v5626
        %v5747 = vmul.f32 %v5739, %v5627
        %v5748 = vmul.f32 %v5740, %v5628
        %v5749 = vmul.f32 %v5741, %v5629
        %v5750 = vmul.f32 %v5734, %v5630
        %v5751 = vmul.f32 %v5735, %v5631
        %v5752 = vmul.f32 %v5736, %v5632
        %v5753 = vmul.f32 %v5737, %v5633
        %v5754 = vmul.f32 %v5738, %v5634
        %v5755 = vmul.f32 %v5739, %v5635
        %v5756 = vmul.f32 %v5740, %v5636
        %v5757 = vmul.f32 %v5741, %v5637
        %v5758 = vperm.slane %v5473, 5
        %v5759 = vperm.slane %v5474, 5
        %v5760 = vperm.slane %v5475, 5
        %v5761 = vperm.slane %v5476, 5
        %v5762 = vperm.slane %v5477, 5
        %v5763 = vperm.slane %v5478, 5
        %v5764 = vperm.slane %v5479, 5
        %v5765 = vperm.slane %v5480, 5
        %v5766 = vmul.f32 %v5758, %v5622
        %v5767 = vmul.f32 %v5759, %v5623
        %v5768 = vmul.f32 %v5760, %v5624
        %v5769 = vmul.f32 %v5761, %v5625
        %v5770 = vmul.f32 %v5762, %v5626
        %v5771 = vmul.f32 %v5763, %v5627
        %v5772 = vmul.f32 %v5764, %v5628
        %v5773 = vmul.f32 %v5765, %v5629
        %v5774 = vmul.f32 %v5758, %v5630
        %v5775 = vmul.f32 %v5759, %v5631
        %v5776 = vmul.f32 %v5760, %v5632
        %v5777 = vmul.f32 %v5761, %v5633
        %v5778 = vmul.f32 %v5762, %v5634
        %v5779 = vmul.f32 %v5763, %v5635
        %v5780 = vmul.f32 %v5764, %v5636
        %v5781 = vmul.f32 %v5765, %v5637
        %v5782 = vperm.slane %v5473, 6
        %v5783 = vperm.slane %v5474, 6
        %v5784 = vperm.slane %v5475, 6
        %v5785 = vperm.slane %v5476, 6
        %v5786 = vperm.slane %v5477, 6
        %v5787 = vperm.slane %v5478, 6
        %v5788 = vperm.slane %v5479, 6
        %v5789 = vperm.slane %v5480, 6
        %v5790 = vmul.f32 %v5782, %v5622
        %v5791 = vmul.f32 %v5783, %v5623
        %v5792 = vmul.f32 %v5784, %v5624
        %v5793 = vmul.f32 %v5785, %v5625
        %v5794 = vmul.f32 %v5786, %v5626
        %v5795 = vmul.f32 %v5787, %v5627
        %v5796 = vmul.f32 %v5788, %v5628
        %v5797 = vmul.f32 %v5789, %v5629
        %v5798 = vmul.f32 %v5782, %v5630
        %v5799 = vmul.f32 %v5783, %v5631
        %v5800 = vmul.f32 %v5784, %v5632
        %v5801 = vmul.f32 %v5785, %v5633
        %v5802 = vmul.f32 %v5786, %v5634
        %v5803 = vmul.f32 %v5787, %v5635
        %v5804 = vmul.f32 %v5788, %v5636
        %v5805 = vmul.f32 %v5789, %v5637
        %v5806 = vperm.slane %v5473, 7
        %v5807 = vperm.slane %v5474, 7
        %v5808 = vperm.slane %v5475, 7
        %v5809 = vperm.slane %v5476, 7
        %v5810 = vperm.slane %v5477, 7
        %v5811 = vperm.slane %v5478, 7
        %v5812 = vperm.slane %v5479, 7
        %v5813 = vperm.slane %v5480, 7
        %v5814 = vmul.f32 %v5806, %v5622
        %v5815 = vmul.f32 %v5807, %v5623
        %v5816 = vmul.f32 %v5808, %v5624
        %v5817 = vmul.f32 %v5809, %v5625
        %v5818 = vmul.f32 %v5810, %v5626
        %v5819 = vmul.f32 %v5811, %v5627
        %v5820 = vmul.f32 %v5812, %v5628
        %v5821 = vmul.f32 %v5813, %v5629
        %v5822 = vmul.f32 %v5806, %v5630
        %v5823 = vmul.f32 %v5807, %v5631
        %v5824 = vmul.f32 %v5808, %v5632
        %v5825 = vmul.f32 %v5809, %v5633
        %v5826 = vmul.f32 %v5810, %v5634
        %v5827 = vmul.f32 %v5811, %v5635
        %v5828 = vmul.f32 %v5812, %v5636
        %v5829 = vmul.f32 %v5813, %v5637
        %v5830 = vperm.slane %v5481, 0
        %v5831 = vperm.slane %v5482, 0
        %v5832 = vperm.slane %v5483, 0
        %v5833 = vperm.slane %v5484, 0
        %v5834 = vperm.slane %v5485, 0
        %v5835 = vperm.slane %v5486, 0
        %v5836 = vperm.slane %v5487, 0
        %v5837 = vperm.slane %v5488, 0
        %v5838 = vmul.f32 %v5830, %v5622
        %v5839 = vmul.f32 %v5831, %v5623
        %v5840 = vmul.f32 %v5832, %v5624
        %v5841 = vmul.f32 %v5833, %v5625
        %v5842 = vmul.f32 %v5834, %v5626
        %v5843 = vmul.f32 %v5835, %v5627
        %v5844 = vmul.f32 %v5836, %v5628
        %v5845 = vmul.f32 %v5837, %v5629
        %v5846 = vmul.f32 %v5830, %v5630
        %v5847 = vmul.f32 %v5831, %v5631
        %v5848 = vmul.f32 %v5832, %v5632
        %v5849 = vmul.f32 %v5833, %v5633
        %v5850 = vmul.f32 %v5834, %v5634
        %v5851 = vmul.f32 %v5835, %v5635
        %v5852 = vmul.f32 %v5836, %v5636
        %v5853 = vmul.f32 %v5837, %v5637
        %v5854 = vperm.slane %v5481, 1
        %v5855 = vperm.slane %v5482, 1
        %v5856 = vperm.slane %v5483, 1
        %v5857 = vperm.slane %v5484, 1
        %v5858 = vperm.slane %v5485, 1
        %v5859 = vperm.slane %v5486, 1
        %v5860 = vperm.slane %v5487, 1
        %v5861 = vperm.slane %v5488, 1
        %v5862 = vmul.f32 %v5854, %v5622
        %v5863 = vmul.f32 %v5855, %v5623
        %v5864 = vmul.f32 %v5856, %v5624
        %v5865 = vmul.f32 %v5857, %v5625
        %v5866 = vmul.f32 %v5858, %v5626
        %v5867 = vmul.f32 %v5859, %v5627
        %v5868 = vmul.f32 %v5860, %v5628
        %v5869 = vmul.f32 %v5861, %v5629
        %v5870 = vmul.f32 %v5854, %v5630
        %v5871 = vmul.f32 %v5855, %v5631
        %v5872 = vmul.f32 %v5856, %v5632
        %v5873 = vmul.f32 %v5857, %v5633
        %v5874 = vmul.f32 %v5858, %v5634
        %v5875 = vmul.f32 %v5859, %v5635
        %v5876 = vmul.f32 %v5860, %v5636
        %v5877 = vmul.f32 %v5861, %v5637
        %v5878 = vperm.slane %v5481, 2
        %v5879 = vperm.slane %v5482, 2
        %v5880 = vperm.slane %v5483, 2
        %v5881 = vperm.slane %v5484, 2
        %v5882 = vperm.slane %v5485, 2
        %v5883 = vperm.slane %v5486, 2
        %v5884 = vperm.slane %v5487, 2
        %v5885 = vperm.slane %v5488, 2
        %v5886 = vmul.f32 %v5878, %v5622
        %v5887 = vmul.f32 %v5879, %v5623
        %v5888 = vmul.f32 %v5880, %v5624
        %v5889 = vmul.f32 %v5881, %v5625
        %v5890 = vmul.f32 %v5882, %v5626
        %v5891 = vmul.f32 %v5883, %v5627
        %v5892 = vmul.f32 %v5884, %v5628
        %v5893 = vmul.f32 %v5885, %v5629
        %v5894 = vmul.f32 %v5878, %v5630
        %v5895 = vmul.f32 %v5879, %v5631
        %v5896 = vmul.f32 %v5880, %v5632
        %v5897 = vmul.f32 %v5881, %v5633
        %v5898 = vmul.f32 %v5882, %v5634
        %v5899 = vmul.f32 %v5883, %v5635
        %v5900 = vmul.f32 %v5884, %v5636
        %v5901 = vmul.f32 %v5885, %v5637
        %v5902 = vperm.slane %v5481, 3
        %v5903 = vperm.slane %v5482, 3
        %v5904 = vperm.slane %v5483, 3
        %v5905 = vperm.slane %v5484, 3
        %v5906 = vperm.slane %v5485, 3
        %v5907 = vperm.slane %v5486, 3
        %v5908 = vperm.slane %v5487, 3
        %v5909 = vperm.slane %v5488, 3
        %v5910 = vmul.f32 %v5902, %v5622
        %v5911 = vmul.f32 %v5903, %v5623
        %v5912 = vmul.f32 %v5904, %v5624
        %v5913 = vmul.f32 %v5905, %v5625
        %v5914 = vmul.f32 %v5906, %v5626
        %v5915 = vmul.f32 %v5907, %v5627
        %v5916 = vmul.f32 %v5908, %v5628
        %v5917 = vmul.f32 %v5909, %v5629
        %v5918 = vmul.f32 %v5902, %v5630
        %v5919 = vmul.f32 %v5903, %v5631
        %v5920 = vmul.f32 %v5904, %v5632
        %v5921 = vmul.f32 %v5905, %v5633
        %v5922 = vmul.f32 %v5906, %v5634
        %v5923 = vmul.f32 %v5907, %v5635
        %v5924 = vmul.f32 %v5908, %v5636
        %v5925 = vmul.f32 %v5909, %v5637
        %v5926 = vperm.slane %v5481, 4
        %v5927 = vperm.slane %v5482, 4
        %v5928 = vperm.slane %v5483, 4
        %v5929 = vperm.slane %v5484, 4
        %v5930 = vperm.slane %v5485, 4
        %v5931 = vperm.slane %v5486, 4
        %v5932 = vperm.slane %v5487, 4
        %v5933 = vperm.slane %v5488, 4
        %v5934 = vmul.f32 %v5926, %v5622
        %v5935 = vmul.f32 %v5927, %v5623
        %v5936 = vmul.f32 %v5928, %v5624
        %v5937 = vmul.f32 %v5929, %v5625
        %v5938 = vmul.f32 %v5930, %v5626
        %v5939 = vmul.f32 %v5931, %v5627
        %v5940 = vmul.f32 %v5932, %v5628
        %v5941 = vmul.f32 %v5933, %v5629
        %v5942 = vmul.f32 %v5926, %v5630
        %v5943 = vmul.f32 %v5927, %v5631
        %v5944 = vmul.f32 %v5928, %v5632
        %v5945 = vmul.f32 %v5929, %v5633
        %v5946 = vmul.f32 %v5930, %v5634
        %v5947 = vmul.f32 %v5931, %v5635
        %v5948 = vmul.f32 %v5932, %v5636
        %v5949 = vmul.f32 %v5933, %v5637
        %v5950 = vperm.slane %v5481, 5
        %v5951 = vperm.slane %v5482, 5
        %v5952 = vperm.slane %v5483, 5
        %v5953 = vperm.slane %v5484, 5
        %v5954 = vperm.slane %v5485, 5
        %v5955 = vperm.slane %v5486, 5
        %v5956 = vperm.slane %v5487, 5
        %v5957 = vperm.slane %v5488, 5
        %v5958 = vmul.f32 %v5950, %v5622
        %v5959 = vmul.f32 %v5951, %v5623
        %v5960 = vmul.f32 %v5952, %v5624
        %v5961 = vmul.f32 %v5953, %v5625
        %v5962 = vmul.f32 %v5954, %v5626
        %v5963 = vmul.f32 %v5955, %v5627
        %v5964 = vmul.f32 %v5956, %v5628
        %v5965 = vmul.f32 %v5957, %v5629
        %v5966 = vmul.f32 %v5950, %v5630
        %v5967 = vmul.f32 %v5951, %v5631
        %v5968 = vmul.f32 %v5952, %v5632
        %v5969 = vmul.f32 %v5953, %v5633
        %v5970 = vmul.f32 %v5954, %v5634
        %v5971 = vmul.f32 %v5955, %v5635
        %v5972 = vmul.f32 %v5956, %v5636
        %v5973 = vmul.f32 %v5957, %v5637
        %v5974 = vperm.slane %v5481, 6
        %v5975 = vperm.slane %v5482, 6
        %v5976 = vperm.slane %v5483, 6
        %v5977 = vperm.slane %v5484, 6
        %v5978 = vperm.slane %v5485, 6
        %v5979 = vperm.slane %v5486, 6
        %v5980 = vperm.slane %v5487, 6
        %v5981 = vperm.slane %v5488, 6
        %v5982 = vmul.f32 %v5974, %v5622
        %v5983 = vmul.f32 %v5975, %v5623
        %v5984 = vmul.f32 %v5976, %v5624
        %v5985 = vmul.f32 %v5977, %v5625
        %v5986 = vmul.f32 %v5978, %v5626
        %v5987 = vmul.f32 %v5979, %v5627
        %v5988 = vmul.f32 %v5980, %v5628
        %v5989 = vmul.f32 %v5981, %v5629
        %v5990 = vmul.f32 %v5974, %v5630
        %v5991 = vmul.f32 %v5975, %v5631
        %v5992 = vmul.f32 %v5976, %v5632
        %v5993 = vmul.f32 %v5977, %v5633
        %v5994 = vmul.f32 %v5978, %v5634
        %v5995 = vmul.f32 %v5979, %v5635
        %v5996 = vmul.f32 %v5980, %v5636
        %v5997 = vmul.f32 %v5981, %v5637
        %v5998 = vperm.slane %v5481, 7
        %v5999 = vperm.slane %v5482, 7
        %v6000 = vperm.slane %v5483, 7
        %v6001 = vperm.slane %v5484, 7
        %v6002 = vperm.slane %v5485, 7
        %v6003 = vperm.slane %v5486, 7
        %v6004 = vperm.slane %v5487, 7
        %v6005 = vperm.slane %v5488, 7
        %v6006 = vmul.f32 %v5998, %v5622
        %v6007 = vmul.f32 %v5999, %v5623
        %v6008 = vmul.f32 %v6000, %v5624
        %v6009 = vmul.f32 %v6001, %v5625
        %v6010 = vmul.f32 %v6002, %v5626
        %v6011 = vmul.f32 %v6003, %v5627
        %v6012 = vmul.f32 %v6004, %v5628
        %v6013 = vmul.f32 %v6005, %v5629
        %v6014 = vmul.f32 %v5998, %v5630
        %v6015 = vmul.f32 %v5999, %v5631
        %v6016 = vmul.f32 %v6000, %v5632
        %v6017 = vmul.f32 %v6001, %v5633
        %v6018 = vmul.f32 %v6002, %v5634
        %v6019 = vmul.f32 %v6003, %v5635
        %v6020 = vmul.f32 %v6004, %v5636
        %v6021 = vmul.f32 %v6005, %v5637
        %v6022 = vpack.c.bf16 %v5654, %v5646
        %v6023 = vpack.c.bf16 %v5655, %v5647
        %v6024 = vpack.c.bf16 %v5656, %v5648
        %v6025 = vpack.c.bf16 %v5657, %v5649
        %v6026 = vpack.c.bf16 %v5658, %v5650
        %v6027 = vpack.c.bf16 %v5659, %v5651
        %v6028 = vpack.c.bf16 %v5660, %v5652
        %v6029 = vpack.c.bf16 %v5661, %v5653
        %v6030 = vpack.c.bf16 %v5678, %v5670
        %v6031 = vpack.c.bf16 %v5679, %v5671
        %v6032 = vpack.c.bf16 %v5680, %v5672
        %v6033 = vpack.c.bf16 %v5681, %v5673
        %v6034 = vpack.c.bf16 %v5682, %v5674
        %v6035 = vpack.c.bf16 %v5683, %v5675
        %v6036 = vpack.c.bf16 %v5684, %v5676
        %v6037 = vpack.c.bf16 %v5685, %v5677
        %v6038 = vpack.c.bf16 %v5702, %v5694
        %v6039 = vpack.c.bf16 %v5703, %v5695
        %v6040 = vpack.c.bf16 %v5704, %v5696
        %v6041 = vpack.c.bf16 %v5705, %v5697
        %v6042 = vpack.c.bf16 %v5706, %v5698
        %v6043 = vpack.c.bf16 %v5707, %v5699
        %v6044 = vpack.c.bf16 %v5708, %v5700
        %v6045 = vpack.c.bf16 %v5709, %v5701
        %v6046 = vpack.c.bf16 %v5726, %v5718
        %v6047 = vpack.c.bf16 %v5727, %v5719
        %v6048 = vpack.c.bf16 %v5728, %v5720
        %v6049 = vpack.c.bf16 %v5729, %v5721
        %v6050 = vpack.c.bf16 %v5730, %v5722
        %v6051 = vpack.c.bf16 %v5731, %v5723
        %v6052 = vpack.c.bf16 %v5732, %v5724
        %v6053 = vpack.c.bf16 %v5733, %v5725
        %v6054 = vpack.c.bf16 %v5750, %v5742
        %v6055 = vpack.c.bf16 %v5751, %v5743
        %v6056 = vpack.c.bf16 %v5752, %v5744
        %v6057 = vpack.c.bf16 %v5753, %v5745
        %v6058 = vpack.c.bf16 %v5754, %v5746
        %v6059 = vpack.c.bf16 %v5755, %v5747
        %v6060 = vpack.c.bf16 %v5756, %v5748
        %v6061 = vpack.c.bf16 %v5757, %v5749
        %v6062 = vpack.c.bf16 %v5774, %v5766
        %v6063 = vpack.c.bf16 %v5775, %v5767
        %v6064 = vpack.c.bf16 %v5776, %v5768
        %v6065 = vpack.c.bf16 %v5777, %v5769
        %v6066 = vpack.c.bf16 %v5778, %v5770
        %v6067 = vpack.c.bf16 %v5779, %v5771
        %v6068 = vpack.c.bf16 %v5780, %v5772
        %v6069 = vpack.c.bf16 %v5781, %v5773
        %v6070 = vpack.c.bf16 %v5798, %v5790
        %v6071 = vpack.c.bf16 %v5799, %v5791
        %v6072 = vpack.c.bf16 %v5800, %v5792
        %v6073 = vpack.c.bf16 %v5801, %v5793
        %v6074 = vpack.c.bf16 %v5802, %v5794
        %v6075 = vpack.c.bf16 %v5803, %v5795
        %v6076 = vpack.c.bf16 %v5804, %v5796
        %v6077 = vpack.c.bf16 %v5805, %v5797
        %v6078 = vpack.c.bf16 %v5822, %v5814
        %v6079 = vpack.c.bf16 %v5823, %v5815
        %v6080 = vpack.c.bf16 %v5824, %v5816
        %v6081 = vpack.c.bf16 %v5825, %v5817
        %v6082 = vpack.c.bf16 %v5826, %v5818
        %v6083 = vpack.c.bf16 %v5827, %v5819
        %v6084 = vpack.c.bf16 %v5828, %v5820
        %v6085 = vpack.c.bf16 %v5829, %v5821
        %v6086 = vpack.c.bf16 %v5846, %v5838
        %v6087 = vpack.c.bf16 %v5847, %v5839
        %v6088 = vpack.c.bf16 %v5848, %v5840
        %v6089 = vpack.c.bf16 %v5849, %v5841
        %v6090 = vpack.c.bf16 %v5850, %v5842
        %v6091 = vpack.c.bf16 %v5851, %v5843
        %v6092 = vpack.c.bf16 %v5852, %v5844
        %v6093 = vpack.c.bf16 %v5853, %v5845
        %v6094 = vpack.c.bf16 %v5870, %v5862
        %v6095 = vpack.c.bf16 %v5871, %v5863
        %v6096 = vpack.c.bf16 %v5872, %v5864
        %v6097 = vpack.c.bf16 %v5873, %v5865
        %v6098 = vpack.c.bf16 %v5874, %v5866
        %v6099 = vpack.c.bf16 %v5875, %v5867
        %v6100 = vpack.c.bf16 %v5876, %v5868
        %v6101 = vpack.c.bf16 %v5877, %v5869
        %v6102 = vpack.c.bf16 %v5894, %v5886
        %v6103 = vpack.c.bf16 %v5895, %v5887
        %v6104 = vpack.c.bf16 %v5896, %v5888
        %v6105 = vpack.c.bf16 %v5897, %v5889
        %v6106 = vpack.c.bf16 %v5898, %v5890
        %v6107 = vpack.c.bf16 %v5899, %v5891
        %v6108 = vpack.c.bf16 %v5900, %v5892
        %v6109 = vpack.c.bf16 %v5901, %v5893
        %v6110 = vpack.c.bf16 %v5918, %v5910
        %v6111 = vpack.c.bf16 %v5919, %v5911
        %v6112 = vpack.c.bf16 %v5920, %v5912
        %v6113 = vpack.c.bf16 %v5921, %v5913
        %v6114 = vpack.c.bf16 %v5922, %v5914
        %v6115 = vpack.c.bf16 %v5923, %v5915
        %v6116 = vpack.c.bf16 %v5924, %v5916
        %v6117 = vpack.c.bf16 %v5925, %v5917
        %v6118 = vpack.c.bf16 %v5942, %v5934
        %v6119 = vpack.c.bf16 %v5943, %v5935
        %v6120 = vpack.c.bf16 %v5944, %v5936
        %v6121 = vpack.c.bf16 %v5945, %v5937
        %v6122 = vpack.c.bf16 %v5946, %v5938
        %v6123 = vpack.c.bf16 %v5947, %v5939
        %v6124 = vpack.c.bf16 %v5948, %v5940
        %v6125 = vpack.c.bf16 %v5949, %v5941
        %v6126 = vpack.c.bf16 %v5966, %v5958
        %v6127 = vpack.c.bf16 %v5967, %v5959
        %v6128 = vpack.c.bf16 %v5968, %v5960
        %v6129 = vpack.c.bf16 %v5969, %v5961
        %v6130 = vpack.c.bf16 %v5970, %v5962
        %v6131 = vpack.c.bf16 %v5971, %v5963
        %v6132 = vpack.c.bf16 %v5972, %v5964
        %v6133 = vpack.c.bf16 %v5973, %v5965
        %v6134 = vpack.c.bf16 %v5990, %v5982
        %v6135 = vpack.c.bf16 %v5991, %v5983
        %v6136 = vpack.c.bf16 %v5992, %v5984
        %v6137 = vpack.c.bf16 %v5993, %v5985
        %v6138 = vpack.c.bf16 %v5994, %v5986
        %v6139 = vpack.c.bf16 %v5995, %v5987
        %v6140 = vpack.c.bf16 %v5996, %v5988
        %v6141 = vpack.c.bf16 %v5997, %v5989
        %v6142 = vpack.c.bf16 %v6014, %v6006
        %v6143 = vpack.c.bf16 %v6015, %v6007
        %v6144 = vpack.c.bf16 %v6016, %v6008
        %v6145 = vpack.c.bf16 %v6017, %v6009
        %v6146 = vpack.c.bf16 %v6018, %v6010
        %v6147 = vpack.c.bf16 %v6019, %v6011
        %v6148 = vpack.c.bf16 %v6020, %v6012
        %v6149 = vpack.c.bf16 %v6021, %v6013
        %v6150 = vrot.slane %v2688, 3
        %v6151 = vrot.slane %v2689, 3
        %6154 = vmatpush.bf16.msra.mxu0 %v6078
        %6155 = vmatpush.bf16.msra.mxu0 %v6070
        %6156 = vmatpush.bf16.msra.mxu0 %v6062
        %6157 = vmatpush.bf16.msra.mxu0 %v6054
        %6158 = vmatpush.bf16.msra.mxu0 %v6046
        %6159 = vmatpush.bf16.msra.mxu0 %v6038
        %6160 = vmatpush.bf16.msra.mxu0 %v6030
        %6161 = vmatpush.bf16.msra.mxu0 %v6022
        %6162 = vmatmul.bf16.gmra.mxu0 %v6150
        %v6163 = vpop.f32.mrf.mxu0
        %v6164 = vadd.f32 0.0, %v6163
        %v6165 = vpop.f32.mrf.mxu0
        %6166 = vdwg.mxu0
        %6167 = vmatpush.bf16.msra.mxu0 %v6142
        %6168 = vmatpush.bf16.msra.mxu0 %v6134
        %6169 = vmatpush.bf16.msra.mxu0 %v6126
        %6170 = vmatpush.bf16.msra.mxu0 %v6118
        %6171 = vmatpush.bf16.msra.mxu0 %v6110
        %6172 = vmatpush.bf16.msra.mxu0 %v6102
        %6173 = vmatpush.bf16.msra.mxu0 %v6094
        %6174 = vmatpush.bf16.msra.mxu0 %v6086
        %6175 = vmatmul.bf16.gmra.mxu0 %v6151
        %v6176 = vpop.f32.mrf.mxu0
        %v6177 = vadd.f32 %v6164, %v6176
        %v6178 = vpop.f32.mrf.mxu0
        %6179 = vdwg.mxu0
        %6180 = vmatpush.bf16.msra.mxu0 %v6079
        %6181 = vmatpush.bf16.msra.mxu0 %v6071
        %6182 = vmatpush.bf16.msra.mxu0 %v6063
        %6183 = vmatpush.bf16.msra.mxu0 %v6055
        %6184 = vmatpush.bf16.msra.mxu0 %v6047
        %6185 = vmatpush.bf16.msra.mxu0 %v6039
        %6186 = vmatpush.bf16.msra.mxu0 %v6031
        %6187 = vmatpush.bf16.msra.mxu0 %v6023
        %6188 = vmatmul.bf16.gmra.mxu0 %v6150
        %v6189 = vpop.f32.mrf.mxu0
        %v6190 = vadd.f32 0.0, %v6189
        %v6191 = vpop.f32.mrf.mxu0
        %6192 = vdwg.mxu0
        %6193 = vmatpush.bf16.msra.mxu0 %v6143
        %6194 = vmatpush.bf16.msra.mxu0 %v6135
        %6195 = vmatpush.bf16.msra.mxu0 %v6127
        %6196 = vmatpush.bf16.msra.mxu0 %v6119
        %6197 = vmatpush.bf16.msra.mxu0 %v6111
        %6198 = vmatpush.bf16.msra.mxu0 %v6103
        %6199 = vmatpush.bf16.msra.mxu0 %v6095
        %6200 = vmatpush.bf16.msra.mxu0 %v6087
        %6201 = vmatmul.bf16.gmra.mxu0 %v6151
        %v6202 = vpop.f32.mrf.mxu0
        %v6203 = vadd.f32 %v6190, %v6202
        %v6204 = vpop.f32.mrf.mxu0
        %6205 = vdwg.mxu0
        %6206 = vmatpush.bf16.msra.mxu0 %v6080
        %6207 = vmatpush.bf16.msra.mxu0 %v6072
        %6208 = vmatpush.bf16.msra.mxu0 %v6064
        %6209 = vmatpush.bf16.msra.mxu0 %v6056
        %6210 = vmatpush.bf16.msra.mxu0 %v6048
        %6211 = vmatpush.bf16.msra.mxu0 %v6040
        %6212 = vmatpush.bf16.msra.mxu0 %v6032
        %6213 = vmatpush.bf16.msra.mxu0 %v6024
        %6214 = vmatmul.bf16.gmra.mxu0 %v6150
        %v6215 = vpop.f32.mrf.mxu0
        %v6216 = vadd.f32 0.0, %v6215
        %v6217 = vpop.f32.mrf.mxu0
        %6218 = vdwg.mxu0
        %6219 = vmatpush.bf16.msra.mxu0 %v6144
        %6220 = vmatpush.bf16.msra.mxu0 %v6136
        %6221 = vmatpush.bf16.msra.mxu0 %v6128
        %6222 = vmatpush.bf16.msra.mxu0 %v6120
        %6223 = vmatpush.bf16.msra.mxu0 %v6112
        %6224 = vmatpush.bf16.msra.mxu0 %v6104
        %6225 = vmatpush.bf16.msra.mxu0 %v6096
        %6226 = vmatpush.bf16.msra.mxu0 %v6088
        %6227 = vmatmul.bf16.gmra.mxu0 %v6151
        %v6228 = vpop.f32.mrf.mxu0
        %v6229 = vadd.f32 %v6216, %v6228
        %v6230 = vpop.f32.mrf.mxu0
        %6231 = vdwg.mxu0
        %6232 = vmatpush.bf16.msra.mxu0 %v6081
        %6233 = vmatpush.bf16.msra.mxu0 %v6073
        %6234 = vmatpush.bf16.msra.mxu0 %v6065
        %6235 = vmatpush.bf16.msra.mxu0 %v6057
        %6236 = vmatpush.bf16.msra.mxu0 %v6049
        %6237 = vmatpush.bf16.msra.mxu0 %v6041
        %6238 = vmatpush.bf16.msra.mxu0 %v6033
        %6239 = vmatpush.bf16.msra.mxu0 %v6025
        %6240 = vmatmul.bf16.gmra.mxu0 %v6150
        %v6241 = vpop.f32.mrf.mxu0
        %v6242 = vadd.f32 0.0, %v6241
        %v6243 = vpop.f32.mrf.mxu0
        %6244 = vdwg.mxu0
        %6245 = vmatpush.bf16.msra.mxu0 %v6145
        %6246 = vmatpush.bf16.msra.mxu0 %v6137
        %6247 = vmatpush.bf16.msra.mxu0 %v6129
        %6248 = vmatpush.bf16.msra.mxu0 %v6121
        %6249 = vmatpush.bf16.msra.mxu0 %v6113
        %6250 = vmatpush.bf16.msra.mxu0 %v6105
        %6251 = vmatpush.bf16.msra.mxu0 %v6097
        %6252 = vmatpush.bf16.msra.mxu0 %v6089
        %6253 = vmatmul.bf16.gmra.mxu0 %v6151
        %v6254 = vpop.f32.mrf.mxu0
        %v6255 = vadd.f32 %v6242, %v6254
        %v6256 = vpop.f32.mrf.mxu0
        %6257 = vdwg.mxu0
        %6258 = vmatpush.bf16.msra.mxu0 %v6082
        %6259 = vmatpush.bf16.msra.mxu0 %v6074
        %6260 = vmatpush.bf16.msra.mxu0 %v6066
        %6261 = vmatpush.bf16.msra.mxu0 %v6058
        %6262 = vmatpush.bf16.msra.mxu0 %v6050
        %6263 = vmatpush.bf16.msra.mxu0 %v6042
        %6264 = vmatpush.bf16.msra.mxu0 %v6034
        %6265 = vmatpush.bf16.msra.mxu0 %v6026
        %6266 = vmatmul.bf16.gmra.mxu0 %v6150
        %v6267 = vpop.f32.mrf.mxu0
        %v6268 = vadd.f32 0.0, %v6267
        %v6269 = vpop.f32.mrf.mxu0
        %6270 = vdwg.mxu0
        %6271 = vmatpush.bf16.msra.mxu0 %v6146
        %6272 = vmatpush.bf16.msra.mxu0 %v6138
        %6273 = vmatpush.bf16.msra.mxu0 %v6130
        %6274 = vmatpush.bf16.msra.mxu0 %v6122
        %6275 = vmatpush.bf16.msra.mxu0 %v6114
        %6276 = vmatpush.bf16.msra.mxu0 %v6106
        %6277 = vmatpush.bf16.msra.mxu0 %v6098
        %6278 = vmatpush.bf16.msra.mxu0 %v6090
        %6279 = vmatmul.bf16.gmra.mxu0 %v6151
        %v6280 = vpop.f32.mrf.mxu0
        %v6281 = vadd.f32 %v6268, %v6280
        %v6282 = vpop.f32.mrf.mxu0
        %6283 = vdwg.mxu0
        %6284 = vmatpush.bf16.msra.mxu0 %v6083
        %6285 = vmatpush.bf16.msra.mxu0 %v6075
        %6286 = vmatpush.bf16.msra.mxu0 %v6067
        %6287 = vmatpush.bf16.msra.mxu0 %v6059
        %6288 = vmatpush.bf16.msra.mxu0 %v6051
        %6289 = vmatpush.bf16.msra.mxu0 %v6043
        %6290 = vmatpush.bf16.msra.mxu0 %v6035
        %6291 = vmatpush.bf16.msra.mxu0 %v6027
        %6292 = vmatmul.bf16.gmra.mxu0 %v6150
        %v6293 = vpop.f32.mrf.mxu0
        %v6294 = vadd.f32 0.0, %v6293
        %v6295 = vpop.f32.mrf.mxu0
        %6296 = vdwg.mxu0
        %6297 = vmatpush.bf16.msra.mxu0 %v6147
        %6298 = vmatpush.bf16.msra.mxu0 %v6139
        %6299 = vmatpush.bf16.msra.mxu0 %v6131
        %6300 = vmatpush.bf16.msra.mxu0 %v6123
        %6301 = vmatpush.bf16.msra.mxu0 %v6115
        %6302 = vmatpush.bf16.msra.mxu0 %v6107
        %6303 = vmatpush.bf16.msra.mxu0 %v6099
        %6304 = vmatpush.bf16.msra.mxu0 %v6091
        %6305 = vmatmul.bf16.gmra.mxu0 %v6151
        %v6306 = vpop.f32.mrf.mxu0
        %v6307 = vadd.f32 %v6294, %v6306
        %v6308 = vpop.f32.mrf.mxu0
        %6309 = vdwg.mxu0
        %6310 = vmatpush.bf16.msra.mxu0 %v6084
        %6311 = vmatpush.bf16.msra.mxu0 %v6076
        %6312 = vmatpush.bf16.msra.mxu0 %v6068
        %6313 = vmatpush.bf16.msra.mxu0 %v6060
        %6314 = vmatpush.bf16.msra.mxu0 %v6052
        %6315 = vmatpush.bf16.msra.mxu0 %v6044
        %6316 = vmatpush.bf16.msra.mxu0 %v6036
        %6317 = vmatpush.bf16.msra.mxu0 %v6028
        %6318 = vmatmul.bf16.gmra.mxu0 %v6150
        %v6319 = vpop.f32.mrf.mxu0
        %v6320 = vadd.f32 0.0, %v6319
        %v6321 = vpop.f32.mrf.mxu0
        %6322 = vdwg.mxu0
        %6323 = vmatpush.bf16.msra.mxu0 %v6148
        %6324 = vmatpush.bf16.msra.mxu0 %v6140
        %6325 = vmatpush.bf16.msra.mxu0 %v6132
        %6326 = vmatpush.bf16.msra.mxu0 %v6124
        %6327 = vmatpush.bf16.msra.mxu0 %v6116
        %6328 = vmatpush.bf16.msra.mxu0 %v6108
        %6329 = vmatpush.bf16.msra.mxu0 %v6100
        %6330 = vmatpush.bf16.msra.mxu0 %v6092
        %6331 = vmatmul.bf16.gmra.mxu0 %v6151
        %v6332 = vpop.f32.mrf.mxu0
        %v6333 = vadd.f32 %v6320, %v6332
        %v6334 = vpop.f32.mrf.mxu0
        %6335 = vdwg.mxu0
        %6336 = vmatpush.bf16.msra.mxu0 %v6085
        %6337 = vmatpush.bf16.msra.mxu0 %v6077
        %6338 = vmatpush.bf16.msra.mxu0 %v6069
        %6339 = vmatpush.bf16.msra.mxu0 %v6061
        %6340 = vmatpush.bf16.msra.mxu0 %v6053
        %6341 = vmatpush.bf16.msra.mxu0 %v6045
        %6342 = vmatpush.bf16.msra.mxu0 %v6037
        %6343 = vmatpush.bf16.msra.mxu0 %v6029
        %6344 = vmatmul.bf16.gmra.mxu0 %v6150
        %v6345 = vpop.f32.mrf.mxu0
        %v6346 = vadd.f32 0.0, %v6345
        %v6347 = vpop.f32.mrf.mxu0
        %6348 = vdwg.mxu0
        %6349 = vmatpush.bf16.msra.mxu0 %v6149
        %6350 = vmatpush.bf16.msra.mxu0 %v6141
        %6351 = vmatpush.bf16.msra.mxu0 %v6133
        %6352 = vmatpush.bf16.msra.mxu0 %v6125
        %6353 = vmatpush.bf16.msra.mxu0 %v6117
        %6354 = vmatpush.bf16.msra.mxu0 %v6109
        %6355 = vmatpush.bf16.msra.mxu0 %v6101
        %6356 = vmatpush.bf16.msra.mxu0 %v6093
        %6357 = vmatmul.bf16.gmra.mxu0 %v6151
        %v6358 = vpop.f32.mrf.mxu0
        %v6359 = vadd.f32 %v6346, %v6358
        %v6360 = vpop.f32.mrf.mxu0
        %6361 = vdwg.mxu0
        %v6370 = vrot.slane %v3869, 6
        %v6371 = vrot.slane %v3895, 6
        %v6372 = vrot.slane %v3921, 6
        %v6373 = vrot.slane %v3947, 6
        %v6374 = vrot.slane %v3973, 6
        %v6375 = vrot.slane %v3999, 6
        %v6376 = vrot.slane %v4025, 6
        %v6377 = vrot.slane %v4051, 6
        %v6394 = vrot.slane %v5023, 4
        %v6395 = vrot.slane %v5049, 4
        %v6396 = vrot.slane %v5075, 4
        %v6397 = vrot.slane %v5101, 4
        %v6398 = vrot.slane %v5127, 4
        %v6399 = vrot.slane %v5153, 4
        %v6400 = vrot.slane %v5179, 4
        %v6401 = vrot.slane %v5205, 4
        %v6418 = vrot.slane %v6177, 2
        %v6419 = vrot.slane %v6203, 2
        %v6420 = vrot.slane %v6229, 2
        %v6421 = vrot.slane %v6255, 2
        %v6422 = vrot.slane %v6281, 2
        %v6423 = vrot.slane %v6307, 2
        %v6424 = vrot.slane %v6333, 2
        %v6425 = vrot.slane %v6359, 2
        %v6434 = vsel %vm1758, %v2713, %v6370
        %v6435 = vsel %vm1758, %v2739, %v6371
        %v6436 = vsel %vm1758, %v2765, %v6372
        %v6437 = vsel %vm1758, %v2791, %v6373
        %v6438 = vsel %vm1758, %v2817, %v6374
        %v6439 = vsel %vm1758, %v2843, %v6375
        %v6440 = vsel %vm1758, %v2869, %v6376
        %v6441 = vsel %vm1758, %v2895, %v6377
        %v6442 = vsel %vm1766, %v6434, %v6394
        %v6443 = vsel %vm1766, %v6435, %v6395
        %v6444 = vsel %vm1766, %v6436, %v6396
        %v6445 = vsel %vm1766, %v6437, %v6397
        %v6446 = vsel %vm1766, %v6438, %v6398
        %v6447 = vsel %vm1766, %v6439, %v6399
        %v6448 = vsel %vm1766, %v6440, %v6400
        %v6449 = vsel %vm1766, %v6441, %v6401
        %vm6450 = vcmask 1045504
        %v6451 = vsel %vm6450, %v6442, %v6418
        %v6452 = vsel %vm6450, %v6443, %v6419
        %v6453 = vsel %vm6450, %v6444, %v6420
        %v6454 = vsel %vm6450, %v6445, %v6421
        %v6455 = vsel %vm6450, %v6446, %v6422
        %v6456 = vsel %vm6450, %v6447, %v6423
        %v6457 = vsel %vm6450, %v6448, %v6424
        %v6458 = vsel %vm6450, %v6449, %v6425
        %v6459 = vld [vmem:[%s5] sm:$0xff]
        %v6460 = vld [vmem:[%s5 + $0x8] sm:$0xff]
        %v6461 = vld [vmem:[%s5 + $0x10] sm:$0x3]
        %v6462 = vld [vmem:[%s6] sm:$0xff]
        %v6463 = vld [vmem:[%s6 + $0x8] sm:$0xff]
        %v6464 = vld [vmem:[%s6 + $0x10] sm:$0x3]
        %6466 = vset.pattern.permute.xlu0 0
        %6467 = vperm.xlu0 %6466, %v6462
        %v6468 = vpop.permute.xlu0 %6467
        %6471 = vset.pattern.permute.xlu0 0
        %6472 = vperm.xlu0 %6471, %v6463
        %v6473 = vpop.permute.xlu0 %6472
        %6476 = vset.pattern.permute.xlu0 0
        %6477 = vperm.xlu0 %6476, %v6464
        %v6478 = vpop.permute.xlu0 %6477
        %v6481 = vsel %vm352, %v6459, 0
        %v6484 = vsel %vm352, %v6460, 0
        %v6487 = vsel %vm352, %v6461, 0
        %6489 = vmatpush.msra.mxu0 0.0
        %6490 = vmatpush.msra.mxu0 0.0
        %6491 = vmatpush.msra.mxu0 0.0
        %6492 = vmatpush.msra.mxu0 0.0
        %6493 = vmatpush.msra.mxu0 0.0
        %6494 = vmatpush.msra.mxu0 0.0
        %6495 = vmatpush.msra.mxu0 0.0
        %6496 = vmatpush.msra.mxu0 0.0
        %6497 = vmatpush.msra.mxu0 0.0
        %6498 = vmatpush.msra.mxu0 0.0
        %6499 = vmatpush.msra.mxu0 0.0
        %6500 = vmatpush.msra.mxu0 0.0
        %6501 = vmatpush.msra.mxu0 0.0
        %6502 = vmatpush.msra.mxu0 0.0
        %6503 = vmatpush.msra.mxu0 0.0
        %6504 = vmatpush.msra.mxu0 %v6451
        %6505 = vmatmul.f32.gmra.mxu0 %v6481
        %v6506 = vpop.f32.mrf.mxu0
        %v6507 = vadd.f32 %v6468, %v6506
        %6508 = vmatmul.f32.gmra.mxu0 %v6484
        %v6509 = vpop.f32.mrf.mxu0
        %v6510 = vadd.f32 %v6473, %v6509
        %6511 = vmatmul.f32.gmra.mxu0 %v6487
        %v6512 = vpop.f32.mrf.mxu0
        %v6513 = vadd.f32 %v6478, %v6512
        %6514 = vdwg.mxu0
        %6515 = vmatpush.msra.mxu0 0.0
        %6516 = vmatpush.msra.mxu0 0.0
        %6517 = vmatpush.msra.mxu0 0.0
        %6518 = vmatpush.msra.mxu0 0.0
        %6519 = vmatpush.msra.mxu0 0.0
        %6520 = vmatpush.msra.mxu0 0.0
        %6521 = vmatpush.msra.mxu0 0.0
        %6522 = vmatpush.msra.mxu0 0.0
        %6523 = vmatpush.msra.mxu0 0.0
        %6524 = vmatpush.msra.mxu0 0.0
        %6525 = vmatpush.msra.mxu0 0.0
        %6526 = vmatpush.msra.mxu0 0.0
        %6527 = vmatpush.msra.mxu0 0.0
        %6528 = vmatpush.msra.mxu0 0.0
        %6529 = vmatpush.msra.mxu0 0.0
        %6530 = vmatpush.msra.mxu0 %v6452
        %6531 = vmatmul.f32.gmra.mxu0 %v6481
        %v6532 = vpop.f32.mrf.mxu0
        %v6533 = vadd.f32 %v6468, %v6532
        %6534 = vmatmul.f32.gmra.mxu0 %v6484
        %v6535 = vpop.f32.mrf.mxu0
        %v6536 = vadd.f32 %v6473, %v6535
        %6537 = vmatmul.f32.gmra.mxu0 %v6487
        %v6538 = vpop.f32.mrf.mxu0
        %v6539 = vadd.f32 %v6478, %v6538
        %6540 = vdwg.mxu0
        %6541 = vmatpush.msra.mxu0 0.0
        %6542 = vmatpush.msra.mxu0 0.0
        %6543 = vmatpush.msra.mxu0 0.0
        %6544 = vmatpush.msra.mxu0 0.0
        %6545 = vmatpush.msra.mxu0 0.0
        %6546 = vmatpush.msra.mxu0 0.0
        %6547 = vmatpush.msra.mxu0 0.0
        %6548 = vmatpush.msra.mxu0 0.0
        %6549 = vmatpush.msra.mxu0 0.0
        %6550 = vmatpush.msra.mxu0 0.0
        %6551 = vmatpush.msra.mxu0 0.0
        %6552 = vmatpush.msra.mxu0 0.0
        %6553 = vmatpush.msra.mxu0 0.0
        %6554 = vmatpush.msra.mxu0 0.0
        %6555 = vmatpush.msra.mxu0 0.0
        %6556 = vmatpush.msra.mxu0 %v6453
        %6557 = vmatmul.f32.gmra.mxu0 %v6481
        %v6558 = vpop.f32.mrf.mxu0
        %v6559 = vadd.f32 %v6468, %v6558
        %6560 = vmatmul.f32.gmra.mxu0 %v6484
        %v6561 = vpop.f32.mrf.mxu0
        %v6562 = vadd.f32 %v6473, %v6561
        %6563 = vmatmul.f32.gmra.mxu0 %v6487
        %v6564 = vpop.f32.mrf.mxu0
        %v6565 = vadd.f32 %v6478, %v6564
        %6566 = vdwg.mxu0
        %6567 = vmatpush.msra.mxu0 0.0
        %6568 = vmatpush.msra.mxu0 0.0
        %6569 = vmatpush.msra.mxu0 0.0
        %6570 = vmatpush.msra.mxu0 0.0
        %6571 = vmatpush.msra.mxu0 0.0
        %6572 = vmatpush.msra.mxu0 0.0
        %6573 = vmatpush.msra.mxu0 0.0
        %6574 = vmatpush.msra.mxu0 0.0
        %6575 = vmatpush.msra.mxu0 0.0
        %6576 = vmatpush.msra.mxu0 0.0
        %6577 = vmatpush.msra.mxu0 0.0
        %6578 = vmatpush.msra.mxu0 0.0
        %6579 = vmatpush.msra.mxu0 0.0
        %6580 = vmatpush.msra.mxu0 0.0
        %6581 = vmatpush.msra.mxu0 0.0
        %6582 = vmatpush.msra.mxu0 %v6454
        %6583 = vmatmul.f32.gmra.mxu0 %v6481
        %v6584 = vpop.f32.mrf.mxu0
        %v6585 = vadd.f32 %v6468, %v6584
        %6586 = vmatmul.f32.gmra.mxu0 %v6484
        %v6587 = vpop.f32.mrf.mxu0
        %v6588 = vadd.f32 %v6473, %v6587
        %6589 = vmatmul.f32.gmra.mxu0 %v6487
        %v6590 = vpop.f32.mrf.mxu0
        %v6591 = vadd.f32 %v6478, %v6590
        %6592 = vdwg.mxu0
        %6593 = vmatpush.msra.mxu0 0.0
        %6594 = vmatpush.msra.mxu0 0.0
        %6595 = vmatpush.msra.mxu0 0.0
        %6596 = vmatpush.msra.mxu0 0.0
        %6597 = vmatpush.msra.mxu0 0.0
        %6598 = vmatpush.msra.mxu0 0.0
        %6599 = vmatpush.msra.mxu0 0.0
        %6600 = vmatpush.msra.mxu0 0.0
        %6601 = vmatpush.msra.mxu0 0.0
        %6602 = vmatpush.msra.mxu0 0.0
        %6603 = vmatpush.msra.mxu0 0.0
        %6604 = vmatpush.msra.mxu0 0.0
        %6605 = vmatpush.msra.mxu0 0.0
        %6606 = vmatpush.msra.mxu0 0.0
        %6607 = vmatpush.msra.mxu0 0.0
        %6608 = vmatpush.msra.mxu0 %v6455
        %6609 = vmatmul.f32.gmra.mxu0 %v6481
        %v6610 = vpop.f32.mrf.mxu0
        %v6611 = vadd.f32 %v6468, %v6610
        %6612 = vmatmul.f32.gmra.mxu0 %v6484
        %v6613 = vpop.f32.mrf.mxu0
        %v6614 = vadd.f32 %v6473, %v6613
        %6615 = vmatmul.f32.gmra.mxu0 %v6487
        %v6616 = vpop.f32.mrf.mxu0
        %v6617 = vadd.f32 %v6478, %v6616
        %6618 = vdwg.mxu0
        %6619 = vmatpush.msra.mxu0 0.0
        %6620 = vmatpush.msra.mxu0 0.0
        %6621 = vmatpush.msra.mxu0 0.0
        %6622 = vmatpush.msra.mxu0 0.0
        %6623 = vmatpush.msra.mxu0 0.0
        %6624 = vmatpush.msra.mxu0 0.0
        %6625 = vmatpush.msra.mxu0 0.0
        %6626 = vmatpush.msra.mxu0 0.0
        %6627 = vmatpush.msra.mxu0 0.0
        %6628 = vmatpush.msra.mxu0 0.0
        %6629 = vmatpush.msra.mxu0 0.0
        %6630 = vmatpush.msra.mxu0 0.0
        %6631 = vmatpush.msra.mxu0 0.0
        %6632 = vmatpush.msra.mxu0 0.0
        %6633 = vmatpush.msra.mxu0 0.0
        %6634 = vmatpush.msra.mxu0 %v6456
        %6635 = vmatmul.f32.gmra.mxu0 %v6481
        %v6636 = vpop.f32.mrf.mxu0
        %v6637 = vadd.f32 %v6468, %v6636
        %6638 = vmatmul.f32.gmra.mxu0 %v6484
        %v6639 = vpop.f32.mrf.mxu0
        %v6640 = vadd.f32 %v6473, %v6639
        %6641 = vmatmul.f32.gmra.mxu0 %v6487
        %v6642 = vpop.f32.mrf.mxu0
        %v6643 = vadd.f32 %v6478, %v6642
        %6644 = vdwg.mxu0
        %6645 = vmatpush.msra.mxu0 0.0
        %6646 = vmatpush.msra.mxu0 0.0
        %6647 = vmatpush.msra.mxu0 0.0
        %6648 = vmatpush.msra.mxu0 0.0
        %6649 = vmatpush.msra.mxu0 0.0
        %6650 = vmatpush.msra.mxu0 0.0
        %6651 = vmatpush.msra.mxu0 0.0
        %6652 = vmatpush.msra.mxu0 0.0
        %6653 = vmatpush.msra.mxu0 0.0
        %6654 = vmatpush.msra.mxu0 0.0
        %6655 = vmatpush.msra.mxu0 0.0
        %6656 = vmatpush.msra.mxu0 0.0
        %6657 = vmatpush.msra.mxu0 0.0
        %6658 = vmatpush.msra.mxu0 0.0
        %6659 = vmatpush.msra.mxu0 0.0
        %6660 = vmatpush.msra.mxu0 %v6457
        %6661 = vmatmul.f32.gmra.mxu0 %v6481
        %v6662 = vpop.f32.mrf.mxu0
        %v6663 = vadd.f32 %v6468, %v6662
        %6664 = vmatmul.f32.gmra.mxu0 %v6484
        %v6665 = vpop.f32.mrf.mxu0
        %v6666 = vadd.f32 %v6473, %v6665
        %6667 = vmatmul.f32.gmra.mxu0 %v6487
        %v6668 = vpop.f32.mrf.mxu0
        %v6669 = vadd.f32 %v6478, %v6668
        %6670 = vdwg.mxu0
        %6671 = vmatpush.msra.mxu0 0.0
        %6672 = vmatpush.msra.mxu0 0.0
        %6673 = vmatpush.msra.mxu0 0.0
        %6674 = vmatpush.msra.mxu0 0.0
        %6675 = vmatpush.msra.mxu0 0.0
        %6676 = vmatpush.msra.mxu0 0.0
        %6677 = vmatpush.msra.mxu0 0.0
        %6678 = vmatpush.msra.mxu0 0.0
        %6679 = vmatpush.msra.mxu0 0.0
        %6680 = vmatpush.msra.mxu0 0.0
        %6681 = vmatpush.msra.mxu0 0.0
        %6682 = vmatpush.msra.mxu0 0.0
        %6683 = vmatpush.msra.mxu0 0.0
        %6684 = vmatpush.msra.mxu0 0.0
        %6685 = vmatpush.msra.mxu0 0.0
        %6686 = vmatpush.msra.mxu0 %v6458
        %6687 = vmatmul.f32.gmra.mxu0 %v6481
        %v6688 = vpop.f32.mrf.mxu0
        %v6689 = vadd.f32 %v6468, %v6688
        %6690 = vmatmul.f32.gmra.mxu0 %v6484
        %v6691 = vpop.f32.mrf.mxu0
        %v6692 = vadd.f32 %v6473, %v6691
        %6693 = vmatmul.f32.gmra.mxu0 %v6487
        %v6694 = vpop.f32.mrf.mxu0
        %v6695 = vadd.f32 %v6478, %v6694
        %6696 = vdwg.mxu0
        %v6697 = vsub.f32 0.0, %v6510
        %v6698 = vsub.f32 0.0, %v6536
        %v6699 = vsub.f32 0.0, %v6562
        %v6700 = vsub.f32 0.0, %v6588
        %v6701 = vsub.f32 0.0, %v6614
        %v6702 = vsub.f32 0.0, %v6640
        %v6703 = vsub.f32 0.0, %v6666
        %v6704 = vsub.f32 0.0, %v6692
        %v6705 = vsub.f32 0.0, %v6513
        %v6706 = vsub.f32 0.0, %v6539
        %v6707 = vsub.f32 0.0, %v6565
        %v6708 = vsub.f32 0.0, %v6591
        %v6709 = vsub.f32 0.0, %v6617
        %v6710 = vsub.f32 0.0, %v6643
        %v6711 = vsub.f32 0.0, %v6669
        %v6712 = vsub.f32 0.0, %v6695
        %v6713 = vmul.f32 %v6697, 1.442695
        %v6714 = vpow.pop %v6713
        %v6715 = vmul.f32 %v6698, 1.442695
        %v6716 = vpow.pop %v6715
        %v6717 = vmul.f32 %v6699, 1.442695
        %v6718 = vpow.pop %v6717
        %v6719 = vmul.f32 %v6700, 1.442695
        %v6720 = vpow.pop %v6719
        %v6721 = vmul.f32 %v6701, 1.442695
        %v6722 = vpow.pop %v6721
        %v6723 = vmul.f32 %v6702, 1.442695
        %v6724 = vpow.pop %v6723
        %v6725 = vmul.f32 %v6703, 1.442695
        %v6726 = vpow.pop %v6725
        %v6727 = vmul.f32 %v6704, 1.442695
        %v6728 = vpow.pop %v6727
        %v6729 = vmul.f32 %v6705, 1.442695
        %v6730 = vpow.pop %v6729
        %v6731 = vmul.f32 %v6706, 1.442695
        %v6732 = vpow.pop %v6731
        %v6733 = vmul.f32 %v6707, 1.442695
        %v6734 = vpow.pop %v6733
        %v6735 = vmul.f32 %v6708, 1.442695
        %v6736 = vpow.pop %v6735
        %v6737 = vmul.f32 %v6709, 1.442695
        %v6738 = vpow.pop %v6737
        %v6739 = vmul.f32 %v6710, 1.442695
        %v6740 = vpow.pop %v6739
        %v6741 = vmul.f32 %v6711, 1.442695
        %v6742 = vpow.pop %v6741
        %v6743 = vmul.f32 %v6712, 1.442695
        %v6744 = vpow.pop %v6743
        %v6745 = vadd.f32 %v6714, 1.0
        %v6746 = vadd.f32 %v6716, 1.0
        %v6747 = vadd.f32 %v6718, 1.0
        %v6748 = vadd.f32 %v6720, 1.0
        %v6749 = vadd.f32 %v6722, 1.0
        %v6750 = vadd.f32 %v6724, 1.0
        %v6751 = vadd.f32 %v6726, 1.0
        %v6752 = vadd.f32 %v6728, 1.0
        %v6753 = vadd.f32 %v6730, 1.0
        %v6754 = vadd.f32 %v6732, 1.0
        %v6755 = vadd.f32 %v6734, 1.0
        %v6756 = vadd.f32 %v6736, 1.0
        %v6757 = vadd.f32 %v6738, 1.0
        %v6758 = vadd.f32 %v6740, 1.0
        %v6759 = vadd.f32 %v6742, 1.0
        %v6760 = vadd.f32 %v6744, 1.0
        %v6761 = vrcp.pop %v6745
        %v6762 = vmul.f32 %v6745, %v6761
        %v6763 = vsub.f32 1.0, %v6762
        %v6764 = vmul.f32 %v6761, %v6763
        %v6765 = vadd.f32 %v6761, %v6764
        %vm6766 = vweird.f32 %v6745
        %vm6767 = vweird.f32 %v6761
        %vm6768 = vmor %vm6766, %vm6767
        %v6769 = vsel %vm6768, %v6761, %v6765
        %v6770 = vand.u32 2147483647, %v6745
        %vm6771 = vcmp.eq.f32.partialorder %v6770, 8.507059e+37
        %v6772 = vand.u32 %v6745, 2147483648
        %v6773 = vor.u32 1.1754944e-38, %v6772
        %v6774 = vsel %vm6771, %v6773, %v6769
        %v6775 = vmul.f32 1.0, %v6774
        %v6776 = vrcp.pop %v6746
        %v6777 = vmul.f32 %v6746, %v6776
        %v6778 = vsub.f32 1.0, %v6777
        %v6779 = vmul.f32 %v6776, %v6778
        %v6780 = vadd.f32 %v6776, %v6779
        %vm6781 = vweird.f32 %v6746
        %vm6782 = vweird.f32 %v6776
        %vm6783 = vmor %vm6781, %vm6782
        %v6784 = vsel %vm6783, %v6776, %v6780
        %v6785 = vand.u32 2147483647, %v6746
        %vm6786 = vcmp.eq.f32.partialorder %v6785, 8.507059e+37
        %v6787 = vand.u32 %v6746, 2147483648
        %v6788 = vor.u32 1.1754944e-38, %v6787
        %v6789 = vsel %vm6786, %v6788, %v6784
        %v6790 = vmul.f32 1.0, %v6789
        %v6791 = vrcp.pop %v6747
        %v6792 = vmul.f32 %v6747, %v6791
        %v6793 = vsub.f32 1.0, %v6792
        %v6794 = vmul.f32 %v6791, %v6793
        %v6795 = vadd.f32 %v6791, %v6794
        %vm6796 = vweird.f32 %v6747
        %vm6797 = vweird.f32 %v6791
        %vm6798 = vmor %vm6796, %vm6797
        %v6799 = vsel %vm6798, %v6791, %v6795
        %v6800 = vand.u32 2147483647, %v6747
        %vm6801 = vcmp.eq.f32.partialorder %v6800, 8.507059e+37
        %v6802 = vand.u32 %v6747, 2147483648
        %v6803 = vor.u32 1.1754944e-38, %v6802
        %v6804 = vsel %vm6801, %v6803, %v6799
        %v6805 = vmul.f32 1.0, %v6804
        %v6806 = vrcp.pop %v6748
        %v6807 = vmul.f32 %v6748, %v6806
        %v6808 = vsub.f32 1.0, %v6807
        %v6809 = vmul.f32 %v6806, %v6808
        %v6810 = vadd.f32 %v6806, %v6809
        %vm6811 = vweird.f32 %v6748
        %vm6812 = vweird.f32 %v6806
        %vm6813 = vmor %vm6811, %vm6812
        %v6814 = vsel %vm6813, %v6806, %v6810
        %v6815 = vand.u32 2147483647, %v6748
        %vm6816 = vcmp.eq.f32.partialorder %v6815, 8.507059e+37
        %v6817 = vand.u32 %v6748, 2147483648
        %v6818 = vor.u32 1.1754944e-38, %v6817
        %v6819 = vsel %vm6816, %v6818, %v6814
        %v6820 = vmul.f32 1.0, %v6819
        %v6821 = vrcp.pop %v6749
        %v6822 = vmul.f32 %v6749, %v6821
        %v6823 = vsub.f32 1.0, %v6822
        %v6824 = vmul.f32 %v6821, %v6823
        %v6825 = vadd.f32 %v6821, %v6824
        %vm6826 = vweird.f32 %v6749
        %vm6827 = vweird.f32 %v6821
        %vm6828 = vmor %vm6826, %vm6827
        %v6829 = vsel %vm6828, %v6821, %v6825
        %v6830 = vand.u32 2147483647, %v6749
        %vm6831 = vcmp.eq.f32.partialorder %v6830, 8.507059e+37
        %v6832 = vand.u32 %v6749, 2147483648
        %v6833 = vor.u32 1.1754944e-38, %v6832
        %v6834 = vsel %vm6831, %v6833, %v6829
        %v6835 = vmul.f32 1.0, %v6834
        %v6836 = vrcp.pop %v6750
        %v6837 = vmul.f32 %v6750, %v6836
        %v6838 = vsub.f32 1.0, %v6837
        %v6839 = vmul.f32 %v6836, %v6838
        %v6840 = vadd.f32 %v6836, %v6839
        %vm6841 = vweird.f32 %v6750
        %vm6842 = vweird.f32 %v6836
        %vm6843 = vmor %vm6841, %vm6842
        %v6844 = vsel %vm6843, %v6836, %v6840
        %v6845 = vand.u32 2147483647, %v6750
        %vm6846 = vcmp.eq.f32.partialorder %v6845, 8.507059e+37
        %v6847 = vand.u32 %v6750, 2147483648
        %v6848 = vor.u32 1.1754944e-38, %v6847
        %v6849 = vsel %vm6846, %v6848, %v6844
        %v6850 = vmul.f32 1.0, %v6849
        %v6851 = vrcp.pop %v6751
        %v6852 = vmul.f32 %v6751, %v6851
        %v6853 = vsub.f32 1.0, %v6852
        %v6854 = vmul.f32 %v6851, %v6853
        %v6855 = vadd.f32 %v6851, %v6854
        %vm6856 = vweird.f32 %v6751
        %vm6857 = vweird.f32 %v6851
        %vm6858 = vmor %vm6856, %vm6857
        %v6859 = vsel %vm6858, %v6851, %v6855
        %v6860 = vand.u32 2147483647, %v6751
        %vm6861 = vcmp.eq.f32.partialorder %v6860, 8.507059e+37
        %v6862 = vand.u32 %v6751, 2147483648
        %v6863 = vor.u32 1.1754944e-38, %v6862
        %v6864 = vsel %vm6861, %v6863, %v6859
        %v6865 = vmul.f32 1.0, %v6864
        %v6866 = vrcp.pop %v6752
        %v6867 = vmul.f32 %v6752, %v6866
        %v6868 = vsub.f32 1.0, %v6867
        %v6869 = vmul.f32 %v6866, %v6868
        %v6870 = vadd.f32 %v6866, %v6869
        %vm6871 = vweird.f32 %v6752
        %vm6872 = vweird.f32 %v6866
        %vm6873 = vmor %vm6871, %vm6872
        %v6874 = vsel %vm6873, %v6866, %v6870
        %v6875 = vand.u32 2147483647, %v6752
        %vm6876 = vcmp.eq.f32.partialorder %v6875, 8.507059e+37
        %v6877 = vand.u32 %v6752, 2147483648
        %v6878 = vor.u32 1.1754944e-38, %v6877
        %v6879 = vsel %vm6876, %v6878, %v6874
        %v6880 = vmul.f32 1.0, %v6879
        %v6881 = vrcp.pop %v6753
        %v6882 = vmul.f32 %v6753, %v6881
        %v6883 = vsub.f32 1.0, %v6882
        %v6884 = vmul.f32 %v6881, %v6883
        %v6885 = vadd.f32 %v6881, %v6884
        %vm6886 = vweird.f32 %v6753
        %vm6887 = vweird.f32 %v6881
        %vm6888 = vmor %vm6886, %vm6887
        %v6889 = vsel %vm6888, %v6881, %v6885
        %v6890 = vand.u32 2147483647, %v6753
        %vm6891 = vcmp.eq.f32.partialorder %v6890, 8.507059e+37
        %v6892 = vand.u32 %v6753, 2147483648
        %v6893 = vor.u32 1.1754944e-38, %v6892
        %v6894 = vsel %vm6891, %v6893, %v6889
        %v6895 = vmul.f32 1.0, %v6894
        %v6896 = vrcp.pop %v6754
        %v6897 = vmul.f32 %v6754, %v6896
        %v6898 = vsub.f32 1.0, %v6897
        %v6899 = vmul.f32 %v6896, %v6898
        %v6900 = vadd.f32 %v6896, %v6899
        %vm6901 = vweird.f32 %v6754
        %vm6902 = vweird.f32 %v6896
        %vm6903 = vmor %vm6901, %vm6902
        %v6904 = vsel %vm6903, %v6896, %v6900
        %v6905 = vand.u32 2147483647, %v6754
        %vm6906 = vcmp.eq.f32.partialorder %v6905, 8.507059e+37
        %v6907 = vand.u32 %v6754, 2147483648
        %v6908 = vor.u32 1.1754944e-38, %v6907
        %v6909 = vsel %vm6906, %v6908, %v6904
        %v6910 = vmul.f32 1.0, %v6909
        %v6911 = vrcp.pop %v6755
        %v6912 = vmul.f32 %v6755, %v6911
        %v6913 = vsub.f32 1.0, %v6912
        %v6914 = vmul.f32 %v6911, %v6913
        %v6915 = vadd.f32 %v6911, %v6914
        %vm6916 = vweird.f32 %v6755
        %vm6917 = vweird.f32 %v6911
        %vm6918 = vmor %vm6916, %vm6917
        %v6919 = vsel %vm6918, %v6911, %v6915
        %v6920 = vand.u32 2147483647, %v6755
        %vm6921 = vcmp.eq.f32.partialorder %v6920, 8.507059e+37
        %v6922 = vand.u32 %v6755, 2147483648
        %v6923 = vor.u32 1.1754944e-38, %v6922
        %v6924 = vsel %vm6921, %v6923, %v6919
        %v6925 = vmul.f32 1.0, %v6924
        %v6926 = vrcp.pop %v6756
        %v6927 = vmul.f32 %v6756, %v6926
        %v6928 = vsub.f32 1.0, %v6927
        %v6929 = vmul.f32 %v6926, %v6928
        %v6930 = vadd.f32 %v6926, %v6929
        %vm6931 = vweird.f32 %v6756
        %vm6932 = vweird.f32 %v6926
        %vm6933 = vmor %vm6931, %vm6932
        %v6934 = vsel %vm6933, %v6926, %v6930
        %v6935 = vand.u32 2147483647, %v6756
        %vm6936 = vcmp.eq.f32.partialorder %v6935, 8.507059e+37
        %v6937 = vand.u32 %v6756, 2147483648
        %v6938 = vor.u32 1.1754944e-38, %v6937
        %v6939 = vsel %vm6936, %v6938, %v6934
        %v6940 = vmul.f32 1.0, %v6939
        %v6941 = vrcp.pop %v6757
        %v6942 = vmul.f32 %v6757, %v6941
        %v6943 = vsub.f32 1.0, %v6942
        %v6944 = vmul.f32 %v6941, %v6943
        %v6945 = vadd.f32 %v6941, %v6944
        %vm6946 = vweird.f32 %v6757
        %vm6947 = vweird.f32 %v6941
        %vm6948 = vmor %vm6946, %vm6947
        %v6949 = vsel %vm6948, %v6941, %v6945
        %v6950 = vand.u32 2147483647, %v6757
        %vm6951 = vcmp.eq.f32.partialorder %v6950, 8.507059e+37
        %v6952 = vand.u32 %v6757, 2147483648
        %v6953 = vor.u32 1.1754944e-38, %v6952
        %v6954 = vsel %vm6951, %v6953, %v6949
        %v6955 = vmul.f32 1.0, %v6954
        %v6956 = vrcp.pop %v6758
        %v6957 = vmul.f32 %v6758, %v6956
        %v6958 = vsub.f32 1.0, %v6957
        %v6959 = vmul.f32 %v6956, %v6958
        %v6960 = vadd.f32 %v6956, %v6959
        %vm6961 = vweird.f32 %v6758
        %vm6962 = vweird.f32 %v6956
        %vm6963 = vmor %vm6961, %vm6962
        %v6964 = vsel %vm6963, %v6956, %v6960
        %v6965 = vand.u32 2147483647, %v6758
        %vm6966 = vcmp.eq.f32.partialorder %v6965, 8.507059e+37
        %v6967 = vand.u32 %v6758, 2147483648
        %v6968 = vor.u32 1.1754944e-38, %v6967
        %v6969 = vsel %vm6966, %v6968, %v6964
        %v6970 = vmul.f32 1.0, %v6969
        %v6971 = vrcp.pop %v6759
        %v6972 = vmul.f32 %v6759, %v6971
        %v6973 = vsub.f32 1.0, %v6972
        %v6974 = vmul.f32 %v6971, %v6973
        %v6975 = vadd.f32 %v6971, %v6974
        %vm6976 = vweird.f32 %v6759
        %vm6977 = vweird.f32 %v6971
        %vm6978 = vmor %vm6976, %vm6977
        %v6979 = vsel %vm6978, %v6971, %v6975
        %v6980 = vand.u32 2147483647, %v6759
        %vm6981 = vcmp.eq.f32.partialorder %v6980, 8.507059e+37
        %v6982 = vand.u32 %v6759, 2147483648
        %v6983 = vor.u32 1.1754944e-38, %v6982
        %v6984 = vsel %vm6981, %v6983, %v6979
        %v6985 = vmul.f32 1.0, %v6984
        %v6986 = vrcp.pop %v6760
        %v6987 = vmul.f32 %v6760, %v6986
        %v6988 = vsub.f32 1.0, %v6987
        %v6989 = vmul.f32 %v6986, %v6988
        %v6990 = vadd.f32 %v6986, %v6989
        %vm6991 = vweird.f32 %v6760
        %vm6992 = vweird.f32 %v6986
        %vm6993 = vmor %vm6991, %vm6992
        %v6994 = vsel %vm6993, %v6986, %v6990
        %v6995 = vand.u32 2147483647, %v6760
        %vm6996 = vcmp.eq.f32.partialorder %v6995, 8.507059e+37
        %v6997 = vand.u32 %v6760, 2147483648
        %v6998 = vor.u32 1.1754944e-38, %v6997
        %v6999 = vsel %vm6996, %v6998, %v6994
        %v7000 = vmul.f32 1.0, %v6999
        %vm7017 = vcmask 1046528
        %v7018 = vrot.slane %v6775, 1
        %v7019 = vrot.slane %v6895, 1
        %v7020 = vsel %vm7017, %v7018, %v7019
        %v7021 = vrot.slane %v6790, 1
        %v7022 = vrot.slane %v6910, 1
        %v7023 = vsel %vm7017, %v7021, %v7022
        %v7024 = vrot.slane %v6805, 1
        %v7025 = vrot.slane %v6925, 1
        %v7026 = vsel %vm7017, %v7024, %v7025
        %v7027 = vrot.slane %v6820, 1
        %v7028 = vrot.slane %v6940, 1
        %v7029 = vsel %vm7017, %v7027, %v7028
        %v7030 = vrot.slane %v6835, 1
        %v7031 = vrot.slane %v6955, 1
        %v7032 = vsel %vm7017, %v7030, %v7031
        %v7033 = vrot.slane %v6850, 1
        %v7034 = vrot.slane %v6970, 1
        %v7035 = vsel %vm7017, %v7033, %v7034
        %v7036 = vrot.slane %v6865, 1
        %v7037 = vrot.slane %v6985, 1
        %v7038 = vsel %vm7017, %v7036, %v7037
        %v7039 = vrot.slane %v6880, 1
        %v7040 = vrot.slane %v7000, 1
        %v7041 = vsel %vm7017, %v7039, %v7040
        %v7058 = vmul.f32 %v6507, %v7020
        %v7059 = vmul.f32 %v6533, %v7023
        %v7060 = vmul.f32 %v6559, %v7026
        %v7061 = vmul.f32 %v6585, %v7029
        %v7062 = vmul.f32 %v6611, %v7032
        %v7063 = vmul.f32 %v6637, %v7035
        %v7064 = vmul.f32 %v6663, %v7038
        %v7065 = vmul.f32 %v6689, %v7041
        %v7066 = vmul.f32 %v6510, %v7019
        %v7067 = vmul.f32 %v6536, %v7022
        %v7068 = vmul.f32 %v6562, %v7025
        %v7069 = vmul.f32 %v6588, %v7028
        %v7070 = vmul.f32 %v6614, %v7031
        %v7071 = vmul.f32 %v6640, %v7034
        %v7072 = vmul.f32 %v6666, %v7037
        %v7073 = vmul.f32 %v6692, %v7040
        %v7074 = vsel %vm1754, %v7066, -inf
        %v7075 = vmax.f32 %v7058, %v7074
        %v7076 = vrot.slane %v7075, 4
        %v7077 = vmax.f32 %v7075, %v7076
        %v7078 = vrot.slane %v7077, 2
        %v7079 = vmax.f32 %v7077, %v7078
        %v7080 = vrot.slane %v7079, 1
        %v7081 = vmax.f32 %v7079, %v7080
        %v7082 = vsel %vm1754, %v7067, -inf
        %v7083 = vmax.f32 %v7059, %v7082
        %v7084 = vrot.slane %v7083, 4
        %v7085 = vmax.f32 %v7083, %v7084
        %v7086 = vrot.slane %v7085, 2
        %v7087 = vmax.f32 %v7085, %v7086
        %v7088 = vrot.slane %v7087, 1
        %v7089 = vmax.f32 %v7087, %v7088
        %v7090 = vsel %vm1754, %v7068, -inf
        %v7091 = vmax.f32 %v7060, %v7090
        %v7092 = vrot.slane %v7091, 4
        %v7093 = vmax.f32 %v7091, %v7092
        %v7094 = vrot.slane %v7093, 2
        %v7095 = vmax.f32 %v7093, %v7094
        %v7096 = vrot.slane %v7095, 1
        %v7097 = vmax.f32 %v7095, %v7096
        %v7098 = vsel %vm1754, %v7069, -inf
        %v7099 = vmax.f32 %v7061, %v7098
        %v7100 = vrot.slane %v7099, 4
        %v7101 = vmax.f32 %v7099, %v7100
        %v7102 = vrot.slane %v7101, 2
        %v7103 = vmax.f32 %v7101, %v7102
        %v7104 = vrot.slane %v7103, 1
        %v7105 = vmax.f32 %v7103, %v7104
        %v7106 = vsel %vm1754, %v7070, -inf
        %v7107 = vmax.f32 %v7062, %v7106
        %v7108 = vrot.slane %v7107, 4
        %v7109 = vmax.f32 %v7107, %v7108
        %v7110 = vrot.slane %v7109, 2
        %v7111 = vmax.f32 %v7109, %v7110
        %v7112 = vrot.slane %v7111, 1
        %v7113 = vmax.f32 %v7111, %v7112
        %v7114 = vsel %vm1754, %v7071, -inf
        %v7115 = vmax.f32 %v7063, %v7114
        %v7116 = vrot.slane %v7115, 4
        %v7117 = vmax.f32 %v7115, %v7116
        %v7118 = vrot.slane %v7117, 2
        %v7119 = vmax.f32 %v7117, %v7118
        %v7120 = vrot.slane %v7119, 1
        %v7121 = vmax.f32 %v7119, %v7120
        %v7122 = vsel %vm1754, %v7072, -inf
        %v7123 = vmax.f32 %v7064, %v7122
        %v7124 = vrot.slane %v7123, 4
        %v7125 = vmax.f32 %v7123, %v7124
        %v7126 = vrot.slane %v7125, 2
        %v7127 = vmax.f32 %v7125, %v7126
        %v7128 = vrot.slane %v7127, 1
        %v7129 = vmax.f32 %v7127, %v7128
        %v7130 = vsel %vm1754, %v7073, -inf
        %v7131 = vmax.f32 %v7065, %v7130
        %v7132 = vrot.slane %v7131, 4
        %v7133 = vmax.f32 %v7131, %v7132
        %v7134 = vrot.slane %v7133, 2
        %v7135 = vmax.f32 %v7133, %v7134
        %v7136 = vrot.slane %v7135, 1
        %v7137 = vmax.f32 %v7135, %v7136
        %v7138 = vsub.f32 %v7058, %v7081
        %v7139 = vsub.f32 %v7059, %v7089
        %v7140 = vsub.f32 %v7060, %v7097
        %v7141 = vsub.f32 %v7061, %v7105
        %v7142 = vsub.f32 %v7062, %v7113
        %v7143 = vsub.f32 %v7063, %v7121
        %v7144 = vsub.f32 %v7064, %v7129
        %v7145 = vsub.f32 %v7065, %v7137
        %v7146 = vsub.f32 %v7066, %v7081
        %v7147 = vsub.f32 %v7067, %v7089
        %v7148 = vsub.f32 %v7068, %v7097
        %v7149 = vsub.f32 %v7069, %v7105
        %v7150 = vsub.f32 %v7070, %v7113
        %v7151 = vsub.f32 %v7071, %v7121
        %v7152 = vsub.f32 %v7072, %v7129
        %v7153 = vsub.f32 %v7073, %v7137
        %v7154 = vmul.f32 %v7138, 1.442695
        %v7155 = vpow.pop %v7154
        %v7156 = vmul.f32 %v7139, 1.442695
        %v7157 = vpow.pop %v7156
        %v7158 = vmul.f32 %v7140, 1.442695
        %v7159 = vpow.pop %v7158
        %v7160 = vmul.f32 %v7141, 1.442695
        %v7161 = vpow.pop %v7160
        %v7162 = vmul.f32 %v7142, 1.442695
        %v7163 = vpow.pop %v7162
        %v7164 = vmul.f32 %v7143, 1.442695
        %v7165 = vpow.pop %v7164
        %v7166 = vmul.f32 %v7144, 1.442695
        %v7167 = vpow.pop %v7166
        %v7168 = vmul.f32 %v7145, 1.442695
        %v7169 = vpow.pop %v7168
        %v7170 = vmul.f32 %v7146, 1.442695
        %v7171 = vpow.pop %v7170
        %v7172 = vmul.f32 %v7147, 1.442695
        %v7173 = vpow.pop %v7172
        %v7174 = vmul.f32 %v7148, 1.442695
        %v7175 = vpow.pop %v7174
        %v7176 = vmul.f32 %v7149, 1.442695
        %v7177 = vpow.pop %v7176
        %v7178 = vmul.f32 %v7150, 1.442695
        %v7179 = vpow.pop %v7178
        %v7180 = vmul.f32 %v7151, 1.442695
        %v7181 = vpow.pop %v7180
        %v7182 = vmul.f32 %v7152, 1.442695
        %v7183 = vpow.pop %v7182
        %v7184 = vmul.f32 %v7153, 1.442695
        %v7185 = vpow.pop %v7184
        %v7186 = vsel %vm1754, %v7171, 0.0
        %v7187 = vadd.f32 %v7155, %v7186
        %v7188 = vrot.slane %v7187, 4
        %v7189 = vadd.f32 %v7187, %v7188
        %v7190 = vrot.slane %v7189, 2
        %v7191 = vadd.f32 %v7189, %v7190
        %v7192 = vrot.slane %v7191, 1
        %v7193 = vadd.f32 %v7191, %v7192
        %v7194 = vsel %vm1754, %v7173, 0.0
        %v7195 = vadd.f32 %v7157, %v7194
        %v7196 = vrot.slane %v7195, 4
        %v7197 = vadd.f32 %v7195, %v7196
        %v7198 = vrot.slane %v7197, 2
        %v7199 = vadd.f32 %v7197, %v7198
        %v7200 = vrot.slane %v7199, 1
        %v7201 = vadd.f32 %v7199, %v7200
        %v7202 = vsel %vm1754, %v7175, 0.0
        %v7203 = vadd.f32 %v7159, %v7202
        %v7204 = vrot.slane %v7203, 4
        %v7205 = vadd.f32 %v7203, %v7204
        %v7206 = vrot.slane %v7205, 2
        %v7207 = vadd.f32 %v7205, %v7206
        %v7208 = vrot.slane %v7207, 1
        %v7209 = vadd.f32 %v7207, %v7208
        %v7210 = vsel %vm1754, %v7177, 0.0
        %v7211 = vadd.f32 %v7161, %v7210
        %v7212 = vrot.slane %v7211, 4
        %v7213 = vadd.f32 %v7211, %v7212
        %v7214 = vrot.slane %v7213, 2
        %v7215 = vadd.f32 %v7213, %v7214
        %v7216 = vrot.slane %v7215, 1
        %v7217 = vadd.f32 %v7215, %v7216
        %v7218 = vsel %vm1754, %v7179, 0.0
        %v7219 = vadd.f32 %v7163, %v7218
        %v7220 = vrot.slane %v7219, 4
        %v7221 = vadd.f32 %v7219, %v7220
        %v7222 = vrot.slane %v7221, 2
        %v7223 = vadd.f32 %v7221, %v7222
        %v7224 = vrot.slane %v7223, 1
        %v7225 = vadd.f32 %v7223, %v7224
        %v7226 = vsel %vm1754, %v7181, 0.0
        %v7227 = vadd.f32 %v7165, %v7226
        %v7228 = vrot.slane %v7227, 4
        %v7229 = vadd.f32 %v7227, %v7228
        %v7230 = vrot.slane %v7229, 2
        %v7231 = vadd.f32 %v7229, %v7230
        %v7232 = vrot.slane %v7231, 1
        %v7233 = vadd.f32 %v7231, %v7232
        %v7234 = vsel %vm1754, %v7183, 0.0
        %v7235 = vadd.f32 %v7167, %v7234
        %v7236 = vrot.slane %v7235, 4
        %v7237 = vadd.f32 %v7235, %v7236
        %v7238 = vrot.slane %v7237, 2
        %v7239 = vadd.f32 %v7237, %v7238
        %v7240 = vrot.slane %v7239, 1
        %v7241 = vadd.f32 %v7239, %v7240
        %v7242 = vsel %vm1754, %v7185, 0.0
        %v7243 = vadd.f32 %v7169, %v7242
        %v7244 = vrot.slane %v7243, 4
        %v7245 = vadd.f32 %v7243, %v7244
        %v7246 = vrot.slane %v7245, 2
        %v7247 = vadd.f32 %v7245, %v7246
        %v7248 = vrot.slane %v7247, 1
        %v7249 = vadd.f32 %v7247, %v7248
        %v7250 = vrcp.pop %v7193
        %v7251 = vrcp.pop %v7201
        %v7252 = vrcp.pop %v7209
        %v7253 = vrcp.pop %v7217
        %v7254 = vrcp.pop %v7225
        %v7255 = vrcp.pop %v7233
        %v7256 = vrcp.pop %v7241
        %v7257 = vrcp.pop %v7249
        %v7258 = vmul.f32 %v7155, %v7250
        %v7259 = vmul.f32 %v7157, %v7251
        %v7260 = vmul.f32 %v7159, %v7252
        %v7261 = vmul.f32 %v7161, %v7253
        %v7262 = vmul.f32 %v7163, %v7254
        %v7263 = vmul.f32 %v7165, %v7255
        %v7264 = vmul.f32 %v7167, %v7256
        %v7265 = vmul.f32 %v7169, %v7257
        %v7266 = vmul.f32 %v7171, %v7250
        %v7267 = vmul.f32 %v7173, %v7251
        %v7268 = vmul.f32 %v7175, %v7252
        %v7269 = vmul.f32 %v7177, %v7253
        %v7270 = vmul.f32 %v7179, %v7254
        %v7271 = vmul.f32 %v7181, %v7255
        %v7272 = vmul.f32 %v7183, %v7256
        %v7273 = vmul.f32 %v7185, %v7257
        %v7290 = vrot.slane %v1718, 6
        %v7291 = vrot.slane %v1726, 6
        %v7292 = vsel %vm1758, %v7290, %v7291
        %v7293 = vrot.slane %v1719, 6
        %v7294 = vrot.slane %v1727, 6
        %v7295 = vsel %vm1758, %v7293, %v7294
        %v7296 = vrot.slane %v1720, 6
        %v7297 = vrot.slane %v1728, 6
        %v7298 = vsel %vm1758, %v7296, %v7297
        %v7299 = vrot.slane %v1721, 6
        %v7300 = vrot.slane %v1729, 6
        %v7301 = vsel %vm1758, %v7299, %v7300
        %v7302 = vrot.slane %v1722, 6
        %v7303 = vrot.slane %v1730, 6
        %v7304 = vsel %vm1758, %v7302, %v7303
        %v7305 = vrot.slane %v1723, 6
        %v7306 = vrot.slane %v1731, 6
        %v7307 = vsel %vm1758, %v7305, %v7306
        %v7308 = vrot.slane %v1724, 6
        %v7309 = vrot.slane %v1732, 6
        %v7310 = vsel %vm1758, %v7308, %v7309
        %v7311 = vrot.slane %v1725, 6
        %v7312 = vrot.slane %v1733, 6
        %v7313 = vsel %vm1758, %v7311, %v7312
        %v7330 = vmul.f32 %v7258, %v7292
        %v7331 = vmul.f32 %v7259, %v7295
        %v7332 = vmul.f32 %v7260, %v7298
        %v7333 = vmul.f32 %v7261, %v7301
        %v7334 = vmul.f32 %v7262, %v7304
        %v7335 = vmul.f32 %v7263, %v7307
        %v7336 = vmul.f32 %v7264, %v7310
        %v7337 = vmul.f32 %v7265, %v7313
        %v7338 = vmul.f32 %v7266, %v7291
        %v7339 = vmul.f32 %v7267, %v7294
        %v7340 = vmul.f32 %v7268, %v7297
        %v7341 = vmul.f32 %v7269, %v7300
        %v7342 = vmul.f32 %v7270, %v7303
        %v7343 = vmul.f32 %v7271, %v7306
        %v7344 = vmul.f32 %v7272, %v7309
        %v7345 = vmul.f32 %v7273, %v7312
        %7347 = vrot.lane.b32.xlu0 %v6458, 33
        %v7348 = vpop.permute.xlu0 %7347
        %7357 = vrot.lane.b32.xlu0 %v6451, 33
        %v7358 = vpop.permute.xlu0 %7357
        %7359 = vrot.lane.b32.xlu0 %v6452, 33
        %v7360 = vpop.permute.xlu0 %7359
        %7361 = vrot.lane.b32.xlu0 %v6453, 33
        %v7362 = vpop.permute.xlu0 %7361
        %7363 = vrot.lane.b32.xlu0 %v6454, 33
        %v7364 = vpop.permute.xlu0 %7363
        %7365 = vrot.lane.b32.xlu0 %v6455, 33
        %v7366 = vpop.permute.xlu0 %7365
        %7367 = vrot.lane.b32.xlu0 %v6456, 33
        %v7368 = vpop.permute.xlu0 %7367
        %7369 = vrot.lane.b32.xlu0 %v6457, 33
        %v7370 = vpop.permute.xlu0 %7369
        %vm7371 = vcmask 269312
        %v7372 = vsel %vm7371, %v7358, %v7360
        %v7373 = vsel %vm7371, %v7360, %v7362
        %v7374 = vsel %vm7371, %v7362, %v7364
        %v7375 = vsel %vm7371, %v7364, %v7366
        %v7376 = vsel %vm7371, %v7366, %v7368
        %v7377 = vsel %vm7371, %v7368, %v7370
        %v7378 = vsel %vm7371, %v7370, %v7348
        %v7387 = vsel %vm7371, %v7348, %v7358
        %v7388 = vperm.slane %v7330, 0
        %v7389 = vperm.slane %v7331, 0
        %v7390 = vperm.slane %v7332, 0
        %v7391 = vperm.slane %v7333, 0
        %v7392 = vperm.slane %v7334, 0
        %v7393 = vperm.slane %v7335, 0
        %v7394 = vperm.slane %v7336, 0
        %v7395 = vperm.slane %v7337, 0
        %v7396 = vmul.f32 %v7388, %v7387
        %v7397 = vmul.f32 %v7389, %v7372
        %v7398 = vmul.f32 %v7390, %v7373
        %v7399 = vmul.f32 %v7391, %v7374
        %v7400 = vmul.f32 %v7392, %v7375
        %v7401 = vmul.f32 %v7393, %v7376
        %v7402 = vmul.f32 %v7394, %v7377
        %v7403 = vmul.f32 %v7395, %v7378
        %v7404 = vadd.f32 %v7396, 0.0
        %v7405 = vadd.f32 %v7397, 0.0
        %v7406 = vadd.f32 %v7398, 0.0
        %v7407 = vadd.f32 %v7399, 0.0
        %v7408 = vadd.f32 %v7400, 0.0
        %v7409 = vadd.f32 %v7401, 0.0
        %v7410 = vadd.f32 %v7402, 0.0
        %v7411 = vadd.f32 %v7403, 0.0
        %7412 = vrot.lane.b32.xlu0 %v6458, 32
        %v7413 = vpop.permute.xlu0 %7412
        %7415 = vrot.lane.b32.xlu0 %v6451, 32
        %v7416 = vpop.permute.xlu0 %7415
        %7417 = vrot.lane.b32.xlu0 %v6452, 32
        %v7418 = vpop.permute.xlu0 %7417
        %7419 = vrot.lane.b32.xlu0 %v6453, 32
        %v7420 = vpop.permute.xlu0 %7419
        %7421 = vrot.lane.b32.xlu0 %v6454, 32
        %v7422 = vpop.permute.xlu0 %7421
        %7423 = vrot.lane.b32.xlu0 %v6455, 32
        %v7424 = vpop.permute.xlu0 %7423
        %7425 = vrot.lane.b32.xlu0 %v6456, 32
        %v7426 = vpop.permute.xlu0 %7425
        %7427 = vrot.lane.b32.xlu0 %v6457, 32
        %v7428 = vpop.permute.xlu0 %7427
        %vm7429 = vcmask 261120
        %v7430 = vsel %vm7429, %v7416, %v7418
        %v7431 = vsel %vm7429, %v7418, %v7420
        %v7432 = vsel %vm7429, %v7420, %v7422
        %v7433 = vsel %vm7429, %v7422, %v7424
        %v7434 = vsel %vm7429, %v7424, %v7426
        %v7435 = vsel %vm7429, %v7426, %v7428
        %v7436 = vsel %vm7429, %v7428, %v7413
        %v7445 = vsel %vm7429, %v7413, %v7416
        %v7446 = vperm.slane %v7330, 1
        %v7447 = vperm.slane %v7331, 1
        %v7448 = vperm.slane %v7332, 1
        %v7449 = vperm.slane %v7333, 1
        %v7450 = vperm.slane %v7334, 1
        %v7451 = vperm.slane %v7335, 1
        %v7452 = vperm.slane %v7336, 1
        %v7453 = vperm.slane %v7337, 1
        %v7454 = vmul.f32 %v7446, %v7445
        %v7455 = vmul.f32 %v7447, %v7430
        %v7456 = vmul.f32 %v7448, %v7431
        %v7457 = vmul.f32 %v7449, %v7432
        %v7458 = vmul.f32 %v7450, %v7433
        %v7459 = vmul.f32 %v7451, %v7434
        %v7460 = vmul.f32 %v7452, %v7435
        %v7461 = vmul.f32 %v7453, %v7436
        %v7462 = vadd.f32 %v7404, %v7454
        %v7463 = vadd.f32 %v7405, %v7455
        %v7464 = vadd.f32 %v7406, %v7456
        %v7465 = vadd.f32 %v7407, %v7457
        %v7466 = vadd.f32 %v7408, %v7458
        %v7467 = vadd.f32 %v7409, %v7459
        %v7468 = vadd.f32 %v7410, %v7460
        %v7469 = vadd.f32 %v7411, %v7461
        %7470 = vrot.lane.b32.xlu0 %v6458, 31
        %v7471 = vpop.permute.xlu0 %7470
        %7473 = vrot.lane.b32.xlu0 %v6451, 31
        %v7474 = vpop.permute.xlu0 %7473
        %7475 = vrot.lane.b32.xlu0 %v6452, 31
        %v7476 = vpop.permute.xlu0 %7475
        %7477 = vrot.lane.b32.xlu0 %v6453, 31
        %v7478 = vpop.permute.xlu0 %7477
        %7479 = vrot.lane.b32.xlu0 %v6454, 31
        %v7480 = vpop.permute.xlu0 %7479
        %7481 = vrot.lane.b32.xlu0 %v6455, 31
        %v7482 = vpop.permute.xlu0 %7481
        %7483 = vrot.lane.b32.xlu0 %v6456, 31
        %v7484 = vpop.permute.xlu0 %7483
        %7485 = vrot.lane.b32.xlu0 %v6457, 31
        %v7486 = vpop.permute.xlu0 %7485
        %vm7487 = vcmask 252928
        %v7488 = vsel %vm7487, %v7474, %v7476
        %v7489 = vsel %vm7487, %v7476, %v7478
        %v7490 = vsel %vm7487, %v7478, %v7480
        %v7491 = vsel %vm7487, %v7480, %v7482
        %v7492 = vsel %vm7487, %v7482, %v7484
        %v7493 = vsel %vm7487, %v7484, %v7486
        %v7494 = vsel %vm7487, %v7486, %v7471
        %v7503 = vsel %vm7487, %v7471, %v7474
        %v7504 = vperm.slane %v7330, 2
        %v7505 = vperm.slane %v7331, 2
        %v7506 = vperm.slane %v7332, 2
        %v7507 = vperm.slane %v7333, 2
        %v7508 = vperm.slane %v7334, 2
        %v7509 = vperm.slane %v7335, 2
        %v7510 = vperm.slane %v7336, 2
        %v7511 = vperm.slane %v7337, 2
        %v7512 = vmul.f32 %v7504, %v7503
        %v7513 = vmul.f32 %v7505, %v7488
        %v7514 = vmul.f32 %v7506, %v7489
        %v7515 = vmul.f32 %v7507, %v7490
        %v7516 = vmul.f32 %v7508, %v7491
        %v7517 = vmul.f32 %v7509, %v7492
        %v7518 = vmul.f32 %v7510, %v7493
        %v7519 = vmul.f32 %v7511, %v7494
        %v7520 = vadd.f32 %v7462, %v7512
        %v7521 = vadd.f32 %v7463, %v7513
        %v7522 = vadd.f32 %v7464, %v7514
        %v7523 = vadd.f32 %v7465, %v7515
        %v7524 = vadd.f32 %v7466, %v7516
        %v7525 = vadd.f32 %v7467, %v7517
        %v7526 = vadd.f32 %v7468, %v7518
        %v7527 = vadd.f32 %v7469, %v7519
        %7528 = vrot.lane.b32.xlu0 %v6458, 1
        %v7529 = vpop.permute.xlu0 %7528
        %7531 = vrot.lane.b32.xlu0 %v6451, 1
        %v7532 = vpop.permute.xlu0 %7531
        %7533 = vrot.lane.b32.xlu0 %v6452, 1
        %v7534 = vpop.permute.xlu0 %7533
        %7535 = vrot.lane.b32.xlu0 %v6453, 1
        %v7536 = vpop.permute.xlu0 %7535
        %7537 = vrot.lane.b32.xlu0 %v6454, 1
        %v7538 = vpop.permute.xlu0 %7537
        %7539 = vrot.lane.b32.xlu0 %v6455, 1
        %v7540 = vpop.permute.xlu0 %7539
        %7541 = vrot.lane.b32.xlu0 %v6456, 1
        %v7542 = vpop.permute.xlu0 %7541
        %7543 = vrot.lane.b32.xlu0 %v6457, 1
        %v7544 = vpop.permute.xlu0 %7543
        %vm7545 = vcmask 7168
        %v7546 = vsel %vm7545, %v7532, %v7534
        %v7547 = vsel %vm7545, %v7534, %v7536
        %v7548 = vsel %vm7545, %v7536, %v7538
        %v7549 = vsel %vm7545, %v7538, %v7540
        %v7550 = vsel %vm7545, %v7540, %v7542
        %v7551 = vsel %vm7545, %v7542, %v7544
        %v7552 = vsel %vm7545, %v7544, %v7529
        %v7561 = vsel %vm7545, %v7529, %v7532
        %v7562 = vperm.slane %v7330, 3
        %v7563 = vperm.slane %v7331, 3
        %v7564 = vperm.slane %v7332, 3
        %v7565 = vperm.slane %v7333, 3
        %v7566 = vperm.slane %v7334, 3
        %v7567 = vperm.slane %v7335, 3
        %v7568 = vperm.slane %v7336, 3
        %v7569 = vperm.slane %v7337, 3
        %v7570 = vmul.f32 %v7562, %v7561
        %v7571 = vmul.f32 %v7563, %v7546
        %v7572 = vmul.f32 %v7564, %v7547
        %v7573 = vmul.f32 %v7565, %v7548
        %v7574 = vmul.f32 %v7566, %v7549
        %v7575 = vmul.f32 %v7567, %v7550
        %v7576 = vmul.f32 %v7568, %v7551
        %v7577 = vmul.f32 %v7569, %v7552
        %v7578 = vadd.f32 %v7520, %v7570
        %v7579 = vadd.f32 %v7521, %v7571
        %v7580 = vadd.f32 %v7522, %v7572
        %v7581 = vadd.f32 %v7523, %v7573
        %v7582 = vadd.f32 %v7524, %v7574
        %v7583 = vadd.f32 %v7525, %v7575
        %v7584 = vadd.f32 %v7526, %v7576
        %v7585 = vadd.f32 %v7527, %v7577
        %v7586 = vperm.slane %v7330, 4
        %v7587 = vperm.slane %v7331, 4
        %v7588 = vperm.slane %v7332, 4
        %v7589 = vperm.slane %v7333, 4
        %v7590 = vperm.slane %v7334, 4
        %v7591 = vperm.slane %v7335, 4
        %v7592 = vperm.slane %v7336, 4
        %v7593 = vperm.slane %v7337, 4
        %v7594 = vmul.f32 %v7586, %v6451
        %v7595 = vmul.f32 %v7587, %v6452
        %v7596 = vmul.f32 %v7588, %v6453
        %v7597 = vmul.f32 %v7589, %v6454
        %v7598 = vmul.f32 %v7590, %v6455
        %v7599 = vmul.f32 %v7591, %v6456
        %v7600 = vmul.f32 %v7592, %v6457
        %v7601 = vmul.f32 %v7593, %v6458
        %v7602 = vadd.f32 %v7578, %v7594
        %v7603 = vadd.f32 %v7579, %v7595
        %v7604 = vadd.f32 %v7580, %v7596
        %v7605 = vadd.f32 %v7581, %v7597
        %v7606 = vadd.f32 %v7582, %v7598
        %v7607 = vadd.f32 %v7583, %v7599
        %v7608 = vadd.f32 %v7584, %v7600
        %v7609 = vadd.f32 %v7585, %v7601
        %7610 = vrot.lane.b32.xlu0 %v6451, 127
        %v7611 = vpop.permute.xlu0 %7610
        %7612 = vrot.lane.b32.xlu0 %v6452, 127
        %v7613 = vpop.permute.xlu0 %7612
        %7614 = vrot.lane.b32.xlu0 %v6453, 127
        %v7615 = vpop.permute.xlu0 %7614
        %7616 = vrot.lane.b32.xlu0 %v6454, 127
        %v7617 = vpop.permute.xlu0 %7616
        %7618 = vrot.lane.b32.xlu0 %v6455, 127
        %v7619 = vpop.permute.xlu0 %7618
        %7620 = vrot.lane.b32.xlu0 %v6456, 127
        %v7621 = vpop.permute.xlu0 %7620
        %7622 = vrot.lane.b32.xlu0 %v6457, 127
        %v7623 = vpop.permute.xlu0 %7622
        %7624 = vrot.lane.b32.xlu0 %v6458, 127
        %v7625 = vpop.permute.xlu0 %7624
        %vm7626 = vcmask 1039360
        %v7627 = vsel %vm7626, %v7611, %v7613
        %v7628 = vsel %vm7626, %v7613, %v7615
        %v7629 = vsel %vm7626, %v7615, %v7617
        %v7630 = vsel %vm7626, %v7617, %v7619
        %v7631 = vsel %vm7626, %v7619, %v7621
        %v7632 = vsel %vm7626, %v7621, %v7623
        %v7633 = vsel %vm7626, %v7623, %v7625
        %v7643 = vsel %vm7626, %v7625, %v7611
        %v7644 = vperm.slane %v7330, 5
        %v7645 = vperm.slane %v7331, 5
        %v7646 = vperm.slane %v7332, 5
        %v7647 = vperm.slane %v7333, 5
        %v7648 = vperm.slane %v7334, 5
        %v7649 = vperm.slane %v7335, 5
        %v7650 = vperm.slane %v7336, 5
        %v7651 = vperm.slane %v7337, 5
        %v7652 = vmul.f32 %v7644, %v7627
        %v7653 = vmul.f32 %v7645, %v7628
        %v7654 = vmul.f32 %v7646, %v7629
        %v7655 = vmul.f32 %v7647, %v7630
        %v7656 = vmul.f32 %v7648, %v7631
        %v7657 = vmul.f32 %v7649, %v7632
        %v7658 = vmul.f32 %v7650, %v7633
        %v7659 = vmul.f32 %v7651, %v7643
        %v7660 = vadd.f32 %v7602, %v7652
        %v7661 = vadd.f32 %v7603, %v7653
        %v7662 = vadd.f32 %v7604, %v7654
        %v7663 = vadd.f32 %v7605, %v7655
        %v7664 = vadd.f32 %v7606, %v7656
        %v7665 = vadd.f32 %v7607, %v7657
        %v7666 = vadd.f32 %v7608, %v7658
        %v7667 = vadd.f32 %v7609, %v7659
        %7668 = vrot.lane.b32.xlu0 %v6451, 97
        %v7669 = vpop.permute.xlu0 %7668
        %7670 = vrot.lane.b32.xlu0 %v6452, 97
        %v7671 = vpop.permute.xlu0 %7670
        %7672 = vrot.lane.b32.xlu0 %v6453, 97
        %v7673 = vpop.permute.xlu0 %7672
        %7674 = vrot.lane.b32.xlu0 %v6454, 97
        %v7675 = vpop.permute.xlu0 %7674
        %7676 = vrot.lane.b32.xlu0 %v6455, 97
        %v7677 = vpop.permute.xlu0 %7676
        %7678 = vrot.lane.b32.xlu0 %v6456, 97
        %v7679 = vpop.permute.xlu0 %7678
        %7680 = vrot.lane.b32.xlu0 %v6457, 97
        %v7681 = vpop.permute.xlu0 %7680
        %7682 = vrot.lane.b32.xlu0 %v6458, 97
        %v7683 = vpop.permute.xlu0 %7682
        %vm7684 = vcmask 793600
        %v7685 = vsel %vm7684, %v7669, %v7671
        %v7686 = vsel %vm7684, %v7671, %v7673
        %v7687 = vsel %vm7684, %v7673, %v7675
        %v7688 = vsel %vm7684, %v7675, %v7677
        %v7689 = vsel %vm7684, %v7677, %v7679
        %v7690 = vsel %vm7684, %v7679, %v7681
        %v7691 = vsel %vm7684, %v7681, %v7683
        %v7701 = vsel %vm7684, %v7683, %v7669
        %v7702 = vperm.slane %v7330, 6
        %v7703 = vperm.slane %v7331, 6
        %v7704 = vperm.slane %v7332, 6
        %v7705 = vperm.slane %v7333, 6
        %v7706 = vperm.slane %v7334, 6
        %v7707 = vperm.slane %v7335, 6
        %v7708 = vperm.slane %v7336, 6
        %v7709 = vperm.slane %v7337, 6
        %v7710 = vmul.f32 %v7702, %v7685
        %v7711 = vmul.f32 %v7703, %v7686
        %v7712 = vmul.f32 %v7704, %v7687
        %v7713 = vmul.f32 %v7705, %v7688
        %v7714 = vmul.f32 %v7706, %v7689
        %v7715 = vmul.f32 %v7707, %v7690
        %v7716 = vmul.f32 %v7708, %v7691
        %v7717 = vmul.f32 %v7709, %v7701
        %v7718 = vadd.f32 %v7660, %v7710
        %v7719 = vadd.f32 %v7661, %v7711
        %v7720 = vadd.f32 %v7662, %v7712
        %v7721 = vadd.f32 %v7663, %v7713
        %v7722 = vadd.f32 %v7664, %v7714
        %v7723 = vadd.f32 %v7665, %v7715
        %v7724 = vadd.f32 %v7666, %v7716
        %v7725 = vadd.f32 %v7667, %v7717
        %7726 = vrot.lane.b32.xlu0 %v6451, 96
        %v7727 = vpop.permute.xlu0 %7726
        %7728 = vrot.lane.b32.xlu0 %v6452, 96
        %v7729 = vpop.permute.xlu0 %7728
        %7730 = vrot.lane.b32.xlu0 %v6453, 96
        %v7731 = vpop.permute.xlu0 %7730
        %7732 = vrot.lane.b32.xlu0 %v6454, 96
        %v7733 = vpop.permute.xlu0 %7732
        %7734 = vrot.lane.b32.xlu0 %v6455, 96
        %v7735 = vpop.permute.xlu0 %7734
        %7736 = vrot.lane.b32.xlu0 %v6456, 96
        %v7737 = vpop.permute.xlu0 %7736
        %7738 = vrot.lane.b32.xlu0 %v6457, 96
        %v7739 = vpop.permute.xlu0 %7738
        %7740 = vrot.lane.b32.xlu0 %v6458, 96
        %v7741 = vpop.permute.xlu0 %7740
        %vm7742 = vcmask 785408
        %v7743 = vsel %vm7742, %v7727, %v7729
        %v7744 = vsel %vm7742, %v7729, %v7731
        %v7745 = vsel %vm7742, %v7731, %v7733
        %v7746 = vsel %vm7742, %v7733, %v7735
        %v7747 = vsel %vm7742, %v7735, %v7737
        %v7748 = vsel %vm7742, %v7737, %v7739
        %v7749 = vsel %vm7742, %v7739, %v7741
        %v7759 = vsel %vm7742, %v7741, %v7727
        %v7760 = vperm.slane %v7330, 7
        %v7761 = vperm.slane %v7331, 7
        %v7762 = vperm.slane %v7332, 7
        %v7763 = vperm.slane %v7333, 7
        %v7764 = vperm.slane %v7334, 7
        %v7765 = vperm.slane %v7335, 7
        %v7766 = vperm.slane %v7336, 7
        %v7767 = vperm.slane %v7337, 7
        %v7768 = vmul.f32 %v7760, %v7743
        %v7769 = vmul.f32 %v7761, %v7744
        %v7770 = vmul.f32 %v7762, %v7745
        %v7771 = vmul.f32 %v7763, %v7746
        %v7772 = vmul.f32 %v7764, %v7747
        %v7773 = vmul.f32 %v7765, %v7748
        %v7774 = vmul.f32 %v7766, %v7749
        %v7775 = vmul.f32 %v7767, %v7759
        %v7776 = vadd.f32 %v7718, %v7768
        %v7777 = vadd.f32 %v7719, %v7769
        %v7778 = vadd.f32 %v7720, %v7770
        %v7779 = vadd.f32 %v7721, %v7771
        %v7780 = vadd.f32 %v7722, %v7772
        %v7781 = vadd.f32 %v7723, %v7773
        %v7782 = vadd.f32 %v7724, %v7774
        %v7783 = vadd.f32 %v7725, %v7775
        %7784 = vrot.lane.b32.xlu0 %v6451, 95
        %v7785 = vpop.permute.xlu0 %7784
        %7786 = vrot.lane.b32.xlu0 %v6452, 95
        %v7787 = vpop.permute.xlu0 %7786
        %7788 = vrot.lane.b32.xlu0 %v6453, 95
        %v7789 = vpop.permute.xlu0 %7788
        %7790 = vrot.lane.b32.xlu0 %v6454, 95
        %v7791 = vpop.permute.xlu0 %7790
        %7792 = vrot.lane.b32.xlu0 %v6455, 95
        %v7793 = vpop.permute.xlu0 %7792
        %7794 = vrot.lane.b32.xlu0 %v6456, 95
        %v7795 = vpop.permute.xlu0 %7794
        %7796 = vrot.lane.b32.xlu0 %v6457, 95
        %v7797 = vpop.permute.xlu0 %7796
        %7798 = vrot.lane.b32.xlu0 %v6458, 95
        %v7799 = vpop.permute.xlu0 %7798
        %vm7800 = vcmask 777216
        %v7801 = vsel %vm7800, %v7785, %v7787
        %v7802 = vsel %vm7800, %v7787, %v7789
        %v7803 = vsel %vm7800, %v7789, %v7791
        %v7804 = vsel %vm7800, %v7791, %v7793
        %v7805 = vsel %vm7800, %v7793, %v7795
        %v7806 = vsel %vm7800, %v7795, %v7797
        %v7807 = vsel %vm7800, %v7797, %v7799
        %v7817 = vsel %vm7800, %v7799, %v7785
        %v7818 = vperm.slane %v7338, 0
        %v7819 = vperm.slane %v7339, 0
        %v7820 = vperm.slane %v7340, 0
        %v7821 = vperm.slane %v7341, 0
        %v7822 = vperm.slane %v7342, 0
        %v7823 = vperm.slane %v7343, 0
        %v7824 = vperm.slane %v7344, 0
        %v7825 = vperm.slane %v7345, 0
        %v7826 = vmul.f32 %v7818, %v7801
        %v7827 = vmul.f32 %v7819, %v7802
        %v7828 = vmul.f32 %v7820, %v7803
        %v7829 = vmul.f32 %v7821, %v7804
        %v7830 = vmul.f32 %v7822, %v7805
        %v7831 = vmul.f32 %v7823, %v7806
        %v7832 = vmul.f32 %v7824, %v7807
        %v7833 = vmul.f32 %v7825, %v7817
        %v7834 = vadd.f32 %v7776, %v7826
        %v7835 = vadd.f32 %v7777, %v7827
        %v7836 = vadd.f32 %v7778, %v7828
        %v7837 = vadd.f32 %v7779, %v7829
        %v7838 = vadd.f32 %v7780, %v7830
        %v7839 = vadd.f32 %v7781, %v7831
        %v7840 = vadd.f32 %v7782, %v7832
        %v7841 = vadd.f32 %v7783, %v7833
        %7842 = vst [vmem:[%s288] sm:$0xff] %v7834
        %7843 = vst [vmem:[%s288 + $0x8] sm:$0xff] %v7835
        %7844 = vst [vmem:[%s288 + $0x10] sm:$0xff] %v7836
        %7845 = vst [vmem:[%s288 + $0x18] sm:$0xff] %v7837
        %7846 = vst [vmem:[%s288 + $0x20] sm:$0xff] %v7838
        %7847 = vst [vmem:[%s288 + $0x28] sm:$0xff] %v7839
        %7848 = vst [vmem:[%s288 + $0x30] sm:$0xff] %v7840
        %7849 = vst [vmem:[%s288 + $0x38] sm:$0xff] %v7841
        %s7850 = sand.u32 %s182, 1
        %s7851 = scalar_lea.sflag [#allocation4], %s7850
        %s7852 = sand.u32 %s182, 1
        %s7853 = smul.addr %s7852, 64
        %s7854 = scalar_lea.vmem [#allocation5], %s7853
        // Predicated region
        $region53: #{tpu_custom_call.1} parent=47 // pred_check
          %p7855 = pneg %p192
        $region54: #{tpu_custom_call.1} parent=47 // pred_check_branch
          %7857 = sbr.rel (%p7855) target = $region56
        $region55: #{tpu_custom_call.1} parent=47 // pred_region
          %7859 = vsyncadd %s7851, 0
          %s7860 = smul.addr %s22, 8
          %s7861 = smul.addr %s7860, 8
          %s7862 = scalar_lea.hbm %s7, %s7861
          %s7864 = sshll.u32 %s7854, 4
          %s7865 = int_to_ptr.vmem [resolvable:$true] %s7864
          %s7866 = sshll.u32 %s7862, 4
          %s7867 = int_to_ptr.hbm [resolvable:$true] %s7866
          %7869 = dma.vmem_to_hbm [thread:$0]  %s7865, 1024, %s7867, %s7851
        $region56: #{tpu_custom_call.1} parent=47 // pred_fallthru
          _
      $region48: #{tpu_custom_call.1} parent=5 // pred_fallthru
        _
      %p7870 = scmp.le.s32.totalorder 2, %s17
      // Predicated region
      $region57: #{tpu_custom_call.1} parent=5 // pred_check
        %p7871 = pneg %p7870
      $region58: #{tpu_custom_call.1} parent=5 // pred_check_branch
        %7873 = sbr.rel (%p7871) target = $region60
      $region59: #{tpu_custom_call.1} parent=5 // pred_region
        %s7874 = ssub.s32 %s17, 2
        // Predicated region
        $region61: #{tpu_custom_call.1} parent=59 // pred_check
          %p7875 = pneg %p198
        $region62: #{tpu_custom_call.1} parent=59 // pred_check_branch
          %7877 = sbr.rel (%p7875) target = $region64
        $region63: #{tpu_custom_call.1} parent=59 // pred_region
          %s7878 = sand.u32 %s183, 1
          %s7879 = scalar_lea.sflag [#allocation4], %s7878
          %s7880 = sand.u32 %s183, 1
          %s7881 = smul.addr %s7880, 64
          %s7882 = scalar_lea.vmem [#allocation5], %s7881
          %7884 = dma.done %s7879, 1024
        $region64: #{tpu_custom_call.1} parent=59 // pred_fallthru
          _
      $region60: #{tpu_custom_call.1} parent=5 // pred_fallthru
        _
    $region6: #{tpu_custom_call.1} parent=1 // loop_footer
      %s21 = sadd.s32 1, %s17
    $region7: #{tpu_custom_call.1} parent=1 // loop_footer_branch
      %16 = sbr.rel target = $region3
    $region8: #{tpu_custom_call.1} parent=1 // loop_exit
      _
    %7885 = vsyncpa [#allocation3], 1
    %s7886 = scalar_lea.sflag [#allocation3], 1
    %7887 = vsyncpa %s7886, 1
    %7888 = vsyncpa [#allocation4], 1
    %s7889 = scalar_lea.sflag [#allocation4], 1
    %7890 = vsyncpa %s7889, 1

</llo_original>
